<compile_context>
chip_gen: v5e
topology: v5e:2x2
jax: 0.10.0
libtpu: 0.0.40
codegen_flags: <defaults>
</compile_context>

<pallas_src>
import jax
import jax.numpy as jnp
from jax import lax
from jax.experimental import pallas as pl
from jax.experimental.pallas import tpu as pltpu


# ----------------------------------------------------------------------------
# Kernel: recurrent part only (layer-0 input projection precomputed outside).
# Grid = (batch tiles ["parallel"], T chunks ["arbitrary"]).
# ----------------------------------------------------------------------------
def _lstm2_cls_kernel(
    gx_ref,       # (Tc, Bt, 4H) bf16  x @ W_ih0 + (b_ih0 + b_hh0), time-major chunk
    whh0_ref,     # (H, 4H)  bf16      layer-0 recurrent weight (pre-transposed)
    wih1_ref,     # (H, 4H)  bf16      layer-1 input weight (pre-transposed)
    whh1_ref,     # (H, 4H)  bf16      layer-1 recurrent weight (pre-transposed)
    b1_ref,       # (1, 4H)  f32       b_ih1 + b_hh1
    wc_ref,       # (H, Lp)  f32       classifier weight (pre-transposed, lane-padded)
    bc_ref,       # (1, Lp)  f32       classifier bias (lane-padded)
    logits_ref,   # (Bt, Lp) f32       output (written on the last T chunk)
    h0_ref, c0_ref, h1_ref, c1_ref,    # (Bt, H) f32 VMEM scratch (persist over T chunks)
):
    t_blk = pl.program_id(1)
    Tc, Bt, G = gx_ref.shape
    H = G // 4

    # Fresh recurrent state at the start of every sequence (first T chunk).
    @pl.when(t_blk == 0)
    def _():
        h0_ref[...] = jnp.zeros_like(h0_ref)
        c0_ref[...] = jnp.zeros_like(c0_ref)
        h1_ref[...] = jnp.zeros_like(h1_ref)
        c1_ref[...] = jnp.zeros_like(c1_ref)

    # Weights resident once in VMEM; bias broadcast hoisted out of the loop.
    whh0 = whh0_ref[...]                                # (H, 4H)  bf16
    wih1 = wih1_ref[...]                                # (H, 4H)  bf16
    whh1 = whh1_ref[...]                                # (H, 4H)  bf16
    b1 = jnp.broadcast_to(b1_ref[...], (Bt, 4 * H))     # (Bt, 4H) f32

    def gates_to_hc(gates, c):
        # gates laid out as [i | f | g | o] along the lane axis (4H)
        i_g = jax.nn.sigmoid(gates[:, 0 * H:1 * H])
        f_g = jax.nn.sigmoid(gates[:, 1 * H:2 * H])
        g_g = jnp.tanh(gates[:, 2 * H:3 * H])
        o_g = jax.nn.sigmoid(gates[:, 3 * H:4 * H])
        c_new = f_g * c + i_g * g_g
        h_new = o_g * jnp.tanh(c_new)
        return h_new, c_new

    def step(t, carry):
        h0, c0, h1, c1 = carry
        gx_t = gx_ref[t].astype(jnp.float32)             # (Bt, 4H)
        # Layer-1 recurrent term first: depends only on the *previous* step's
        # h1, so its MXU push overlaps layer-0's matmul and gate math
        # (no concat / false dependency on h0n).
        g1_rec = jnp.dot(h1.astype(jnp.bfloat16), whh1,
                         preferred_element_type=jnp.float32)
        # Layer 0: only the recurrent matmul remains in the loop.
        g0 = gx_t + jnp.dot(h0.astype(jnp.bfloat16), whh0,
                            preferred_element_type=jnp.float32)
        h0n, c0n = gates_to_hc(g0, c0)
        # Layer 1: input-projection matmul on the freshly computed h0n.
        g1 = g1_rec + b1 + jnp.dot(h0n.astype(jnp.bfloat16), wih1,
                                   preferred_element_type=jnp.float32)
        h1n, c1n = gates_to_hc(g1, c1)
        return (h0n, c0n, h1n, c1n)

    # Partial unroll: lets the scheduler software-pipeline adjacent timesteps
    # (step t's recurrent dots depend only on step t-1's state).
    if Tc <= 16:
        unroll = Tc
    elif Tc % 8 == 0:
        unroll = 8
    elif Tc % 4 == 0:
        unroll = 4
    elif Tc % 2 == 0:
        unroll = 2
    else:
        unroll = 1

    carry = (h0_ref[...], c0_ref[...], h1_ref[...], c1_ref[...])
    h0, c0, h1, c1 = lax.fori_loop(0, Tc, step, carry, unroll=unroll)
    h0_ref[...] = h0
    c0_ref[...] = c0
    h1_ref[...] = h1
    c1_ref[...] = c1

    # Last T chunk: h_n[-1] -> dropout (identity, eval) -> classifier.
    @pl.when(t_blk == pl.num_programs(1) - 1)
    def _():
        logits = (jnp.dot(h1, wc_ref[...], preferred_element_type=jnp.float32)
                  + bc_ref[...])
        logits_ref[...] = logits.astype(logits_ref.dtype)


# ----------------------------------------------------------------------------
# Wrapper
# ----------------------------------------------------------------------------
def _largest_divisor(n, cap, align=1):
    """Largest divisor of n that is <= cap and a multiple of align, else n."""
    for c in range(min(n, cap), 0, -1):
        if n % c == 0 and c % align == 0:
            return c
    return n


@jax.jit
def lstm2_classifier_forward(x, params):
    """x: (B, T, 768) float32 — BERT sequence_output (batch_first)."""
    B, T, D = x.shape
    H = params["w_hh0"].shape[0]
    L = params["wc"].shape[1]
    Lp = max(128, ((L + 127) // 128) * 128)   # lane-dense classifier output

    # Hoisted layer-0 input projection: one well-shaped GEMM over all (T*B)
    # rows, emitted time-major with b0 folded in, stored bf16 (halves the HBM
    # round trip; the in-kernel add upcasts to f32 before the gate math).
    gx = (jnp.einsum("btd,dg->tbg", x, params["w_ih0"])
          + params["b0"]).astype(jnp.bfloat16)                       # (T, B, 4H)

    # Recurrent weights: bf16 for the MXU, layer-1 input/recurrent kept split.
    whh0 = params["w_hh0"].astype(jnp.bfloat16)                      # (H, 4H)
    wih1 = params["w_ih1"].astype(jnp.bfloat16)                      # (H, 4H)
    whh1 = params["w_hh1"].astype(jnp.bfloat16)                      # (H, 4H)

    # Classifier padded to a full 128-lane output (sliced back outside).
    wc_p = jnp.zeros((H, Lp), jnp.float32).at[:, :L].set(params["wc"])
    bc_p = jnp.zeros((1, Lp), jnp.float32).at[:, :L].set(params["bc"])

    # Tiling: batch tiles shard across cores ("parallel"); T chunks stream gx
    # through VMEM ("arbitrary") so long sequences never exceed v7x's 64 MiB.
    if B % 8 == 0:
        b_tile = _largest_divisor(B, 64, align=8)
    else:
        b_tile = B                      # full-dim block (allowed by BlockSpec)
    t_chunk = _largest_divisor(T, 32)
    grid = (B // b_tile, T // t_chunk)

    logits_p = pl.pallas_call(
        _lstm2_cls_kernel,
        out_shape=jax.ShapeDtypeStruct((B, Lp), jnp.float32),
        grid_spec=pltpu.PrefetchScalarGridSpec(
            num_scalar_prefetch=0,
            grid=grid,
            in_specs=[
                pl.BlockSpec((t_chunk, b_tile, 4 * H), lambda b, t: (t, b, 0)),
                pl.BlockSpec((H, 4 * H), lambda b, t: (0, 0)),
                pl.BlockSpec((H, 4 * H), lambda b, t: (0, 0)),
                pl.BlockSpec((H, 4 * H), lambda b, t: (0, 0)),
                pl.BlockSpec((1, 4 * H), lambda b, t: (0, 0)),
                pl.BlockSpec((H, Lp), lambda b, t: (0, 0)),
                pl.BlockSpec((1, Lp), lambda b, t: (0, 0)),
            ],
            out_specs=pl.BlockSpec((b_tile, Lp), lambda b, t: (b, 0)),
            scratch_shapes=[pltpu.VMEM((b_tile, H), jnp.float32)] * 4,
        ),
        compiler_params=pltpu.CompilerParams(
            dimension_semantics=("parallel", "arbitrary"),
            # Explicit limit; actual use (gx chunk + weights + double buffers)
            # is a few MiB at these tile caps — well under v7x's 64 MiB VMEM.
            vmem_limit_bytes=48 * 1024 * 1024,
        ),
    )(gx, whh0, wih1, whh1, params["b1"], wc_p, bc_p)

    return logits_p[:, :L]


# ----------------------------------------------------------------------------
# Deterministic parameter init (shapes per nn.LSTM(768, 256, num_layers=2) +
# nn.Linear(256, num_labels)); all weights stored pre-transposed (in, 4H).
# ----------------------------------------------------------------------------
def init_params(key, input_size=768, hidden=256, num_labels=5):
    ks = jax.random.split(key, 10)
    bound = 1.0 / jnp.sqrt(hidden)

    def u(k, shape):
        return jax.random.uniform(k, shape, jnp.float32, -bound, bound)

    w_ih0 = u(ks[0], (input_size, 4 * hidden))
    w_hh0 = u(ks[1], (hidden, 4 * hidden))
    b0 = u(ks[2], (1, 4 * hidden)) + u(ks[3], (1, 4 * hidden))   # b_ih + b_hh
    w_ih1 = u(ks[4], (hidden, 4 * hidden))
    w_hh1 = u(ks[5], (hidden, 4 * hidden))
    b1 = u(ks[6], (1, 4 * hidden)) + u(ks[7], (1, 4 * hidden))
    wc = u(ks[8], (hidden, num_labels))                          # (H, L) = W^T
    bc = u(ks[9], (1, num_labels))
    return dict(w_ih0=w_ih0, w_hh0=w_hh0, b0=b0,
                w_ih1=w_ih1, w_hh1=w_hh1, b1=b1,
                wc=wc, bc=bc)


# ----------------------------------------------------------------------------
# Pure-JAX f32 reference (same math, un-fused) for correctness check.
# ----------------------------------------------------------------------------
def reference_forward(x, params):
    B, T, D = x.shape
    H = params["w_hh0"].shape[0]

    def cell(xv, h, c, wih, whh, b):
        g = xv @ wih + h @ whh + b
        i = jax.nn.sigmoid(g[:, 0 * H:1 * H])
        f = jax.nn.sigmoid(g[:, 1 * H:2 * H])
        gg = jnp.tanh(g[:, 2 * H:3 * H])
        o = jax.nn.sigmoid(g[:, 3 * H:4 * H])
        c_n = f * c + i * gg
        return o * jnp.tanh(c_n), c_n

    h0 = c0 = h1 = c1 = jnp.zeros((B, H), jnp.float32)
    for t in range(T):
        h0, c0 = cell(x[:, t, :], h0, c0,
                      params["w_ih0"], params["w_hh0"], params["b0"])
        h1, c1 = cell(h0, h1, c1,
                      params["w_ih1"], params["w_hh1"], params["b1"])
    return h1 @ params["wc"] + params["bc"]


if __name__ == "__main__":
    B, T, D = 8, 8, 768      # small batch / seq; D fixed at 768 by the module
    H, NUM_LABELS = 256, 5

    key = jax.random.PRNGKey(0)
    kx, kp = jax.random.split(key)
    x = jax.random.normal(kx, (B, T, D), jnp.float32)  # stands in for BERT output
    params = init_params(kp, input_size=D, hidden=H, num_labels=NUM_LABELS)

    logits = lstm2_classifier_forward(x, params)
    logits = jax.block_until_ready(logits)

    ref = reference_forward(x, params)
    assert logits.shape == (B, NUM_LABELS)
    # bf16 gx + bf16 recurrent weights/h with f32 accumulation -> loosened tol.
    err = jnp.max(jnp.abs(logits - ref))
    assert jnp.allclose(logits, ref, atol=3e-2, rtol=3e-2), (
        f"mismatch: max abs err {err}")

    print("KERNEL_OK")
</pallas_src>

<mosaic_0001>
module attributes {stable_mosaic.version = 11 : i64} {
  func.func @_lstm2_cls_kernel(%arg0: i32, %arg1: i32, %arg2: memref<8x8x1024xbf16, #tpu.memory_space<vmem>>, %arg3: memref<256x1024xbf16, #tpu.memory_space<vmem>>, %arg4: memref<256x1024xbf16, #tpu.memory_space<vmem>>, %arg5: memref<256x1024xbf16, #tpu.memory_space<vmem>>, %arg6: memref<1x1024xf32, #tpu.memory_space<vmem>>, %arg7: memref<256x128xf32, #tpu.memory_space<vmem>>, %arg8: memref<1x128xf32, #tpu.memory_space<vmem>>, %arg9: memref<8x128xf32, #tpu.memory_space<vmem>>, %arg10: memref<8x256xf32, #tpu.memory_space<vmem>>, %arg11: memref<8x256xf32, #tpu.memory_space<vmem>>, %arg12: memref<8x256xf32, #tpu.memory_space<vmem>>, %arg13: memref<8x256xf32, #tpu.memory_space<vmem>>) attributes {dimension_semantics = [#tpu.dimension_semantics<parallel>, #tpu.dimension_semantics<arbitrary>], iteration_bounds = array<i64: 1, 1>, scalar_prefetch = 0 : i64, scratch_operands = 4 : i64, tpu.core_type = #tpu.core_type<tc>, window_params = [{transform_indices = @transform_0, window_bounds = array<i64: 8, 8, 1024>}, {pipeline_mode = #tpu.pipeline_mode<synchronous>, transform_indices = @transform_1, window_bounds = array<i64: 256, 1024>}, {pipeline_mode = #tpu.pipeline_mode<synchronous>, transform_indices = @transform_2, window_bounds = array<i64: 256, 1024>}, {pipeline_mode = #tpu.pipeline_mode<synchronous>, transform_indices = @transform_3, window_bounds = array<i64: 256, 1024>}, {pipeline_mode = #tpu.pipeline_mode<synchronous>, transform_indices = @transform_4, window_bounds = array<i64: 1, 1024>}, {pipeline_mode = #tpu.pipeline_mode<synchronous>, transform_indices = @transform_5, window_bounds = array<i64: 256, 128>}, {pipeline_mode = #tpu.pipeline_mode<synchronous>, transform_indices = @transform_6, window_bounds = array<i64: 1, 128>}, {transform_indices = @transform_7, window_bounds = array<i64: 8, 128>}]} {
    %c0_i32 = arith.constant 0 : i32
    %0 = arith.cmpi eq, %arg1, %c0_i32 : i32
    %1 = arith.extui %0 : i1 to i32
    %c0_i32_0 = arith.constant 0 : i32
    %2 = arith.cmpi ne, %1, %c0_i32_0 : i32
    scf.if %2 {
      %cst_114 = arith.constant 0.000000e+00 : f32
      %524 = vector.broadcast %cst_114 : f32 to vector<8x256xf32>
      %c0_115 = arith.constant 0 : index
      %c0_116 = arith.constant 0 : index
      %525 = vector.load %arg10[%c0_115, %c0_116] : memref<8x256xf32, #tpu.memory_space<vmem>>, vector<8x256xf32>
      tpu.vector_store %arg10[%c0_115, %c0_116], %524 {strides = array<i32>} : memref<8x256xf32, #tpu.memory_space<vmem>>, vector<8x256xf32>,
      %cst_117 = arith.constant 0.000000e+00 : f32
      %526 = vector.broadcast %cst_117 : f32 to vector<8x256xf32>
      %c0_118 = arith.constant 0 : index
      %c0_119 = arith.constant 0 : index
      %527 = vector.load %arg11[%c0_118, %c0_119] : memref<8x256xf32, #tpu.memory_space<vmem>>, vector<8x256xf32>
      tpu.vector_store %arg11[%c0_118, %c0_119], %526 {strides = array<i32>} : memref<8x256xf32, #tpu.memory_space<vmem>>, vector<8x256xf32>,
      %cst_120 = arith.constant 0.000000e+00 : f32
      %528 = vector.broadcast %cst_120 : f32 to vector<8x256xf32>
      %c0_121 = arith.constant 0 : index
      %c0_122 = arith.constant 0 : index
      %529 = vector.load %arg12[%c0_121, %c0_122] : memref<8x256xf32, #tpu.memory_space<vmem>>, vector<8x256xf32>
      tpu.vector_store %arg12[%c0_121, %c0_122], %528 {strides = array<i32>} : memref<8x256xf32, #tpu.memory_space<vmem>>, vector<8x256xf32>,
      %cst_123 = arith.constant 0.000000e+00 : f32
      %530 = vector.broadcast %cst_123 : f32 to vector<8x256xf32>
      %c0_124 = arith.constant 0 : index
      %c0_125 = arith.constant 0 : index
      %531 = vector.load %arg13[%c0_124, %c0_125] : memref<8x256xf32, #tpu.memory_space<vmem>>, vector<8x256xf32>
      tpu.vector_store %arg13[%c0_124, %c0_125], %530 {strides = array<i32>} : memref<8x256xf32, #tpu.memory_space<vmem>>, vector<8x256xf32>,
    } else {
    }
    %c0 = arith.constant 0 : index
    %c0_1 = arith.constant 0 : index
    %3 = vector.load %arg3[%c0, %c0_1] : memref<256x1024xbf16, #tpu.memory_space<vmem>>, vector<256x1024xbf16>
    %c0_2 = arith.constant 0 : index
    %c0_3 = arith.constant 0 : index
    %4 = vector.load %arg4[%c0_2, %c0_3] : memref<256x1024xbf16, #tpu.memory_space<vmem>>, vector<256x1024xbf16>
    %c0_4 = arith.constant 0 : index
    %c0_5 = arith.constant 0 : index
    %5 = vector.load %arg5[%c0_4, %c0_5] : memref<256x1024xbf16, #tpu.memory_space<vmem>>, vector<256x1024xbf16>
    %c0_6 = arith.constant 0 : index
    %c0_7 = arith.constant 0 : index
    %6 = vector.load %arg6[%c0_6, %c0_7] : memref<1x1024xf32, #tpu.memory_space<vmem>>, vector<1x1024xf32>
    %7 = vector.shape_cast %6 : vector<1x1024xf32> to vector<1x1024xf32>
    %8 = vector.broadcast %7 : vector<1x1024xf32> to vector<8x1024xf32>
    %c0_8 = arith.constant 0 : index
    %c0_9 = arith.constant 0 : index
    %9 = vector.load %arg10[%c0_8, %c0_9] : memref<8x256xf32, #tpu.memory_space<vmem>>, vector<8x256xf32>
    %c0_10 = arith.constant 0 : index
    %c0_11 = arith.constant 0 : index
    %10 = vector.load %arg11[%c0_10, %c0_11] : memref<8x256xf32, #tpu.memory_space<vmem>>, vector<8x256xf32>
    %c0_12 = arith.constant 0 : index
    %c0_13 = arith.constant 0 : index
    %11 = vector.load %arg12[%c0_12, %c0_13] : memref<8x256xf32, #tpu.memory_space<vmem>>, vector<8x256xf32>
    %c0_14 = arith.constant 0 : index
    %c0_15 = arith.constant 0 : index
    %12 = vector.load %arg13[%c0_14, %c0_15] : memref<8x256xf32, #tpu.memory_space<vmem>>, vector<8x256xf32>
    %c0_i32_16 = arith.constant 0 : i32
    %13 = arith.index_cast %c0_i32_16 : i32 to index
    %c0_17 = arith.constant 0 : index
    %c0_18 = arith.constant 0 : index
    %14 = vector.load %arg2[%13, %c0_17, %c0_18] : memref<8x8x1024xbf16, #tpu.memory_space<vmem>>, vector<1x8x1024xbf16>
    %15 = vector.shape_cast %14 : vector<1x8x1024xbf16> to vector<8x1024xbf16>
    %16 = arith.extf %15 : vector<8x1024xbf16> to vector<8x1024xf32>
    %17 = arith.truncf %11 : vector<8x256xf32> to vector<8x256xbf16>
    %cst = arith.constant dense<0.000000e+00> : vector<8x1024xf32>
    %18 = tpu.matmul %17, %5, %cst {dimension_numbers = #tpu.dot_dimension_numbers<[1], [0], [0], [1], [0, 0, 1, 1], [], []>} : vector<8x256xbf16>, vector<256x1024xbf16>, vector<8x1024xf32> -> vector<8x1024xf32>
    %19 = arith.truncf %9 : vector<8x256xf32> to vector<8x256xbf16>
    %cst_19 = arith.constant dense<0.000000e+00> : vector<8x1024xf32>
    %20 = tpu.matmul %19, %3, %cst_19 {dimension_numbers = #tpu.dot_dimension_numbers<[1], [0], [0], [1], [0, 0, 1, 1], [], []>} : vector<8x256xbf16>, vector<256x1024xbf16>, vector<8x1024xf32> -> vector<8x1024xf32>
    %21 = arith.addf %16, %20 : vector<8x1024xf32>
    %22 = vector.extract_strided_slice %21 {offsets = [0, 0], sizes = [8, 256], strides = [1, 1]} : vector<8x1024xf32> to vector<8x256xf32>
    %23 = arith.negf %22 : vector<8x256xf32>
    %24 = math.exp %23 : vector<8x256xf32>
    %cst_20 = arith.constant 1.000000e+00 : f32
    %25 = vector.broadcast %cst_20 : f32 to vector<8x256xf32>
    %26 = arith.addf %25, %24 : vector<8x256xf32>
    %27 = arith.divf %25, %26 : vector<8x256xf32>
    %28 = vector.extract_strided_slice %21 {offsets = [0, 256], sizes = [8, 256], strides = [1, 1]} : vector<8x1024xf32> to vector<8x256xf32>
    %29 = arith.negf %28 : vector<8x256xf32>
    %30 = math.exp %29 : vector<8x256xf32>
    %cst_21 = arith.constant 1.000000e+00 : f32
    %31 = vector.broadcast %cst_21 : f32 to vector<8x256xf32>
    %32 = arith.addf %31, %30 : vector<8x256xf32>
    %33 = arith.divf %31, %32 : vector<8x256xf32>
    %34 = vector.extract_strided_slice %21 {offsets = [0, 512], sizes = [8, 256], strides = [1, 1]} : vector<8x1024xf32> to vector<8x256xf32>
    %35 = math.tanh %34 : vector<8x256xf32>
    %36 = vector.extract_strided_slice %21 {offsets = [0, 768], sizes = [8, 256], strides = [1, 1]} : vector<8x1024xf32> to vector<8x256xf32>
    %37 = arith.negf %36 : vector<8x256xf32>
    %38 = math.exp %37 : vector<8x256xf32>
    %cst_22 = arith.constant 1.000000e+00 : f32
    %39 = vector.broadcast %cst_22 : f32 to vector<8x256xf32>
    %40 = arith.addf %39, %38 : vector<8x256xf32>
    %41 = arith.divf %39, %40 : vector<8x256xf32>
    %42 = arith.mulf %33, %10 : vector<8x256xf32>
    %43 = arith.mulf %27, %35 : vector<8x256xf32>
    %44 = arith.addf %42, %43 : vector<8x256xf32>
    %45 = math.tanh %44 : vector<8x256xf32>
    %46 = arith.mulf %41, %45 : vector<8x256xf32>
    %47 = arith.addf %18, %8 : vector<8x1024xf32>
    %48 = arith.truncf %46 : vector<8x256xf32> to vector<8x256xbf16>
    %cst_23 = arith.constant dense<0.000000e+00> : vector<8x1024xf32>
    %49 = tpu.matmul %48, %4, %cst_23 {dimension_numbers = #tpu.dot_dimension_numbers<[1], [0], [0], [1], [0, 0, 1, 1], [], []>} : vector<8x256xbf16>, vector<256x1024xbf16>, vector<8x1024xf32> -> vector<8x1024xf32>
    %50 = arith.addf %47, %49 : vector<8x1024xf32>
    %51 = vector.extract_strided_slice %50 {offsets = [0, 0], sizes = [8, 256], strides = [1, 1]} : vector<8x1024xf32> to vector<8x256xf32>
    %52 = arith.negf %51 : vector<8x256xf32>
    %53 = math.exp %52 : vector<8x256xf32>
    %cst_24 = arith.constant 1.000000e+00 : f32
    %54 = vector.broadcast %cst_24 : f32 to vector<8x256xf32>
    %55 = arith.addf %54, %53 : vector<8x256xf32>
    %56 = arith.divf %54, %55 : vector<8x256xf32>
    %57 = vector.extract_strided_slice %50 {offsets = [0, 256], sizes = [8, 256], strides = [1, 1]} : vector<8x1024xf32> to vector<8x256xf32>
    %58 = arith.negf %57 : vector<8x256xf32>
    %59 = math.exp %58 : vector<8x256xf32>
    %cst_25 = arith.constant 1.000000e+00 : f32
    %60 = vector.broadcast %cst_25 : f32 to vector<8x256xf32>
    %61 = arith.addf %60, %59 : vector<8x256xf32>
    %62 = arith.divf %60, %61 : vector<8x256xf32>
    %63 = vector.extract_strided_slice %50 {offsets = [0, 512], sizes = [8, 256], strides = [1, 1]} : vector<8x1024xf32> to vector<8x256xf32>
    %64 = math.tanh %63 : vector<8x256xf32>
    %65 = vector.extract_strided_slice %50 {offsets = [0, 768], sizes = [8, 256], strides = [1, 1]} : vector<8x1024xf32> to vector<8x256xf32>
    %66 = arith.negf %65 : vector<8x256xf32>
    %67 = math.exp %66 : vector<8x256xf32>
    %cst_26 = arith.constant 1.000000e+00 : f32
    %68 = vector.broadcast %cst_26 : f32 to vector<8x256xf32>
    %69 = arith.addf %68, %67 : vector<8x256xf32>
    %70 = arith.divf %68, %69 : vector<8x256xf32>
    %71 = arith.mulf %62, %12 : vector<8x256xf32>
    %72 = arith.mulf %56, %64 : vector<8x256xf32>
    %73 = arith.addf %71, %72 : vector<8x256xf32>
    %74 = math.tanh %73 : vector<8x256xf32>
    %75 = arith.mulf %70, %74 : vector<8x256xf32>
    %c1_i32 = arith.constant 1 : i32
    %76 = arith.index_cast %c1_i32 : i32 to index
    %c0_27 = arith.constant 0 : index
    %c0_28 = arith.constant 0 : index
    %77 = vector.load %arg2[%76, %c0_27, %c0_28] : memref<8x8x1024xbf16, #tpu.memory_space<vmem>>, vector<1x8x1024xbf16>
    %78 = vector.shape_cast %77 : vector<1x8x1024xbf16> to vector<8x1024xbf16>
    %79 = arith.extf %78 : vector<8x1024xbf16> to vector<8x1024xf32>
    %80 = arith.truncf %75 : vector<8x256xf32> to vector<8x256xbf16>
    %cst_29 = arith.constant dense<0.000000e+00> : vector<8x1024xf32>
    %81 = tpu.matmul %80, %5, %cst_29 {dimension_numbers = #tpu.dot_dimension_numbers<[1], [0], [0], [1], [0, 0, 1, 1], [], []>} : vector<8x256xbf16>, vector<256x1024xbf16>, vector<8x1024xf32> -> vector<8x1024xf32>
    %82 = arith.truncf %46 : vector<8x256xf32> to vector<8x256xbf16>
    %cst_30 = arith.constant dense<0.000000e+00> : vector<8x1024xf32>
    %83 = tpu.matmul %82, %3, %cst_30 {dimension_numbers = #tpu.dot_dimension_numbers<[1], [0], [0], [1], [0, 0, 1, 1], [], []>} : vector<8x256xbf16>, vector<256x1024xbf16>, vector<8x1024xf32> -> vector<8x1024xf32>
    %84 = arith.addf %79, %83 : vector<8x1024xf32>
    %85 = vector.extract_strided_slice %84 {offsets = [0, 0], sizes = [8, 256], strides = [1, 1]} : vector<8x1024xf32> to vector<8x256xf32>
    %86 = arith.negf %85 : vector<8x256xf32>
    %87 = math.exp %86 : vector<8x256xf32>
    %cst_31 = arith.constant 1.000000e+00 : f32
    %88 = vector.broadcast %cst_31 : f32 to vector<8x256xf32>
    %89 = arith.addf %88, %87 : vector<8x256xf32>
    %90 = arith.divf %88, %89 : vector<8x256xf32>
    %91 = vector.extract_strided_slice %84 {offsets = [0, 256], sizes = [8, 256], strides = [1, 1]} : vector<8x1024xf32> to vector<8x256xf32>
    %92 = arith.negf %91 : vector<8x256xf32>
    %93 = math.exp %92 : vector<8x256xf32>
    %cst_32 = arith.constant 1.000000e+00 : f32
    %94 = vector.broadcast %cst_32 : f32 to vector<8x256xf32>
    %95 = arith.addf %94, %93 : vector<8x256xf32>
    %96 = arith.divf %94, %95 : vector<8x256xf32>
    %97 = vector.extract_strided_slice %84 {offsets = [0, 512], sizes = [8, 256], strides = [1, 1]} : vector<8x1024xf32> to vector<8x256xf32>
    %98 = math.tanh %97 : vector<8x256xf32>
    %99 = vector.extract_strided_slice %84 {offsets = [0, 768], sizes = [8, 256], strides = [1, 1]} : vector<8x1024xf32> to vector<8x256xf32>
    %100 = arith.negf %99 : vector<8x256xf32>
    %101 = math.exp %100 : vector<8x256xf32>
    %cst_33 = arith.constant 1.000000e+00 : f32
    %102 = vector.broadcast %cst_33 : f32 to vector<8x256xf32>
    %103 = arith.addf %102, %101 : vector<8x256xf32>
    %104 = arith.divf %102, %103 : vector<8x256xf32>
    %105 = arith.mulf %96, %44 : vector<8x256xf32>
    %106 = arith.mulf %90, %98 : vector<8x256xf32>
    %107 = arith.addf %105, %106 : vector<8x256xf32>
    %108 = math.tanh %107 : vector<8x256xf32>
    %109 = arith.mulf %104, %108 : vector<8x256xf32>
    %110 = arith.addf %81, %8 : vector<8x1024xf32>
    %111 = arith.truncf %109 : vector<8x256xf32> to vector<8x256xbf16>
    %cst_34 = arith.constant dense<0.000000e+00> : vector<8x1024xf32>
    %112 = tpu.matmul %111, %4, %cst_34 {dimension_numbers = #tpu.dot_dimension_numbers<[1], [0], [0], [1], [0, 0, 1, 1], [], []>} : vector<8x256xbf16>, vector<256x1024xbf16>, vector<8x1024xf32> -> vector<8x1024xf32>
    %113 = arith.addf %110, %112 : vector<8x1024xf32>
    %114 = vector.extract_strided_slice %113 {offsets = [0, 0], sizes = [8, 256], strides = [1, 1]} : vector<8x1024xf32> to vector<8x256xf32>
    %115 = arith.negf %114 : vector<8x256xf32>
    %116 = math.exp %115 : vector<8x256xf32>
    %cst_35 = arith.constant 1.000000e+00 : f32
    %117 = vector.broadcast %cst_35 : f32 to vector<8x256xf32>
    %118 = arith.addf %117, %116 : vector<8x256xf32>
    %119 = arith.divf %117, %118 : vector<8x256xf32>
    %120 = vector.extract_strided_slice %113 {offsets = [0, 256], sizes = [8, 256], strides = [1, 1]} : vector<8x1024xf32> to vector<8x256xf32>
    %121 = arith.negf %120 : vector<8x256xf32>
    %122 = math.exp %121 : vector<8x256xf32>
    %cst_36 = arith.constant 1.000000e+00 : f32
    %123 = vector.broadcast %cst_36 : f32 to vector<8x256xf32>
    %124 = arith.addf %123, %122 : vector<8x256xf32>
    %125 = arith.divf %123, %124 : vector<8x256xf32>
    %126 = vector.extract_strided_slice %113 {offsets = [0, 512], sizes = [8, 256], strides = [1, 1]} : vector<8x1024xf32> to vector<8x256xf32>
    %127 = math.tanh %126 : vector<8x256xf32>
    %128 = vector.extract_strided_slice %113 {offsets = [0, 768], sizes = [8, 256], strides = [1, 1]} : vector<8x1024xf32> to vector<8x256xf32>
    %129 = arith.negf %128 : vector<8x256xf32>
    %130 = math.exp %129 : vector<8x256xf32>
    %cst_37 = arith.constant 1.000000e+00 : f32
    %131 = vector.broadcast %cst_37 : f32 to vector<8x256xf32>
    %132 = arith.addf %131, %130 : vector<8x256xf32>
    %133 = arith.divf %131, %132 : vector<8x256xf32>
    %134 = arith.mulf %125, %73 : vector<8x256xf32>
    %135 = arith.mulf %119, %127 : vector<8x256xf32>
    %136 = arith.addf %134, %135 : vector<8x256xf32>
    %137 = math.tanh %136 : vector<8x256xf32>
    %138 = arith.mulf %133, %137 : vector<8x256xf32>
    %c2_i32 = arith.constant 2 : i32
    %139 = arith.index_cast %c2_i32 : i32 to index
    %c0_38 = arith.constant 0 : index
    %c0_39 = arith.constant 0 : index
    %140 = vector.load %arg2[%139, %c0_38, %c0_39] : memref<8x8x1024xbf16, #tpu.memory_space<vmem>>, vector<1x8x1024xbf16>
    %141 = vector.shape_cast %140 : vector<1x8x1024xbf16> to vector<8x1024xbf16>
    %142 = arith.extf %141 : vector<8x1024xbf16> to vector<8x1024xf32>
    %143 = arith.truncf %138 : vector<8x256xf32> to vector<8x256xbf16>
    %cst_40 = arith.constant dense<0.000000e+00> : vector<8x1024xf32>
    %144 = tpu.matmul %143, %5, %cst_40 {dimension_numbers = #tpu.dot_dimension_numbers<[1], [0], [0], [1], [0, 0, 1, 1], [], []>} : vector<8x256xbf16>, vector<256x1024xbf16>, vector<8x1024xf32> -> vector<8x1024xf32>
    %145 = arith.truncf %109 : vector<8x256xf32> to vector<8x256xbf16>
    %cst_41 = arith.constant dense<0.000000e+00> : vector<8x1024xf32>
    %146 = tpu.matmul %145, %3, %cst_41 {dimension_numbers = #tpu.dot_dimension_numbers<[1], [0], [0], [1], [0, 0, 1, 1], [], []>} : vector<8x256xbf16>, vector<256x1024xbf16>, vector<8x1024xf32> -> vector<8x1024xf32>
    %147 = arith.addf %142, %146 : vector<8x1024xf32>
    %148 = vector.extract_strided_slice %147 {offsets = [0, 0], sizes = [8, 256], strides = [1, 1]} : vector<8x1024xf32> to vector<8x256xf32>
    %149 = arith.negf %148 : vector<8x256xf32>
    %150 = math.exp %149 : vector<8x256xf32>
    %cst_42 = arith.constant 1.000000e+00 : f32
    %151 = vector.broadcast %cst_42 : f32 to vector<8x256xf32>
    %152 = arith.addf %151, %150 : vector<8x256xf32>
    %153 = arith.divf %151, %152 : vector<8x256xf32>
    %154 = vector.extract_strided_slice %147 {offsets = [0, 256], sizes = [8, 256], strides = [1, 1]} : vector<8x1024xf32> to vector<8x256xf32>
    %155 = arith.negf %154 : vector<8x256xf32>
    %156 = math.exp %155 : vector<8x256xf32>
    %cst_43 = arith.constant 1.000000e+00 : f32
    %157 = vector.broadcast %cst_43 : f32 to vector<8x256xf32>
    %158 = arith.addf %157, %156 : vector<8x256xf32>
    %159 = arith.divf %157, %158 : vector<8x256xf32>
    %160 = vector.extract_strided_slice %147 {offsets = [0, 512], sizes = [8, 256], strides = [1, 1]} : vector<8x1024xf32> to vector<8x256xf32>
    %161 = math.tanh %160 : vector<8x256xf32>
    %162 = vector.extract_strided_slice %147 {offsets = [0, 768], sizes = [8, 256], strides = [1, 1]} : vector<8x1024xf32> to vector<8x256xf32>
    %163 = arith.negf %162 : vector<8x256xf32>
    %164 = math.exp %163 : vector<8x256xf32>
    %cst_44 = arith.constant 1.000000e+00 : f32
    %165 = vector.broadcast %cst_44 : f32 to vector<8x256xf32>
    %166 = arith.addf %165, %164 : vector<8x256xf32>
    %167 = arith.divf %165, %166 : vector<8x256xf32>
    %168 = arith.mulf %159, %107 : vector<8x256xf32>
    %169 = arith.mulf %153, %161 : vector<8x256xf32>
    %170 = arith.addf %168, %169 : vector<8x256xf32>
    %171 = math.tanh %170 : vector<8x256xf32>
    %172 = arith.mulf %167, %171 : vector<8x256xf32>
    %173 = arith.addf %144, %8 : vector<8x1024xf32>
    %174 = arith.truncf %172 : vector<8x256xf32> to vector<8x256xbf16>
    %cst_45 = arith.constant dense<0.000000e+00> : vector<8x1024xf32>
    %175 = tpu.matmul %174, %4, %cst_45 {dimension_numbers = #tpu.dot_dimension_numbers<[1], [0], [0], [1], [0, 0, 1, 1], [], []>} : vector<8x256xbf16>, vector<256x1024xbf16>, vector<8x1024xf32> -> vector<8x1024xf32>
    %176 = arith.addf %173, %175 : vector<8x1024xf32>
    %177 = vector.extract_strided_slice %176 {offsets = [0, 0], sizes = [8, 256], strides = [1, 1]} : vector<8x1024xf32> to vector<8x256xf32>
    %178 = arith.negf %177 : vector<8x256xf32>
    %179 = math.exp %178 : vector<8x256xf32>
    %cst_46 = arith.constant 1.000000e+00 : f32
    %180 = vector.broadcast %cst_46 : f32 to vector<8x256xf32>
    %181 = arith.addf %180, %179 : vector<8x256xf32>
    %182 = arith.divf %180, %181 : vector<8x256xf32>
    %183 = vector.extract_strided_slice %176 {offsets = [0, 256], sizes = [8, 256], strides = [1, 1]} : vector<8x1024xf32> to vector<8x256xf32>
    %184 = arith.negf %183 : vector<8x256xf32>
    %185 = math.exp %184 : vector<8x256xf32>
    %cst_47 = arith.constant 1.000000e+00 : f32
    %186 = vector.broadcast %cst_47 : f32 to vector<8x256xf32>
    %187 = arith.addf %186, %185 : vector<8x256xf32>
    %188 = arith.divf %186, %187 : vector<8x256xf32>
    %189 = vector.extract_strided_slice %176 {offsets = [0, 512], sizes = [8, 256], strides = [1, 1]} : vector<8x1024xf32> to vector<8x256xf32>
    %190 = math.tanh %189 : vector<8x256xf32>
    %191 = vector.extract_strided_slice %176 {offsets = [0, 768], sizes = [8, 256], strides = [1, 1]} : vector<8x1024xf32> to vector<8x256xf32>
    %192 = arith.negf %191 : vector<8x256xf32>
    %193 = math.exp %192 : vector<8x256xf32>
    %cst_48 = arith.constant 1.000000e+00 : f32
    %194 = vector.broadcast %cst_48 : f32 to vector<8x256xf32>
    %195 = arith.addf %194, %193 : vector<8x256xf32>
    %196 = arith.divf %194, %195 : vector<8x256xf32>
    %197 = arith.mulf %188, %136 : vector<8x256xf32>
    %198 = arith.mulf %182, %190 : vector<8x256xf32>
    %199 = arith.addf %197, %198 : vector<8x256xf32>
    %200 = math.tanh %199 : vector<8x256xf32>
    %201 = arith.mulf %196, %200 : vector<8x256xf32>
    %c3_i32 = arith.constant 3 : i32
    %202 = arith.index_cast %c3_i32 : i32 to index
    %c0_49 = arith.constant 0 : index
    %c0_50 = arith.constant 0 : index
    %203 = vector.load %arg2[%202, %c0_49, %c0_50] : memref<8x8x1024xbf16, #tpu.memory_space<vmem>>, vector<1x8x1024xbf16>
    %204 = vector.shape_cast %203 : vector<1x8x1024xbf16> to vector<8x1024xbf16>
    %205 = arith.extf %204 : vector<8x1024xbf16> to vector<8x1024xf32>
    %206 = arith.truncf %201 : vector<8x256xf32> to vector<8x256xbf16>
    %cst_51 = arith.constant dense<0.000000e+00> : vector<8x1024xf32>
    %207 = tpu.matmul %206, %5, %cst_51 {dimension_numbers = #tpu.dot_dimension_numbers<[1], [0], [0], [1], [0, 0, 1, 1], [], []>} : vector<8x256xbf16>, vector<256x1024xbf16>, vector<8x1024xf32> -> vector<8x1024xf32>
    %208 = arith.truncf %172 : vector<8x256xf32> to vector<8x256xbf16>
    %cst_52 = arith.constant dense<0.000000e+00> : vector<8x1024xf32>
    %209 = tpu.matmul %208, %3, %cst_52 {dimension_numbers = #tpu.dot_dimension_numbers<[1], [0], [0], [1], [0, 0, 1, 1], [], []>} : vector<8x256xbf16>, vector<256x1024xbf16>, vector<8x1024xf32> -> vector<8x1024xf32>
    %210 = arith.addf %205, %209 : vector<8x1024xf32>
    %211 = vector.extract_strided_slice %210 {offsets = [0, 0], sizes = [8, 256], strides = [1, 1]} : vector<8x1024xf32> to vector<8x256xf32>
    %212 = arith.negf %211 : vector<8x256xf32>
    %213 = math.exp %212 : vector<8x256xf32>
    %cst_53 = arith.constant 1.000000e+00 : f32
    %214 = vector.broadcast %cst_53 : f32 to vector<8x256xf32>
    %215 = arith.addf %214, %213 : vector<8x256xf32>
    %216 = arith.divf %214, %215 : vector<8x256xf32>
    %217 = vector.extract_strided_slice %210 {offsets = [0, 256], sizes = [8, 256], strides = [1, 1]} : vector<8x1024xf32> to vector<8x256xf32>
    %218 = arith.negf %217 : vector<8x256xf32>
    %219 = math.exp %218 : vector<8x256xf32>
    %cst_54 = arith.constant 1.000000e+00 : f32
    %220 = vector.broadcast %cst_54 : f32 to vector<8x256xf32>
    %221 = arith.addf %220, %219 : vector<8x256xf32>
    %222 = arith.divf %220, %221 : vector<8x256xf32>
    %223 = vector.extract_strided_slice %210 {offsets = [0, 512], sizes = [8, 256], strides = [1, 1]} : vector<8x1024xf32> to vector<8x256xf32>
    %224 = math.tanh %223 : vector<8x256xf32>
    %225 = vector.extract_strided_slice %210 {offsets = [0, 768], sizes = [8, 256], strides = [1, 1]} : vector<8x1024xf32> to vector<8x256xf32>
    %226 = arith.negf %225 : vector<8x256xf32>
    %227 = math.exp %226 : vector<8x256xf32>
    %cst_55 = arith.constant 1.000000e+00 : f32
    %228 = vector.broadcast %cst_55 : f32 to vector<8x256xf32>
    %229 = arith.addf %228, %227 : vector<8x256xf32>
    %230 = arith.divf %228, %229 : vector<8x256xf32>
    %231 = arith.mulf %222, %170 : vector<8x256xf32>
    %232 = arith.mulf %216, %224 : vector<8x256xf32>
    %233 = arith.addf %231, %232 : vector<8x256xf32>
    %234 = math.tanh %233 : vector<8x256xf32>
    %235 = arith.mulf %230, %234 : vector<8x256xf32>
    %236 = arith.addf %207, %8 : vector<8x1024xf32>
    %237 = arith.truncf %235 : vector<8x256xf32> to vector<8x256xbf16>
    %cst_56 = arith.constant dense<0.000000e+00> : vector<8x1024xf32>
    %238 = tpu.matmul %237, %4, %cst_56 {dimension_numbers = #tpu.dot_dimension_numbers<[1], [0], [0], [1], [0, 0, 1, 1], [], []>} : vector<8x256xbf16>, vector<256x1024xbf16>, vector<8x1024xf32> -> vector<8x1024xf32>
    %239 = arith.addf %236, %238 : vector<8x1024xf32>
    %240 = vector.extract_strided_slice %239 {offsets = [0, 0], sizes = [8, 256], strides = [1, 1]} : vector<8x1024xf32> to vector<8x256xf32>
    %241 = arith.negf %240 : vector<8x256xf32>
    %242 = math.exp %241 : vector<8x256xf32>
    %cst_57 = arith.constant 1.000000e+00 : f32
    %243 = vector.broadcast %cst_57 : f32 to vector<8x256xf32>
    %244 = arith.addf %243, %242 : vector<8x256xf32>
    %245 = arith.divf %243, %244 : vector<8x256xf32>
    %246 = vector.extract_strided_slice %239 {offsets = [0, 256], sizes = [8, 256], strides = [1, 1]} : vector<8x1024xf32> to vector<8x256xf32>
    %247 = arith.negf %246 : vector<8x256xf32>
    %248 = math.exp %247 : vector<8x256xf32>
    %cst_58 = arith.constant 1.000000e+00 : f32
    %249 = vector.broadcast %cst_58 : f32 to vector<8x256xf32>
    %250 = arith.addf %249, %248 : vector<8x256xf32>
    %251 = arith.divf %249, %250 : vector<8x256xf32>
    %252 = vector.extract_strided_slice %239 {offsets = [0, 512], sizes = [8, 256], strides = [1, 1]} : vector<8x1024xf32> to vector<8x256xf32>
    %253 = math.tanh %252 : vector<8x256xf32>
    %254 = vector.extract_strided_slice %239 {offsets = [0, 768], sizes = [8, 256], strides = [1, 1]} : vector<8x1024xf32> to vector<8x256xf32>
    %255 = arith.negf %254 : vector<8x256xf32>
    %256 = math.exp %255 : vector<8x256xf32>
    %cst_59 = arith.constant 1.000000e+00 : f32
    %257 = vector.broadcast %cst_59 : f32 to vector<8x256xf32>
    %258 = arith.addf %257, %256 : vector<8x256xf32>
    %259 = arith.divf %257, %258 : vector<8x256xf32>
    %260 = arith.mulf %251, %199 : vector<8x256xf32>
    %261 = arith.mulf %245, %253 : vector<8x256xf32>
    %262 = arith.addf %260, %261 : vector<8x256xf32>
    %263 = math.tanh %262 : vector<8x256xf32>
    %264 = arith.mulf %259, %263 : vector<8x256xf32>
    %c4_i32 = arith.constant 4 : i32
    %265 = arith.index_cast %c4_i32 : i32 to index
    %c0_60 = arith.constant 0 : index
    %c0_61 = arith.constant 0 : index
    %266 = vector.load %arg2[%265, %c0_60, %c0_61] : memref<8x8x1024xbf16, #tpu.memory_space<vmem>>, vector<1x8x1024xbf16>
    %267 = vector.shape_cast %266 : vector<1x8x1024xbf16> to vector<8x1024xbf16>
    %268 = arith.extf %267 : vector<8x1024xbf16> to vector<8x1024xf32>
    %269 = arith.truncf %264 : vector<8x256xf32> to vector<8x256xbf16>
    %cst_62 = arith.constant dense<0.000000e+00> : vector<8x1024xf32>
    %270 = tpu.matmul %269, %5, %cst_62 {dimension_numbers = #tpu.dot_dimension_numbers<[1], [0], [0], [1], [0, 0, 1, 1], [], []>} : vector<8x256xbf16>, vector<256x1024xbf16>, vector<8x1024xf32> -> vector<8x1024xf32>
    %271 = arith.truncf %235 : vector<8x256xf32> to vector<8x256xbf16>
    %cst_63 = arith.constant dense<0.000000e+00> : vector<8x1024xf32>
    %272 = tpu.matmul %271, %3, %cst_63 {dimension_numbers = #tpu.dot_dimension_numbers<[1], [0], [0], [1], [0, 0, 1, 1], [], []>} : vector<8x256xbf16>, vector<256x1024xbf16>, vector<8x1024xf32> -> vector<8x1024xf32>
    %273 = arith.addf %268, %272 : vector<8x1024xf32>
    %274 = vector.extract_strided_slice %273 {offsets = [0, 0], sizes = [8, 256], strides = [1, 1]} : vector<8x1024xf32> to vector<8x256xf32>
    %275 = arith.negf %274 : vector<8x256xf32>
    %276 = math.exp %275 : vector<8x256xf32>
    %cst_64 = arith.constant 1.000000e+00 : f32
    %277 = vector.broadcast %cst_64 : f32 to vector<8x256xf32>
    %278 = arith.addf %277, %276 : vector<8x256xf32>
    %279 = arith.divf %277, %278 : vector<8x256xf32>
    %280 = vector.extract_strided_slice %273 {offsets = [0, 256], sizes = [8, 256], strides = [1, 1]} : vector<8x1024xf32> to vector<8x256xf32>
    %281 = arith.negf %280 : vector<8x256xf32>
    %282 = math.exp %281 : vector<8x256xf32>
    %cst_65 = arith.constant 1.000000e+00 : f32
    %283 = vector.broadcast %cst_65 : f32 to vector<8x256xf32>
    %284 = arith.addf %283, %282 : vector<8x256xf32>
    %285 = arith.divf %283, %284 : vector<8x256xf32>
    %286 = vector.extract_strided_slice %273 {offsets = [0, 512], sizes = [8, 256], strides = [1, 1]} : vector<8x1024xf32> to vector<8x256xf32>
    %287 = math.tanh %286 : vector<8x256xf32>
    %288 = vector.extract_strided_slice %273 {offsets = [0, 768], sizes = [8, 256], strides = [1, 1]} : vector<8x1024xf32> to vector<8x256xf32>
    %289 = arith.negf %288 : vector<8x256xf32>
    %290 = math.exp %289 : vector<8x256xf32>
    %cst_66 = arith.constant 1.000000e+00 : f32
    %291 = vector.broadcast %cst_66 : f32 to vector<8x256xf32>
    %292 = arith.addf %291, %290 : vector<8x256xf32>
    %293 = arith.divf %291, %292 : vector<8x256xf32>
    %294 = arith.mulf %285, %233 : vector<8x256xf32>
    %295 = arith.mulf %279, %287 : vector<8x256xf32>
    %296 = arith.addf %294, %295 : vector<8x256xf32>
    %297 = math.tanh %296 : vector<8x256xf32>
    %298 = arith.mulf %293, %297 : vector<8x256xf32>
    %299 = arith.addf %270, %8 : vector<8x1024xf32>
    %300 = arith.truncf %298 : vector<8x256xf32> to vector<8x256xbf16>
    %cst_67 = arith.constant dense<0.000000e+00> : vector<8x1024xf32>
    %301 = tpu.matmul %300, %4, %cst_67 {dimension_numbers = #tpu.dot_dimension_numbers<[1], [0], [0], [1], [0, 0, 1, 1], [], []>} : vector<8x256xbf16>, vector<256x1024xbf16>, vector<8x1024xf32> -> vector<8x1024xf32>
    %302 = arith.addf %299, %301 : vector<8x1024xf32>
    %303 = vector.extract_strided_slice %302 {offsets = [0, 0], sizes = [8, 256], strides = [1, 1]} : vector<8x1024xf32> to vector<8x256xf32>
    %304 = arith.negf %303 : vector<8x256xf32>
    %305 = math.exp %304 : vector<8x256xf32>
    %cst_68 = arith.constant 1.000000e+00 : f32
    %306 = vector.broadcast %cst_68 : f32 to vector<8x256xf32>
    %307 = arith.addf %306, %305 : vector<8x256xf32>
    %308 = arith.divf %306, %307 : vector<8x256xf32>
    %309 = vector.extract_strided_slice %302 {offsets = [0, 256], sizes = [8, 256], strides = [1, 1]} : vector<8x1024xf32> to vector<8x256xf32>
    %310 = arith.negf %309 : vector<8x256xf32>
    %311 = math.exp %310 : vector<8x256xf32>
    %cst_69 = arith.constant 1.000000e+00 : f32
    %312 = vector.broadcast %cst_69 : f32 to vector<8x256xf32>
    %313 = arith.addf %312, %311 : vector<8x256xf32>
    %314 = arith.divf %312, %313 : vector<8x256xf32>
    %315 = vector.extract_strided_slice %302 {offsets = [0, 512], sizes = [8, 256], strides = [1, 1]} : vector<8x1024xf32> to vector<8x256xf32>
    %316 = math.tanh %315 : vector<8x256xf32>
    %317 = vector.extract_strided_slice %302 {offsets = [0, 768], sizes = [8, 256], strides = [1, 1]} : vector<8x1024xf32> to vector<8x256xf32>
    %318 = arith.negf %317 : vector<8x256xf32>
    %319 = math.exp %318 : vector<8x256xf32>
    %cst_70 = arith.constant 1.000000e+00 : f32
    %320 = vector.broadcast %cst_70 : f32 to vector<8x256xf32>
    %321 = arith.addf %320, %319 : vector<8x256xf32>
    %322 = arith.divf %320, %321 : vector<8x256xf32>
    %323 = arith.mulf %314, %262 : vector<8x256xf32>
    %324 = arith.mulf %308, %316 : vector<8x256xf32>
    %325 = arith.addf %323, %324 : vector<8x256xf32>
    %326 = math.tanh %325 : vector<8x256xf32>
    %327 = arith.mulf %322, %326 : vector<8x256xf32>
    %c5_i32 = arith.constant 5 : i32
    %328 = arith.index_cast %c5_i32 : i32 to index
    %c0_71 = arith.constant 0 : index
    %c0_72 = arith.constant 0 : index
    %329 = vector.load %arg2[%328, %c0_71, %c0_72] : memref<8x8x1024xbf16, #tpu.memory_space<vmem>>, vector<1x8x1024xbf16>
    %330 = vector.shape_cast %329 : vector<1x8x1024xbf16> to vector<8x1024xbf16>
    %331 = arith.extf %330 : vector<8x1024xbf16> to vector<8x1024xf32>
    %332 = arith.truncf %327 : vector<8x256xf32> to vector<8x256xbf16>
    %cst_73 = arith.constant dense<0.000000e+00> : vector<8x1024xf32>
    %333 = tpu.matmul %332, %5, %cst_73 {dimension_numbers = #tpu.dot_dimension_numbers<[1], [0], [0], [1], [0, 0, 1, 1], [], []>} : vector<8x256xbf16>, vector<256x1024xbf16>, vector<8x1024xf32> -> vector<8x1024xf32>
    %334 = arith.truncf %298 : vector<8x256xf32> to vector<8x256xbf16>
    %cst_74 = arith.constant dense<0.000000e+00> : vector<8x1024xf32>
    %335 = tpu.matmul %334, %3, %cst_74 {dimension_numbers = #tpu.dot_dimension_numbers<[1], [0], [0], [1], [0, 0, 1, 1], [], []>} : vector<8x256xbf16>, vector<256x1024xbf16>, vector<8x1024xf32> -> vector<8x1024xf32>
    %336 = arith.addf %331, %335 : vector<8x1024xf32>
    %337 = vector.extract_strided_slice %336 {offsets = [0, 0], sizes = [8, 256], strides = [1, 1]} : vector<8x1024xf32> to vector<8x256xf32>
    %338 = arith.negf %337 : vector<8x256xf32>
    %339 = math.exp %338 : vector<8x256xf32>
    %cst_75 = arith.constant 1.000000e+00 : f32
    %340 = vector.broadcast %cst_75 : f32 to vector<8x256xf32>
    %341 = arith.addf %340, %339 : vector<8x256xf32>
    %342 = arith.divf %340, %341 : vector<8x256xf32>
    %343 = vector.extract_strided_slice %336 {offsets = [0, 256], sizes = [8, 256], strides = [1, 1]} : vector<8x1024xf32> to vector<8x256xf32>
    %344 = arith.negf %343 : vector<8x256xf32>
    %345 = math.exp %344 : vector<8x256xf32>
    %cst_76 = arith.constant 1.000000e+00 : f32
    %346 = vector.broadcast %cst_76 : f32 to vector<8x256xf32>
    %347 = arith.addf %346, %345 : vector<8x256xf32>
    %348 = arith.divf %346, %347 : vector<8x256xf32>
    %349 = vector.extract_strided_slice %336 {offsets = [0, 512], sizes = [8, 256], strides = [1, 1]} : vector<8x1024xf32> to vector<8x256xf32>
    %350 = math.tanh %349 : vector<8x256xf32>
    %351 = vector.extract_strided_slice %336 {offsets = [0, 768], sizes = [8, 256], strides = [1, 1]} : vector<8x1024xf32> to vector<8x256xf32>
    %352 = arith.negf %351 : vector<8x256xf32>
    %353 = math.exp %352 : vector<8x256xf32>
    %cst_77 = arith.constant 1.000000e+00 : f32
    %354 = vector.broadcast %cst_77 : f32 to vector<8x256xf32>
    %355 = arith.addf %354, %353 : vector<8x256xf32>
    %356 = arith.divf %354, %355 : vector<8x256xf32>
    %357 = arith.mulf %348, %296 : vector<8x256xf32>
    %358 = arith.mulf %342, %350 : vector<8x256xf32>
    %359 = arith.addf %357, %358 : vector<8x256xf32>
    %360 = math.tanh %359 : vector<8x256xf32>
    %361 = arith.mulf %356, %360 : vector<8x256xf32>
    %362 = arith.addf %333, %8 : vector<8x1024xf32>
    %363 = arith.truncf %361 : vector<8x256xf32> to vector<8x256xbf16>
    %cst_78 = arith.constant dense<0.000000e+00> : vector<8x1024xf32>
    %364 = tpu.matmul %363, %4, %cst_78 {dimension_numbers = #tpu.dot_dimension_numbers<[1], [0], [0], [1], [0, 0, 1, 1], [], []>} : vector<8x256xbf16>, vector<256x1024xbf16>, vector<8x1024xf32> -> vector<8x1024xf32>
    %365 = arith.addf %362, %364 : vector<8x1024xf32>
    %366 = vector.extract_strided_slice %365 {offsets = [0, 0], sizes = [8, 256], strides = [1, 1]} : vector<8x1024xf32> to vector<8x256xf32>
    %367 = arith.negf %366 : vector<8x256xf32>
    %368 = math.exp %367 : vector<8x256xf32>
    %cst_79 = arith.constant 1.000000e+00 : f32
    %369 = vector.broadcast %cst_79 : f32 to vector<8x256xf32>
    %370 = arith.addf %369, %368 : vector<8x256xf32>
    %371 = arith.divf %369, %370 : vector<8x256xf32>
    %372 = vector.extract_strided_slice %365 {offsets = [0, 256], sizes = [8, 256], strides = [1, 1]} : vector<8x1024xf32> to vector<8x256xf32>
    %373 = arith.negf %372 : vector<8x256xf32>
    %374 = math.exp %373 : vector<8x256xf32>
    %cst_80 = arith.constant 1.000000e+00 : f32
    %375 = vector.broadcast %cst_80 : f32 to vector<8x256xf32>
    %376 = arith.addf %375, %374 : vector<8x256xf32>
    %377 = arith.divf %375, %376 : vector<8x256xf32>
    %378 = vector.extract_strided_slice %365 {offsets = [0, 512], sizes = [8, 256], strides = [1, 1]} : vector<8x1024xf32> to vector<8x256xf32>
    %379 = math.tanh %378 : vector<8x256xf32>
    %380 = vector.extract_strided_slice %365 {offsets = [0, 768], sizes = [8, 256], strides = [1, 1]} : vector<8x1024xf32> to vector<8x256xf32>
    %381 = arith.negf %380 : vector<8x256xf32>
    %382 = math.exp %381 : vector<8x256xf32>
    %cst_81 = arith.constant 1.000000e+00 : f32
    %383 = vector.broadcast %cst_81 : f32 to vector<8x256xf32>
    %384 = arith.addf %383, %382 : vector<8x256xf32>
    %385 = arith.divf %383, %384 : vector<8x256xf32>
    %386 = arith.mulf %377, %325 : vector<8x256xf32>
    %387 = arith.mulf %371, %379 : vector<8x256xf32>
    %388 = arith.addf %386, %387 : vector<8x256xf32>
    %389 = math.tanh %388 : vector<8x256xf32>
    %390 = arith.mulf %385, %389 : vector<8x256xf32>
    %c6_i32 = arith.constant 6 : i32
    %391 = arith.index_cast %c6_i32 : i32 to index
    %c0_82 = arith.constant 0 : index
    %c0_83 = arith.constant 0 : index
    %392 = vector.load %arg2[%391, %c0_82, %c0_83] : memref<8x8x1024xbf16, #tpu.memory_space<vmem>>, vector<1x8x1024xbf16>
    %393 = vector.shape_cast %392 : vector<1x8x1024xbf16> to vector<8x1024xbf16>
    %394 = arith.extf %393 : vector<8x1024xbf16> to vector<8x1024xf32>
    %395 = arith.truncf %390 : vector<8x256xf32> to vector<8x256xbf16>
    %cst_84 = arith.constant dense<0.000000e+00> : vector<8x1024xf32>
    %396 = tpu.matmul %395, %5, %cst_84 {dimension_numbers = #tpu.dot_dimension_numbers<[1], [0], [0], [1], [0, 0, 1, 1], [], []>} : vector<8x256xbf16>, vector<256x1024xbf16>, vector<8x1024xf32> -> vector<8x1024xf32>
    %397 = arith.truncf %361 : vector<8x256xf32> to vector<8x256xbf16>
    %cst_85 = arith.constant dense<0.000000e+00> : vector<8x1024xf32>
    %398 = tpu.matmul %397, %3, %cst_85 {dimension_numbers = #tpu.dot_dimension_numbers<[1], [0], [0], [1], [0, 0, 1, 1], [], []>} : vector<8x256xbf16>, vector<256x1024xbf16>, vector<8x1024xf32> -> vector<8x1024xf32>
    %399 = arith.addf %394, %398 : vector<8x1024xf32>
    %400 = vector.extract_strided_slice %399 {offsets = [0, 0], sizes = [8, 256], strides = [1, 1]} : vector<8x1024xf32> to vector<8x256xf32>
    %401 = arith.negf %400 : vector<8x256xf32>
    %402 = math.exp %401 : vector<8x256xf32>
    %cst_86 = arith.constant 1.000000e+00 : f32
    %403 = vector.broadcast %cst_86 : f32 to vector<8x256xf32>
    %404 = arith.addf %403, %402 : vector<8x256xf32>
    %405 = arith.divf %403, %404 : vector<8x256xf32>
    %406 = vector.extract_strided_slice %399 {offsets = [0, 256], sizes = [8, 256], strides = [1, 1]} : vector<8x1024xf32> to vector<8x256xf32>
    %407 = arith.negf %406 : vector<8x256xf32>
    %408 = math.exp %407 : vector<8x256xf32>
    %cst_87 = arith.constant 1.000000e+00 : f32
    %409 = vector.broadcast %cst_87 : f32 to vector<8x256xf32>
    %410 = arith.addf %409, %408 : vector<8x256xf32>
    %411 = arith.divf %409, %410 : vector<8x256xf32>
    %412 = vector.extract_strided_slice %399 {offsets = [0, 512], sizes = [8, 256], strides = [1, 1]} : vector<8x1024xf32> to vector<8x256xf32>
    %413 = math.tanh %412 : vector<8x256xf32>
    %414 = vector.extract_strided_slice %399 {offsets = [0, 768], sizes = [8, 256], strides = [1, 1]} : vector<8x1024xf32> to vector<8x256xf32>
    %415 = arith.negf %414 : vector<8x256xf32>
    %416 = math.exp %415 : vector<8x256xf32>
    %cst_88 = arith.constant 1.000000e+00 : f32
    %417 = vector.broadcast %cst_88 : f32 to vector<8x256xf32>
    %418 = arith.addf %417, %416 : vector<8x256xf32>
    %419 = arith.divf %417, %418 : vector<8x256xf32>
    %420 = arith.mulf %411, %359 : vector<8x256xf32>
    %421 = arith.mulf %405, %413 : vector<8x256xf32>
    %422 = arith.addf %420, %421 : vector<8x256xf32>
    %423 = math.tanh %422 : vector<8x256xf32>
    %424 = arith.mulf %419, %423 : vector<8x256xf32>
    %425 = arith.addf %396, %8 : vector<8x1024xf32>
    %426 = arith.truncf %424 : vector<8x256xf32> to vector<8x256xbf16>
    %cst_89 = arith.constant dense<0.000000e+00> : vector<8x1024xf32>
    %427 = tpu.matmul %426, %4, %cst_89 {dimension_numbers = #tpu.dot_dimension_numbers<[1], [0], [0], [1], [0, 0, 1, 1], [], []>} : vector<8x256xbf16>, vector<256x1024xbf16>, vector<8x1024xf32> -> vector<8x1024xf32>
    %428 = arith.addf %425, %427 : vector<8x1024xf32>
    %429 = vector.extract_strided_slice %428 {offsets = [0, 0], sizes = [8, 256], strides = [1, 1]} : vector<8x1024xf32> to vector<8x256xf32>
    %430 = arith.negf %429 : vector<8x256xf32>
    %431 = math.exp %430 : vector<8x256xf32>
    %cst_90 = arith.constant 1.000000e+00 : f32
    %432 = vector.broadcast %cst_90 : f32 to vector<8x256xf32>
    %433 = arith.addf %432, %431 : vector<8x256xf32>
    %434 = arith.divf %432, %433 : vector<8x256xf32>
    %435 = vector.extract_strided_slice %428 {offsets = [0, 256], sizes = [8, 256], strides = [1, 1]} : vector<8x1024xf32> to vector<8x256xf32>
    %436 = arith.negf %435 : vector<8x256xf32>
    %437 = math.exp %436 : vector<8x256xf32>
    %cst_91 = arith.constant 1.000000e+00 : f32
    %438 = vector.broadcast %cst_91 : f32 to vector<8x256xf32>
    %439 = arith.addf %438, %437 : vector<8x256xf32>
    %440 = arith.divf %438, %439 : vector<8x256xf32>
    %441 = vector.extract_strided_slice %428 {offsets = [0, 512], sizes = [8, 256], strides = [1, 1]} : vector<8x1024xf32> to vector<8x256xf32>
    %442 = math.tanh %441 : vector<8x256xf32>
    %443 = vector.extract_strided_slice %428 {offsets = [0, 768], sizes = [8, 256], strides = [1, 1]} : vector<8x1024xf32> to vector<8x256xf32>
    %444 = arith.negf %443 : vector<8x256xf32>
    %445 = math.exp %444 : vector<8x256xf32>
    %cst_92 = arith.constant 1.000000e+00 : f32
    %446 = vector.broadcast %cst_92 : f32 to vector<8x256xf32>
    %447 = arith.addf %446, %445 : vector<8x256xf32>
    %448 = arith.divf %446, %447 : vector<8x256xf32>
    %449 = arith.mulf %440, %388 : vector<8x256xf32>
    %450 = arith.mulf %434, %442 : vector<8x256xf32>
    %451 = arith.addf %449, %450 : vector<8x256xf32>
    %452 = math.tanh %451 : vector<8x256xf32>
    %453 = arith.mulf %448, %452 : vector<8x256xf32>
    %c7_i32 = arith.constant 7 : i32
    %454 = arith.index_cast %c7_i32 : i32 to index
    %c0_93 = arith.constant 0 : index
    %c0_94 = arith.constant 0 : index
    %455 = vector.load %arg2[%454, %c0_93, %c0_94] : memref<8x8x1024xbf16, #tpu.memory_space<vmem>>, vector<1x8x1024xbf16>
    %456 = vector.shape_cast %455 : vector<1x8x1024xbf16> to vector<8x1024xbf16>
    %457 = arith.extf %456 : vector<8x1024xbf16> to vector<8x1024xf32>
    %458 = arith.truncf %453 : vector<8x256xf32> to vector<8x256xbf16>
    %cst_95 = arith.constant dense<0.000000e+00> : vector<8x1024xf32>
    %459 = tpu.matmul %458, %5, %cst_95 {dimension_numbers = #tpu.dot_dimension_numbers<[1], [0], [0], [1], [0, 0, 1, 1], [], []>} : vector<8x256xbf16>, vector<256x1024xbf16>, vector<8x1024xf32> -> vector<8x1024xf32>
    %460 = arith.truncf %424 : vector<8x256xf32> to vector<8x256xbf16>
    %cst_96 = arith.constant dense<0.000000e+00> : vector<8x1024xf32>
    %461 = tpu.matmul %460, %3, %cst_96 {dimension_numbers = #tpu.dot_dimension_numbers<[1], [0], [0], [1], [0, 0, 1, 1], [], []>} : vector<8x256xbf16>, vector<256x1024xbf16>, vector<8x1024xf32> -> vector<8x1024xf32>
    %462 = arith.addf %457, %461 : vector<8x1024xf32>
    %463 = vector.extract_strided_slice %462 {offsets = [0, 0], sizes = [8, 256], strides = [1, 1]} : vector<8x1024xf32> to vector<8x256xf32>
    %464 = arith.negf %463 : vector<8x256xf32>
    %465 = math.exp %464 : vector<8x256xf32>
    %cst_97 = arith.constant 1.000000e+00 : f32
    %466 = vector.broadcast %cst_97 : f32 to vector<8x256xf32>
    %467 = arith.addf %466, %465 : vector<8x256xf32>
    %468 = arith.divf %466, %467 : vector<8x256xf32>
    %469 = vector.extract_strided_slice %462 {offsets = [0, 256], sizes = [8, 256], strides = [1, 1]} : vector<8x1024xf32> to vector<8x256xf32>
    %470 = arith.negf %469 : vector<8x256xf32>
    %471 = math.exp %470 : vector<8x256xf32>
    %cst_98 = arith.constant 1.000000e+00 : f32
    %472 = vector.broadcast %cst_98 : f32 to vector<8x256xf32>
    %473 = arith.addf %472, %471 : vector<8x256xf32>
    %474 = arith.divf %472, %473 : vector<8x256xf32>
    %475 = vector.extract_strided_slice %462 {offsets = [0, 512], sizes = [8, 256], strides = [1, 1]} : vector<8x1024xf32> to vector<8x256xf32>
    %476 = math.tanh %475 : vector<8x256xf32>
    %477 = vector.extract_strided_slice %462 {offsets = [0, 768], sizes = [8, 256], strides = [1, 1]} : vector<8x1024xf32> to vector<8x256xf32>
    %478 = arith.negf %477 : vector<8x256xf32>
    %479 = math.exp %478 : vector<8x256xf32>
    %cst_99 = arith.constant 1.000000e+00 : f32
    %480 = vector.broadcast %cst_99 : f32 to vector<8x256xf32>
    %481 = arith.addf %480, %479 : vector<8x256xf32>
    %482 = arith.divf %480, %481 : vector<8x256xf32>
    %483 = arith.mulf %474, %422 : vector<8x256xf32>
    %484 = arith.mulf %468, %476 : vector<8x256xf32>
    %485 = arith.addf %483, %484 : vector<8x256xf32>
    %486 = math.tanh %485 : vector<8x256xf32>
    %487 = arith.mulf %482, %486 : vector<8x256xf32>
    %488 = arith.addf %459, %8 : vector<8x1024xf32>
    %489 = arith.truncf %487 : vector<8x256xf32> to vector<8x256xbf16>
    %cst_100 = arith.constant dense<0.000000e+00> : vector<8x1024xf32>
    %490 = tpu.matmul %489, %4, %cst_100 {dimension_numbers = #tpu.dot_dimension_numbers<[1], [0], [0], [1], [0, 0, 1, 1], [], []>} : vector<8x256xbf16>, vector<256x1024xbf16>, vector<8x1024xf32> -> vector<8x1024xf32>
    %491 = arith.addf %488, %490 : vector<8x1024xf32>
    %492 = vector.extract_strided_slice %491 {offsets = [0, 0], sizes = [8, 256], strides = [1, 1]} : vector<8x1024xf32> to vector<8x256xf32>
    %493 = arith.negf %492 : vector<8x256xf32>
    %494 = math.exp %493 : vector<8x256xf32>
    %cst_101 = arith.constant 1.000000e+00 : f32
    %495 = vector.broadcast %cst_101 : f32 to vector<8x256xf32>
    %496 = arith.addf %495, %494 : vector<8x256xf32>
    %497 = arith.divf %495, %496 : vector<8x256xf32>
    %498 = vector.extract_strided_slice %491 {offsets = [0, 256], sizes = [8, 256], strides = [1, 1]} : vector<8x1024xf32> to vector<8x256xf32>
    %499 = arith.negf %498 : vector<8x256xf32>
    %500 = math.exp %499 : vector<8x256xf32>
    %cst_102 = arith.constant 1.000000e+00 : f32
    %501 = vector.broadcast %cst_102 : f32 to vector<8x256xf32>
    %502 = arith.addf %501, %500 : vector<8x256xf32>
    %503 = arith.divf %501, %502 : vector<8x256xf32>
    %504 = vector.extract_strided_slice %491 {offsets = [0, 512], sizes = [8, 256], strides = [1, 1]} : vector<8x1024xf32> to vector<8x256xf32>
    %505 = math.tanh %504 : vector<8x256xf32>
    %506 = vector.extract_strided_slice %491 {offsets = [0, 768], sizes = [8, 256], strides = [1, 1]} : vector<8x1024xf32> to vector<8x256xf32>
    %507 = arith.negf %506 : vector<8x256xf32>
    %508 = math.exp %507 : vector<8x256xf32>
    %cst_103 = arith.constant 1.000000e+00 : f32
    %509 = vector.broadcast %cst_103 : f32 to vector<8x256xf32>
    %510 = arith.addf %509, %508 : vector<8x256xf32>
    %511 = arith.divf %509, %510 : vector<8x256xf32>
    %512 = arith.mulf %503, %451 : vector<8x256xf32>
    %513 = arith.mulf %497, %505 : vector<8x256xf32>
    %514 = arith.addf %512, %513 : vector<8x256xf32>
    %515 = math.tanh %514 : vector<8x256xf32>
    %516 = arith.mulf %511, %515 : vector<8x256xf32>
    %c8_i32 = arith.constant 8 : i32
    %c0_104 = arith.constant 0 : index
    %c0_105 = arith.constant 0 : index
    %517 = vector.load %arg10[%c0_104, %c0_105] : memref<8x256xf32, #tpu.memory_space<vmem>>, vector<8x256xf32>
    tpu.vector_store %arg10[%c0_104, %c0_105], %487 {strides = array<i32>} : memref<8x256xf32, #tpu.memory_space<vmem>>, vector<8x256xf32>,
    %c0_106 = arith.constant 0 : index
    %c0_107 = arith.constant 0 : index
    %518 = vector.load %arg11[%c0_106, %c0_107] : memref<8x256xf32, #tpu.memory_space<vmem>>, vector<8x256xf32>
    tpu.vector_store %arg11[%c0_106, %c0_107], %485 {strides = array<i32>} : memref<8x256xf32, #tpu.memory_space<vmem>>, vector<8x256xf32>,
    %c0_108 = arith.constant 0 : index
    %c0_109 = arith.constant 0 : index
    %519 = vector.load %arg12[%c0_108, %c0_109] : memref<8x256xf32, #tpu.memory_space<vmem>>, vector<8x256xf32>
    tpu.vector_store %arg12[%c0_108, %c0_109], %516 {strides = array<i32>} : memref<8x256xf32, #tpu.memory_space<vmem>>, vector<8x256xf32>,
    %c0_110 = arith.constant 0 : index
    %c0_111 = arith.constant 0 : index
    %520 = vector.load %arg13[%c0_110, %c0_111] : memref<8x256xf32, #tpu.memory_space<vmem>>, vector<8x256xf32>
    tpu.vector_store %arg13[%c0_110, %c0_111], %514 {strides = array<i32>} : memref<8x256xf32, #tpu.memory_space<vmem>>, vector<8x256xf32>,
    %c0_i32_112 = arith.constant 0 : i32
    %521 = arith.cmpi eq, %arg1, %c0_i32_112 : i32
    %522 = arith.extui %521 : i1 to i32
    %c0_i32_113 = arith.constant 0 : i32
    %523 = arith.cmpi ne, %522, %c0_i32_113 : i32
    scf.if %523 {
      %c0_114 = arith.constant 0 : index
      %c0_115 = arith.constant 0 : index
      %524 = vector.load %arg7[%c0_114, %c0_115] : memref<256x128xf32, #tpu.memory_space<vmem>>, vector<256x128xf32>
      %cst_116 = arith.constant dense<0.000000e+00> : vector<8x128xf32>
      %525 = tpu.matmul %516, %524, %cst_116 {dimension_numbers = #tpu.dot_dimension_numbers<[1], [0], [0], [1], [0, 0, 1, 1], [], []>} : vector<8x256xf32>, vector<256x128xf32>, vector<8x128xf32> -> vector<8x128xf32>
      %c0_117 = arith.constant 0 : index
      %c0_118 = arith.constant 0 : index
      %526 = vector.load %arg8[%c0_117, %c0_118] : memref<1x128xf32, #tpu.memory_space<vmem>>, vector<1x128xf32>
      %527 = vector.broadcast %526 : vector<1x128xf32> to vector<8x128xf32>
      %528 = arith.addf %525, %527 : vector<8x128xf32>
      %c0_119 = arith.constant 0 : index
      %c0_120 = arith.constant 0 : index
      %529 = vector.load %arg9[%c0_119, %c0_120] : memref<8x128xf32, #tpu.memory_space<vmem>>, vector<8x128xf32>
      tpu.vector_store %arg9[%c0_119, %c0_120], %528 {strides = array<i32>} : memref<8x128xf32, #tpu.memory_space<vmem>>, vector<8x128xf32>,
    } else {
    }
    return
  }
  func.func @transform_0(%arg0: i32, %arg1: i32) -> (i32, i32, i32) {
    %c0_i32 = arith.constant 0 : i32
    %c0_i32_0 = arith.constant 0 : i32
    return %arg1, %arg0, %c0_i32 : i32, i32, i32
  }
  func.func @transform_1(%arg0: i32, %arg1: i32) -> (i32, i32) {
    %c0_i32 = arith.constant 0 : i32
    %c0_i32_0 = arith.constant 0 : i32
    %c0_i32_1 = arith.constant 0 : i32
    return %c0_i32, %c0_i32_0 : i32, i32
  }
  func.func @transform_2(%arg0: i32, %arg1: i32) -> (i32, i32) {
    %c0_i32 = arith.constant 0 : i32
    %c0_i32_0 = arith.constant 0 : i32
    %c0_i32_1 = arith.constant 0 : i32
    return %c0_i32, %c0_i32_0 : i32, i32
  }
  func.func @transform_3(%arg0: i32, %arg1: i32) -> (i32, i32) {
    %c0_i32 = arith.constant 0 : i32
    %c0_i32_0 = arith.constant 0 : i32
    %c0_i32_1 = arith.constant 0 : i32
    return %c0_i32, %c0_i32_0 : i32, i32
  }
  func.func @transform_4(%arg0: i32, %arg1: i32) -> (i32, i32) {
    %c0_i32 = arith.constant 0 : i32
    %c0_i32_0 = arith.constant 0 : i32
    %c0_i32_1 = arith.constant 0 : i32
    return %c0_i32, %c0_i32_0 : i32, i32
  }
  func.func @transform_5(%arg0: i32, %arg1: i32) -> (i32, i32) {
    %c0_i32 = arith.constant 0 : i32
    %c0_i32_0 = arith.constant 0 : i32
    %c0_i32_1 = arith.constant 0 : i32
    return %c0_i32, %c0_i32_0 : i32, i32
  }
  func.func @transform_6(%arg0: i32, %arg1: i32) -> (i32, i32) {
    %c0_i32 = arith.constant 0 : i32
    %c0_i32_0 = arith.constant 0 : i32
    %c0_i32_1 = arith.constant 0 : i32
    return %c0_i32, %c0_i32_0 : i32, i32
  }
  func.func @transform_7(%arg0: i32, %arg1: i32) -> (i32, i32) {
    %c0_i32 = arith.constant 0 : i32
    %c0_i32_0 = arith.constant 0 : i32
    return %arg0, %c0_i32 : i32, i32
  }
}

</mosaic_0001>

<llo_original>
// kernel: lstm2_classifier_forward.1
$region0: #{lstm2_classifier_forward.1}
  #allocation0 [shape = 'u32[]', space=smem, size = 0x4, offset = 0x4, fixed_abs, tag = 'smem constant byte address 0x4 - core index']
  #allocation1 [shape = 'u32[72,128]{1,0:T(1,128)}', space=vmem, size = 0x9000, scoped, tag = 'internal scratch']
  #allocation2 [shape = 'f32[8,256]{1,0:T(8,128)}', space=vmem, size = 0x2000, scoped, tag = 'scratch operand']
  #allocation3 [shape = 'f32[8,256]{1,0:T(8,128)}', space=vmem, size = 0x2000, scoped, tag = 'scratch operand']
  #allocation4 [shape = 'f32[8,256]{1,0:T(8,128)}', space=vmem, size = 0x2000, scoped, tag = 'scratch operand']
  #allocation5 [shape = 'f32[8,256]{1,0:T(8,128)}', space=vmem, size = 0x2000, scoped, tag = 'scratch operand']
  %s0 = inlined_call_operand.vmem [shape: bf16[8,8,1024], index: 0, kind: input, shape index: {}]
  %s1 = inlined_call_operand.vmem [shape: bf16[256,1024], index: 1, kind: input, shape index: {}]
  %s2 = inlined_call_operand.vmem [shape: bf16[256,1024], index: 2, kind: input, shape index: {}]
  %s3 = inlined_call_operand.vmem [shape: bf16[256,1024], index: 3, kind: input, shape index: {}]
  %s4 = inlined_call_operand.vmem [shape: f32[1,1024], index: 4, kind: input, shape index: {}]
  %s5 = inlined_call_operand.vmem [shape: f32[256,128], index: 5, kind: input, shape index: {}]
  %s6 = inlined_call_operand.vmem [shape: f32[1,128], index: 6, kind: input, shape index: {}]
  %s7 = inlined_call_operand.hbm [shape: f32[8,128], index: 7, kind: output, shape index: {}]
  %s8 = sld [smem:[#allocation0]]
  $region46: #{lstm2_classifier_forward.1} parent=0
    _
  %s10 = ssub.s32 1, %s8
  %s11 = scalar_select 0, %s10, %s8
  $region1: #{lstm2_classifier_forward.1} parent=0
    #allocation6 [shape = 'u8[4096]{0}', space=vmem, size = 0x1000, scoped, tag = 'output window, operand 0, single buffered']
    #allocation7 [shape = 's32[1]{0}', space=sflag, size = 0x4, scoped, tag = 'scoped memory for lstm2_classifier_forward.1']
    %12 = vsyncpa [#allocation7], 0
    // Predicated region
    $region2: #{lstm2_classifier_forward.1} parent=1 // pred_check
      _
    $region3: #{lstm2_classifier_forward.1} parent=1 // pred_check_branch
      %14 = sbr.rel (0) target = $region5
    $region4: #{lstm2_classifier_forward.1} parent=1 // pred_region
      _
    $region5: #{lstm2_classifier_forward.1} parent=1 // pred_fallthru
      _
    // Predicated region
    $region6: #{lstm2_classifier_forward.1} parent=1 // pred_check
      _
    $region7: #{lstm2_classifier_forward.1} parent=1 // pred_check_branch
      %16 = sbr.rel (0) target = $region9
    $region8: #{lstm2_classifier_forward.1} parent=1 // pred_region
      _
    $region9: #{lstm2_classifier_forward.1} parent=1 // pred_fallthru
      _
    // Predicated region
    $region10: #{lstm2_classifier_forward.1} parent=1 // pred_check
      _
    $region11: #{lstm2_classifier_forward.1} parent=1 // pred_check_branch
      %18 = sbr.rel (0) target = $region13
    $region12: #{lstm2_classifier_forward.1} parent=1 // pred_region
      _
    $region13: #{lstm2_classifier_forward.1} parent=1 // pred_fallthru
      _
    // Predicated region
    $region14: #{lstm2_classifier_forward.1} parent=1 // pred_check
      _
    $region15: #{lstm2_classifier_forward.1} parent=1 // pred_check_branch
      %20 = sbr.rel (0) target = $region17
    $region16: #{lstm2_classifier_forward.1} parent=1 // pred_region
      _
    $region17: #{lstm2_classifier_forward.1} parent=1 // pred_fallthru
      _
    // Predicated region
    $region18: #{lstm2_classifier_forward.1} parent=1 // pred_check
      _
    $region19: #{lstm2_classifier_forward.1} parent=1 // pred_check_branch
      %22 = sbr.rel (0) target = $region21
    $region20: #{lstm2_classifier_forward.1} parent=1 // pred_region
      _
    $region21: #{lstm2_classifier_forward.1} parent=1 // pred_fallthru
      _
    // Predicated region
    $region22: #{lstm2_classifier_forward.1} parent=1 // pred_check
      _
    $region23: #{lstm2_classifier_forward.1} parent=1 // pred_check_branch
      %24 = sbr.rel (0) target = $region25
    $region24: #{lstm2_classifier_forward.1} parent=1 // pred_region
      _
    $region25: #{lstm2_classifier_forward.1} parent=1 // pred_fallthru
      _
    // Predicated region
    $region26: #{lstm2_classifier_forward.1} parent=1 // pred_check
      _
    $region27: #{lstm2_classifier_forward.1} parent=1 // pred_check_branch
      %26 = sbr.rel (0) target = $region29
    $region28: #{lstm2_classifier_forward.1} parent=1 // pred_region
      _
    $region29: #{lstm2_classifier_forward.1} parent=1 // pred_fallthru
      _
    %p27 = scmp.eq.s32.totalorder 0, 0
    // Predicated region
    $region30: #{lstm2_classifier_forward.1} parent=1 // pred_check
      %p28 = pneg %p27
    $region31: #{lstm2_classifier_forward.1} parent=1 // pred_check_branch
      %30 = sbr.rel (%p28) target = $region33
    $region32: #{lstm2_classifier_forward.1} parent=1 // pred_region
      %31 = vst [vmem:[#allocation2] sm:$0xff] 0.0
      %32 = vst [vmem:[#allocation2 + $0x8] sm:$0xff] 0.0
      %33 = vst [vmem:[#allocation3] sm:$0xff] 0.0
      %34 = vst [vmem:[#allocation3 + $0x8] sm:$0xff] 0.0
      %35 = vst [vmem:[#allocation4] sm:$0xff] 0.0
      %36 = vst [vmem:[#allocation4 + $0x8] sm:$0xff] 0.0
      %37 = vst [vmem:[#allocation5] sm:$0xff] 0.0
      %38 = vst [vmem:[#allocation5 + $0x8] sm:$0xff] 0.0
    $region33: #{lstm2_classifier_forward.1} parent=1 // pred_fallthru
      _
    %v39 = vld [vmem:[%s1] sm:$0xff]
    %v40 = vld [vmem:[%s1 + $0x8] sm:$0xff]
    %v41 = vld [vmem:[%s1 + $0x10] sm:$0xff]
    %v42 = vld [vmem:[%s1 + $0x18] sm:$0xff]
    %v43 = vld [vmem:[%s1 + $0x20] sm:$0xff]
    %v44 = vld [vmem:[%s1 + $0x28] sm:$0xff]
    %v45 = vld [vmem:[%s1 + $0x30] sm:$0xff]
    %v46 = vld [vmem:[%s1 + $0x38] sm:$0xff]
    %v47 = vld [vmem:[%s1 + $0x40] sm:$0xff]
    %v48 = vld [vmem:[%s1 + $0x48] sm:$0xff]
    %v49 = vld [vmem:[%s1 + $0x50] sm:$0xff]
    %v50 = vld [vmem:[%s1 + $0x58] sm:$0xff]
    %v51 = vld [vmem:[%s1 + $0x60] sm:$0xff]
    %v52 = vld [vmem:[%s1 + $0x68] sm:$0xff]
    %v53 = vld [vmem:[%s1 + $0x70] sm:$0xff]
    %v54 = vld [vmem:[%s1 + $0x78] sm:$0xff]
    %v55 = vld [vmem:[%s1 + $0x80] sm:$0xff]
    %v56 = vld [vmem:[%s1 + $0x88] sm:$0xff]
    %v57 = vld [vmem:[%s1 + $0x90] sm:$0xff]
    %v58 = vld [vmem:[%s1 + $0x98] sm:$0xff]
    %v59 = vld [vmem:[%s1 + $0xa0] sm:$0xff]
    %v60 = vld [vmem:[%s1 + $0xa8] sm:$0xff]
    %v61 = vld [vmem:[%s1 + $0xb0] sm:$0xff]
    %v62 = vld [vmem:[%s1 + $0xb8] sm:$0xff]
    %v63 = vld [vmem:[%s1 + $0xc0] sm:$0xff]
    %v64 = vld [vmem:[%s1 + $0xc8] sm:$0xff]
    %v65 = vld [vmem:[%s1 + $0xd0] sm:$0xff]
    %v66 = vld [vmem:[%s1 + $0xd8] sm:$0xff]
    %v67 = vld [vmem:[%s1 + $0xe0] sm:$0xff]
    %v68 = vld [vmem:[%s1 + $0xe8] sm:$0xff]
    %v69 = vld [vmem:[%s1 + $0xf0] sm:$0xff]
    %v70 = vld [vmem:[%s1 + $0xf8] sm:$0xff]
    %v71 = vld [vmem:[%s1 + $0x100] sm:$0xff]
    %v72 = vld [vmem:[%s1 + $0x108] sm:$0xff]
    %v73 = vld [vmem:[%s1 + $0x110] sm:$0xff]
    %v74 = vld [vmem:[%s1 + $0x118] sm:$0xff]
    %v75 = vld [vmem:[%s1 + $0x120] sm:$0xff]
    %v76 = vld [vmem:[%s1 + $0x128] sm:$0xff]
    %v77 = vld [vmem:[%s1 + $0x130] sm:$0xff]
    %v78 = vld [vmem:[%s1 + $0x138] sm:$0xff]
    %v79 = vld [vmem:[%s1 + $0x140] sm:$0xff]
    %v80 = vld [vmem:[%s1 + $0x148] sm:$0xff]
    %v81 = vld [vmem:[%s1 + $0x150] sm:$0xff]
    %v82 = vld [vmem:[%s1 + $0x158] sm:$0xff]
    %v83 = vld [vmem:[%s1 + $0x160] sm:$0xff]
    %v84 = vld [vmem:[%s1 + $0x168] sm:$0xff]
    %v85 = vld [vmem:[%s1 + $0x170] sm:$0xff]
    %v86 = vld [vmem:[%s1 + $0x178] sm:$0xff]
    %v87 = vld [vmem:[%s1 + $0x180] sm:$0xff]
    %v88 = vld [vmem:[%s1 + $0x188] sm:$0xff]
    %v89 = vld [vmem:[%s1 + $0x190] sm:$0xff]
    %v90 = vld [vmem:[%s1 + $0x198] sm:$0xff]
    %v91 = vld [vmem:[%s1 + $0x1a0] sm:$0xff]
    %v92 = vld [vmem:[%s1 + $0x1a8] sm:$0xff]
    %v93 = vld [vmem:[%s1 + $0x1b0] sm:$0xff]
    %v94 = vld [vmem:[%s1 + $0x1b8] sm:$0xff]
    %v95 = vld [vmem:[%s1 + $0x1c0] sm:$0xff]
    %v96 = vld [vmem:[%s1 + $0x1c8] sm:$0xff]
    %v97 = vld [vmem:[%s1 + $0x1d0] sm:$0xff]
    %v98 = vld [vmem:[%s1 + $0x1d8] sm:$0xff]
    %v99 = vld [vmem:[%s1 + $0x1e0] sm:$0xff]
    %v100 = vld [vmem:[%s1 + $0x1e8] sm:$0xff]
    %v101 = vld [vmem:[%s1 + $0x1f0] sm:$0xff]
    %v102 = vld [vmem:[%s1 + $0x1f8] sm:$0xff]
    %v103 = vld [vmem:[%s1 + $0x200] sm:$0xff]
    %v104 = vld [vmem:[%s1 + $0x208] sm:$0xff]
    %v105 = vld [vmem:[%s1 + $0x210] sm:$0xff]
    %v106 = vld [vmem:[%s1 + $0x218] sm:$0xff]
    %v107 = vld [vmem:[%s1 + $0x220] sm:$0xff]
    %v108 = vld [vmem:[%s1 + $0x228] sm:$0xff]
    %v109 = vld [vmem:[%s1 + $0x230] sm:$0xff]
    %v110 = vld [vmem:[%s1 + $0x238] sm:$0xff]
    %v111 = vld [vmem:[%s1 + $0x240] sm:$0xff]
    %v112 = vld [vmem:[%s1 + $0x248] sm:$0xff]
    %v113 = vld [vmem:[%s1 + $0x250] sm:$0xff]
    %v114 = vld [vmem:[%s1 + $0x258] sm:$0xff]
    %v115 = vld [vmem:[%s1 + $0x260] sm:$0xff]
    %v116 = vld [vmem:[%s1 + $0x268] sm:$0xff]
    %v117 = vld [vmem:[%s1 + $0x270] sm:$0xff]
    %v118 = vld [vmem:[%s1 + $0x278] sm:$0xff]
    %v119 = vld [vmem:[%s1 + $0x280] sm:$0xff]
    %v120 = vld [vmem:[%s1 + $0x288] sm:$0xff]
    %v121 = vld [vmem:[%s1 + $0x290] sm:$0xff]
    %v122 = vld [vmem:[%s1 + $0x298] sm:$0xff]
    %v123 = vld [vmem:[%s1 + $0x2a0] sm:$0xff]
    %v124 = vld [vmem:[%s1 + $0x2a8] sm:$0xff]
    %v125 = vld [vmem:[%s1 + $0x2b0] sm:$0xff]
    %v126 = vld [vmem:[%s1 + $0x2b8] sm:$0xff]
    %v127 = vld [vmem:[%s1 + $0x2c0] sm:$0xff]
    %v128 = vld [vmem:[%s1 + $0x2c8] sm:$0xff]
    %v129 = vld [vmem:[%s1 + $0x2d0] sm:$0xff]
    %v130 = vld [vmem:[%s1 + $0x2d8] sm:$0xff]
    %v131 = vld [vmem:[%s1 + $0x2e0] sm:$0xff]
    %v132 = vld [vmem:[%s1 + $0x2e8] sm:$0xff]
    %v133 = vld [vmem:[%s1 + $0x2f0] sm:$0xff]
    %v134 = vld [vmem:[%s1 + $0x2f8] sm:$0xff]
    %v135 = vld [vmem:[%s1 + $0x300] sm:$0xff]
    %v136 = vld [vmem:[%s1 + $0x308] sm:$0xff]
    %v137 = vld [vmem:[%s1 + $0x310] sm:$0xff]
    %v138 = vld [vmem:[%s1 + $0x318] sm:$0xff]
    %v139 = vld [vmem:[%s1 + $0x320] sm:$0xff]
    %v140 = vld [vmem:[%s1 + $0x328] sm:$0xff]
    %v141 = vld [vmem:[%s1 + $0x330] sm:$0xff]
    %v142 = vld [vmem:[%s1 + $0x338] sm:$0xff]
    %v143 = vld [vmem:[%s1 + $0x340] sm:$0xff]
    %v144 = vld [vmem:[%s1 + $0x348] sm:$0xff]
    %v145 = vld [vmem:[%s1 + $0x350] sm:$0xff]
    %v146 = vld [vmem:[%s1 + $0x358] sm:$0xff]
    %v147 = vld [vmem:[%s1 + $0x360] sm:$0xff]
    %v148 = vld [vmem:[%s1 + $0x368] sm:$0xff]
    %v149 = vld [vmem:[%s1 + $0x370] sm:$0xff]
    %v150 = vld [vmem:[%s1 + $0x378] sm:$0xff]
    %v151 = vld [vmem:[%s1 + $0x380] sm:$0xff]
    %v152 = vld [vmem:[%s1 + $0x388] sm:$0xff]
    %v153 = vld [vmem:[%s1 + $0x390] sm:$0xff]
    %v154 = vld [vmem:[%s1 + $0x398] sm:$0xff]
    %v155 = vld [vmem:[%s1 + $0x3a0] sm:$0xff]
    %v156 = vld [vmem:[%s1 + $0x3a8] sm:$0xff]
    %v157 = vld [vmem:[%s1 + $0x3b0] sm:$0xff]
    %v158 = vld [vmem:[%s1 + $0x3b8] sm:$0xff]
    %v159 = vld [vmem:[%s1 + $0x3c0] sm:$0xff]
    %v160 = vld [vmem:[%s1 + $0x3c8] sm:$0xff]
    %v161 = vld [vmem:[%s1 + $0x3d0] sm:$0xff]
    %v162 = vld [vmem:[%s1 + $0x3d8] sm:$0xff]
    %v163 = vld [vmem:[%s1 + $0x3e0] sm:$0xff]
    %v164 = vld [vmem:[%s1 + $0x3e8] sm:$0xff]
    %v165 = vld [vmem:[%s1 + $0x3f0] sm:$0xff]
    %v166 = vld [vmem:[%s1 + $0x3f8] sm:$0xff]
    %v167 = vld [vmem:[%s2] sm:$0xff]
    %v168 = vld [vmem:[%s2 + $0x8] sm:$0xff]
    %v169 = vld [vmem:[%s2 + $0x10] sm:$0xff]
    %v170 = vld [vmem:[%s2 + $0x18] sm:$0xff]
    %v171 = vld [vmem:[%s2 + $0x20] sm:$0xff]
    %v172 = vld [vmem:[%s2 + $0x28] sm:$0xff]
    %v173 = vld [vmem:[%s2 + $0x30] sm:$0xff]
    %v174 = vld [vmem:[%s2 + $0x38] sm:$0xff]
    %v175 = vld [vmem:[%s2 + $0x40] sm:$0xff]
    %v176 = vld [vmem:[%s2 + $0x48] sm:$0xff]
    %v177 = vld [vmem:[%s2 + $0x50] sm:$0xff]
    %v178 = vld [vmem:[%s2 + $0x58] sm:$0xff]
    %v179 = vld [vmem:[%s2 + $0x60] sm:$0xff]
    %v180 = vld [vmem:[%s2 + $0x68] sm:$0xff]
    %v181 = vld [vmem:[%s2 + $0x70] sm:$0xff]
    %v182 = vld [vmem:[%s2 + $0x78] sm:$0xff]
    %v183 = vld [vmem:[%s2 + $0x80] sm:$0xff]
    %v184 = vld [vmem:[%s2 + $0x88] sm:$0xff]
    %v185 = vld [vmem:[%s2 + $0x90] sm:$0xff]
    %v186 = vld [vmem:[%s2 + $0x98] sm:$0xff]
    %v187 = vld [vmem:[%s2 + $0xa0] sm:$0xff]
    %v188 = vld [vmem:[%s2 + $0xa8] sm:$0xff]
    %v189 = vld [vmem:[%s2 + $0xb0] sm:$0xff]
    %v190 = vld [vmem:[%s2 + $0xb8] sm:$0xff]
    %v191 = vld [vmem:[%s2 + $0xc0] sm:$0xff]
    %v192 = vld [vmem:[%s2 + $0xc8] sm:$0xff]
    %v193 = vld [vmem:[%s2 + $0xd0] sm:$0xff]
    %v194 = vld [vmem:[%s2 + $0xd8] sm:$0xff]
    %v195 = vld [vmem:[%s2 + $0xe0] sm:$0xff]
    %v196 = vld [vmem:[%s2 + $0xe8] sm:$0xff]
    %v197 = vld [vmem:[%s2 + $0xf0] sm:$0xff]
    %v198 = vld [vmem:[%s2 + $0xf8] sm:$0xff]
    %v199 = vld [vmem:[%s2 + $0x100] sm:$0xff]
    %v200 = vld [vmem:[%s2 + $0x108] sm:$0xff]
    %v201 = vld [vmem:[%s2 + $0x110] sm:$0xff]
    %v202 = vld [vmem:[%s2 + $0x118] sm:$0xff]
    %v203 = vld [vmem:[%s2 + $0x120] sm:$0xff]
    %v204 = vld [vmem:[%s2 + $0x128] sm:$0xff]
    %v205 = vld [vmem:[%s2 + $0x130] sm:$0xff]
    %v206 = vld [vmem:[%s2 + $0x138] sm:$0xff]
    %v207 = vld [vmem:[%s2 + $0x140] sm:$0xff]
    %v208 = vld [vmem:[%s2 + $0x148] sm:$0xff]
    %v209 = vld [vmem:[%s2 + $0x150] sm:$0xff]
    %v210 = vld [vmem:[%s2 + $0x158] sm:$0xff]
    %v211 = vld [vmem:[%s2 + $0x160] sm:$0xff]
    %v212 = vld [vmem:[%s2 + $0x168] sm:$0xff]
    %v213 = vld [vmem:[%s2 + $0x170] sm:$0xff]
    %v214 = vld [vmem:[%s2 + $0x178] sm:$0xff]
    %v215 = vld [vmem:[%s2 + $0x180] sm:$0xff]
    %v216 = vld [vmem:[%s2 + $0x188] sm:$0xff]
    %v217 = vld [vmem:[%s2 + $0x190] sm:$0xff]
    %v218 = vld [vmem:[%s2 + $0x198] sm:$0xff]
    %v219 = vld [vmem:[%s2 + $0x1a0] sm:$0xff]
    %v220 = vld [vmem:[%s2 + $0x1a8] sm:$0xff]
    %v221 = vld [vmem:[%s2 + $0x1b0] sm:$0xff]
    %v222 = vld [vmem:[%s2 + $0x1b8] sm:$0xff]
    %v223 = vld [vmem:[%s2 + $0x1c0] sm:$0xff]
    %v224 = vld [vmem:[%s2 + $0x1c8] sm:$0xff]
    %v225 = vld [vmem:[%s2 + $0x1d0] sm:$0xff]
    %v226 = vld [vmem:[%s2 + $0x1d8] sm:$0xff]
    %v227 = vld [vmem:[%s2 + $0x1e0] sm:$0xff]
    %v228 = vld [vmem:[%s2 + $0x1e8] sm:$0xff]
    %v229 = vld [vmem:[%s2 + $0x1f0] sm:$0xff]
    %v230 = vld [vmem:[%s2 + $0x1f8] sm:$0xff]
    %v231 = vld [vmem:[%s2 + $0x200] sm:$0xff]
    %v232 = vld [vmem:[%s2 + $0x208] sm:$0xff]
    %v233 = vld [vmem:[%s2 + $0x210] sm:$0xff]
    %v234 = vld [vmem:[%s2 + $0x218] sm:$0xff]
    %v235 = vld [vmem:[%s2 + $0x220] sm:$0xff]
    %v236 = vld [vmem:[%s2 + $0x228] sm:$0xff]
    %v237 = vld [vmem:[%s2 + $0x230] sm:$0xff]
    %v238 = vld [vmem:[%s2 + $0x238] sm:$0xff]
    %v239 = vld [vmem:[%s2 + $0x240] sm:$0xff]
    %v240 = vld [vmem:[%s2 + $0x248] sm:$0xff]
    %v241 = vld [vmem:[%s2 + $0x250] sm:$0xff]
    %v242 = vld [vmem:[%s2 + $0x258] sm:$0xff]
    %v243 = vld [vmem:[%s2 + $0x260] sm:$0xff]
    %v244 = vld [vmem:[%s2 + $0x268] sm:$0xff]
    %v245 = vld [vmem:[%s2 + $0x270] sm:$0xff]
    %v246 = vld [vmem:[%s2 + $0x278] sm:$0xff]
    %v247 = vld [vmem:[%s2 + $0x280] sm:$0xff]
    %v248 = vld [vmem:[%s2 + $0x288] sm:$0xff]
    %v249 = vld [vmem:[%s2 + $0x290] sm:$0xff]
    %v250 = vld [vmem:[%s2 + $0x298] sm:$0xff]
    %v251 = vld [vmem:[%s2 + $0x2a0] sm:$0xff]
    %v252 = vld [vmem:[%s2 + $0x2a8] sm:$0xff]
    %v253 = vld [vmem:[%s2 + $0x2b0] sm:$0xff]
    %v254 = vld [vmem:[%s2 + $0x2b8] sm:$0xff]
    %v255 = vld [vmem:[%s2 + $0x2c0] sm:$0xff]
    %v256 = vld [vmem:[%s2 + $0x2c8] sm:$0xff]
    %v257 = vld [vmem:[%s2 + $0x2d0] sm:$0xff]
    %v258 = vld [vmem:[%s2 + $0x2d8] sm:$0xff]
    %v259 = vld [vmem:[%s2 + $0x2e0] sm:$0xff]
    %v260 = vld [vmem:[%s2 + $0x2e8] sm:$0xff]
    %v261 = vld [vmem:[%s2 + $0x2f0] sm:$0xff]
    %v262 = vld [vmem:[%s2 + $0x2f8] sm:$0xff]
    %v263 = vld [vmem:[%s2 + $0x300] sm:$0xff]
    %v264 = vld [vmem:[%s2 + $0x308] sm:$0xff]
    %v265 = vld [vmem:[%s2 + $0x310] sm:$0xff]
    %v266 = vld [vmem:[%s2 + $0x318] sm:$0xff]
    %v267 = vld [vmem:[%s2 + $0x320] sm:$0xff]
    %v268 = vld [vmem:[%s2 + $0x328] sm:$0xff]
    %v269 = vld [vmem:[%s2 + $0x330] sm:$0xff]
    %v270 = vld [vmem:[%s2 + $0x338] sm:$0xff]
    %v271 = vld [vmem:[%s2 + $0x340] sm:$0xff]
    %v272 = vld [vmem:[%s2 + $0x348] sm:$0xff]
    %v273 = vld [vmem:[%s2 + $0x350] sm:$0xff]
    %v274 = vld [vmem:[%s2 + $0x358] sm:$0xff]
    %v275 = vld [vmem:[%s2 + $0x360] sm:$0xff]
    %v276 = vld [vmem:[%s2 + $0x368] sm:$0xff]
    %v277 = vld [vmem:[%s2 + $0x370] sm:$0xff]
    %v278 = vld [vmem:[%s2 + $0x378] sm:$0xff]
    %v279 = vld [vmem:[%s2 + $0x380] sm:$0xff]
    %v280 = vld [vmem:[%s2 + $0x388] sm:$0xff]
    %v281 = vld [vmem:[%s2 + $0x390] sm:$0xff]
    %v282 = vld [vmem:[%s2 + $0x398] sm:$0xff]
    %v283 = vld [vmem:[%s2 + $0x3a0] sm:$0xff]
    %v284 = vld [vmem:[%s2 + $0x3a8] sm:$0xff]
    %v285 = vld [vmem:[%s2 + $0x3b0] sm:$0xff]
    %v286 = vld [vmem:[%s2 + $0x3b8] sm:$0xff]
    %v287 = vld [vmem:[%s2 + $0x3c0] sm:$0xff]
    %v288 = vld [vmem:[%s2 + $0x3c8] sm:$0xff]
    %v289 = vld [vmem:[%s2 + $0x3d0] sm:$0xff]
    %v290 = vld [vmem:[%s2 + $0x3d8] sm:$0xff]
    %v291 = vld [vmem:[%s2 + $0x3e0] sm:$0xff]
    %v292 = vld [vmem:[%s2 + $0x3e8] sm:$0xff]
    %v293 = vld [vmem:[%s2 + $0x3f0] sm:$0xff]
    %v294 = vld [vmem:[%s2 + $0x3f8] sm:$0xff]
    %v295 = vld [vmem:[%s3] sm:$0xff]
    %v296 = vld [vmem:[%s3 + $0x8] sm:$0xff]
    %v297 = vld [vmem:[%s3 + $0x10] sm:$0xff]
    %v298 = vld [vmem:[%s3 + $0x18] sm:$0xff]
    %v299 = vld [vmem:[%s3 + $0x20] sm:$0xff]
    %v300 = vld [vmem:[%s3 + $0x28] sm:$0xff]
    %v301 = vld [vmem:[%s3 + $0x30] sm:$0xff]
    %v302 = vld [vmem:[%s3 + $0x38] sm:$0xff]
    %v303 = vld [vmem:[%s3 + $0x40] sm:$0xff]
    %v304 = vld [vmem:[%s3 + $0x48] sm:$0xff]
    %v305 = vld [vmem:[%s3 + $0x50] sm:$0xff]
    %v306 = vld [vmem:[%s3 + $0x58] sm:$0xff]
    %v307 = vld [vmem:[%s3 + $0x60] sm:$0xff]
    %v308 = vld [vmem:[%s3 + $0x68] sm:$0xff]
    %v309 = vld [vmem:[%s3 + $0x70] sm:$0xff]
    %v310 = vld [vmem:[%s3 + $0x78] sm:$0xff]
    %v311 = vld [vmem:[%s3 + $0x80] sm:$0xff]
    %v312 = vld [vmem:[%s3 + $0x88] sm:$0xff]
    %v313 = vld [vmem:[%s3 + $0x90] sm:$0xff]
    %v314 = vld [vmem:[%s3 + $0x98] sm:$0xff]
    %v315 = vld [vmem:[%s3 + $0xa0] sm:$0xff]
    %v316 = vld [vmem:[%s3 + $0xa8] sm:$0xff]
    %v317 = vld [vmem:[%s3 + $0xb0] sm:$0xff]
    %v318 = vld [vmem:[%s3 + $0xb8] sm:$0xff]
    %v319 = vld [vmem:[%s3 + $0xc0] sm:$0xff]
    %v320 = vld [vmem:[%s3 + $0xc8] sm:$0xff]
    %v321 = vld [vmem:[%s3 + $0xd0] sm:$0xff]
    %v322 = vld [vmem:[%s3 + $0xd8] sm:$0xff]
    %v323 = vld [vmem:[%s3 + $0xe0] sm:$0xff]
    %v324 = vld [vmem:[%s3 + $0xe8] sm:$0xff]
    %v325 = vld [vmem:[%s3 + $0xf0] sm:$0xff]
    %v326 = vld [vmem:[%s3 + $0xf8] sm:$0xff]
    %v327 = vld [vmem:[%s3 + $0x100] sm:$0xff]
    %v328 = vld [vmem:[%s3 + $0x108] sm:$0xff]
    %v329 = vld [vmem:[%s3 + $0x110] sm:$0xff]
    %v330 = vld [vmem:[%s3 + $0x118] sm:$0xff]
    %v331 = vld [vmem:[%s3 + $0x120] sm:$0xff]
    %v332 = vld [vmem:[%s3 + $0x128] sm:$0xff]
    %v333 = vld [vmem:[%s3 + $0x130] sm:$0xff]
    %v334 = vld [vmem:[%s3 + $0x138] sm:$0xff]
    %v335 = vld [vmem:[%s3 + $0x140] sm:$0xff]
    %v336 = vld [vmem:[%s3 + $0x148] sm:$0xff]
    %v337 = vld [vmem:[%s3 + $0x150] sm:$0xff]
    %v338 = vld [vmem:[%s3 + $0x158] sm:$0xff]
    %v339 = vld [vmem:[%s3 + $0x160] sm:$0xff]
    %v340 = vld [vmem:[%s3 + $0x168] sm:$0xff]
    %v341 = vld [vmem:[%s3 + $0x170] sm:$0xff]
    %v342 = vld [vmem:[%s3 + $0x178] sm:$0xff]
    %v343 = vld [vmem:[%s3 + $0x180] sm:$0xff]
    %v344 = vld [vmem:[%s3 + $0x188] sm:$0xff]
    %v345 = vld [vmem:[%s3 + $0x190] sm:$0xff]
    %v346 = vld [vmem:[%s3 + $0x198] sm:$0xff]
    %v347 = vld [vmem:[%s3 + $0x1a0] sm:$0xff]
    %v348 = vld [vmem:[%s3 + $0x1a8] sm:$0xff]
    %v349 = vld [vmem:[%s3 + $0x1b0] sm:$0xff]
    %v350 = vld [vmem:[%s3 + $0x1b8] sm:$0xff]
    %v351 = vld [vmem:[%s3 + $0x1c0] sm:$0xff]
    %v352 = vld [vmem:[%s3 + $0x1c8] sm:$0xff]
    %v353 = vld [vmem:[%s3 + $0x1d0] sm:$0xff]
    %v354 = vld [vmem:[%s3 + $0x1d8] sm:$0xff]
    %v355 = vld [vmem:[%s3 + $0x1e0] sm:$0xff]
    %v356 = vld [vmem:[%s3 + $0x1e8] sm:$0xff]
    %v357 = vld [vmem:[%s3 + $0x1f0] sm:$0xff]
    %v358 = vld [vmem:[%s3 + $0x1f8] sm:$0xff]
    %v359 = vld [vmem:[%s3 + $0x200] sm:$0xff]
    %v360 = vld [vmem:[%s3 + $0x208] sm:$0xff]
    %v361 = vld [vmem:[%s3 + $0x210] sm:$0xff]
    %v362 = vld [vmem:[%s3 + $0x218] sm:$0xff]
    %v363 = vld [vmem:[%s3 + $0x220] sm:$0xff]
    %v364 = vld [vmem:[%s3 + $0x228] sm:$0xff]
    %v365 = vld [vmem:[%s3 + $0x230] sm:$0xff]
    %v366 = vld [vmem:[%s3 + $0x238] sm:$0xff]
    %v367 = vld [vmem:[%s3 + $0x240] sm:$0xff]
    %v368 = vld [vmem:[%s3 + $0x248] sm:$0xff]
    %v369 = vld [vmem:[%s3 + $0x250] sm:$0xff]
    %v370 = vld [vmem:[%s3 + $0x258] sm:$0xff]
    %v371 = vld [vmem:[%s3 + $0x260] sm:$0xff]
    %v372 = vld [vmem:[%s3 + $0x268] sm:$0xff]
    %v373 = vld [vmem:[%s3 + $0x270] sm:$0xff]
    %v374 = vld [vmem:[%s3 + $0x278] sm:$0xff]
    %v375 = vld [vmem:[%s3 + $0x280] sm:$0xff]
    %v376 = vld [vmem:[%s3 + $0x288] sm:$0xff]
    %v377 = vld [vmem:[%s3 + $0x290] sm:$0xff]
    %v378 = vld [vmem:[%s3 + $0x298] sm:$0xff]
    %v379 = vld [vmem:[%s3 + $0x2a0] sm:$0xff]
    %v380 = vld [vmem:[%s3 + $0x2a8] sm:$0xff]
    %v381 = vld [vmem:[%s3 + $0x2b0] sm:$0xff]
    %v382 = vld [vmem:[%s3 + $0x2b8] sm:$0xff]
    %v383 = vld [vmem:[%s3 + $0x2c0] sm:$0xff]
    %v384 = vld [vmem:[%s3 + $0x2c8] sm:$0xff]
    %v385 = vld [vmem:[%s3 + $0x2d0] sm:$0xff]
    %v386 = vld [vmem:[%s3 + $0x2d8] sm:$0xff]
    %v387 = vld [vmem:[%s3 + $0x2e0] sm:$0xff]
    %v388 = vld [vmem:[%s3 + $0x2e8] sm:$0xff]
    %v389 = vld [vmem:[%s3 + $0x2f0] sm:$0xff]
    %v390 = vld [vmem:[%s3 + $0x2f8] sm:$0xff]
    %v391 = vld [vmem:[%s3 + $0x300] sm:$0xff]
    %v392 = vld [vmem:[%s3 + $0x308] sm:$0xff]
    %v393 = vld [vmem:[%s3 + $0x310] sm:$0xff]
    %v394 = vld [vmem:[%s3 + $0x318] sm:$0xff]
    %v395 = vld [vmem:[%s3 + $0x320] sm:$0xff]
    %v396 = vld [vmem:[%s3 + $0x328] sm:$0xff]
    %v397 = vld [vmem:[%s3 + $0x330] sm:$0xff]
    %v398 = vld [vmem:[%s3 + $0x338] sm:$0xff]
    %v399 = vld [vmem:[%s3 + $0x340] sm:$0xff]
    %v400 = vld [vmem:[%s3 + $0x348] sm:$0xff]
    %v401 = vld [vmem:[%s3 + $0x350] sm:$0xff]
    %v402 = vld [vmem:[%s3 + $0x358] sm:$0xff]
    %v403 = vld [vmem:[%s3 + $0x360] sm:$0xff]
    %v404 = vld [vmem:[%s3 + $0x368] sm:$0xff]
    %v405 = vld [vmem:[%s3 + $0x370] sm:$0xff]
    %v406 = vld [vmem:[%s3 + $0x378] sm:$0xff]
    %v407 = vld [vmem:[%s3 + $0x380] sm:$0xff]
    %v408 = vld [vmem:[%s3 + $0x388] sm:$0xff]
    %v409 = vld [vmem:[%s3 + $0x390] sm:$0xff]
    %v410 = vld [vmem:[%s3 + $0x398] sm:$0xff]
    %v411 = vld [vmem:[%s3 + $0x3a0] sm:$0xff]
    %v412 = vld [vmem:[%s3 + $0x3a8] sm:$0xff]
    %v413 = vld [vmem:[%s3 + $0x3b0] sm:$0xff]
    %v414 = vld [vmem:[%s3 + $0x3b8] sm:$0xff]
    %v415 = vld [vmem:[%s3 + $0x3c0] sm:$0xff]
    %v416 = vld [vmem:[%s3 + $0x3c8] sm:$0xff]
    %v417 = vld [vmem:[%s3 + $0x3d0] sm:$0xff]
    %v418 = vld [vmem:[%s3 + $0x3d8] sm:$0xff]
    %v419 = vld [vmem:[%s3 + $0x3e0] sm:$0xff]
    %v420 = vld [vmem:[%s3 + $0x3e8] sm:$0xff]
    %v421 = vld [vmem:[%s3 + $0x3f0] sm:$0xff]
    %v422 = vld [vmem:[%s3 + $0x3f8] sm:$0xff]
    %v423 = vld [vmem:[%s4] sm:$0xff]
    %v425 = vperm.slane %v423, 0
    %v426 = vperm.slane %v423, 1
    %v427 = vperm.slane %v423, 2
    %v428 = vperm.slane %v423, 3
    %v429 = vperm.slane %v423, 4
    %v430 = vperm.slane %v423, 5
    %v431 = vperm.slane %v423, 6
    %v432 = vperm.slane %v423, 7
    %v441 = vld [vmem:[#allocation2] sm:$0xff]
    %v442 = vld [vmem:[#allocation2 + $0x8] sm:$0xff]
    %v443 = vld [vmem:[#allocation3] sm:$0xff]
    %v444 = vld [vmem:[#allocation3 + $0x8] sm:$0xff]
    %v445 = vld [vmem:[#allocation4] sm:$0xff]
    %v446 = vld [vmem:[#allocation4 + $0x8] sm:$0xff]
    %v447 = vld [vmem:[#allocation5] sm:$0xff]
    %v448 = vld [vmem:[#allocation5 + $0x8] sm:$0xff]
    %v449 = vld [vmem:[%s0] sm:$0xff]
    %v450 = vld [vmem:[%s0 + $0x8] sm:$0xff]
    %v451 = vld [vmem:[%s0 + $0x10] sm:$0xff]
    %v452 = vld [vmem:[%s0 + $0x18] sm:$0xff]
    %v453 = vunpack.c.l.bf16 %v449
    %v454 = vunpack.c.h.bf16 %v449
    %v455 = vunpack.c.l.bf16 %v450
    %v456 = vunpack.c.h.bf16 %v450
    %v457 = vunpack.c.l.bf16 %v451
    %v458 = vunpack.c.h.bf16 %v451
    %v459 = vunpack.c.l.bf16 %v452
    %v460 = vunpack.c.h.bf16 %v452
    %v461 = vpack.c.bf16 %v445, %v445
    %v462 = vpack.c.bf16 %v446, %v446
    %v463 = vpack.c.bf16 %v441, %v441
    %v464 = vpack.c.bf16 %v442, %v442
    %v593 = vunpack.c.l.b16 %v39
    %v594 = vunpack.c.h.b16 %v39
    %v595 = vunpack.c.l.b16 %v40
    %v596 = vunpack.c.h.b16 %v40
    %v597 = vunpack.c.l.b16 %v41
    %v598 = vunpack.c.h.b16 %v41
    %v599 = vunpack.c.l.b16 %v42
    %v600 = vunpack.c.h.b16 %v42
    %v601 = vunpack.c.l.b16 %v43
    %v602 = vunpack.c.h.b16 %v43
    %v603 = vunpack.c.l.b16 %v44
    %v604 = vunpack.c.h.b16 %v44
    %v605 = vunpack.c.l.b16 %v45
    %v606 = vunpack.c.h.b16 %v45
    %v607 = vunpack.c.l.b16 %v46
    %v608 = vunpack.c.h.b16 %v46
    %v609 = vunpack.c.l.b16 %v47
    %v610 = vunpack.c.h.b16 %v47
    %v611 = vunpack.c.l.b16 %v48
    %v612 = vunpack.c.h.b16 %v48
    %v613 = vunpack.c.l.b16 %v49
    %v614 = vunpack.c.h.b16 %v49
    %v615 = vunpack.c.l.b16 %v50
    %v616 = vunpack.c.h.b16 %v50
    %v617 = vunpack.c.l.b16 %v51
    %v618 = vunpack.c.h.b16 %v51
    %v619 = vunpack.c.l.b16 %v52
    %v620 = vunpack.c.h.b16 %v52
    %v621 = vunpack.c.l.b16 %v53
    %v622 = vunpack.c.h.b16 %v53
    %v623 = vunpack.c.l.b16 %v54
    %v624 = vunpack.c.h.b16 %v54
    %v625 = vunpack.c.l.b16 %v55
    %v626 = vunpack.c.h.b16 %v55
    %v627 = vunpack.c.l.b16 %v56
    %v628 = vunpack.c.h.b16 %v56
    %v629 = vunpack.c.l.b16 %v57
    %v630 = vunpack.c.h.b16 %v57
    %v631 = vunpack.c.l.b16 %v58
    %v632 = vunpack.c.h.b16 %v58
    %v633 = vunpack.c.l.b16 %v59
    %v634 = vunpack.c.h.b16 %v59
    %v635 = vunpack.c.l.b16 %v60
    %v636 = vunpack.c.h.b16 %v60
    %v637 = vunpack.c.l.b16 %v61
    %v638 = vunpack.c.h.b16 %v61
    %v639 = vunpack.c.l.b16 %v62
    %v640 = vunpack.c.h.b16 %v62
    %v641 = vunpack.c.l.b16 %v63
    %v642 = vunpack.c.h.b16 %v63
    %v643 = vunpack.c.l.b16 %v64
    %v644 = vunpack.c.h.b16 %v64
    %v645 = vunpack.c.l.b16 %v65
    %v646 = vunpack.c.h.b16 %v65
    %v647 = vunpack.c.l.b16 %v66
    %v648 = vunpack.c.h.b16 %v66
    %v649 = vunpack.c.l.b16 %v67
    %v650 = vunpack.c.h.b16 %v67
    %v651 = vunpack.c.l.b16 %v68
    %v652 = vunpack.c.h.b16 %v68
    %v653 = vunpack.c.l.b16 %v69
    %v654 = vunpack.c.h.b16 %v69
    %v655 = vunpack.c.l.b16 %v70
    %v656 = vunpack.c.h.b16 %v70
    %v657 = vunpack.c.l.b16 %v71
    %v658 = vunpack.c.h.b16 %v71
    %v659 = vunpack.c.l.b16 %v72
    %v660 = vunpack.c.h.b16 %v72
    %v661 = vunpack.c.l.b16 %v73
    %v662 = vunpack.c.h.b16 %v73
    %v663 = vunpack.c.l.b16 %v74
    %v664 = vunpack.c.h.b16 %v74
    %v665 = vunpack.c.l.b16 %v75
    %v666 = vunpack.c.h.b16 %v75
    %v667 = vunpack.c.l.b16 %v76
    %v668 = vunpack.c.h.b16 %v76
    %v669 = vunpack.c.l.b16 %v77
    %v670 = vunpack.c.h.b16 %v77
    %v671 = vunpack.c.l.b16 %v78
    %v672 = vunpack.c.h.b16 %v78
    %v673 = vunpack.c.l.b16 %v79
    %v674 = vunpack.c.h.b16 %v79
    %v675 = vunpack.c.l.b16 %v80
    %v676 = vunpack.c.h.b16 %v80
    %v677 = vunpack.c.l.b16 %v81
    %v678 = vunpack.c.h.b16 %v81
    %v679 = vunpack.c.l.b16 %v82
    %v680 = vunpack.c.h.b16 %v82
    %v681 = vunpack.c.l.b16 %v83
    %v682 = vunpack.c.h.b16 %v83
    %v683 = vunpack.c.l.b16 %v84
    %v684 = vunpack.c.h.b16 %v84
    %v685 = vunpack.c.l.b16 %v85
    %v686 = vunpack.c.h.b16 %v85
    %v687 = vunpack.c.l.b16 %v86
    %v688 = vunpack.c.h.b16 %v86
    %v689 = vunpack.c.l.b16 %v87
    %v690 = vunpack.c.h.b16 %v87
    %v691 = vunpack.c.l.b16 %v88
    %v692 = vunpack.c.h.b16 %v88
    %v693 = vunpack.c.l.b16 %v89
    %v694 = vunpack.c.h.b16 %v89
    %v695 = vunpack.c.l.b16 %v90
    %v696 = vunpack.c.h.b16 %v90
    %v697 = vunpack.c.l.b16 %v91
    %v698 = vunpack.c.h.b16 %v91
    %v699 = vunpack.c.l.b16 %v92
    %v700 = vunpack.c.h.b16 %v92
    %v701 = vunpack.c.l.b16 %v93
    %v702 = vunpack.c.h.b16 %v93
    %v703 = vunpack.c.l.b16 %v94
    %v704 = vunpack.c.h.b16 %v94
    %v705 = vunpack.c.l.b16 %v95
    %v706 = vunpack.c.h.b16 %v95
    %v707 = vunpack.c.l.b16 %v96
    %v708 = vunpack.c.h.b16 %v96
    %v709 = vunpack.c.l.b16 %v97
    %v710 = vunpack.c.h.b16 %v97
    %v711 = vunpack.c.l.b16 %v98
    %v712 = vunpack.c.h.b16 %v98
    %v713 = vunpack.c.l.b16 %v99
    %v714 = vunpack.c.h.b16 %v99
    %v715 = vunpack.c.l.b16 %v100
    %v716 = vunpack.c.h.b16 %v100
    %v717 = vunpack.c.l.b16 %v101
    %v718 = vunpack.c.h.b16 %v101
    %v719 = vunpack.c.l.b16 %v102
    %v720 = vunpack.c.h.b16 %v102
    %v721 = vunpack.c.l.b16 %v103
    %v722 = vunpack.c.h.b16 %v103
    %v723 = vunpack.c.l.b16 %v104
    %v724 = vunpack.c.h.b16 %v104
    %v725 = vunpack.c.l.b16 %v105
    %v726 = vunpack.c.h.b16 %v105
    %v727 = vunpack.c.l.b16 %v106
    %v728 = vunpack.c.h.b16 %v106
    %v729 = vunpack.c.l.b16 %v107
    %v730 = vunpack.c.h.b16 %v107
    %v731 = vunpack.c.l.b16 %v108
    %v732 = vunpack.c.h.b16 %v108
    %v733 = vunpack.c.l.b16 %v109
    %v734 = vunpack.c.h.b16 %v109
    %v735 = vunpack.c.l.b16 %v110
    %v736 = vunpack.c.h.b16 %v110
    %v737 = vunpack.c.l.b16 %v111
    %v738 = vunpack.c.h.b16 %v111
    %v739 = vunpack.c.l.b16 %v112
    %v740 = vunpack.c.h.b16 %v112
    %v741 = vunpack.c.l.b16 %v113
    %v742 = vunpack.c.h.b16 %v113
    %v743 = vunpack.c.l.b16 %v114
    %v744 = vunpack.c.h.b16 %v114
    %v745 = vunpack.c.l.b16 %v115
    %v746 = vunpack.c.h.b16 %v115
    %v747 = vunpack.c.l.b16 %v116
    %v748 = vunpack.c.h.b16 %v116
    %v749 = vunpack.c.l.b16 %v117
    %v750 = vunpack.c.h.b16 %v117
    %v751 = vunpack.c.l.b16 %v118
    %v752 = vunpack.c.h.b16 %v118
    %v753 = vunpack.c.l.b16 %v119
    %v754 = vunpack.c.h.b16 %v119
    %v755 = vunpack.c.l.b16 %v120
    %v756 = vunpack.c.h.b16 %v120
    %v757 = vunpack.c.l.b16 %v121
    %v758 = vunpack.c.h.b16 %v121
    %v759 = vunpack.c.l.b16 %v122
    %v760 = vunpack.c.h.b16 %v122
    %v761 = vunpack.c.l.b16 %v123
    %v762 = vunpack.c.h.b16 %v123
    %v763 = vunpack.c.l.b16 %v124
    %v764 = vunpack.c.h.b16 %v124
    %v765 = vunpack.c.l.b16 %v125
    %v766 = vunpack.c.h.b16 %v125
    %v767 = vunpack.c.l.b16 %v126
    %v768 = vunpack.c.h.b16 %v126
    %v769 = vunpack.c.l.b16 %v127
    %v770 = vunpack.c.h.b16 %v127
    %v771 = vunpack.c.l.b16 %v128
    %v772 = vunpack.c.h.b16 %v128
    %v773 = vunpack.c.l.b16 %v129
    %v774 = vunpack.c.h.b16 %v129
    %v775 = vunpack.c.l.b16 %v130
    %v776 = vunpack.c.h.b16 %v130
    %v777 = vunpack.c.l.b16 %v131
    %v778 = vunpack.c.h.b16 %v131
    %v779 = vunpack.c.l.b16 %v132
    %v780 = vunpack.c.h.b16 %v132
    %v781 = vunpack.c.l.b16 %v133
    %v782 = vunpack.c.h.b16 %v133
    %v783 = vunpack.c.l.b16 %v134
    %v784 = vunpack.c.h.b16 %v134
    %v785 = vunpack.c.l.b16 %v135
    %v786 = vunpack.c.h.b16 %v135
    %v787 = vunpack.c.l.b16 %v136
    %v788 = vunpack.c.h.b16 %v136
    %v789 = vunpack.c.l.b16 %v137
    %v790 = vunpack.c.h.b16 %v137
    %v791 = vunpack.c.l.b16 %v138
    %v792 = vunpack.c.h.b16 %v138
    %v793 = vunpack.c.l.b16 %v139
    %v794 = vunpack.c.h.b16 %v139
    %v795 = vunpack.c.l.b16 %v140
    %v796 = vunpack.c.h.b16 %v140
    %v797 = vunpack.c.l.b16 %v141
    %v798 = vunpack.c.h.b16 %v141
    %v799 = vunpack.c.l.b16 %v142
    %v800 = vunpack.c.h.b16 %v142
    %v801 = vunpack.c.l.b16 %v143
    %v802 = vunpack.c.h.b16 %v143
    %v803 = vunpack.c.l.b16 %v144
    %v804 = vunpack.c.h.b16 %v144
    %v805 = vunpack.c.l.b16 %v145
    %v806 = vunpack.c.h.b16 %v145
    %v807 = vunpack.c.l.b16 %v146
    %v808 = vunpack.c.h.b16 %v146
    %v809 = vunpack.c.l.b16 %v147
    %v810 = vunpack.c.h.b16 %v147
    %v811 = vunpack.c.l.b16 %v148
    %v812 = vunpack.c.h.b16 %v148
    %v813 = vunpack.c.l.b16 %v149
    %v814 = vunpack.c.h.b16 %v149
    %v815 = vunpack.c.l.b16 %v150
    %v816 = vunpack.c.h.b16 %v150
    %v817 = vunpack.c.l.b16 %v151
    %v818 = vunpack.c.h.b16 %v151
    %v819 = vunpack.c.l.b16 %v152
    %v820 = vunpack.c.h.b16 %v152
    %v821 = vunpack.c.l.b16 %v153
    %v822 = vunpack.c.h.b16 %v153
    %v823 = vunpack.c.l.b16 %v154
    %v824 = vunpack.c.h.b16 %v154
    %v825 = vunpack.c.l.b16 %v155
    %v826 = vunpack.c.h.b16 %v155
    %v827 = vunpack.c.l.b16 %v156
    %v828 = vunpack.c.h.b16 %v156
    %v829 = vunpack.c.l.b16 %v157
    %v830 = vunpack.c.h.b16 %v157
    %v831 = vunpack.c.l.b16 %v158
    %v832 = vunpack.c.h.b16 %v158
    %v833 = vunpack.c.l.b16 %v159
    %v834 = vunpack.c.h.b16 %v159
    %v835 = vunpack.c.l.b16 %v160
    %v836 = vunpack.c.h.b16 %v160
    %v837 = vunpack.c.l.b16 %v161
    %v838 = vunpack.c.h.b16 %v161
    %v839 = vunpack.c.l.b16 %v162
    %v840 = vunpack.c.h.b16 %v162
    %v841 = vunpack.c.l.b16 %v163
    %v842 = vunpack.c.h.b16 %v163
    %v843 = vunpack.c.l.b16 %v164
    %v844 = vunpack.c.h.b16 %v164
    %v845 = vunpack.c.l.b16 %v165
    %v846 = vunpack.c.h.b16 %v165
    %v847 = vunpack.c.l.b16 %v166
    %v848 = vunpack.c.h.b16 %v166
    %v849 = vpack.c.b16 %v601, %v593
    %v850 = vpack.c.b16 %v602, %v594
    %v851 = vpack.c.b16 %v603, %v595
    %v852 = vpack.c.b16 %v604, %v596
    %v853 = vpack.c.b16 %v605, %v597
    %v854 = vpack.c.b16 %v606, %v598
    %v855 = vpack.c.b16 %v607, %v599
    %v856 = vpack.c.b16 %v608, %v600
    %v857 = vpack.c.b16 %v617, %v609
    %v858 = vpack.c.b16 %v618, %v610
    %v859 = vpack.c.b16 %v619, %v611
    %v860 = vpack.c.b16 %v620, %v612
    %v861 = vpack.c.b16 %v621, %v613
    %v862 = vpack.c.b16 %v622, %v614
    %v863 = vpack.c.b16 %v623, %v615
    %v864 = vpack.c.b16 %v624, %v616
    %v865 = vpack.c.b16 %v633, %v625
    %v866 = vpack.c.b16 %v634, %v626
    %v867 = vpack.c.b16 %v635, %v627
    %v868 = vpack.c.b16 %v636, %v628
    %v869 = vpack.c.b16 %v637, %v629
    %v870 = vpack.c.b16 %v638, %v630
    %v871 = vpack.c.b16 %v639, %v631
    %v872 = vpack.c.b16 %v640, %v632
    %v873 = vpack.c.b16 %v649, %v641
    %v874 = vpack.c.b16 %v650, %v642
    %v875 = vpack.c.b16 %v651, %v643
    %v876 = vpack.c.b16 %v652, %v644
    %v877 = vpack.c.b16 %v653, %v645
    %v878 = vpack.c.b16 %v654, %v646
    %v879 = vpack.c.b16 %v655, %v647
    %v880 = vpack.c.b16 %v656, %v648
    %v881 = vpack.c.b16 %v665, %v657
    %v882 = vpack.c.b16 %v666, %v658
    %v883 = vpack.c.b16 %v667, %v659
    %v884 = vpack.c.b16 %v668, %v660
    %v885 = vpack.c.b16 %v669, %v661
    %v886 = vpack.c.b16 %v670, %v662
    %v887 = vpack.c.b16 %v671, %v663
    %v888 = vpack.c.b16 %v672, %v664
    %v889 = vpack.c.b16 %v681, %v673
    %v890 = vpack.c.b16 %v682, %v674
    %v891 = vpack.c.b16 %v683, %v675
    %v892 = vpack.c.b16 %v684, %v676
    %v893 = vpack.c.b16 %v685, %v677
    %v894 = vpack.c.b16 %v686, %v678
    %v895 = vpack.c.b16 %v687, %v679
    %v896 = vpack.c.b16 %v688, %v680
    %v897 = vpack.c.b16 %v697, %v689
    %v898 = vpack.c.b16 %v698, %v690
    %v899 = vpack.c.b16 %v699, %v691
    %v900 = vpack.c.b16 %v700, %v692
    %v901 = vpack.c.b16 %v701, %v693
    %v902 = vpack.c.b16 %v702, %v694
    %v903 = vpack.c.b16 %v703, %v695
    %v904 = vpack.c.b16 %v704, %v696
    %v905 = vpack.c.b16 %v713, %v705
    %v906 = vpack.c.b16 %v714, %v706
    %v907 = vpack.c.b16 %v715, %v707
    %v908 = vpack.c.b16 %v716, %v708
    %v909 = vpack.c.b16 %v717, %v709
    %v910 = vpack.c.b16 %v718, %v710
    %v911 = vpack.c.b16 %v719, %v711
    %v912 = vpack.c.b16 %v720, %v712
    %v913 = vpack.c.b16 %v729, %v721
    %v914 = vpack.c.b16 %v730, %v722
    %v915 = vpack.c.b16 %v731, %v723
    %v916 = vpack.c.b16 %v732, %v724
    %v917 = vpack.c.b16 %v733, %v725
    %v918 = vpack.c.b16 %v734, %v726
    %v919 = vpack.c.b16 %v735, %v727
    %v920 = vpack.c.b16 %v736, %v728
    %v921 = vpack.c.b16 %v745, %v737
    %v922 = vpack.c.b16 %v746, %v738
    %v923 = vpack.c.b16 %v747, %v739
    %v924 = vpack.c.b16 %v748, %v740
    %v925 = vpack.c.b16 %v749, %v741
    %v926 = vpack.c.b16 %v750, %v742
    %v927 = vpack.c.b16 %v751, %v743
    %v928 = vpack.c.b16 %v752, %v744
    %v929 = vpack.c.b16 %v761, %v753
    %v930 = vpack.c.b16 %v762, %v754
    %v931 = vpack.c.b16 %v763, %v755
    %v932 = vpack.c.b16 %v764, %v756
    %v933 = vpack.c.b16 %v765, %v757
    %v934 = vpack.c.b16 %v766, %v758
    %v935 = vpack.c.b16 %v767, %v759
    %v936 = vpack.c.b16 %v768, %v760
    %v937 = vpack.c.b16 %v777, %v769
    %v938 = vpack.c.b16 %v778, %v770
    %v939 = vpack.c.b16 %v779, %v771
    %v940 = vpack.c.b16 %v780, %v772
    %v941 = vpack.c.b16 %v781, %v773
    %v942 = vpack.c.b16 %v782, %v774
    %v943 = vpack.c.b16 %v783, %v775
    %v944 = vpack.c.b16 %v784, %v776
    %v945 = vpack.c.b16 %v793, %v785
    %v946 = vpack.c.b16 %v794, %v786
    %v947 = vpack.c.b16 %v795, %v787
    %v948 = vpack.c.b16 %v796, %v788
    %v949 = vpack.c.b16 %v797, %v789
    %v950 = vpack.c.b16 %v798, %v790
    %v951 = vpack.c.b16 %v799, %v791
    %v952 = vpack.c.b16 %v800, %v792
    %v953 = vpack.c.b16 %v809, %v801
    %v954 = vpack.c.b16 %v810, %v802
    %v955 = vpack.c.b16 %v811, %v803
    %v956 = vpack.c.b16 %v812, %v804
    %v957 = vpack.c.b16 %v813, %v805
    %v958 = vpack.c.b16 %v814, %v806
    %v959 = vpack.c.b16 %v815, %v807
    %v960 = vpack.c.b16 %v816, %v808
    %v961 = vpack.c.b16 %v825, %v817
    %v962 = vpack.c.b16 %v826, %v818
    %v963 = vpack.c.b16 %v827, %v819
    %v964 = vpack.c.b16 %v828, %v820
    %v965 = vpack.c.b16 %v829, %v821
    %v966 = vpack.c.b16 %v830, %v822
    %v967 = vpack.c.b16 %v831, %v823
    %v968 = vpack.c.b16 %v832, %v824
    %v969 = vpack.c.b16 %v841, %v833
    %v970 = vpack.c.b16 %v842, %v834
    %v971 = vpack.c.b16 %v843, %v835
    %v972 = vpack.c.b16 %v844, %v836
    %v973 = vpack.c.b16 %v845, %v837
    %v974 = vpack.c.b16 %v846, %v838
    %v975 = vpack.c.b16 %v847, %v839
    %v976 = vpack.c.b16 %v848, %v840
    %1105 = vmatpush.bf16.msra.mxu0 %v905
    %1106 = vmatpush.bf16.msra.mxu0 %v897
    %1107 = vmatpush.bf16.msra.mxu0 %v889
    %1108 = vmatpush.bf16.msra.mxu0 %v881
    %1109 = vmatpush.bf16.msra.mxu0 %v873
    %1110 = vmatpush.bf16.msra.mxu0 %v865
    %1111 = vmatpush.bf16.msra.mxu0 %v857
    %1112 = vmatpush.bf16.msra.mxu0 %v849
    %1113 = vmatmul.bf16.gmra.mxu0 %v463
    %v1114 = vpop.f32.mrf.mxu0
    %v1115 = vadd.f32 0.0, %v1114
    %v1116 = vpop.f32.mrf.mxu0
    %1117 = vdwg.mxu0
    %1118 = vmatpush.bf16.msra.mxu0 %v969
    %1119 = vmatpush.bf16.msra.mxu0 %v961
    %1120 = vmatpush.bf16.msra.mxu0 %v953
    %1121 = vmatpush.bf16.msra.mxu0 %v945
    %1122 = vmatpush.bf16.msra.mxu0 %v937
    %1123 = vmatpush.bf16.msra.mxu0 %v929
    %1124 = vmatpush.bf16.msra.mxu0 %v921
    %1125 = vmatpush.bf16.msra.mxu0 %v913
    %1126 = vmatmul.bf16.gmra.mxu0 %v464
    %v1127 = vpop.f32.mrf.mxu0
    %v1128 = vadd.f32 %v1115, %v1127
    %v1129 = vpop.f32.mrf.mxu0
    %1130 = vdwg.mxu0
    %1131 = vmatpush.bf16.msra.mxu0 %v906
    %1132 = vmatpush.bf16.msra.mxu0 %v898
    %1133 = vmatpush.bf16.msra.mxu0 %v890
    %1134 = vmatpush.bf16.msra.mxu0 %v882
    %1135 = vmatpush.bf16.msra.mxu0 %v874
    %1136 = vmatpush.bf16.msra.mxu0 %v866
    %1137 = vmatpush.bf16.msra.mxu0 %v858
    %1138 = vmatpush.bf16.msra.mxu0 %v850
    %1139 = vmatmul.bf16.gmra.mxu0 %v463
    %v1140 = vpop.f32.mrf.mxu0
    %v1141 = vadd.f32 0.0, %v1140
    %v1142 = vpop.f32.mrf.mxu0
    %1143 = vdwg.mxu0
    %1144 = vmatpush.bf16.msra.mxu0 %v970
    %1145 = vmatpush.bf16.msra.mxu0 %v962
    %1146 = vmatpush.bf16.msra.mxu0 %v954
    %1147 = vmatpush.bf16.msra.mxu0 %v946
    %1148 = vmatpush.bf16.msra.mxu0 %v938
    %1149 = vmatpush.bf16.msra.mxu0 %v930
    %1150 = vmatpush.bf16.msra.mxu0 %v922
    %1151 = vmatpush.bf16.msra.mxu0 %v914
    %1152 = vmatmul.bf16.gmra.mxu0 %v464
    %v1153 = vpop.f32.mrf.mxu0
    %v1154 = vadd.f32 %v1141, %v1153
    %v1155 = vpop.f32.mrf.mxu0
    %1156 = vdwg.mxu0
    %1157 = vmatpush.bf16.msra.mxu0 %v907
    %1158 = vmatpush.bf16.msra.mxu0 %v899
    %1159 = vmatpush.bf16.msra.mxu0 %v891
    %1160 = vmatpush.bf16.msra.mxu0 %v883
    %1161 = vmatpush.bf16.msra.mxu0 %v875
    %1162 = vmatpush.bf16.msra.mxu0 %v867
    %1163 = vmatpush.bf16.msra.mxu0 %v859
    %1164 = vmatpush.bf16.msra.mxu0 %v851
    %1165 = vmatmul.bf16.gmra.mxu0 %v463
    %v1166 = vpop.f32.mrf.mxu0
    %v1167 = vadd.f32 0.0, %v1166
    %v1168 = vpop.f32.mrf.mxu0
    %1169 = vdwg.mxu0
    %1170 = vmatpush.bf16.msra.mxu0 %v971
    %1171 = vmatpush.bf16.msra.mxu0 %v963
    %1172 = vmatpush.bf16.msra.mxu0 %v955
    %1173 = vmatpush.bf16.msra.mxu0 %v947
    %1174 = vmatpush.bf16.msra.mxu0 %v939
    %1175 = vmatpush.bf16.msra.mxu0 %v931
    %1176 = vmatpush.bf16.msra.mxu0 %v923
    %1177 = vmatpush.bf16.msra.mxu0 %v915
    %1178 = vmatmul.bf16.gmra.mxu0 %v464
    %v1179 = vpop.f32.mrf.mxu0
    %v1180 = vadd.f32 %v1167, %v1179
    %v1181 = vpop.f32.mrf.mxu0
    %1182 = vdwg.mxu0
    %1183 = vmatpush.bf16.msra.mxu0 %v908
    %1184 = vmatpush.bf16.msra.mxu0 %v900
    %1185 = vmatpush.bf16.msra.mxu0 %v892
    %1186 = vmatpush.bf16.msra.mxu0 %v884
    %1187 = vmatpush.bf16.msra.mxu0 %v876
    %1188 = vmatpush.bf16.msra.mxu0 %v868
    %1189 = vmatpush.bf16.msra.mxu0 %v860
    %1190 = vmatpush.bf16.msra.mxu0 %v852
    %1191 = vmatmul.bf16.gmra.mxu0 %v463
    %v1192 = vpop.f32.mrf.mxu0
    %v1193 = vadd.f32 0.0, %v1192
    %v1194 = vpop.f32.mrf.mxu0
    %1195 = vdwg.mxu0
    %1196 = vmatpush.bf16.msra.mxu0 %v972
    %1197 = vmatpush.bf16.msra.mxu0 %v964
    %1198 = vmatpush.bf16.msra.mxu0 %v956
    %1199 = vmatpush.bf16.msra.mxu0 %v948
    %1200 = vmatpush.bf16.msra.mxu0 %v940
    %1201 = vmatpush.bf16.msra.mxu0 %v932
    %1202 = vmatpush.bf16.msra.mxu0 %v924
    %1203 = vmatpush.bf16.msra.mxu0 %v916
    %1204 = vmatmul.bf16.gmra.mxu0 %v464
    %v1205 = vpop.f32.mrf.mxu0
    %v1206 = vadd.f32 %v1193, %v1205
    %v1207 = vpop.f32.mrf.mxu0
    %1208 = vdwg.mxu0
    %1209 = vmatpush.bf16.msra.mxu0 %v909
    %1210 = vmatpush.bf16.msra.mxu0 %v901
    %1211 = vmatpush.bf16.msra.mxu0 %v893
    %1212 = vmatpush.bf16.msra.mxu0 %v885
    %1213 = vmatpush.bf16.msra.mxu0 %v877
    %1214 = vmatpush.bf16.msra.mxu0 %v869
    %1215 = vmatpush.bf16.msra.mxu0 %v861
    %1216 = vmatpush.bf16.msra.mxu0 %v853
    %1217 = vmatmul.bf16.gmra.mxu0 %v463
    %v1218 = vpop.f32.mrf.mxu0
    %v1219 = vadd.f32 0.0, %v1218
    %v1220 = vpop.f32.mrf.mxu0
    %1221 = vdwg.mxu0
    %1222 = vmatpush.bf16.msra.mxu0 %v973
    %1223 = vmatpush.bf16.msra.mxu0 %v965
    %1224 = vmatpush.bf16.msra.mxu0 %v957
    %1225 = vmatpush.bf16.msra.mxu0 %v949
    %1226 = vmatpush.bf16.msra.mxu0 %v941
    %1227 = vmatpush.bf16.msra.mxu0 %v933
    %1228 = vmatpush.bf16.msra.mxu0 %v925
    %1229 = vmatpush.bf16.msra.mxu0 %v917
    %1230 = vmatmul.bf16.gmra.mxu0 %v464
    %v1231 = vpop.f32.mrf.mxu0
    %v1232 = vadd.f32 %v1219, %v1231
    %v1233 = vpop.f32.mrf.mxu0
    %1234 = vdwg.mxu0
    %1235 = vmatpush.bf16.msra.mxu0 %v910
    %1236 = vmatpush.bf16.msra.mxu0 %v902
    %1237 = vmatpush.bf16.msra.mxu0 %v894
    %1238 = vmatpush.bf16.msra.mxu0 %v886
    %1239 = vmatpush.bf16.msra.mxu0 %v878
    %1240 = vmatpush.bf16.msra.mxu0 %v870
    %1241 = vmatpush.bf16.msra.mxu0 %v862
    %1242 = vmatpush.bf16.msra.mxu0 %v854
    %1243 = vmatmul.bf16.gmra.mxu0 %v463
    %v1244 = vpop.f32.mrf.mxu0
    %v1245 = vadd.f32 0.0, %v1244
    %v1246 = vpop.f32.mrf.mxu0
    %1247 = vdwg.mxu0
    %1248 = vmatpush.bf16.msra.mxu0 %v974
    %1249 = vmatpush.bf16.msra.mxu0 %v966
    %1250 = vmatpush.bf16.msra.mxu0 %v958
    %1251 = vmatpush.bf16.msra.mxu0 %v950
    %1252 = vmatpush.bf16.msra.mxu0 %v942
    %1253 = vmatpush.bf16.msra.mxu0 %v934
    %1254 = vmatpush.bf16.msra.mxu0 %v926
    %1255 = vmatpush.bf16.msra.mxu0 %v918
    %1256 = vmatmul.bf16.gmra.mxu0 %v464
    %v1257 = vpop.f32.mrf.mxu0
    %v1258 = vadd.f32 %v1245, %v1257
    %v1259 = vpop.f32.mrf.mxu0
    %1260 = vdwg.mxu0
    %1261 = vmatpush.bf16.msra.mxu0 %v911
    %1262 = vmatpush.bf16.msra.mxu0 %v903
    %1263 = vmatpush.bf16.msra.mxu0 %v895
    %1264 = vmatpush.bf16.msra.mxu0 %v887
    %1265 = vmatpush.bf16.msra.mxu0 %v879
    %1266 = vmatpush.bf16.msra.mxu0 %v871
    %1267 = vmatpush.bf16.msra.mxu0 %v863
    %1268 = vmatpush.bf16.msra.mxu0 %v855
    %1269 = vmatmul.bf16.gmra.mxu0 %v463
    %v1270 = vpop.f32.mrf.mxu0
    %v1271 = vadd.f32 0.0, %v1270
    %v1272 = vpop.f32.mrf.mxu0
    %1273 = vdwg.mxu0
    %1274 = vmatpush.bf16.msra.mxu0 %v975
    %1275 = vmatpush.bf16.msra.mxu0 %v967
    %1276 = vmatpush.bf16.msra.mxu0 %v959
    %1277 = vmatpush.bf16.msra.mxu0 %v951
    %1278 = vmatpush.bf16.msra.mxu0 %v943
    %1279 = vmatpush.bf16.msra.mxu0 %v935
    %1280 = vmatpush.bf16.msra.mxu0 %v927
    %1281 = vmatpush.bf16.msra.mxu0 %v919
    %1282 = vmatmul.bf16.gmra.mxu0 %v464
    %v1283 = vpop.f32.mrf.mxu0
    %v1284 = vadd.f32 %v1271, %v1283
    %v1285 = vpop.f32.mrf.mxu0
    %1286 = vdwg.mxu0
    %1287 = vmatpush.bf16.msra.mxu0 %v912
    %1288 = vmatpush.bf16.msra.mxu0 %v904
    %1289 = vmatpush.bf16.msra.mxu0 %v896
    %1290 = vmatpush.bf16.msra.mxu0 %v888
    %1291 = vmatpush.bf16.msra.mxu0 %v880
    %1292 = vmatpush.bf16.msra.mxu0 %v872
    %1293 = vmatpush.bf16.msra.mxu0 %v864
    %1294 = vmatpush.bf16.msra.mxu0 %v856
    %1295 = vmatmul.bf16.gmra.mxu0 %v463
    %v1296 = vpop.f32.mrf.mxu0
    %v1297 = vadd.f32 0.0, %v1296
    %v1298 = vpop.f32.mrf.mxu0
    %1299 = vdwg.mxu0
    %1300 = vmatpush.bf16.msra.mxu0 %v976
    %1301 = vmatpush.bf16.msra.mxu0 %v968
    %1302 = vmatpush.bf16.msra.mxu0 %v960
    %1303 = vmatpush.bf16.msra.mxu0 %v952
    %1304 = vmatpush.bf16.msra.mxu0 %v944
    %1305 = vmatpush.bf16.msra.mxu0 %v936
    %1306 = vmatpush.bf16.msra.mxu0 %v928
    %1307 = vmatpush.bf16.msra.mxu0 %v920
    %1308 = vmatmul.bf16.gmra.mxu0 %v464
    %v1309 = vpop.f32.mrf.mxu0
    %v1310 = vadd.f32 %v1297, %v1309
    %v1311 = vpop.f32.mrf.mxu0
    %1312 = vdwg.mxu0
    %v1313 = vadd.f32 %v453, %v1128
    %v1314 = vadd.f32 %v454, %v1154
    %v1315 = vadd.f32 %v455, %v1180
    %v1316 = vadd.f32 %v456, %v1206
    %v1317 = vadd.f32 %v457, %v1232
    %v1318 = vadd.f32 %v458, %v1258
    %v1319 = vadd.f32 %v459, %v1284
    %v1320 = vadd.f32 %v460, %v1310
    %v1321 = vxor.u32 %v1313, 2147483648
    %v1322 = vxor.u32 %v1314, 2147483648
    %v1323 = vmul.f32 %v1321, 1.442695
    %v1324 = vpow.pop %v1323
    %v1325 = vmul.f32 %v1322, 1.442695
    %v1326 = vpow.pop %v1325
    %v1327 = vadd.f32 %v1324, 1.0
    %v1328 = vadd.f32 %v1326, 1.0
    %v1329 = vrcp.pop %v1327
    %v1330 = vmul.f32 %v1327, %v1329
    %v1331 = vsub.f32 1.0, %v1330
    %v1332 = vmul.f32 %v1329, %v1331
    %v1333 = vadd.f32 %v1329, %v1332
    %vm1334 = vweird.f32 %v1327
    %vm1335 = vweird.f32 %v1329
    %vm1336 = vmor %vm1334, %vm1335
    %v1337 = vsel %vm1336, %v1329, %v1333
    %v1338 = vand.u32 2147483647, %v1327
    %vm1339 = vcmp.eq.f32.partialorder %v1338, 8.507059e+37
    %v1340 = vand.u32 %v1327, 2147483648
    %v1341 = vor.u32 1.1754944e-38, %v1340
    %v1342 = vsel %vm1339, %v1341, %v1337
    %v1343 = vmul.f32 1.0, %v1342
    %v1344 = vrcp.pop %v1328
    %v1345 = vmul.f32 %v1328, %v1344
    %v1346 = vsub.f32 1.0, %v1345
    %v1347 = vmul.f32 %v1344, %v1346
    %v1348 = vadd.f32 %v1344, %v1347
    %vm1349 = vweird.f32 %v1328
    %vm1350 = vweird.f32 %v1344
    %vm1351 = vmor %vm1349, %vm1350
    %v1352 = vsel %vm1351, %v1344, %v1348
    %v1353 = vand.u32 2147483647, %v1328
    %vm1354 = vcmp.eq.f32.partialorder %v1353, 8.507059e+37
    %v1355 = vand.u32 %v1328, 2147483648
    %v1356 = vor.u32 1.1754944e-38, %v1355
    %v1357 = vsel %vm1354, %v1356, %v1352
    %v1358 = vmul.f32 1.0, %v1357
    %v1359 = vxor.u32 %v1315, 2147483648
    %v1360 = vxor.u32 %v1316, 2147483648
    %v1361 = vmul.f32 %v1359, 1.442695
    %v1362 = vpow.pop %v1361
    %v1363 = vmul.f32 %v1360, 1.442695
    %v1364 = vpow.pop %v1363
    %v1365 = vadd.f32 %v1362, 1.0
    %v1366 = vadd.f32 %v1364, 1.0
    %v1367 = vrcp.pop %v1365
    %v1368 = vmul.f32 %v1365, %v1367
    %v1369 = vsub.f32 1.0, %v1368
    %v1370 = vmul.f32 %v1367, %v1369
    %v1371 = vadd.f32 %v1367, %v1370
    %vm1372 = vweird.f32 %v1365
    %vm1373 = vweird.f32 %v1367
    %vm1374 = vmor %vm1372, %vm1373
    %v1375 = vsel %vm1374, %v1367, %v1371
    %v1376 = vand.u32 2147483647, %v1365
    %vm1377 = vcmp.eq.f32.partialorder %v1376, 8.507059e+37
    %v1378 = vand.u32 %v1365, 2147483648
    %v1379 = vor.u32 1.1754944e-38, %v1378
    %v1380 = vsel %vm1377, %v1379, %v1375
    %v1381 = vmul.f32 1.0, %v1380
    %v1382 = vrcp.pop %v1366
    %v1383 = vmul.f32 %v1366, %v1382
    %v1384 = vsub.f32 1.0, %v1383
    %v1385 = vmul.f32 %v1382, %v1384
    %v1386 = vadd.f32 %v1382, %v1385
    %vm1387 = vweird.f32 %v1366
    %vm1388 = vweird.f32 %v1382
    %vm1389 = vmor %vm1387, %vm1388
    %v1390 = vsel %vm1389, %v1382, %v1386
    %v1391 = vand.u32 2147483647, %v1366
    %vm1392 = vcmp.eq.f32.partialorder %v1391, 8.507059e+37
    %v1393 = vand.u32 %v1366, 2147483648
    %v1394 = vor.u32 1.1754944e-38, %v1393
    %v1395 = vsel %vm1392, %v1394, %v1390
    %v1396 = vmul.f32 1.0, %v1395
    %v1397 = vtanh.pop %v1317
    %v1398 = vtanh.pop %v1318
    %v1399 = vxor.u32 %v1319, 2147483648
    %v1400 = vxor.u32 %v1320, 2147483648
    %v1401 = vmul.f32 %v1399, 1.442695
    %v1402 = vpow.pop %v1401
    %v1403 = vmul.f32 %v1400, 1.442695
    %v1404 = vpow.pop %v1403
    %v1405 = vadd.f32 %v1402, 1.0
    %v1406 = vadd.f32 %v1404, 1.0
    %v1407 = vrcp.pop %v1405
    %v1408 = vmul.f32 %v1405, %v1407
    %v1409 = vsub.f32 1.0, %v1408
    %v1410 = vmul.f32 %v1407, %v1409
    %v1411 = vadd.f32 %v1407, %v1410
    %vm1412 = vweird.f32 %v1405
    %vm1413 = vweird.f32 %v1407
    %vm1414 = vmor %vm1412, %vm1413
    %v1415 = vsel %vm1414, %v1407, %v1411
    %v1416 = vand.u32 2147483647, %v1405
    %vm1417 = vcmp.eq.f32.partialorder %v1416, 8.507059e+37
    %v1418 = vand.u32 %v1405, 2147483648
    %v1419 = vor.u32 1.1754944e-38, %v1418
    %v1420 = vsel %vm1417, %v1419, %v1415
    %v1421 = vmul.f32 1.0, %v1420
    %v1422 = vrcp.pop %v1406
    %v1423 = vmul.f32 %v1406, %v1422
    %v1424 = vsub.f32 1.0, %v1423
    %v1425 = vmul.f32 %v1422, %v1424
    %v1426 = vadd.f32 %v1422, %v1425
    %vm1427 = vweird.f32 %v1406
    %vm1428 = vweird.f32 %v1422
    %vm1429 = vmor %vm1427, %vm1428
    %v1430 = vsel %vm1429, %v1422, %v1426
    %v1431 = vand.u32 2147483647, %v1406
    %vm1432 = vcmp.eq.f32.partialorder %v1431, 8.507059e+37
    %v1433 = vand.u32 %v1406, 2147483648
    %v1434 = vor.u32 1.1754944e-38, %v1433
    %v1435 = vsel %vm1432, %v1434, %v1430
    %v1436 = vmul.f32 1.0, %v1435
    %v1437 = vmul.f32 %v1381, %v443
    %v1438 = vmul.f32 %v1396, %v444
    %v1439 = vmul.f32 %v1343, %v1397
    %v1440 = vmul.f32 %v1358, %v1398
    %v1441 = vadd.f32 %v1437, %v1439
    %v1442 = vadd.f32 %v1438, %v1440
    %v1443 = vtanh.pop %v1441
    %v1444 = vtanh.pop %v1442
    %v1445 = vmul.f32 %v1421, %v1443
    %v1446 = vmul.f32 %v1436, %v1444
    %v1575 = vunpack.c.l.b16 %v295
    %v1576 = vunpack.c.h.b16 %v295
    %v1577 = vunpack.c.l.b16 %v296
    %v1578 = vunpack.c.h.b16 %v296
    %v1579 = vunpack.c.l.b16 %v297
    %v1580 = vunpack.c.h.b16 %v297
    %v1581 = vunpack.c.l.b16 %v298
    %v1582 = vunpack.c.h.b16 %v298
    %v1583 = vunpack.c.l.b16 %v299
    %v1584 = vunpack.c.h.b16 %v299
    %v1585 = vunpack.c.l.b16 %v300
    %v1586 = vunpack.c.h.b16 %v300
    %v1587 = vunpack.c.l.b16 %v301
    %v1588 = vunpack.c.h.b16 %v301
    %v1589 = vunpack.c.l.b16 %v302
    %v1590 = vunpack.c.h.b16 %v302
    %v1591 = vunpack.c.l.b16 %v303
    %v1592 = vunpack.c.h.b16 %v303
    %v1593 = vunpack.c.l.b16 %v304
    %v1594 = vunpack.c.h.b16 %v304
    %v1595 = vunpack.c.l.b16 %v305
    %v1596 = vunpack.c.h.b16 %v305
    %v1597 = vunpack.c.l.b16 %v306
    %v1598 = vunpack.c.h.b16 %v306
    %v1599 = vunpack.c.l.b16 %v307
    %v1600 = vunpack.c.h.b16 %v307
    %v1601 = vunpack.c.l.b16 %v308
    %v1602 = vunpack.c.h.b16 %v308
    %v1603 = vunpack.c.l.b16 %v309
    %v1604 = vunpack.c.h.b16 %v309
    %v1605 = vunpack.c.l.b16 %v310
    %v1606 = vunpack.c.h.b16 %v310
    %v1607 = vunpack.c.l.b16 %v311
    %v1608 = vunpack.c.h.b16 %v311
    %v1609 = vunpack.c.l.b16 %v312
    %v1610 = vunpack.c.h.b16 %v312
    %v1611 = vunpack.c.l.b16 %v313
    %v1612 = vunpack.c.h.b16 %v313
    %v1613 = vunpack.c.l.b16 %v314
    %v1614 = vunpack.c.h.b16 %v314
    %v1615 = vunpack.c.l.b16 %v315
    %v1616 = vunpack.c.h.b16 %v315
    %v1617 = vunpack.c.l.b16 %v316
    %v1618 = vunpack.c.h.b16 %v316
    %v1619 = vunpack.c.l.b16 %v317
    %v1620 = vunpack.c.h.b16 %v317
    %v1621 = vunpack.c.l.b16 %v318
    %v1622 = vunpack.c.h.b16 %v318
    %v1623 = vunpack.c.l.b16 %v319
    %v1624 = vunpack.c.h.b16 %v319
    %v1625 = vunpack.c.l.b16 %v320
    %v1626 = vunpack.c.h.b16 %v320
    %v1627 = vunpack.c.l.b16 %v321
    %v1628 = vunpack.c.h.b16 %v321
    %v1629 = vunpack.c.l.b16 %v322
    %v1630 = vunpack.c.h.b16 %v322
    %v1631 = vunpack.c.l.b16 %v323
    %v1632 = vunpack.c.h.b16 %v323
    %v1633 = vunpack.c.l.b16 %v324
    %v1634 = vunpack.c.h.b16 %v324
    %v1635 = vunpack.c.l.b16 %v325
    %v1636 = vunpack.c.h.b16 %v325
    %v1637 = vunpack.c.l.b16 %v326
    %v1638 = vunpack.c.h.b16 %v326
    %v1639 = vunpack.c.l.b16 %v327
    %v1640 = vunpack.c.h.b16 %v327
    %v1641 = vunpack.c.l.b16 %v328
    %v1642 = vunpack.c.h.b16 %v328
    %v1643 = vunpack.c.l.b16 %v329
    %v1644 = vunpack.c.h.b16 %v329
    %v1645 = vunpack.c.l.b16 %v330
    %v1646 = vunpack.c.h.b16 %v330
    %v1647 = vunpack.c.l.b16 %v331
    %v1648 = vunpack.c.h.b16 %v331
    %v1649 = vunpack.c.l.b16 %v332
    %v1650 = vunpack.c.h.b16 %v332
    %v1651 = vunpack.c.l.b16 %v333
    %v1652 = vunpack.c.h.b16 %v333
    %v1653 = vunpack.c.l.b16 %v334
    %v1654 = vunpack.c.h.b16 %v334
    %v1655 = vunpack.c.l.b16 %v335
    %v1656 = vunpack.c.h.b16 %v335
    %v1657 = vunpack.c.l.b16 %v336
    %v1658 = vunpack.c.h.b16 %v336
    %v1659 = vunpack.c.l.b16 %v337
    %v1660 = vunpack.c.h.b16 %v337
    %v1661 = vunpack.c.l.b16 %v338
    %v1662 = vunpack.c.h.b16 %v338
    %v1663 = vunpack.c.l.b16 %v339
    %v1664 = vunpack.c.h.b16 %v339
    %v1665 = vunpack.c.l.b16 %v340
    %v1666 = vunpack.c.h.b16 %v340
    %v1667 = vunpack.c.l.b16 %v341
    %v1668 = vunpack.c.h.b16 %v341
    %v1669 = vunpack.c.l.b16 %v342
    %v1670 = vunpack.c.h.b16 %v342
    %v1671 = vunpack.c.l.b16 %v343
    %v1672 = vunpack.c.h.b16 %v343
    %v1673 = vunpack.c.l.b16 %v344
    %v1674 = vunpack.c.h.b16 %v344
    %v1675 = vunpack.c.l.b16 %v345
    %v1676 = vunpack.c.h.b16 %v345
    %v1677 = vunpack.c.l.b16 %v346
    %v1678 = vunpack.c.h.b16 %v346
    %v1679 = vunpack.c.l.b16 %v347
    %v1680 = vunpack.c.h.b16 %v347
    %v1681 = vunpack.c.l.b16 %v348
    %v1682 = vunpack.c.h.b16 %v348
    %v1683 = vunpack.c.l.b16 %v349
    %v1684 = vunpack.c.h.b16 %v349
    %v1685 = vunpack.c.l.b16 %v350
    %v1686 = vunpack.c.h.b16 %v350
    %v1687 = vunpack.c.l.b16 %v351
    %v1688 = vunpack.c.h.b16 %v351
    %v1689 = vunpack.c.l.b16 %v352
    %v1690 = vunpack.c.h.b16 %v352
    %v1691 = vunpack.c.l.b16 %v353
    %v1692 = vunpack.c.h.b16 %v353
    %v1693 = vunpack.c.l.b16 %v354
    %v1694 = vunpack.c.h.b16 %v354
    %v1695 = vunpack.c.l.b16 %v355
    %v1696 = vunpack.c.h.b16 %v355
    %v1697 = vunpack.c.l.b16 %v356
    %v1698 = vunpack.c.h.b16 %v356
    %v1699 = vunpack.c.l.b16 %v357
    %v1700 = vunpack.c.h.b16 %v357
    %v1701 = vunpack.c.l.b16 %v358
    %v1702 = vunpack.c.h.b16 %v358
    %v1703 = vunpack.c.l.b16 %v359
    %v1704 = vunpack.c.h.b16 %v359
    %v1705 = vunpack.c.l.b16 %v360
    %v1706 = vunpack.c.h.b16 %v360
    %v1707 = vunpack.c.l.b16 %v361
    %v1708 = vunpack.c.h.b16 %v361
    %v1709 = vunpack.c.l.b16 %v362
    %v1710 = vunpack.c.h.b16 %v362
    %v1711 = vunpack.c.l.b16 %v363
    %v1712 = vunpack.c.h.b16 %v363
    %v1713 = vunpack.c.l.b16 %v364
    %v1714 = vunpack.c.h.b16 %v364
    %v1715 = vunpack.c.l.b16 %v365
    %v1716 = vunpack.c.h.b16 %v365
    %v1717 = vunpack.c.l.b16 %v366
    %v1718 = vunpack.c.h.b16 %v366
    %v1719 = vunpack.c.l.b16 %v367
    %v1720 = vunpack.c.h.b16 %v367
    %v1721 = vunpack.c.l.b16 %v368
    %v1722 = vunpack.c.h.b16 %v368
    %v1723 = vunpack.c.l.b16 %v369
    %v1724 = vunpack.c.h.b16 %v369
    %v1725 = vunpack.c.l.b16 %v370
    %v1726 = vunpack.c.h.b16 %v370
    %v1727 = vunpack.c.l.b16 %v371
    %v1728 = vunpack.c.h.b16 %v371
    %v1729 = vunpack.c.l.b16 %v372
    %v1730 = vunpack.c.h.b16 %v372
    %v1731 = vunpack.c.l.b16 %v373
    %v1732 = vunpack.c.h.b16 %v373
    %v1733 = vunpack.c.l.b16 %v374
    %v1734 = vunpack.c.h.b16 %v374
    %v1735 = vunpack.c.l.b16 %v375
    %v1736 = vunpack.c.h.b16 %v375
    %v1737 = vunpack.c.l.b16 %v376
    %v1738 = vunpack.c.h.b16 %v376
    %v1739 = vunpack.c.l.b16 %v377
    %v1740 = vunpack.c.h.b16 %v377
    %v1741 = vunpack.c.l.b16 %v378
    %v1742 = vunpack.c.h.b16 %v378
    %v1743 = vunpack.c.l.b16 %v379
    %v1744 = vunpack.c.h.b16 %v379
    %v1745 = vunpack.c.l.b16 %v380
    %v1746 = vunpack.c.h.b16 %v380
    %v1747 = vunpack.c.l.b16 %v381
    %v1748 = vunpack.c.h.b16 %v381
    %v1749 = vunpack.c.l.b16 %v382
    %v1750 = vunpack.c.h.b16 %v382
    %v1751 = vunpack.c.l.b16 %v383
    %v1752 = vunpack.c.h.b16 %v383
    %v1753 = vunpack.c.l.b16 %v384
    %v1754 = vunpack.c.h.b16 %v384
    %v1755 = vunpack.c.l.b16 %v385
    %v1756 = vunpack.c.h.b16 %v385
    %v1757 = vunpack.c.l.b16 %v386
    %v1758 = vunpack.c.h.b16 %v386
    %v1759 = vunpack.c.l.b16 %v387
    %v1760 = vunpack.c.h.b16 %v387
    %v1761 = vunpack.c.l.b16 %v388
    %v1762 = vunpack.c.h.b16 %v388
    %v1763 = vunpack.c.l.b16 %v389
    %v1764 = vunpack.c.h.b16 %v389
    %v1765 = vunpack.c.l.b16 %v390
    %v1766 = vunpack.c.h.b16 %v390
    %v1767 = vunpack.c.l.b16 %v391
    %v1768 = vunpack.c.h.b16 %v391
    %v1769 = vunpack.c.l.b16 %v392
    %v1770 = vunpack.c.h.b16 %v392
    %v1771 = vunpack.c.l.b16 %v393
    %v1772 = vunpack.c.h.b16 %v393
    %v1773 = vunpack.c.l.b16 %v394
    %v1774 = vunpack.c.h.b16 %v394
    %v1775 = vunpack.c.l.b16 %v395
    %v1776 = vunpack.c.h.b16 %v395
    %v1777 = vunpack.c.l.b16 %v396
    %v1778 = vunpack.c.h.b16 %v396
    %v1779 = vunpack.c.l.b16 %v397
    %v1780 = vunpack.c.h.b16 %v397
    %v1781 = vunpack.c.l.b16 %v398
    %v1782 = vunpack.c.h.b16 %v398
    %v1783 = vunpack.c.l.b16 %v399
    %v1784 = vunpack.c.h.b16 %v399
    %v1785 = vunpack.c.l.b16 %v400
    %v1786 = vunpack.c.h.b16 %v400
    %v1787 = vunpack.c.l.b16 %v401
    %v1788 = vunpack.c.h.b16 %v401
    %v1789 = vunpack.c.l.b16 %v402
    %v1790 = vunpack.c.h.b16 %v402
    %v1791 = vunpack.c.l.b16 %v403
    %v1792 = vunpack.c.h.b16 %v403
    %v1793 = vunpack.c.l.b16 %v404
    %v1794 = vunpack.c.h.b16 %v404
    %v1795 = vunpack.c.l.b16 %v405
    %v1796 = vunpack.c.h.b16 %v405
    %v1797 = vunpack.c.l.b16 %v406
    %v1798 = vunpack.c.h.b16 %v406
    %v1799 = vunpack.c.l.b16 %v407
    %v1800 = vunpack.c.h.b16 %v407
    %v1801 = vunpack.c.l.b16 %v408
    %v1802 = vunpack.c.h.b16 %v408
    %v1803 = vunpack.c.l.b16 %v409
    %v1804 = vunpack.c.h.b16 %v409
    %v1805 = vunpack.c.l.b16 %v410
    %v1806 = vunpack.c.h.b16 %v410
    %v1807 = vunpack.c.l.b16 %v411
    %v1808 = vunpack.c.h.b16 %v411
    %v1809 = vunpack.c.l.b16 %v412
    %v1810 = vunpack.c.h.b16 %v412
    %v1811 = vunpack.c.l.b16 %v413
    %v1812 = vunpack.c.h.b16 %v413
    %v1813 = vunpack.c.l.b16 %v414
    %v1814 = vunpack.c.h.b16 %v414
    %v1815 = vunpack.c.l.b16 %v415
    %v1816 = vunpack.c.h.b16 %v415
    %v1817 = vunpack.c.l.b16 %v416
    %v1818 = vunpack.c.h.b16 %v416
    %v1819 = vunpack.c.l.b16 %v417
    %v1820 = vunpack.c.h.b16 %v417
    %v1821 = vunpack.c.l.b16 %v418
    %v1822 = vunpack.c.h.b16 %v418
    %v1823 = vunpack.c.l.b16 %v419
    %v1824 = vunpack.c.h.b16 %v419
    %v1825 = vunpack.c.l.b16 %v420
    %v1826 = vunpack.c.h.b16 %v420
    %v1827 = vunpack.c.l.b16 %v421
    %v1828 = vunpack.c.h.b16 %v421
    %v1829 = vunpack.c.l.b16 %v422
    %v1830 = vunpack.c.h.b16 %v422
    %v1831 = vpack.c.b16 %v1583, %v1575
    %v1832 = vpack.c.b16 %v1584, %v1576
    %v1833 = vpack.c.b16 %v1585, %v1577
    %v1834 = vpack.c.b16 %v1586, %v1578
    %v1835 = vpack.c.b16 %v1587, %v1579
    %v1836 = vpack.c.b16 %v1588, %v1580
    %v1837 = vpack.c.b16 %v1589, %v1581
    %v1838 = vpack.c.b16 %v1590, %v1582
    %v1839 = vpack.c.b16 %v1599, %v1591
    %v1840 = vpack.c.b16 %v1600, %v1592
    %v1841 = vpack.c.b16 %v1601, %v1593
    %v1842 = vpack.c.b16 %v1602, %v1594
    %v1843 = vpack.c.b16 %v1603, %v1595
    %v1844 = vpack.c.b16 %v1604, %v1596
    %v1845 = vpack.c.b16 %v1605, %v1597
    %v1846 = vpack.c.b16 %v1606, %v1598
    %v1847 = vpack.c.b16 %v1615, %v1607
    %v1848 = vpack.c.b16 %v1616, %v1608
    %v1849 = vpack.c.b16 %v1617, %v1609
    %v1850 = vpack.c.b16 %v1618, %v1610
    %v1851 = vpack.c.b16 %v1619, %v1611
    %v1852 = vpack.c.b16 %v1620, %v1612
    %v1853 = vpack.c.b16 %v1621, %v1613
    %v1854 = vpack.c.b16 %v1622, %v1614
    %v1855 = vpack.c.b16 %v1631, %v1623
    %v1856 = vpack.c.b16 %v1632, %v1624
    %v1857 = vpack.c.b16 %v1633, %v1625
    %v1858 = vpack.c.b16 %v1634, %v1626
    %v1859 = vpack.c.b16 %v1635, %v1627
    %v1860 = vpack.c.b16 %v1636, %v1628
    %v1861 = vpack.c.b16 %v1637, %v1629
    %v1862 = vpack.c.b16 %v1638, %v1630
    %v1863 = vpack.c.b16 %v1647, %v1639
    %v1864 = vpack.c.b16 %v1648, %v1640
    %v1865 = vpack.c.b16 %v1649, %v1641
    %v1866 = vpack.c.b16 %v1650, %v1642
    %v1867 = vpack.c.b16 %v1651, %v1643
    %v1868 = vpack.c.b16 %v1652, %v1644
    %v1869 = vpack.c.b16 %v1653, %v1645
    %v1870 = vpack.c.b16 %v1654, %v1646
    %v1871 = vpack.c.b16 %v1663, %v1655
    %v1872 = vpack.c.b16 %v1664, %v1656
    %v1873 = vpack.c.b16 %v1665, %v1657
    %v1874 = vpack.c.b16 %v1666, %v1658
    %v1875 = vpack.c.b16 %v1667, %v1659
    %v1876 = vpack.c.b16 %v1668, %v1660
    %v1877 = vpack.c.b16 %v1669, %v1661
    %v1878 = vpack.c.b16 %v1670, %v1662
    %v1879 = vpack.c.b16 %v1679, %v1671
    %v1880 = vpack.c.b16 %v1680, %v1672
    %v1881 = vpack.c.b16 %v1681, %v1673
    %v1882 = vpack.c.b16 %v1682, %v1674
    %v1883 = vpack.c.b16 %v1683, %v1675
    %v1884 = vpack.c.b16 %v1684, %v1676
    %v1885 = vpack.c.b16 %v1685, %v1677
    %v1886 = vpack.c.b16 %v1686, %v1678
    %v1887 = vpack.c.b16 %v1695, %v1687
    %v1888 = vpack.c.b16 %v1696, %v1688
    %v1889 = vpack.c.b16 %v1697, %v1689
    %v1890 = vpack.c.b16 %v1698, %v1690
    %v1891 = vpack.c.b16 %v1699, %v1691
    %v1892 = vpack.c.b16 %v1700, %v1692
    %v1893 = vpack.c.b16 %v1701, %v1693
    %v1894 = vpack.c.b16 %v1702, %v1694
    %v1895 = vpack.c.b16 %v1711, %v1703
    %v1896 = vpack.c.b16 %v1712, %v1704
    %v1897 = vpack.c.b16 %v1713, %v1705
    %v1898 = vpack.c.b16 %v1714, %v1706
    %v1899 = vpack.c.b16 %v1715, %v1707
    %v1900 = vpack.c.b16 %v1716, %v1708
    %v1901 = vpack.c.b16 %v1717, %v1709
    %v1902 = vpack.c.b16 %v1718, %v1710
    %v1903 = vpack.c.b16 %v1727, %v1719
    %v1904 = vpack.c.b16 %v1728, %v1720
    %v1905 = vpack.c.b16 %v1729, %v1721
    %v1906 = vpack.c.b16 %v1730, %v1722
    %v1907 = vpack.c.b16 %v1731, %v1723
    %v1908 = vpack.c.b16 %v1732, %v1724
    %v1909 = vpack.c.b16 %v1733, %v1725
    %v1910 = vpack.c.b16 %v1734, %v1726
    %v1911 = vpack.c.b16 %v1743, %v1735
    %v1912 = vpack.c.b16 %v1744, %v1736
    %v1913 = vpack.c.b16 %v1745, %v1737
    %v1914 = vpack.c.b16 %v1746, %v1738
    %v1915 = vpack.c.b16 %v1747, %v1739
    %v1916 = vpack.c.b16 %v1748, %v1740
    %v1917 = vpack.c.b16 %v1749, %v1741
    %v1918 = vpack.c.b16 %v1750, %v1742
    %v1919 = vpack.c.b16 %v1759, %v1751
    %v1920 = vpack.c.b16 %v1760, %v1752
    %v1921 = vpack.c.b16 %v1761, %v1753
    %v1922 = vpack.c.b16 %v1762, %v1754
    %v1923 = vpack.c.b16 %v1763, %v1755
    %v1924 = vpack.c.b16 %v1764, %v1756
    %v1925 = vpack.c.b16 %v1765, %v1757
    %v1926 = vpack.c.b16 %v1766, %v1758
    %v1927 = vpack.c.b16 %v1775, %v1767
    %v1928 = vpack.c.b16 %v1776, %v1768
    %v1929 = vpack.c.b16 %v1777, %v1769
    %v1930 = vpack.c.b16 %v1778, %v1770
    %v1931 = vpack.c.b16 %v1779, %v1771
    %v1932 = vpack.c.b16 %v1780, %v1772
    %v1933 = vpack.c.b16 %v1781, %v1773
    %v1934 = vpack.c.b16 %v1782, %v1774
    %v1935 = vpack.c.b16 %v1791, %v1783
    %v1936 = vpack.c.b16 %v1792, %v1784
    %v1937 = vpack.c.b16 %v1793, %v1785
    %v1938 = vpack.c.b16 %v1794, %v1786
    %v1939 = vpack.c.b16 %v1795, %v1787
    %v1940 = vpack.c.b16 %v1796, %v1788
    %v1941 = vpack.c.b16 %v1797, %v1789
    %v1942 = vpack.c.b16 %v1798, %v1790
    %v1943 = vpack.c.b16 %v1807, %v1799
    %v1944 = vpack.c.b16 %v1808, %v1800
    %v1945 = vpack.c.b16 %v1809, %v1801
    %v1946 = vpack.c.b16 %v1810, %v1802
    %v1947 = vpack.c.b16 %v1811, %v1803
    %v1948 = vpack.c.b16 %v1812, %v1804
    %v1949 = vpack.c.b16 %v1813, %v1805
    %v1950 = vpack.c.b16 %v1814, %v1806
    %v1951 = vpack.c.b16 %v1823, %v1815
    %v1952 = vpack.c.b16 %v1824, %v1816
    %v1953 = vpack.c.b16 %v1825, %v1817
    %v1954 = vpack.c.b16 %v1826, %v1818
    %v1955 = vpack.c.b16 %v1827, %v1819
    %v1956 = vpack.c.b16 %v1828, %v1820
    %v1957 = vpack.c.b16 %v1829, %v1821
    %v1958 = vpack.c.b16 %v1830, %v1822
    %2087 = vmatpush.bf16.msra.mxu0 %v1887
    %2088 = vmatpush.bf16.msra.mxu0 %v1879
    %2089 = vmatpush.bf16.msra.mxu0 %v1871
    %2090 = vmatpush.bf16.msra.mxu0 %v1863
    %2091 = vmatpush.bf16.msra.mxu0 %v1855
    %2092 = vmatpush.bf16.msra.mxu0 %v1847
    %2093 = vmatpush.bf16.msra.mxu0 %v1839
    %2094 = vmatpush.bf16.msra.mxu0 %v1831
    %2095 = vmatmul.bf16.gmra.mxu0 %v461
    %v2096 = vpop.f32.mrf.mxu0
    %v2097 = vadd.f32 %v425, %v2096
    %v2098 = vpop.f32.mrf.mxu0
    %2099 = vdwg.mxu0
    %2100 = vmatpush.bf16.msra.mxu0 %v1951
    %2101 = vmatpush.bf16.msra.mxu0 %v1943
    %2102 = vmatpush.bf16.msra.mxu0 %v1935
    %2103 = vmatpush.bf16.msra.mxu0 %v1927
    %2104 = vmatpush.bf16.msra.mxu0 %v1919
    %2105 = vmatpush.bf16.msra.mxu0 %v1911
    %2106 = vmatpush.bf16.msra.mxu0 %v1903
    %2107 = vmatpush.bf16.msra.mxu0 %v1895
    %2108 = vmatmul.bf16.gmra.mxu0 %v462
    %v2109 = vpop.f32.mrf.mxu0
    %v2110 = vadd.f32 %v2097, %v2109
    %v2111 = vpop.f32.mrf.mxu0
    %2112 = vdwg.mxu0
    %2113 = vmatpush.bf16.msra.mxu0 %v1888
    %2114 = vmatpush.bf16.msra.mxu0 %v1880
    %2115 = vmatpush.bf16.msra.mxu0 %v1872
    %2116 = vmatpush.bf16.msra.mxu0 %v1864
    %2117 = vmatpush.bf16.msra.mxu0 %v1856
    %2118 = vmatpush.bf16.msra.mxu0 %v1848
    %2119 = vmatpush.bf16.msra.mxu0 %v1840
    %2120 = vmatpush.bf16.msra.mxu0 %v1832
    %2121 = vmatmul.bf16.gmra.mxu0 %v461
    %v2122 = vpop.f32.mrf.mxu0
    %v2123 = vadd.f32 %v426, %v2122
    %v2124 = vpop.f32.mrf.mxu0
    %2125 = vdwg.mxu0
    %2126 = vmatpush.bf16.msra.mxu0 %v1952
    %2127 = vmatpush.bf16.msra.mxu0 %v1944
    %2128 = vmatpush.bf16.msra.mxu0 %v1936
    %2129 = vmatpush.bf16.msra.mxu0 %v1928
    %2130 = vmatpush.bf16.msra.mxu0 %v1920
    %2131 = vmatpush.bf16.msra.mxu0 %v1912
    %2132 = vmatpush.bf16.msra.mxu0 %v1904
    %2133 = vmatpush.bf16.msra.mxu0 %v1896
    %2134 = vmatmul.bf16.gmra.mxu0 %v462
    %v2135 = vpop.f32.mrf.mxu0
    %v2136 = vadd.f32 %v2123, %v2135
    %v2137 = vpop.f32.mrf.mxu0
    %2138 = vdwg.mxu0
    %2139 = vmatpush.bf16.msra.mxu0 %v1889
    %2140 = vmatpush.bf16.msra.mxu0 %v1881
    %2141 = vmatpush.bf16.msra.mxu0 %v1873
    %2142 = vmatpush.bf16.msra.mxu0 %v1865
    %2143 = vmatpush.bf16.msra.mxu0 %v1857
    %2144 = vmatpush.bf16.msra.mxu0 %v1849
    %2145 = vmatpush.bf16.msra.mxu0 %v1841
    %2146 = vmatpush.bf16.msra.mxu0 %v1833
    %2147 = vmatmul.bf16.gmra.mxu0 %v461
    %v2148 = vpop.f32.mrf.mxu0
    %v2149 = vadd.f32 %v427, %v2148
    %v2150 = vpop.f32.mrf.mxu0
    %2151 = vdwg.mxu0
    %2152 = vmatpush.bf16.msra.mxu0 %v1953
    %2153 = vmatpush.bf16.msra.mxu0 %v1945
    %2154 = vmatpush.bf16.msra.mxu0 %v1937
    %2155 = vmatpush.bf16.msra.mxu0 %v1929
    %2156 = vmatpush.bf16.msra.mxu0 %v1921
    %2157 = vmatpush.bf16.msra.mxu0 %v1913
    %2158 = vmatpush.bf16.msra.mxu0 %v1905
    %2159 = vmatpush.bf16.msra.mxu0 %v1897
    %2160 = vmatmul.bf16.gmra.mxu0 %v462
    %v2161 = vpop.f32.mrf.mxu0
    %v2162 = vadd.f32 %v2149, %v2161
    %v2163 = vpop.f32.mrf.mxu0
    %2164 = vdwg.mxu0
    %2165 = vmatpush.bf16.msra.mxu0 %v1890
    %2166 = vmatpush.bf16.msra.mxu0 %v1882
    %2167 = vmatpush.bf16.msra.mxu0 %v1874
    %2168 = vmatpush.bf16.msra.mxu0 %v1866
    %2169 = vmatpush.bf16.msra.mxu0 %v1858
    %2170 = vmatpush.bf16.msra.mxu0 %v1850
    %2171 = vmatpush.bf16.msra.mxu0 %v1842
    %2172 = vmatpush.bf16.msra.mxu0 %v1834
    %2173 = vmatmul.bf16.gmra.mxu0 %v461
    %v2174 = vpop.f32.mrf.mxu0
    %v2175 = vadd.f32 %v428, %v2174
    %v2176 = vpop.f32.mrf.mxu0
    %2177 = vdwg.mxu0
    %2178 = vmatpush.bf16.msra.mxu0 %v1954
    %2179 = vmatpush.bf16.msra.mxu0 %v1946
    %2180 = vmatpush.bf16.msra.mxu0 %v1938
    %2181 = vmatpush.bf16.msra.mxu0 %v1930
    %2182 = vmatpush.bf16.msra.mxu0 %v1922
    %2183 = vmatpush.bf16.msra.mxu0 %v1914
    %2184 = vmatpush.bf16.msra.mxu0 %v1906
    %2185 = vmatpush.bf16.msra.mxu0 %v1898
    %2186 = vmatmul.bf16.gmra.mxu0 %v462
    %v2187 = vpop.f32.mrf.mxu0
    %v2188 = vadd.f32 %v2175, %v2187
    %v2189 = vpop.f32.mrf.mxu0
    %2190 = vdwg.mxu0
    %2191 = vmatpush.bf16.msra.mxu0 %v1891
    %2192 = vmatpush.bf16.msra.mxu0 %v1883
    %2193 = vmatpush.bf16.msra.mxu0 %v1875
    %2194 = vmatpush.bf16.msra.mxu0 %v1867
    %2195 = vmatpush.bf16.msra.mxu0 %v1859
    %2196 = vmatpush.bf16.msra.mxu0 %v1851
    %2197 = vmatpush.bf16.msra.mxu0 %v1843
    %2198 = vmatpush.bf16.msra.mxu0 %v1835
    %2199 = vmatmul.bf16.gmra.mxu0 %v461
    %v2200 = vpop.f32.mrf.mxu0
    %v2201 = vadd.f32 %v429, %v2200
    %v2202 = vpop.f32.mrf.mxu0
    %2203 = vdwg.mxu0
    %2204 = vmatpush.bf16.msra.mxu0 %v1955
    %2205 = vmatpush.bf16.msra.mxu0 %v1947
    %2206 = vmatpush.bf16.msra.mxu0 %v1939
    %2207 = vmatpush.bf16.msra.mxu0 %v1931
    %2208 = vmatpush.bf16.msra.mxu0 %v1923
    %2209 = vmatpush.bf16.msra.mxu0 %v1915
    %2210 = vmatpush.bf16.msra.mxu0 %v1907
    %2211 = vmatpush.bf16.msra.mxu0 %v1899
    %2212 = vmatmul.bf16.gmra.mxu0 %v462
    %v2213 = vpop.f32.mrf.mxu0
    %v2214 = vadd.f32 %v2201, %v2213
    %v2215 = vpop.f32.mrf.mxu0
    %2216 = vdwg.mxu0
    %2217 = vmatpush.bf16.msra.mxu0 %v1892
    %2218 = vmatpush.bf16.msra.mxu0 %v1884
    %2219 = vmatpush.bf16.msra.mxu0 %v1876
    %2220 = vmatpush.bf16.msra.mxu0 %v1868
    %2221 = vmatpush.bf16.msra.mxu0 %v1860
    %2222 = vmatpush.bf16.msra.mxu0 %v1852
    %2223 = vmatpush.bf16.msra.mxu0 %v1844
    %2224 = vmatpush.bf16.msra.mxu0 %v1836
    %2225 = vmatmul.bf16.gmra.mxu0 %v461
    %v2226 = vpop.f32.mrf.mxu0
    %v2227 = vadd.f32 %v430, %v2226
    %v2228 = vpop.f32.mrf.mxu0
    %2229 = vdwg.mxu0
    %2230 = vmatpush.bf16.msra.mxu0 %v1956
    %2231 = vmatpush.bf16.msra.mxu0 %v1948
    %2232 = vmatpush.bf16.msra.mxu0 %v1940
    %2233 = vmatpush.bf16.msra.mxu0 %v1932
    %2234 = vmatpush.bf16.msra.mxu0 %v1924
    %2235 = vmatpush.bf16.msra.mxu0 %v1916
    %2236 = vmatpush.bf16.msra.mxu0 %v1908
    %2237 = vmatpush.bf16.msra.mxu0 %v1900
    %2238 = vmatmul.bf16.gmra.mxu0 %v462
    %v2239 = vpop.f32.mrf.mxu0
    %v2240 = vadd.f32 %v2227, %v2239
    %v2241 = vpop.f32.mrf.mxu0
    %2242 = vdwg.mxu0
    %2243 = vmatpush.bf16.msra.mxu0 %v1893
    %2244 = vmatpush.bf16.msra.mxu0 %v1885
    %2245 = vmatpush.bf16.msra.mxu0 %v1877
    %2246 = vmatpush.bf16.msra.mxu0 %v1869
    %2247 = vmatpush.bf16.msra.mxu0 %v1861
    %2248 = vmatpush.bf16.msra.mxu0 %v1853
    %2249 = vmatpush.bf16.msra.mxu0 %v1845
    %2250 = vmatpush.bf16.msra.mxu0 %v1837
    %2251 = vmatmul.bf16.gmra.mxu0 %v461
    %v2252 = vpop.f32.mrf.mxu0
    %v2253 = vadd.f32 %v431, %v2252
    %v2254 = vpop.f32.mrf.mxu0
    %2255 = vdwg.mxu0
    %2256 = vmatpush.bf16.msra.mxu0 %v1957
    %2257 = vmatpush.bf16.msra.mxu0 %v1949
    %2258 = vmatpush.bf16.msra.mxu0 %v1941
    %2259 = vmatpush.bf16.msra.mxu0 %v1933
    %2260 = vmatpush.bf16.msra.mxu0 %v1925
    %2261 = vmatpush.bf16.msra.mxu0 %v1917
    %2262 = vmatpush.bf16.msra.mxu0 %v1909
    %2263 = vmatpush.bf16.msra.mxu0 %v1901
    %2264 = vmatmul.bf16.gmra.mxu0 %v462
    %v2265 = vpop.f32.mrf.mxu0
    %v2266 = vadd.f32 %v2253, %v2265
    %v2267 = vpop.f32.mrf.mxu0
    %2268 = vdwg.mxu0
    %2269 = vmatpush.bf16.msra.mxu0 %v1894
    %2270 = vmatpush.bf16.msra.mxu0 %v1886
    %2271 = vmatpush.bf16.msra.mxu0 %v1878
    %2272 = vmatpush.bf16.msra.mxu0 %v1870
    %2273 = vmatpush.bf16.msra.mxu0 %v1862
    %2274 = vmatpush.bf16.msra.mxu0 %v1854
    %2275 = vmatpush.bf16.msra.mxu0 %v1846
    %2276 = vmatpush.bf16.msra.mxu0 %v1838
    %2277 = vmatmul.bf16.gmra.mxu0 %v461
    %v2278 = vpop.f32.mrf.mxu0
    %v2279 = vadd.f32 %v432, %v2278
    %v2280 = vpop.f32.mrf.mxu0
    %2281 = vdwg.mxu0
    %2282 = vmatpush.bf16.msra.mxu0 %v1958
    %2283 = vmatpush.bf16.msra.mxu0 %v1950
    %2284 = vmatpush.bf16.msra.mxu0 %v1942
    %2285 = vmatpush.bf16.msra.mxu0 %v1934
    %2286 = vmatpush.bf16.msra.mxu0 %v1926
    %2287 = vmatpush.bf16.msra.mxu0 %v1918
    %2288 = vmatpush.bf16.msra.mxu0 %v1910
    %2289 = vmatpush.bf16.msra.mxu0 %v1902
    %2290 = vmatmul.bf16.gmra.mxu0 %v462
    %v2291 = vpop.f32.mrf.mxu0
    %v2292 = vadd.f32 %v2279, %v2291
    %v2293 = vpop.f32.mrf.mxu0
    %2294 = vdwg.mxu0
    %v2295 = vpack.c.bf16 %v1445, %v1445
    %v2296 = vpack.c.bf16 %v1446, %v1446
    %v2425 = vunpack.c.l.b16 %v167
    %v2426 = vunpack.c.h.b16 %v167
    %v2427 = vunpack.c.l.b16 %v168
    %v2428 = vunpack.c.h.b16 %v168
    %v2429 = vunpack.c.l.b16 %v169
    %v2430 = vunpack.c.h.b16 %v169
    %v2431 = vunpack.c.l.b16 %v170
    %v2432 = vunpack.c.h.b16 %v170
    %v2433 = vunpack.c.l.b16 %v171
    %v2434 = vunpack.c.h.b16 %v171
    %v2435 = vunpack.c.l.b16 %v172
    %v2436 = vunpack.c.h.b16 %v172
    %v2437 = vunpack.c.l.b16 %v173
    %v2438 = vunpack.c.h.b16 %v173
    %v2439 = vunpack.c.l.b16 %v174
    %v2440 = vunpack.c.h.b16 %v174
    %v2441 = vunpack.c.l.b16 %v175
    %v2442 = vunpack.c.h.b16 %v175
    %v2443 = vunpack.c.l.b16 %v176
    %v2444 = vunpack.c.h.b16 %v176
    %v2445 = vunpack.c.l.b16 %v177
    %v2446 = vunpack.c.h.b16 %v177
    %v2447 = vunpack.c.l.b16 %v178
    %v2448 = vunpack.c.h.b16 %v178
    %v2449 = vunpack.c.l.b16 %v179
    %v2450 = vunpack.c.h.b16 %v179
    %v2451 = vunpack.c.l.b16 %v180
    %v2452 = vunpack.c.h.b16 %v180
    %v2453 = vunpack.c.l.b16 %v181
    %v2454 = vunpack.c.h.b16 %v181
    %v2455 = vunpack.c.l.b16 %v182
    %v2456 = vunpack.c.h.b16 %v182
    %v2457 = vunpack.c.l.b16 %v183
    %v2458 = vunpack.c.h.b16 %v183
    %v2459 = vunpack.c.l.b16 %v184
    %v2460 = vunpack.c.h.b16 %v184
    %v2461 = vunpack.c.l.b16 %v185
    %v2462 = vunpack.c.h.b16 %v185
    %v2463 = vunpack.c.l.b16 %v186
    %v2464 = vunpack.c.h.b16 %v186
    %v2465 = vunpack.c.l.b16 %v187
    %v2466 = vunpack.c.h.b16 %v187
    %v2467 = vunpack.c.l.b16 %v188
    %v2468 = vunpack.c.h.b16 %v188
    %v2469 = vunpack.c.l.b16 %v189
    %v2470 = vunpack.c.h.b16 %v189
    %v2471 = vunpack.c.l.b16 %v190
    %v2472 = vunpack.c.h.b16 %v190
    %v2473 = vunpack.c.l.b16 %v191
    %v2474 = vunpack.c.h.b16 %v191
    %v2475 = vunpack.c.l.b16 %v192
    %v2476 = vunpack.c.h.b16 %v192
    %v2477 = vunpack.c.l.b16 %v193
    %v2478 = vunpack.c.h.b16 %v193
    %v2479 = vunpack.c.l.b16 %v194
    %v2480 = vunpack.c.h.b16 %v194
    %v2481 = vunpack.c.l.b16 %v195
    %v2482 = vunpack.c.h.b16 %v195
    %v2483 = vunpack.c.l.b16 %v196
    %v2484 = vunpack.c.h.b16 %v196
    %v2485 = vunpack.c.l.b16 %v197
    %v2486 = vunpack.c.h.b16 %v197
    %v2487 = vunpack.c.l.b16 %v198
    %v2488 = vunpack.c.h.b16 %v198
    %v2489 = vunpack.c.l.b16 %v199
    %v2490 = vunpack.c.h.b16 %v199
    %v2491 = vunpack.c.l.b16 %v200
    %v2492 = vunpack.c.h.b16 %v200
    %v2493 = vunpack.c.l.b16 %v201
    %v2494 = vunpack.c.h.b16 %v201
    %v2495 = vunpack.c.l.b16 %v202
    %v2496 = vunpack.c.h.b16 %v202
    %v2497 = vunpack.c.l.b16 %v203
    %v2498 = vunpack.c.h.b16 %v203
    %v2499 = vunpack.c.l.b16 %v204
    %v2500 = vunpack.c.h.b16 %v204
    %v2501 = vunpack.c.l.b16 %v205
    %v2502 = vunpack.c.h.b16 %v205
    %v2503 = vunpack.c.l.b16 %v206
    %v2504 = vunpack.c.h.b16 %v206
    %v2505 = vunpack.c.l.b16 %v207
    %v2506 = vunpack.c.h.b16 %v207
    %v2507 = vunpack.c.l.b16 %v208
    %v2508 = vunpack.c.h.b16 %v208
    %v2509 = vunpack.c.l.b16 %v209
    %v2510 = vunpack.c.h.b16 %v209
    %v2511 = vunpack.c.l.b16 %v210
    %v2512 = vunpack.c.h.b16 %v210
    %v2513 = vunpack.c.l.b16 %v211
    %v2514 = vunpack.c.h.b16 %v211
    %v2515 = vunpack.c.l.b16 %v212
    %v2516 = vunpack.c.h.b16 %v212
    %v2517 = vunpack.c.l.b16 %v213
    %v2518 = vunpack.c.h.b16 %v213
    %v2519 = vunpack.c.l.b16 %v214
    %v2520 = vunpack.c.h.b16 %v214
    %v2521 = vunpack.c.l.b16 %v215
    %v2522 = vunpack.c.h.b16 %v215
    %v2523 = vunpack.c.l.b16 %v216
    %v2524 = vunpack.c.h.b16 %v216
    %v2525 = vunpack.c.l.b16 %v217
    %v2526 = vunpack.c.h.b16 %v217
    %v2527 = vunpack.c.l.b16 %v218
    %v2528 = vunpack.c.h.b16 %v218
    %v2529 = vunpack.c.l.b16 %v219
    %v2530 = vunpack.c.h.b16 %v219
    %v2531 = vunpack.c.l.b16 %v220
    %v2532 = vunpack.c.h.b16 %v220
    %v2533 = vunpack.c.l.b16 %v221
    %v2534 = vunpack.c.h.b16 %v221
    %v2535 = vunpack.c.l.b16 %v222
    %v2536 = vunpack.c.h.b16 %v222
    %v2537 = vunpack.c.l.b16 %v223
    %v2538 = vunpack.c.h.b16 %v223
    %v2539 = vunpack.c.l.b16 %v224
    %v2540 = vunpack.c.h.b16 %v224
    %v2541 = vunpack.c.l.b16 %v225
    %v2542 = vunpack.c.h.b16 %v225
    %v2543 = vunpack.c.l.b16 %v226
    %v2544 = vunpack.c.h.b16 %v226
    %v2545 = vunpack.c.l.b16 %v227
    %v2546 = vunpack.c.h.b16 %v227
    %v2547 = vunpack.c.l.b16 %v228
    %v2548 = vunpack.c.h.b16 %v228
    %v2549 = vunpack.c.l.b16 %v229
    %v2550 = vunpack.c.h.b16 %v229
    %v2551 = vunpack.c.l.b16 %v230
    %v2552 = vunpack.c.h.b16 %v230
    %v2553 = vunpack.c.l.b16 %v231
    %v2554 = vunpack.c.h.b16 %v231
    %v2555 = vunpack.c.l.b16 %v232
    %v2556 = vunpack.c.h.b16 %v232
    %v2557 = vunpack.c.l.b16 %v233
    %v2558 = vunpack.c.h.b16 %v233
    %v2559 = vunpack.c.l.b16 %v234
    %v2560 = vunpack.c.h.b16 %v234
    %v2561 = vunpack.c.l.b16 %v235
    %v2562 = vunpack.c.h.b16 %v235
    %v2563 = vunpack.c.l.b16 %v236
    %v2564 = vunpack.c.h.b16 %v236
    %v2565 = vunpack.c.l.b16 %v237
    %v2566 = vunpack.c.h.b16 %v237
    %v2567 = vunpack.c.l.b16 %v238
    %v2568 = vunpack.c.h.b16 %v238
    %v2569 = vunpack.c.l.b16 %v239
    %v2570 = vunpack.c.h.b16 %v239
    %v2571 = vunpack.c.l.b16 %v240
    %v2572 = vunpack.c.h.b16 %v240
    %v2573 = vunpack.c.l.b16 %v241
    %v2574 = vunpack.c.h.b16 %v241
    %v2575 = vunpack.c.l.b16 %v242
    %v2576 = vunpack.c.h.b16 %v242
    %v2577 = vunpack.c.l.b16 %v243
    %v2578 = vunpack.c.h.b16 %v243
    %v2579 = vunpack.c.l.b16 %v244
    %v2580 = vunpack.c.h.b16 %v244
    %v2581 = vunpack.c.l.b16 %v245
    %v2582 = vunpack.c.h.b16 %v245
    %v2583 = vunpack.c.l.b16 %v246
    %v2584 = vunpack.c.h.b16 %v246
    %v2585 = vunpack.c.l.b16 %v247
    %v2586 = vunpack.c.h.b16 %v247
    %v2587 = vunpack.c.l.b16 %v248
    %v2588 = vunpack.c.h.b16 %v248
    %v2589 = vunpack.c.l.b16 %v249
    %v2590 = vunpack.c.h.b16 %v249
    %v2591 = vunpack.c.l.b16 %v250
    %v2592 = vunpack.c.h.b16 %v250
    %v2593 = vunpack.c.l.b16 %v251
    %v2594 = vunpack.c.h.b16 %v251
    %v2595 = vunpack.c.l.b16 %v252
    %v2596 = vunpack.c.h.b16 %v252
    %v2597 = vunpack.c.l.b16 %v253
    %v2598 = vunpack.c.h.b16 %v253
    %v2599 = vunpack.c.l.b16 %v254
    %v2600 = vunpack.c.h.b16 %v254
    %v2601 = vunpack.c.l.b16 %v255
    %v2602 = vunpack.c.h.b16 %v255
    %v2603 = vunpack.c.l.b16 %v256
    %v2604 = vunpack.c.h.b16 %v256
    %v2605 = vunpack.c.l.b16 %v257
    %v2606 = vunpack.c.h.b16 %v257
    %v2607 = vunpack.c.l.b16 %v258
    %v2608 = vunpack.c.h.b16 %v258
    %v2609 = vunpack.c.l.b16 %v259
    %v2610 = vunpack.c.h.b16 %v259
    %v2611 = vunpack.c.l.b16 %v260
    %v2612 = vunpack.c.h.b16 %v260
    %v2613 = vunpack.c.l.b16 %v261
    %v2614 = vunpack.c.h.b16 %v261
    %v2615 = vunpack.c.l.b16 %v262
    %v2616 = vunpack.c.h.b16 %v262
    %v2617 = vunpack.c.l.b16 %v263
    %v2618 = vunpack.c.h.b16 %v263
    %v2619 = vunpack.c.l.b16 %v264
    %v2620 = vunpack.c.h.b16 %v264
    %v2621 = vunpack.c.l.b16 %v265
    %v2622 = vunpack.c.h.b16 %v265
    %v2623 = vunpack.c.l.b16 %v266
    %v2624 = vunpack.c.h.b16 %v266
    %v2625 = vunpack.c.l.b16 %v267
    %v2626 = vunpack.c.h.b16 %v267
    %v2627 = vunpack.c.l.b16 %v268
    %v2628 = vunpack.c.h.b16 %v268
    %v2629 = vunpack.c.l.b16 %v269
    %v2630 = vunpack.c.h.b16 %v269
    %v2631 = vunpack.c.l.b16 %v270
    %v2632 = vunpack.c.h.b16 %v270
    %v2633 = vunpack.c.l.b16 %v271
    %v2634 = vunpack.c.h.b16 %v271
    %v2635 = vunpack.c.l.b16 %v272
    %v2636 = vunpack.c.h.b16 %v272
    %v2637 = vunpack.c.l.b16 %v273
    %v2638 = vunpack.c.h.b16 %v273
    %v2639 = vunpack.c.l.b16 %v274
    %v2640 = vunpack.c.h.b16 %v274
    %v2641 = vunpack.c.l.b16 %v275
    %v2642 = vunpack.c.h.b16 %v275
    %v2643 = vunpack.c.l.b16 %v276
    %v2644 = vunpack.c.h.b16 %v276
    %v2645 = vunpack.c.l.b16 %v277
    %v2646 = vunpack.c.h.b16 %v277
    %v2647 = vunpack.c.l.b16 %v278
    %v2648 = vunpack.c.h.b16 %v278
    %v2649 = vunpack.c.l.b16 %v279
    %v2650 = vunpack.c.h.b16 %v279
    %v2651 = vunpack.c.l.b16 %v280
    %v2652 = vunpack.c.h.b16 %v280
    %v2653 = vunpack.c.l.b16 %v281
    %v2654 = vunpack.c.h.b16 %v281
    %v2655 = vunpack.c.l.b16 %v282
    %v2656 = vunpack.c.h.b16 %v282
    %v2657 = vunpack.c.l.b16 %v283
    %v2658 = vunpack.c.h.b16 %v283
    %v2659 = vunpack.c.l.b16 %v284
    %v2660 = vunpack.c.h.b16 %v284
    %v2661 = vunpack.c.l.b16 %v285
    %v2662 = vunpack.c.h.b16 %v285
    %v2663 = vunpack.c.l.b16 %v286
    %v2664 = vunpack.c.h.b16 %v286
    %v2665 = vunpack.c.l.b16 %v287
    %v2666 = vunpack.c.h.b16 %v287
    %v2667 = vunpack.c.l.b16 %v288
    %v2668 = vunpack.c.h.b16 %v288
    %v2669 = vunpack.c.l.b16 %v289
    %v2670 = vunpack.c.h.b16 %v289
    %v2671 = vunpack.c.l.b16 %v290
    %v2672 = vunpack.c.h.b16 %v290
    %v2673 = vunpack.c.l.b16 %v291
    %v2674 = vunpack.c.h.b16 %v291
    %v2675 = vunpack.c.l.b16 %v292
    %v2676 = vunpack.c.h.b16 %v292
    %v2677 = vunpack.c.l.b16 %v293
    %v2678 = vunpack.c.h.b16 %v293
    %v2679 = vunpack.c.l.b16 %v294
    %v2680 = vunpack.c.h.b16 %v294
    %v2681 = vpack.c.b16 %v2433, %v2425
    %v2682 = vpack.c.b16 %v2434, %v2426
    %v2683 = vpack.c.b16 %v2435, %v2427
    %v2684 = vpack.c.b16 %v2436, %v2428
    %v2685 = vpack.c.b16 %v2437, %v2429
    %v2686 = vpack.c.b16 %v2438, %v2430
    %v2687 = vpack.c.b16 %v2439, %v2431
    %v2688 = vpack.c.b16 %v2440, %v2432
    %v2689 = vpack.c.b16 %v2449, %v2441
    %v2690 = vpack.c.b16 %v2450, %v2442
    %v2691 = vpack.c.b16 %v2451, %v2443
    %v2692 = vpack.c.b16 %v2452, %v2444
    %v2693 = vpack.c.b16 %v2453, %v2445
    %v2694 = vpack.c.b16 %v2454, %v2446
    %v2695 = vpack.c.b16 %v2455, %v2447
    %v2696 = vpack.c.b16 %v2456, %v2448
    %v2697 = vpack.c.b16 %v2465, %v2457
    %v2698 = vpack.c.b16 %v2466, %v2458
    %v2699 = vpack.c.b16 %v2467, %v2459
    %v2700 = vpack.c.b16 %v2468, %v2460
    %v2701 = vpack.c.b16 %v2469, %v2461
    %v2702 = vpack.c.b16 %v2470, %v2462
    %v2703 = vpack.c.b16 %v2471, %v2463
    %v2704 = vpack.c.b16 %v2472, %v2464
    %v2705 = vpack.c.b16 %v2481, %v2473
    %v2706 = vpack.c.b16 %v2482, %v2474
    %v2707 = vpack.c.b16 %v2483, %v2475
    %v2708 = vpack.c.b16 %v2484, %v2476
    %v2709 = vpack.c.b16 %v2485, %v2477
    %v2710 = vpack.c.b16 %v2486, %v2478
    %v2711 = vpack.c.b16 %v2487, %v2479
    %v2712 = vpack.c.b16 %v2488, %v2480
    %v2713 = vpack.c.b16 %v2497, %v2489
    %v2714 = vpack.c.b16 %v2498, %v2490
    %v2715 = vpack.c.b16 %v2499, %v2491
    %v2716 = vpack.c.b16 %v2500, %v2492
    %v2717 = vpack.c.b16 %v2501, %v2493
    %v2718 = vpack.c.b16 %v2502, %v2494
    %v2719 = vpack.c.b16 %v2503, %v2495
    %v2720 = vpack.c.b16 %v2504, %v2496
    %v2721 = vpack.c.b16 %v2513, %v2505
    %v2722 = vpack.c.b16 %v2514, %v2506
    %v2723 = vpack.c.b16 %v2515, %v2507
    %v2724 = vpack.c.b16 %v2516, %v2508
    %v2725 = vpack.c.b16 %v2517, %v2509
    %v2726 = vpack.c.b16 %v2518, %v2510
    %v2727 = vpack.c.b16 %v2519, %v2511
    %v2728 = vpack.c.b16 %v2520, %v2512
    %v2729 = vpack.c.b16 %v2529, %v2521
    %v2730 = vpack.c.b16 %v2530, %v2522
    %v2731 = vpack.c.b16 %v2531, %v2523
    %v2732 = vpack.c.b16 %v2532, %v2524
    %v2733 = vpack.c.b16 %v2533, %v2525
    %v2734 = vpack.c.b16 %v2534, %v2526
    %v2735 = vpack.c.b16 %v2535, %v2527
    %v2736 = vpack.c.b16 %v2536, %v2528
    %v2737 = vpack.c.b16 %v2545, %v2537
    %v2738 = vpack.c.b16 %v2546, %v2538
    %v2739 = vpack.c.b16 %v2547, %v2539
    %v2740 = vpack.c.b16 %v2548, %v2540
    %v2741 = vpack.c.b16 %v2549, %v2541
    %v2742 = vpack.c.b16 %v2550, %v2542
    %v2743 = vpack.c.b16 %v2551, %v2543
    %v2744 = vpack.c.b16 %v2552, %v2544
    %v2745 = vpack.c.b16 %v2561, %v2553
    %v2746 = vpack.c.b16 %v2562, %v2554
    %v2747 = vpack.c.b16 %v2563, %v2555
    %v2748 = vpack.c.b16 %v2564, %v2556
    %v2749 = vpack.c.b16 %v2565, %v2557
    %v2750 = vpack.c.b16 %v2566, %v2558
    %v2751 = vpack.c.b16 %v2567, %v2559
    %v2752 = vpack.c.b16 %v2568, %v2560
    %v2753 = vpack.c.b16 %v2577, %v2569
    %v2754 = vpack.c.b16 %v2578, %v2570
    %v2755 = vpack.c.b16 %v2579, %v2571
    %v2756 = vpack.c.b16 %v2580, %v2572
    %v2757 = vpack.c.b16 %v2581, %v2573
    %v2758 = vpack.c.b16 %v2582, %v2574
    %v2759 = vpack.c.b16 %v2583, %v2575
    %v2760 = vpack.c.b16 %v2584, %v2576
    %v2761 = vpack.c.b16 %v2593, %v2585
    %v2762 = vpack.c.b16 %v2594, %v2586
    %v2763 = vpack.c.b16 %v2595, %v2587
    %v2764 = vpack.c.b16 %v2596, %v2588
    %v2765 = vpack.c.b16 %v2597, %v2589
    %v2766 = vpack.c.b16 %v2598, %v2590
    %v2767 = vpack.c.b16 %v2599, %v2591
    %v2768 = vpack.c.b16 %v2600, %v2592
    %v2769 = vpack.c.b16 %v2609, %v2601
    %v2770 = vpack.c.b16 %v2610, %v2602
    %v2771 = vpack.c.b16 %v2611, %v2603
    %v2772 = vpack.c.b16 %v2612, %v2604
    %v2773 = vpack.c.b16 %v2613, %v2605
    %v2774 = vpack.c.b16 %v2614, %v2606
    %v2775 = vpack.c.b16 %v2615, %v2607
    %v2776 = vpack.c.b16 %v2616, %v2608
    %v2777 = vpack.c.b16 %v2625, %v2617
    %v2778 = vpack.c.b16 %v2626, %v2618
    %v2779 = vpack.c.b16 %v2627, %v2619
    %v2780 = vpack.c.b16 %v2628, %v2620
    %v2781 = vpack.c.b16 %v2629, %v2621
    %v2782 = vpack.c.b16 %v2630, %v2622
    %v2783 = vpack.c.b16 %v2631, %v2623
    %v2784 = vpack.c.b16 %v2632, %v2624
    %v2785 = vpack.c.b16 %v2641, %v2633
    %v2786 = vpack.c.b16 %v2642, %v2634
    %v2787 = vpack.c.b16 %v2643, %v2635
    %v2788 = vpack.c.b16 %v2644, %v2636
    %v2789 = vpack.c.b16 %v2645, %v2637
    %v2790 = vpack.c.b16 %v2646, %v2638
    %v2791 = vpack.c.b16 %v2647, %v2639
    %v2792 = vpack.c.b16 %v2648, %v2640
    %v2793 = vpack.c.b16 %v2657, %v2649
    %v2794 = vpack.c.b16 %v2658, %v2650
    %v2795 = vpack.c.b16 %v2659, %v2651
    %v2796 = vpack.c.b16 %v2660, %v2652
    %v2797 = vpack.c.b16 %v2661, %v2653
    %v2798 = vpack.c.b16 %v2662, %v2654
    %v2799 = vpack.c.b16 %v2663, %v2655
    %v2800 = vpack.c.b16 %v2664, %v2656
    %v2801 = vpack.c.b16 %v2673, %v2665
    %v2802 = vpack.c.b16 %v2674, %v2666
    %v2803 = vpack.c.b16 %v2675, %v2667
    %v2804 = vpack.c.b16 %v2676, %v2668
    %v2805 = vpack.c.b16 %v2677, %v2669
    %v2806 = vpack.c.b16 %v2678, %v2670
    %v2807 = vpack.c.b16 %v2679, %v2671
    %v2808 = vpack.c.b16 %v2680, %v2672
    %2937 = vmatpush.bf16.msra.mxu0 %v2737
    %2938 = vmatpush.bf16.msra.mxu0 %v2729
    %2939 = vmatpush.bf16.msra.mxu0 %v2721
    %2940 = vmatpush.bf16.msra.mxu0 %v2713
    %2941 = vmatpush.bf16.msra.mxu0 %v2705
    %2942 = vmatpush.bf16.msra.mxu0 %v2697
    %2943 = vmatpush.bf16.msra.mxu0 %v2689
    %2944 = vmatpush.bf16.msra.mxu0 %v2681
    %2945 = vmatmul.bf16.gmra.mxu0 %v2295
    %v2946 = vpop.f32.mrf.mxu0
    %v2947 = vadd.f32 0.0, %v2946
    %v2948 = vpop.f32.mrf.mxu0
    %2949 = vdwg.mxu0
    %2950 = vmatpush.bf16.msra.mxu0 %v2801
    %2951 = vmatpush.bf16.msra.mxu0 %v2793
    %2952 = vmatpush.bf16.msra.mxu0 %v2785
    %2953 = vmatpush.bf16.msra.mxu0 %v2777
    %2954 = vmatpush.bf16.msra.mxu0 %v2769
    %2955 = vmatpush.bf16.msra.mxu0 %v2761
    %2956 = vmatpush.bf16.msra.mxu0 %v2753
    %2957 = vmatpush.bf16.msra.mxu0 %v2745
    %2958 = vmatmul.bf16.gmra.mxu0 %v2296
    %v2959 = vpop.f32.mrf.mxu0
    %v2960 = vadd.f32 %v2947, %v2959
    %v2961 = vpop.f32.mrf.mxu0
    %2962 = vdwg.mxu0
    %2963 = vmatpush.bf16.msra.mxu0 %v2738
    %2964 = vmatpush.bf16.msra.mxu0 %v2730
    %2965 = vmatpush.bf16.msra.mxu0 %v2722
    %2966 = vmatpush.bf16.msra.mxu0 %v2714
    %2967 = vmatpush.bf16.msra.mxu0 %v2706
    %2968 = vmatpush.bf16.msra.mxu0 %v2698
    %2969 = vmatpush.bf16.msra.mxu0 %v2690
    %2970 = vmatpush.bf16.msra.mxu0 %v2682
    %2971 = vmatmul.bf16.gmra.mxu0 %v2295
    %v2972 = vpop.f32.mrf.mxu0
    %v2973 = vadd.f32 0.0, %v2972
    %v2974 = vpop.f32.mrf.mxu0
    %2975 = vdwg.mxu0
    %2976 = vmatpush.bf16.msra.mxu0 %v2802
    %2977 = vmatpush.bf16.msra.mxu0 %v2794
    %2978 = vmatpush.bf16.msra.mxu0 %v2786
    %2979 = vmatpush.bf16.msra.mxu0 %v2778
    %2980 = vmatpush.bf16.msra.mxu0 %v2770
    %2981 = vmatpush.bf16.msra.mxu0 %v2762
    %2982 = vmatpush.bf16.msra.mxu0 %v2754
    %2983 = vmatpush.bf16.msra.mxu0 %v2746
    %2984 = vmatmul.bf16.gmra.mxu0 %v2296
    %v2985 = vpop.f32.mrf.mxu0
    %v2986 = vadd.f32 %v2973, %v2985
    %v2987 = vpop.f32.mrf.mxu0
    %2988 = vdwg.mxu0
    %2989 = vmatpush.bf16.msra.mxu0 %v2739
    %2990 = vmatpush.bf16.msra.mxu0 %v2731
    %2991 = vmatpush.bf16.msra.mxu0 %v2723
    %2992 = vmatpush.bf16.msra.mxu0 %v2715
    %2993 = vmatpush.bf16.msra.mxu0 %v2707
    %2994 = vmatpush.bf16.msra.mxu0 %v2699
    %2995 = vmatpush.bf16.msra.mxu0 %v2691
    %2996 = vmatpush.bf16.msra.mxu0 %v2683
    %2997 = vmatmul.bf16.gmra.mxu0 %v2295
    %v2998 = vpop.f32.mrf.mxu0
    %v2999 = vadd.f32 0.0, %v2998
    %v3000 = vpop.f32.mrf.mxu0
    %3001 = vdwg.mxu0
    %3002 = vmatpush.bf16.msra.mxu0 %v2803
    %3003 = vmatpush.bf16.msra.mxu0 %v2795
    %3004 = vmatpush.bf16.msra.mxu0 %v2787
    %3005 = vmatpush.bf16.msra.mxu0 %v2779
    %3006 = vmatpush.bf16.msra.mxu0 %v2771
    %3007 = vmatpush.bf16.msra.mxu0 %v2763
    %3008 = vmatpush.bf16.msra.mxu0 %v2755
    %3009 = vmatpush.bf16.msra.mxu0 %v2747
    %3010 = vmatmul.bf16.gmra.mxu0 %v2296
    %v3011 = vpop.f32.mrf.mxu0
    %v3012 = vadd.f32 %v2999, %v3011
    %v3013 = vpop.f32.mrf.mxu0
    %3014 = vdwg.mxu0
    %3015 = vmatpush.bf16.msra.mxu0 %v2740
    %3016 = vmatpush.bf16.msra.mxu0 %v2732
    %3017 = vmatpush.bf16.msra.mxu0 %v2724
    %3018 = vmatpush.bf16.msra.mxu0 %v2716
    %3019 = vmatpush.bf16.msra.mxu0 %v2708
    %3020 = vmatpush.bf16.msra.mxu0 %v2700
    %3021 = vmatpush.bf16.msra.mxu0 %v2692
    %3022 = vmatpush.bf16.msra.mxu0 %v2684
    %3023 = vmatmul.bf16.gmra.mxu0 %v2295
    %v3024 = vpop.f32.mrf.mxu0
    %v3025 = vadd.f32 0.0, %v3024
    %v3026 = vpop.f32.mrf.mxu0
    %3027 = vdwg.mxu0
    %3028 = vmatpush.bf16.msra.mxu0 %v2804
    %3029 = vmatpush.bf16.msra.mxu0 %v2796
    %3030 = vmatpush.bf16.msra.mxu0 %v2788
    %3031 = vmatpush.bf16.msra.mxu0 %v2780
    %3032 = vmatpush.bf16.msra.mxu0 %v2772
    %3033 = vmatpush.bf16.msra.mxu0 %v2764
    %3034 = vmatpush.bf16.msra.mxu0 %v2756
    %3035 = vmatpush.bf16.msra.mxu0 %v2748
    %3036 = vmatmul.bf16.gmra.mxu0 %v2296
    %v3037 = vpop.f32.mrf.mxu0
    %v3038 = vadd.f32 %v3025, %v3037
    %v3039 = vpop.f32.mrf.mxu0
    %3040 = vdwg.mxu0
    %3041 = vmatpush.bf16.msra.mxu0 %v2741
    %3042 = vmatpush.bf16.msra.mxu0 %v2733
    %3043 = vmatpush.bf16.msra.mxu0 %v2725
    %3044 = vmatpush.bf16.msra.mxu0 %v2717
    %3045 = vmatpush.bf16.msra.mxu0 %v2709
    %3046 = vmatpush.bf16.msra.mxu0 %v2701
    %3047 = vmatpush.bf16.msra.mxu0 %v2693
    %3048 = vmatpush.bf16.msra.mxu0 %v2685
    %3049 = vmatmul.bf16.gmra.mxu0 %v2295
    %v3050 = vpop.f32.mrf.mxu0
    %v3051 = vadd.f32 0.0, %v3050
    %v3052 = vpop.f32.mrf.mxu0
    %3053 = vdwg.mxu0
    %3054 = vmatpush.bf16.msra.mxu0 %v2805
    %3055 = vmatpush.bf16.msra.mxu0 %v2797
    %3056 = vmatpush.bf16.msra.mxu0 %v2789
    %3057 = vmatpush.bf16.msra.mxu0 %v2781
    %3058 = vmatpush.bf16.msra.mxu0 %v2773
    %3059 = vmatpush.bf16.msra.mxu0 %v2765
    %3060 = vmatpush.bf16.msra.mxu0 %v2757
    %3061 = vmatpush.bf16.msra.mxu0 %v2749
    %3062 = vmatmul.bf16.gmra.mxu0 %v2296
    %v3063 = vpop.f32.mrf.mxu0
    %v3064 = vadd.f32 %v3051, %v3063
    %v3065 = vpop.f32.mrf.mxu0
    %3066 = vdwg.mxu0
    %3067 = vmatpush.bf16.msra.mxu0 %v2742
    %3068 = vmatpush.bf16.msra.mxu0 %v2734
    %3069 = vmatpush.bf16.msra.mxu0 %v2726
    %3070 = vmatpush.bf16.msra.mxu0 %v2718
    %3071 = vmatpush.bf16.msra.mxu0 %v2710
    %3072 = vmatpush.bf16.msra.mxu0 %v2702
    %3073 = vmatpush.bf16.msra.mxu0 %v2694
    %3074 = vmatpush.bf16.msra.mxu0 %v2686
    %3075 = vmatmul.bf16.gmra.mxu0 %v2295
    %v3076 = vpop.f32.mrf.mxu0
    %v3077 = vadd.f32 0.0, %v3076
    %v3078 = vpop.f32.mrf.mxu0
    %3079 = vdwg.mxu0
    %3080 = vmatpush.bf16.msra.mxu0 %v2806
    %3081 = vmatpush.bf16.msra.mxu0 %v2798
    %3082 = vmatpush.bf16.msra.mxu0 %v2790
    %3083 = vmatpush.bf16.msra.mxu0 %v2782
    %3084 = vmatpush.bf16.msra.mxu0 %v2774
    %3085 = vmatpush.bf16.msra.mxu0 %v2766
    %3086 = vmatpush.bf16.msra.mxu0 %v2758
    %3087 = vmatpush.bf16.msra.mxu0 %v2750
    %3088 = vmatmul.bf16.gmra.mxu0 %v2296
    %v3089 = vpop.f32.mrf.mxu0
    %v3090 = vadd.f32 %v3077, %v3089
    %v3091 = vpop.f32.mrf.mxu0
    %3092 = vdwg.mxu0
    %3093 = vmatpush.bf16.msra.mxu0 %v2743
    %3094 = vmatpush.bf16.msra.mxu0 %v2735
    %3095 = vmatpush.bf16.msra.mxu0 %v2727
    %3096 = vmatpush.bf16.msra.mxu0 %v2719
    %3097 = vmatpush.bf16.msra.mxu0 %v2711
    %3098 = vmatpush.bf16.msra.mxu0 %v2703
    %3099 = vmatpush.bf16.msra.mxu0 %v2695
    %3100 = vmatpush.bf16.msra.mxu0 %v2687
    %3101 = vmatmul.bf16.gmra.mxu0 %v2295
    %v3102 = vpop.f32.mrf.mxu0
    %v3103 = vadd.f32 0.0, %v3102
    %v3104 = vpop.f32.mrf.mxu0
    %3105 = vdwg.mxu0
    %3106 = vmatpush.bf16.msra.mxu0 %v2807
    %3107 = vmatpush.bf16.msra.mxu0 %v2799
    %3108 = vmatpush.bf16.msra.mxu0 %v2791
    %3109 = vmatpush.bf16.msra.mxu0 %v2783
    %3110 = vmatpush.bf16.msra.mxu0 %v2775
    %3111 = vmatpush.bf16.msra.mxu0 %v2767
    %3112 = vmatpush.bf16.msra.mxu0 %v2759
    %3113 = vmatpush.bf16.msra.mxu0 %v2751
    %3114 = vmatmul.bf16.gmra.mxu0 %v2296
    %v3115 = vpop.f32.mrf.mxu0
    %v3116 = vadd.f32 %v3103, %v3115
    %v3117 = vpop.f32.mrf.mxu0
    %3118 = vdwg.mxu0
    %3119 = vmatpush.bf16.msra.mxu0 %v2744
    %3120 = vmatpush.bf16.msra.mxu0 %v2736
    %3121 = vmatpush.bf16.msra.mxu0 %v2728
    %3122 = vmatpush.bf16.msra.mxu0 %v2720
    %3123 = vmatpush.bf16.msra.mxu0 %v2712
    %3124 = vmatpush.bf16.msra.mxu0 %v2704
    %3125 = vmatpush.bf16.msra.mxu0 %v2696
    %3126 = vmatpush.bf16.msra.mxu0 %v2688
    %3127 = vmatmul.bf16.gmra.mxu0 %v2295
    %v3128 = vpop.f32.mrf.mxu0
    %v3129 = vadd.f32 0.0, %v3128
    %v3130 = vpop.f32.mrf.mxu0
    %3131 = vdwg.mxu0
    %3132 = vmatpush.bf16.msra.mxu0 %v2808
    %3133 = vmatpush.bf16.msra.mxu0 %v2800
    %3134 = vmatpush.bf16.msra.mxu0 %v2792
    %3135 = vmatpush.bf16.msra.mxu0 %v2784
    %3136 = vmatpush.bf16.msra.mxu0 %v2776
    %3137 = vmatpush.bf16.msra.mxu0 %v2768
    %3138 = vmatpush.bf16.msra.mxu0 %v2760
    %3139 = vmatpush.bf16.msra.mxu0 %v2752
    %3140 = vmatmul.bf16.gmra.mxu0 %v2296
    %v3141 = vpop.f32.mrf.mxu0
    %v3142 = vadd.f32 %v3129, %v3141
    %v3143 = vpop.f32.mrf.mxu0
    %3144 = vdwg.mxu0
    %v3145 = vadd.f32 %v2110, %v2960
    %v3146 = vadd.f32 %v2136, %v2986
    %v3147 = vadd.f32 %v2162, %v3012
    %v3148 = vadd.f32 %v2188, %v3038
    %v3149 = vadd.f32 %v2214, %v3064
    %v3150 = vadd.f32 %v2240, %v3090
    %v3151 = vadd.f32 %v2266, %v3116
    %v3152 = vadd.f32 %v2292, %v3142
    %v3153 = vxor.u32 %v3145, 2147483648
    %v3154 = vxor.u32 %v3146, 2147483648
    %v3155 = vmul.f32 %v3153, 1.442695
    %v3156 = vpow.pop %v3155
    %v3157 = vmul.f32 %v3154, 1.442695
    %v3158 = vpow.pop %v3157
    %v3159 = vadd.f32 %v3156, 1.0
    %v3160 = vadd.f32 %v3158, 1.0
    %v3161 = vrcp.pop %v3159
    %v3162 = vmul.f32 %v3159, %v3161
    %v3163 = vsub.f32 1.0, %v3162
    %v3164 = vmul.f32 %v3161, %v3163
    %v3165 = vadd.f32 %v3161, %v3164
    %vm3166 = vweird.f32 %v3159
    %vm3167 = vweird.f32 %v3161
    %vm3168 = vmor %vm3166, %vm3167
    %v3169 = vsel %vm3168, %v3161, %v3165
    %v3170 = vand.u32 2147483647, %v3159
    %vm3171 = vcmp.eq.f32.partialorder %v3170, 8.507059e+37
    %v3172 = vand.u32 %v3159, 2147483648
    %v3173 = vor.u32 1.1754944e-38, %v3172
    %v3174 = vsel %vm3171, %v3173, %v3169
    %v3175 = vmul.f32 1.0, %v3174
    %v3176 = vrcp.pop %v3160
    %v3177 = vmul.f32 %v3160, %v3176
    %v3178 = vsub.f32 1.0, %v3177
    %v3179 = vmul.f32 %v3176, %v3178
    %v3180 = vadd.f32 %v3176, %v3179
    %vm3181 = vweird.f32 %v3160
    %vm3182 = vweird.f32 %v3176
    %vm3183 = vmor %vm3181, %vm3182
    %v3184 = vsel %vm3183, %v3176, %v3180
    %v3185 = vand.u32 2147483647, %v3160
    %vm3186 = vcmp.eq.f32.partialorder %v3185, 8.507059e+37
    %v3187 = vand.u32 %v3160, 2147483648
    %v3188 = vor.u32 1.1754944e-38, %v3187
    %v3189 = vsel %vm3186, %v3188, %v3184
    %v3190 = vmul.f32 1.0, %v3189
    %v3191 = vxor.u32 %v3147, 2147483648
    %v3192 = vxor.u32 %v3148, 2147483648
    %v3193 = vmul.f32 %v3191, 1.442695
    %v3194 = vpow.pop %v3193
    %v3195 = vmul.f32 %v3192, 1.442695
    %v3196 = vpow.pop %v3195
    %v3197 = vadd.f32 %v3194, 1.0
    %v3198 = vadd.f32 %v3196, 1.0
    %v3199 = vrcp.pop %v3197
    %v3200 = vmul.f32 %v3197, %v3199
    %v3201 = vsub.f32 1.0, %v3200
    %v3202 = vmul.f32 %v3199, %v3201
    %v3203 = vadd.f32 %v3199, %v3202
    %vm3204 = vweird.f32 %v3197
    %vm3205 = vweird.f32 %v3199
    %vm3206 = vmor %vm3204, %vm3205
    %v3207 = vsel %vm3206, %v3199, %v3203
    %v3208 = vand.u32 2147483647, %v3197
    %vm3209 = vcmp.eq.f32.partialorder %v3208, 8.507059e+37
    %v3210 = vand.u32 %v3197, 2147483648
    %v3211 = vor.u32 1.1754944e-38, %v3210
    %v3212 = vsel %vm3209, %v3211, %v3207
    %v3213 = vmul.f32 1.0, %v3212
    %v3214 = vrcp.pop %v3198
    %v3215 = vmul.f32 %v3198, %v3214
    %v3216 = vsub.f32 1.0, %v3215
    %v3217 = vmul.f32 %v3214, %v3216
    %v3218 = vadd.f32 %v3214, %v3217
    %vm3219 = vweird.f32 %v3198
    %vm3220 = vweird.f32 %v3214
    %vm3221 = vmor %vm3219, %vm3220
    %v3222 = vsel %vm3221, %v3214, %v3218
    %v3223 = vand.u32 2147483647, %v3198
    %vm3224 = vcmp.eq.f32.partialorder %v3223, 8.507059e+37
    %v3225 = vand.u32 %v3198, 2147483648
    %v3226 = vor.u32 1.1754944e-38, %v3225
    %v3227 = vsel %vm3224, %v3226, %v3222
    %v3228 = vmul.f32 1.0, %v3227
    %v3229 = vtanh.pop %v3149
    %v3230 = vtanh.pop %v3150
    %v3231 = vxor.u32 %v3151, 2147483648
    %v3232 = vxor.u32 %v3152, 2147483648
    %v3233 = vmul.f32 %v3231, 1.442695
    %v3234 = vpow.pop %v3233
    %v3235 = vmul.f32 %v3232, 1.442695
    %v3236 = vpow.pop %v3235
    %v3237 = vadd.f32 %v3234, 1.0
    %v3238 = vadd.f32 %v3236, 1.0
    %v3239 = vrcp.pop %v3237
    %v3240 = vmul.f32 %v3237, %v3239
    %v3241 = vsub.f32 1.0, %v3240
    %v3242 = vmul.f32 %v3239, %v3241
    %v3243 = vadd.f32 %v3239, %v3242
    %vm3244 = vweird.f32 %v3237
    %vm3245 = vweird.f32 %v3239
    %vm3246 = vmor %vm3244, %vm3245
    %v3247 = vsel %vm3246, %v3239, %v3243
    %v3248 = vand.u32 2147483647, %v3237
    %vm3249 = vcmp.eq.f32.partialorder %v3248, 8.507059e+37
    %v3250 = vand.u32 %v3237, 2147483648
    %v3251 = vor.u32 1.1754944e-38, %v3250
    %v3252 = vsel %vm3249, %v3251, %v3247
    %v3253 = vmul.f32 1.0, %v3252
    %v3254 = vrcp.pop %v3238
    %v3255 = vmul.f32 %v3238, %v3254
    %v3256 = vsub.f32 1.0, %v3255
    %v3257 = vmul.f32 %v3254, %v3256
    %v3258 = vadd.f32 %v3254, %v3257
    %vm3259 = vweird.f32 %v3238
    %vm3260 = vweird.f32 %v3254
    %vm3261 = vmor %vm3259, %vm3260
    %v3262 = vsel %vm3261, %v3254, %v3258
    %v3263 = vand.u32 2147483647, %v3238
    %vm3264 = vcmp.eq.f32.partialorder %v3263, 8.507059e+37
    %v3265 = vand.u32 %v3238, 2147483648
    %v3266 = vor.u32 1.1754944e-38, %v3265
    %v3267 = vsel %vm3264, %v3266, %v3262
    %v3268 = vmul.f32 1.0, %v3267
    %v3269 = vmul.f32 %v3213, %v447
    %v3270 = vmul.f32 %v3228, %v448
    %v3271 = vmul.f32 %v3175, %v3229
    %v3272 = vmul.f32 %v3190, %v3230
    %v3273 = vadd.f32 %v3269, %v3271
    %v3274 = vadd.f32 %v3270, %v3272
    %v3275 = vtanh.pop %v3273
    %v3276 = vtanh.pop %v3274
    %v3277 = vmul.f32 %v3253, %v3275
    %v3278 = vmul.f32 %v3268, %v3276
    %s3279 = scalar_lea.vmem %s0, 32
    %v3280 = vld [vmem:[%s3279] sm:$0xff]
    %v3281 = vld [vmem:[%s3279 + $0x8] sm:$0xff]
    %v3282 = vld [vmem:[%s3279 + $0x10] sm:$0xff]
    %v3283 = vld [vmem:[%s3279 + $0x18] sm:$0xff]
    %v3284 = vunpack.c.l.bf16 %v3280
    %v3285 = vunpack.c.h.bf16 %v3280
    %v3286 = vunpack.c.l.bf16 %v3281
    %v3287 = vunpack.c.h.bf16 %v3281
    %v3288 = vunpack.c.l.bf16 %v3282
    %v3289 = vunpack.c.h.bf16 %v3282
    %v3290 = vunpack.c.l.bf16 %v3283
    %v3291 = vunpack.c.h.bf16 %v3283
    %v3292 = vpack.c.bf16 %v3277, %v3277
    %v3293 = vpack.c.bf16 %v3278, %v3278
    %3294 = vmatpush.bf16.msra.mxu0 %v905
    %3295 = vmatpush.bf16.msra.mxu0 %v897
    %3296 = vmatpush.bf16.msra.mxu0 %v889
    %3297 = vmatpush.bf16.msra.mxu0 %v881
    %3298 = vmatpush.bf16.msra.mxu0 %v873
    %3299 = vmatpush.bf16.msra.mxu0 %v865
    %3300 = vmatpush.bf16.msra.mxu0 %v857
    %3301 = vmatpush.bf16.msra.mxu0 %v849
    %3302 = vmatmul.bf16.gmra.mxu0 %v2295
    %v3303 = vpop.f32.mrf.mxu0
    %v3304 = vadd.f32 0.0, %v3303
    %v3305 = vpop.f32.mrf.mxu0
    %3306 = vdwg.mxu0
    %3307 = vmatpush.bf16.msra.mxu0 %v969
    %3308 = vmatpush.bf16.msra.mxu0 %v961
    %3309 = vmatpush.bf16.msra.mxu0 %v953
    %3310 = vmatpush.bf16.msra.mxu0 %v945
    %3311 = vmatpush.bf16.msra.mxu0 %v937
    %3312 = vmatpush.bf16.msra.mxu0 %v929
    %3313 = vmatpush.bf16.msra.mxu0 %v921
    %3314 = vmatpush.bf16.msra.mxu0 %v913
    %3315 = vmatmul.bf16.gmra.mxu0 %v2296
    %v3316 = vpop.f32.mrf.mxu0
    %v3317 = vadd.f32 %v3304, %v3316
    %v3318 = vpop.f32.mrf.mxu0
    %3319 = vdwg.mxu0
    %3320 = vmatpush.bf16.msra.mxu0 %v906
    %3321 = vmatpush.bf16.msra.mxu0 %v898
    %3322 = vmatpush.bf16.msra.mxu0 %v890
    %3323 = vmatpush.bf16.msra.mxu0 %v882
    %3324 = vmatpush.bf16.msra.mxu0 %v874
    %3325 = vmatpush.bf16.msra.mxu0 %v866
    %3326 = vmatpush.bf16.msra.mxu0 %v858
    %3327 = vmatpush.bf16.msra.mxu0 %v850
    %3328 = vmatmul.bf16.gmra.mxu0 %v2295
    %v3329 = vpop.f32.mrf.mxu0
    %v3330 = vadd.f32 0.0, %v3329
    %v3331 = vpop.f32.mrf.mxu0
    %3332 = vdwg.mxu0
    %3333 = vmatpush.bf16.msra.mxu0 %v970
    %3334 = vmatpush.bf16.msra.mxu0 %v962
    %3335 = vmatpush.bf16.msra.mxu0 %v954
    %3336 = vmatpush.bf16.msra.mxu0 %v946
    %3337 = vmatpush.bf16.msra.mxu0 %v938
    %3338 = vmatpush.bf16.msra.mxu0 %v930
    %3339 = vmatpush.bf16.msra.mxu0 %v922
    %3340 = vmatpush.bf16.msra.mxu0 %v914
    %3341 = vmatmul.bf16.gmra.mxu0 %v2296
    %v3342 = vpop.f32.mrf.mxu0
    %v3343 = vadd.f32 %v3330, %v3342
    %v3344 = vpop.f32.mrf.mxu0
    %3345 = vdwg.mxu0
    %3346 = vmatpush.bf16.msra.mxu0 %v907
    %3347 = vmatpush.bf16.msra.mxu0 %v899
    %3348 = vmatpush.bf16.msra.mxu0 %v891
    %3349 = vmatpush.bf16.msra.mxu0 %v883
    %3350 = vmatpush.bf16.msra.mxu0 %v875
    %3351 = vmatpush.bf16.msra.mxu0 %v867
    %3352 = vmatpush.bf16.msra.mxu0 %v859
    %3353 = vmatpush.bf16.msra.mxu0 %v851
    %3354 = vmatmul.bf16.gmra.mxu0 %v2295
    %v3355 = vpop.f32.mrf.mxu0
    %v3356 = vadd.f32 0.0, %v3355
    %v3357 = vpop.f32.mrf.mxu0
    %3358 = vdwg.mxu0
    %3359 = vmatpush.bf16.msra.mxu0 %v971
    %3360 = vmatpush.bf16.msra.mxu0 %v963
    %3361 = vmatpush.bf16.msra.mxu0 %v955
    %3362 = vmatpush.bf16.msra.mxu0 %v947
    %3363 = vmatpush.bf16.msra.mxu0 %v939
    %3364 = vmatpush.bf16.msra.mxu0 %v931
    %3365 = vmatpush.bf16.msra.mxu0 %v923
    %3366 = vmatpush.bf16.msra.mxu0 %v915
    %3367 = vmatmul.bf16.gmra.mxu0 %v2296
    %v3368 = vpop.f32.mrf.mxu0
    %v3369 = vadd.f32 %v3356, %v3368
    %v3370 = vpop.f32.mrf.mxu0
    %3371 = vdwg.mxu0
    %3372 = vmatpush.bf16.msra.mxu0 %v908
    %3373 = vmatpush.bf16.msra.mxu0 %v900
    %3374 = vmatpush.bf16.msra.mxu0 %v892
    %3375 = vmatpush.bf16.msra.mxu0 %v884
    %3376 = vmatpush.bf16.msra.mxu0 %v876
    %3377 = vmatpush.bf16.msra.mxu0 %v868
    %3378 = vmatpush.bf16.msra.mxu0 %v860
    %3379 = vmatpush.bf16.msra.mxu0 %v852
    %3380 = vmatmul.bf16.gmra.mxu0 %v2295
    %v3381 = vpop.f32.mrf.mxu0
    %v3382 = vadd.f32 0.0, %v3381
    %v3383 = vpop.f32.mrf.mxu0
    %3384 = vdwg.mxu0
    %3385 = vmatpush.bf16.msra.mxu0 %v972
    %3386 = vmatpush.bf16.msra.mxu0 %v964
    %3387 = vmatpush.bf16.msra.mxu0 %v956
    %3388 = vmatpush.bf16.msra.mxu0 %v948
    %3389 = vmatpush.bf16.msra.mxu0 %v940
    %3390 = vmatpush.bf16.msra.mxu0 %v932
    %3391 = vmatpush.bf16.msra.mxu0 %v924
    %3392 = vmatpush.bf16.msra.mxu0 %v916
    %3393 = vmatmul.bf16.gmra.mxu0 %v2296
    %v3394 = vpop.f32.mrf.mxu0
    %v3395 = vadd.f32 %v3382, %v3394
    %v3396 = vpop.f32.mrf.mxu0
    %3397 = vdwg.mxu0
    %3398 = vmatpush.bf16.msra.mxu0 %v909
    %3399 = vmatpush.bf16.msra.mxu0 %v901
    %3400 = vmatpush.bf16.msra.mxu0 %v893
    %3401 = vmatpush.bf16.msra.mxu0 %v885
    %3402 = vmatpush.bf16.msra.mxu0 %v877
    %3403 = vmatpush.bf16.msra.mxu0 %v869
    %3404 = vmatpush.bf16.msra.mxu0 %v861
    %3405 = vmatpush.bf16.msra.mxu0 %v853
    %3406 = vmatmul.bf16.gmra.mxu0 %v2295
    %v3407 = vpop.f32.mrf.mxu0
    %v3408 = vadd.f32 0.0, %v3407
    %v3409 = vpop.f32.mrf.mxu0
    %3410 = vdwg.mxu0
    %3411 = vmatpush.bf16.msra.mxu0 %v973
    %3412 = vmatpush.bf16.msra.mxu0 %v965
    %3413 = vmatpush.bf16.msra.mxu0 %v957
    %3414 = vmatpush.bf16.msra.mxu0 %v949
    %3415 = vmatpush.bf16.msra.mxu0 %v941
    %3416 = vmatpush.bf16.msra.mxu0 %v933
    %3417 = vmatpush.bf16.msra.mxu0 %v925
    %3418 = vmatpush.bf16.msra.mxu0 %v917
    %3419 = vmatmul.bf16.gmra.mxu0 %v2296
    %v3420 = vpop.f32.mrf.mxu0
    %v3421 = vadd.f32 %v3408, %v3420
    %v3422 = vpop.f32.mrf.mxu0
    %3423 = vdwg.mxu0
    %3424 = vmatpush.bf16.msra.mxu0 %v910
    %3425 = vmatpush.bf16.msra.mxu0 %v902
    %3426 = vmatpush.bf16.msra.mxu0 %v894
    %3427 = vmatpush.bf16.msra.mxu0 %v886
    %3428 = vmatpush.bf16.msra.mxu0 %v878
    %3429 = vmatpush.bf16.msra.mxu0 %v870
    %3430 = vmatpush.bf16.msra.mxu0 %v862
    %3431 = vmatpush.bf16.msra.mxu0 %v854
    %3432 = vmatmul.bf16.gmra.mxu0 %v2295
    %v3433 = vpop.f32.mrf.mxu0
    %v3434 = vadd.f32 0.0, %v3433
    %v3435 = vpop.f32.mrf.mxu0
    %3436 = vdwg.mxu0
    %3437 = vmatpush.bf16.msra.mxu0 %v974
    %3438 = vmatpush.bf16.msra.mxu0 %v966
    %3439 = vmatpush.bf16.msra.mxu0 %v958
    %3440 = vmatpush.bf16.msra.mxu0 %v950
    %3441 = vmatpush.bf16.msra.mxu0 %v942
    %3442 = vmatpush.bf16.msra.mxu0 %v934
    %3443 = vmatpush.bf16.msra.mxu0 %v926
    %3444 = vmatpush.bf16.msra.mxu0 %v918
    %3445 = vmatmul.bf16.gmra.mxu0 %v2296
    %v3446 = vpop.f32.mrf.mxu0
    %v3447 = vadd.f32 %v3434, %v3446
    %v3448 = vpop.f32.mrf.mxu0
    %3449 = vdwg.mxu0
    %3450 = vmatpush.bf16.msra.mxu0 %v911
    %3451 = vmatpush.bf16.msra.mxu0 %v903
    %3452 = vmatpush.bf16.msra.mxu0 %v895
    %3453 = vmatpush.bf16.msra.mxu0 %v887
    %3454 = vmatpush.bf16.msra.mxu0 %v879
    %3455 = vmatpush.bf16.msra.mxu0 %v871
    %3456 = vmatpush.bf16.msra.mxu0 %v863
    %3457 = vmatpush.bf16.msra.mxu0 %v855
    %3458 = vmatmul.bf16.gmra.mxu0 %v2295
    %v3459 = vpop.f32.mrf.mxu0
    %v3460 = vadd.f32 0.0, %v3459
    %v3461 = vpop.f32.mrf.mxu0
    %3462 = vdwg.mxu0
    %3463 = vmatpush.bf16.msra.mxu0 %v975
    %3464 = vmatpush.bf16.msra.mxu0 %v967
    %3465 = vmatpush.bf16.msra.mxu0 %v959
    %3466 = vmatpush.bf16.msra.mxu0 %v951
    %3467 = vmatpush.bf16.msra.mxu0 %v943
    %3468 = vmatpush.bf16.msra.mxu0 %v935
    %3469 = vmatpush.bf16.msra.mxu0 %v927
    %3470 = vmatpush.bf16.msra.mxu0 %v919
    %3471 = vmatmul.bf16.gmra.mxu0 %v2296
    %v3472 = vpop.f32.mrf.mxu0
    %v3473 = vadd.f32 %v3460, %v3472
    %v3474 = vpop.f32.mrf.mxu0
    %3475 = vdwg.mxu0
    %3476 = vmatpush.bf16.msra.mxu0 %v912
    %3477 = vmatpush.bf16.msra.mxu0 %v904
    %3478 = vmatpush.bf16.msra.mxu0 %v896
    %3479 = vmatpush.bf16.msra.mxu0 %v888
    %3480 = vmatpush.bf16.msra.mxu0 %v880
    %3481 = vmatpush.bf16.msra.mxu0 %v872
    %3482 = vmatpush.bf16.msra.mxu0 %v864
    %3483 = vmatpush.bf16.msra.mxu0 %v856
    %3484 = vmatmul.bf16.gmra.mxu0 %v2295
    %v3485 = vpop.f32.mrf.mxu0
    %v3486 = vadd.f32 0.0, %v3485
    %v3487 = vpop.f32.mrf.mxu0
    %3488 = vdwg.mxu0
    %3489 = vmatpush.bf16.msra.mxu0 %v976
    %3490 = vmatpush.bf16.msra.mxu0 %v968
    %3491 = vmatpush.bf16.msra.mxu0 %v960
    %3492 = vmatpush.bf16.msra.mxu0 %v952
    %3493 = vmatpush.bf16.msra.mxu0 %v944
    %3494 = vmatpush.bf16.msra.mxu0 %v936
    %3495 = vmatpush.bf16.msra.mxu0 %v928
    %3496 = vmatpush.bf16.msra.mxu0 %v920
    %3497 = vmatmul.bf16.gmra.mxu0 %v2296
    %v3498 = vpop.f32.mrf.mxu0
    %v3499 = vadd.f32 %v3486, %v3498
    %v3500 = vpop.f32.mrf.mxu0
    %3501 = vdwg.mxu0
    %v3502 = vadd.f32 %v3284, %v3317
    %v3503 = vadd.f32 %v3285, %v3343
    %v3504 = vadd.f32 %v3286, %v3369
    %v3505 = vadd.f32 %v3287, %v3395
    %v3506 = vadd.f32 %v3288, %v3421
    %v3507 = vadd.f32 %v3289, %v3447
    %v3508 = vadd.f32 %v3290, %v3473
    %v3509 = vadd.f32 %v3291, %v3499
    %v3510 = vxor.u32 %v3502, 2147483648
    %v3511 = vxor.u32 %v3503, 2147483648
    %v3512 = vmul.f32 %v3510, 1.442695
    %v3513 = vpow.pop %v3512
    %v3514 = vmul.f32 %v3511, 1.442695
    %v3515 = vpow.pop %v3514
    %v3516 = vadd.f32 %v3513, 1.0
    %v3517 = vadd.f32 %v3515, 1.0
    %v3518 = vrcp.pop %v3516
    %v3519 = vmul.f32 %v3516, %v3518
    %v3520 = vsub.f32 1.0, %v3519
    %v3521 = vmul.f32 %v3518, %v3520
    %v3522 = vadd.f32 %v3518, %v3521
    %vm3523 = vweird.f32 %v3516
    %vm3524 = vweird.f32 %v3518
    %vm3525 = vmor %vm3523, %vm3524
    %v3526 = vsel %vm3525, %v3518, %v3522
    %v3527 = vand.u32 2147483647, %v3516
    %vm3528 = vcmp.eq.f32.partialorder %v3527, 8.507059e+37
    %v3529 = vand.u32 %v3516, 2147483648
    %v3530 = vor.u32 1.1754944e-38, %v3529
    %v3531 = vsel %vm3528, %v3530, %v3526
    %v3532 = vmul.f32 1.0, %v3531
    %v3533 = vrcp.pop %v3517
    %v3534 = vmul.f32 %v3517, %v3533
    %v3535 = vsub.f32 1.0, %v3534
    %v3536 = vmul.f32 %v3533, %v3535
    %v3537 = vadd.f32 %v3533, %v3536
    %vm3538 = vweird.f32 %v3517
    %vm3539 = vweird.f32 %v3533
    %vm3540 = vmor %vm3538, %vm3539
    %v3541 = vsel %vm3540, %v3533, %v3537
    %v3542 = vand.u32 2147483647, %v3517
    %vm3543 = vcmp.eq.f32.partialorder %v3542, 8.507059e+37
    %v3544 = vand.u32 %v3517, 2147483648
    %v3545 = vor.u32 1.1754944e-38, %v3544
    %v3546 = vsel %vm3543, %v3545, %v3541
    %v3547 = vmul.f32 1.0, %v3546
    %v3548 = vxor.u32 %v3504, 2147483648
    %v3549 = vxor.u32 %v3505, 2147483648
    %v3550 = vmul.f32 %v3548, 1.442695
    %v3551 = vpow.pop %v3550
    %v3552 = vmul.f32 %v3549, 1.442695
    %v3553 = vpow.pop %v3552
    %v3554 = vadd.f32 %v3551, 1.0
    %v3555 = vadd.f32 %v3553, 1.0
    %v3556 = vrcp.pop %v3554
    %v3557 = vmul.f32 %v3554, %v3556
    %v3558 = vsub.f32 1.0, %v3557
    %v3559 = vmul.f32 %v3556, %v3558
    %v3560 = vadd.f32 %v3556, %v3559
    %vm3561 = vweird.f32 %v3554
    %vm3562 = vweird.f32 %v3556
    %vm3563 = vmor %vm3561, %vm3562
    %v3564 = vsel %vm3563, %v3556, %v3560
    %v3565 = vand.u32 2147483647, %v3554
    %vm3566 = vcmp.eq.f32.partialorder %v3565, 8.507059e+37
    %v3567 = vand.u32 %v3554, 2147483648
    %v3568 = vor.u32 1.1754944e-38, %v3567
    %v3569 = vsel %vm3566, %v3568, %v3564
    %v3570 = vmul.f32 1.0, %v3569
    %v3571 = vrcp.pop %v3555
    %v3572 = vmul.f32 %v3555, %v3571
    %v3573 = vsub.f32 1.0, %v3572
    %v3574 = vmul.f32 %v3571, %v3573
    %v3575 = vadd.f32 %v3571, %v3574
    %vm3576 = vweird.f32 %v3555
    %vm3577 = vweird.f32 %v3571
    %vm3578 = vmor %vm3576, %vm3577
    %v3579 = vsel %vm3578, %v3571, %v3575
    %v3580 = vand.u32 2147483647, %v3555
    %vm3581 = vcmp.eq.f32.partialorder %v3580, 8.507059e+37
    %v3582 = vand.u32 %v3555, 2147483648
    %v3583 = vor.u32 1.1754944e-38, %v3582
    %v3584 = vsel %vm3581, %v3583, %v3579
    %v3585 = vmul.f32 1.0, %v3584
    %v3586 = vtanh.pop %v3506
    %v3587 = vtanh.pop %v3507
    %v3588 = vxor.u32 %v3508, 2147483648
    %v3589 = vxor.u32 %v3509, 2147483648
    %v3590 = vmul.f32 %v3588, 1.442695
    %v3591 = vpow.pop %v3590
    %v3592 = vmul.f32 %v3589, 1.442695
    %v3593 = vpow.pop %v3592
    %v3594 = vadd.f32 %v3591, 1.0
    %v3595 = vadd.f32 %v3593, 1.0
    %v3596 = vrcp.pop %v3594
    %v3597 = vmul.f32 %v3594, %v3596
    %v3598 = vsub.f32 1.0, %v3597
    %v3599 = vmul.f32 %v3596, %v3598
    %v3600 = vadd.f32 %v3596, %v3599
    %vm3601 = vweird.f32 %v3594
    %vm3602 = vweird.f32 %v3596
    %vm3603 = vmor %vm3601, %vm3602
    %v3604 = vsel %vm3603, %v3596, %v3600
    %v3605 = vand.u32 2147483647, %v3594
    %vm3606 = vcmp.eq.f32.partialorder %v3605, 8.507059e+37
    %v3607 = vand.u32 %v3594, 2147483648
    %v3608 = vor.u32 1.1754944e-38, %v3607
    %v3609 = vsel %vm3606, %v3608, %v3604
    %v3610 = vmul.f32 1.0, %v3609
    %v3611 = vrcp.pop %v3595
    %v3612 = vmul.f32 %v3595, %v3611
    %v3613 = vsub.f32 1.0, %v3612
    %v3614 = vmul.f32 %v3611, %v3613
    %v3615 = vadd.f32 %v3611, %v3614
    %vm3616 = vweird.f32 %v3595
    %vm3617 = vweird.f32 %v3611
    %vm3618 = vmor %vm3616, %vm3617
    %v3619 = vsel %vm3618, %v3611, %v3615
    %v3620 = vand.u32 2147483647, %v3595
    %vm3621 = vcmp.eq.f32.partialorder %v3620, 8.507059e+37
    %v3622 = vand.u32 %v3595, 2147483648
    %v3623 = vor.u32 1.1754944e-38, %v3622
    %v3624 = vsel %vm3621, %v3623, %v3619
    %v3625 = vmul.f32 1.0, %v3624
    %v3626 = vmul.f32 %v3570, %v1441
    %v3627 = vmul.f32 %v3585, %v1442
    %v3628 = vmul.f32 %v3532, %v3586
    %v3629 = vmul.f32 %v3547, %v3587
    %v3630 = vadd.f32 %v3626, %v3628
    %v3631 = vadd.f32 %v3627, %v3629
    %v3632 = vtanh.pop %v3630
    %v3633 = vtanh.pop %v3631
    %v3634 = vmul.f32 %v3610, %v3632
    %v3635 = vmul.f32 %v3625, %v3633
    %3636 = vmatpush.bf16.msra.mxu0 %v1887
    %3637 = vmatpush.bf16.msra.mxu0 %v1879
    %3638 = vmatpush.bf16.msra.mxu0 %v1871
    %3639 = vmatpush.bf16.msra.mxu0 %v1863
    %3640 = vmatpush.bf16.msra.mxu0 %v1855
    %3641 = vmatpush.bf16.msra.mxu0 %v1847
    %3642 = vmatpush.bf16.msra.mxu0 %v1839
    %3643 = vmatpush.bf16.msra.mxu0 %v1831
    %3644 = vmatmul.bf16.gmra.mxu0 %v3292
    %v3645 = vpop.f32.mrf.mxu0
    %v3646 = vadd.f32 %v425, %v3645
    %v3647 = vpop.f32.mrf.mxu0
    %3648 = vdwg.mxu0
    %3649 = vmatpush.bf16.msra.mxu0 %v1951
    %3650 = vmatpush.bf16.msra.mxu0 %v1943
    %3651 = vmatpush.bf16.msra.mxu0 %v1935
    %3652 = vmatpush.bf16.msra.mxu0 %v1927
    %3653 = vmatpush.bf16.msra.mxu0 %v1919
    %3654 = vmatpush.bf16.msra.mxu0 %v1911
    %3655 = vmatpush.bf16.msra.mxu0 %v1903
    %3656 = vmatpush.bf16.msra.mxu0 %v1895
    %3657 = vmatmul.bf16.gmra.mxu0 %v3293
    %v3658 = vpop.f32.mrf.mxu0
    %v3659 = vadd.f32 %v3646, %v3658
    %v3660 = vpop.f32.mrf.mxu0
    %3661 = vdwg.mxu0
    %3662 = vmatpush.bf16.msra.mxu0 %v1888
    %3663 = vmatpush.bf16.msra.mxu0 %v1880
    %3664 = vmatpush.bf16.msra.mxu0 %v1872
    %3665 = vmatpush.bf16.msra.mxu0 %v1864
    %3666 = vmatpush.bf16.msra.mxu0 %v1856
    %3667 = vmatpush.bf16.msra.mxu0 %v1848
    %3668 = vmatpush.bf16.msra.mxu0 %v1840
    %3669 = vmatpush.bf16.msra.mxu0 %v1832
    %3670 = vmatmul.bf16.gmra.mxu0 %v3292
    %v3671 = vpop.f32.mrf.mxu0
    %v3672 = vadd.f32 %v426, %v3671
    %v3673 = vpop.f32.mrf.mxu0
    %3674 = vdwg.mxu0
    %3675 = vmatpush.bf16.msra.mxu0 %v1952
    %3676 = vmatpush.bf16.msra.mxu0 %v1944
    %3677 = vmatpush.bf16.msra.mxu0 %v1936
    %3678 = vmatpush.bf16.msra.mxu0 %v1928
    %3679 = vmatpush.bf16.msra.mxu0 %v1920
    %3680 = vmatpush.bf16.msra.mxu0 %v1912
    %3681 = vmatpush.bf16.msra.mxu0 %v1904
    %3682 = vmatpush.bf16.msra.mxu0 %v1896
    %3683 = vmatmul.bf16.gmra.mxu0 %v3293
    %v3684 = vpop.f32.mrf.mxu0
    %v3685 = vadd.f32 %v3672, %v3684
    %v3686 = vpop.f32.mrf.mxu0
    %3687 = vdwg.mxu0
    %3688 = vmatpush.bf16.msra.mxu0 %v1889
    %3689 = vmatpush.bf16.msra.mxu0 %v1881
    %3690 = vmatpush.bf16.msra.mxu0 %v1873
    %3691 = vmatpush.bf16.msra.mxu0 %v1865
    %3692 = vmatpush.bf16.msra.mxu0 %v1857
    %3693 = vmatpush.bf16.msra.mxu0 %v1849
    %3694 = vmatpush.bf16.msra.mxu0 %v1841
    %3695 = vmatpush.bf16.msra.mxu0 %v1833
    %3696 = vmatmul.bf16.gmra.mxu0 %v3292
    %v3697 = vpop.f32.mrf.mxu0
    %v3698 = vadd.f32 %v427, %v3697
    %v3699 = vpop.f32.mrf.mxu0
    %3700 = vdwg.mxu0
    %3701 = vmatpush.bf16.msra.mxu0 %v1953
    %3702 = vmatpush.bf16.msra.mxu0 %v1945
    %3703 = vmatpush.bf16.msra.mxu0 %v1937
    %3704 = vmatpush.bf16.msra.mxu0 %v1929
    %3705 = vmatpush.bf16.msra.mxu0 %v1921
    %3706 = vmatpush.bf16.msra.mxu0 %v1913
    %3707 = vmatpush.bf16.msra.mxu0 %v1905
    %3708 = vmatpush.bf16.msra.mxu0 %v1897
    %3709 = vmatmul.bf16.gmra.mxu0 %v3293
    %v3710 = vpop.f32.mrf.mxu0
    %v3711 = vadd.f32 %v3698, %v3710
    %v3712 = vpop.f32.mrf.mxu0
    %3713 = vdwg.mxu0
    %3714 = vmatpush.bf16.msra.mxu0 %v1890
    %3715 = vmatpush.bf16.msra.mxu0 %v1882
    %3716 = vmatpush.bf16.msra.mxu0 %v1874
    %3717 = vmatpush.bf16.msra.mxu0 %v1866
    %3718 = vmatpush.bf16.msra.mxu0 %v1858
    %3719 = vmatpush.bf16.msra.mxu0 %v1850
    %3720 = vmatpush.bf16.msra.mxu0 %v1842
    %3721 = vmatpush.bf16.msra.mxu0 %v1834
    %3722 = vmatmul.bf16.gmra.mxu0 %v3292
    %v3723 = vpop.f32.mrf.mxu0
    %v3724 = vadd.f32 %v428, %v3723
    %v3725 = vpop.f32.mrf.mxu0
    %3726 = vdwg.mxu0
    %3727 = vmatpush.bf16.msra.mxu0 %v1954
    %3728 = vmatpush.bf16.msra.mxu0 %v1946
    %3729 = vmatpush.bf16.msra.mxu0 %v1938
    %3730 = vmatpush.bf16.msra.mxu0 %v1930
    %3731 = vmatpush.bf16.msra.mxu0 %v1922
    %3732 = vmatpush.bf16.msra.mxu0 %v1914
    %3733 = vmatpush.bf16.msra.mxu0 %v1906
    %3734 = vmatpush.bf16.msra.mxu0 %v1898
    %3735 = vmatmul.bf16.gmra.mxu0 %v3293
    %v3736 = vpop.f32.mrf.mxu0
    %v3737 = vadd.f32 %v3724, %v3736
    %v3738 = vpop.f32.mrf.mxu0
    %3739 = vdwg.mxu0
    %3740 = vmatpush.bf16.msra.mxu0 %v1891
    %3741 = vmatpush.bf16.msra.mxu0 %v1883
    %3742 = vmatpush.bf16.msra.mxu0 %v1875
    %3743 = vmatpush.bf16.msra.mxu0 %v1867
    %3744 = vmatpush.bf16.msra.mxu0 %v1859
    %3745 = vmatpush.bf16.msra.mxu0 %v1851
    %3746 = vmatpush.bf16.msra.mxu0 %v1843
    %3747 = vmatpush.bf16.msra.mxu0 %v1835
    %3748 = vmatmul.bf16.gmra.mxu0 %v3292
    %v3749 = vpop.f32.mrf.mxu0
    %v3750 = vadd.f32 %v429, %v3749
    %v3751 = vpop.f32.mrf.mxu0
    %3752 = vdwg.mxu0
    %3753 = vmatpush.bf16.msra.mxu0 %v1955
    %3754 = vmatpush.bf16.msra.mxu0 %v1947
    %3755 = vmatpush.bf16.msra.mxu0 %v1939
    %3756 = vmatpush.bf16.msra.mxu0 %v1931
    %3757 = vmatpush.bf16.msra.mxu0 %v1923
    %3758 = vmatpush.bf16.msra.mxu0 %v1915
    %3759 = vmatpush.bf16.msra.mxu0 %v1907
    %3760 = vmatpush.bf16.msra.mxu0 %v1899
    %3761 = vmatmul.bf16.gmra.mxu0 %v3293
    %v3762 = vpop.f32.mrf.mxu0
    %v3763 = vadd.f32 %v3750, %v3762
    %v3764 = vpop.f32.mrf.mxu0
    %3765 = vdwg.mxu0
    %3766 = vmatpush.bf16.msra.mxu0 %v1892
    %3767 = vmatpush.bf16.msra.mxu0 %v1884
    %3768 = vmatpush.bf16.msra.mxu0 %v1876
    %3769 = vmatpush.bf16.msra.mxu0 %v1868
    %3770 = vmatpush.bf16.msra.mxu0 %v1860
    %3771 = vmatpush.bf16.msra.mxu0 %v1852
    %3772 = vmatpush.bf16.msra.mxu0 %v1844
    %3773 = vmatpush.bf16.msra.mxu0 %v1836
    %3774 = vmatmul.bf16.gmra.mxu0 %v3292
    %v3775 = vpop.f32.mrf.mxu0
    %v3776 = vadd.f32 %v430, %v3775
    %v3777 = vpop.f32.mrf.mxu0
    %3778 = vdwg.mxu0
    %3779 = vmatpush.bf16.msra.mxu0 %v1956
    %3780 = vmatpush.bf16.msra.mxu0 %v1948
    %3781 = vmatpush.bf16.msra.mxu0 %v1940
    %3782 = vmatpush.bf16.msra.mxu0 %v1932
    %3783 = vmatpush.bf16.msra.mxu0 %v1924
    %3784 = vmatpush.bf16.msra.mxu0 %v1916
    %3785 = vmatpush.bf16.msra.mxu0 %v1908
    %3786 = vmatpush.bf16.msra.mxu0 %v1900
    %3787 = vmatmul.bf16.gmra.mxu0 %v3293
    %v3788 = vpop.f32.mrf.mxu0
    %v3789 = vadd.f32 %v3776, %v3788
    %v3790 = vpop.f32.mrf.mxu0
    %3791 = vdwg.mxu0
    %3792 = vmatpush.bf16.msra.mxu0 %v1893
    %3793 = vmatpush.bf16.msra.mxu0 %v1885
    %3794 = vmatpush.bf16.msra.mxu0 %v1877
    %3795 = vmatpush.bf16.msra.mxu0 %v1869
    %3796 = vmatpush.bf16.msra.mxu0 %v1861
    %3797 = vmatpush.bf16.msra.mxu0 %v1853
    %3798 = vmatpush.bf16.msra.mxu0 %v1845
    %3799 = vmatpush.bf16.msra.mxu0 %v1837
    %3800 = vmatmul.bf16.gmra.mxu0 %v3292
    %v3801 = vpop.f32.mrf.mxu0
    %v3802 = vadd.f32 %v431, %v3801
    %v3803 = vpop.f32.mrf.mxu0
    %3804 = vdwg.mxu0
    %3805 = vmatpush.bf16.msra.mxu0 %v1957
    %3806 = vmatpush.bf16.msra.mxu0 %v1949
    %3807 = vmatpush.bf16.msra.mxu0 %v1941
    %3808 = vmatpush.bf16.msra.mxu0 %v1933
    %3809 = vmatpush.bf16.msra.mxu0 %v1925
    %3810 = vmatpush.bf16.msra.mxu0 %v1917
    %3811 = vmatpush.bf16.msra.mxu0 %v1909
    %3812 = vmatpush.bf16.msra.mxu0 %v1901
    %3813 = vmatmul.bf16.gmra.mxu0 %v3293
    %v3814 = vpop.f32.mrf.mxu0
    %v3815 = vadd.f32 %v3802, %v3814
    %v3816 = vpop.f32.mrf.mxu0
    %3817 = vdwg.mxu0
    %3818 = vmatpush.bf16.msra.mxu0 %v1894
    %3819 = vmatpush.bf16.msra.mxu0 %v1886
    %3820 = vmatpush.bf16.msra.mxu0 %v1878
    %3821 = vmatpush.bf16.msra.mxu0 %v1870
    %3822 = vmatpush.bf16.msra.mxu0 %v1862
    %3823 = vmatpush.bf16.msra.mxu0 %v1854
    %3824 = vmatpush.bf16.msra.mxu0 %v1846
    %3825 = vmatpush.bf16.msra.mxu0 %v1838
    %3826 = vmatmul.bf16.gmra.mxu0 %v3292
    %v3827 = vpop.f32.mrf.mxu0
    %v3828 = vadd.f32 %v432, %v3827
    %v3829 = vpop.f32.mrf.mxu0
    %3830 = vdwg.mxu0
    %3831 = vmatpush.bf16.msra.mxu0 %v1958
    %3832 = vmatpush.bf16.msra.mxu0 %v1950
    %3833 = vmatpush.bf16.msra.mxu0 %v1942
    %3834 = vmatpush.bf16.msra.mxu0 %v1934
    %3835 = vmatpush.bf16.msra.mxu0 %v1926
    %3836 = vmatpush.bf16.msra.mxu0 %v1918
    %3837 = vmatpush.bf16.msra.mxu0 %v1910
    %3838 = vmatpush.bf16.msra.mxu0 %v1902
    %3839 = vmatmul.bf16.gmra.mxu0 %v3293
    %v3840 = vpop.f32.mrf.mxu0
    %v3841 = vadd.f32 %v3828, %v3840
    %v3842 = vpop.f32.mrf.mxu0
    %3843 = vdwg.mxu0
    %v3844 = vpack.c.bf16 %v3634, %v3634
    %v3845 = vpack.c.bf16 %v3635, %v3635
    %3846 = vmatpush.bf16.msra.mxu0 %v2737
    %3847 = vmatpush.bf16.msra.mxu0 %v2729
    %3848 = vmatpush.bf16.msra.mxu0 %v2721
    %3849 = vmatpush.bf16.msra.mxu0 %v2713
    %3850 = vmatpush.bf16.msra.mxu0 %v2705
    %3851 = vmatpush.bf16.msra.mxu0 %v2697
    %3852 = vmatpush.bf16.msra.mxu0 %v2689
    %3853 = vmatpush.bf16.msra.mxu0 %v2681
    %3854 = vmatmul.bf16.gmra.mxu0 %v3844
    %v3855 = vpop.f32.mrf.mxu0
    %v3856 = vadd.f32 0.0, %v3855
    %v3857 = vpop.f32.mrf.mxu0
    %3858 = vdwg.mxu0
    %3859 = vmatpush.bf16.msra.mxu0 %v2801
    %3860 = vmatpush.bf16.msra.mxu0 %v2793
    %3861 = vmatpush.bf16.msra.mxu0 %v2785
    %3862 = vmatpush.bf16.msra.mxu0 %v2777
    %3863 = vmatpush.bf16.msra.mxu0 %v2769
    %3864 = vmatpush.bf16.msra.mxu0 %v2761
    %3865 = vmatpush.bf16.msra.mxu0 %v2753
    %3866 = vmatpush.bf16.msra.mxu0 %v2745
    %3867 = vmatmul.bf16.gmra.mxu0 %v3845
    %v3868 = vpop.f32.mrf.mxu0
    %v3869 = vadd.f32 %v3856, %v3868
    %v3870 = vpop.f32.mrf.mxu0
    %3871 = vdwg.mxu0
    %3872 = vmatpush.bf16.msra.mxu0 %v2738
    %3873 = vmatpush.bf16.msra.mxu0 %v2730
    %3874 = vmatpush.bf16.msra.mxu0 %v2722
    %3875 = vmatpush.bf16.msra.mxu0 %v2714
    %3876 = vmatpush.bf16.msra.mxu0 %v2706
    %3877 = vmatpush.bf16.msra.mxu0 %v2698
    %3878 = vmatpush.bf16.msra.mxu0 %v2690
    %3879 = vmatpush.bf16.msra.mxu0 %v2682
    %3880 = vmatmul.bf16.gmra.mxu0 %v3844
    %v3881 = vpop.f32.mrf.mxu0
    %v3882 = vadd.f32 0.0, %v3881
    %v3883 = vpop.f32.mrf.mxu0
    %3884 = vdwg.mxu0
    %3885 = vmatpush.bf16.msra.mxu0 %v2802
    %3886 = vmatpush.bf16.msra.mxu0 %v2794
    %3887 = vmatpush.bf16.msra.mxu0 %v2786
    %3888 = vmatpush.bf16.msra.mxu0 %v2778
    %3889 = vmatpush.bf16.msra.mxu0 %v2770
    %3890 = vmatpush.bf16.msra.mxu0 %v2762
    %3891 = vmatpush.bf16.msra.mxu0 %v2754
    %3892 = vmatpush.bf16.msra.mxu0 %v2746
    %3893 = vmatmul.bf16.gmra.mxu0 %v3845
    %v3894 = vpop.f32.mrf.mxu0
    %v3895 = vadd.f32 %v3882, %v3894
    %v3896 = vpop.f32.mrf.mxu0
    %3897 = vdwg.mxu0
    %3898 = vmatpush.bf16.msra.mxu0 %v2739
    %3899 = vmatpush.bf16.msra.mxu0 %v2731
    %3900 = vmatpush.bf16.msra.mxu0 %v2723
    %3901 = vmatpush.bf16.msra.mxu0 %v2715
    %3902 = vmatpush.bf16.msra.mxu0 %v2707
    %3903 = vmatpush.bf16.msra.mxu0 %v2699
    %3904 = vmatpush.bf16.msra.mxu0 %v2691
    %3905 = vmatpush.bf16.msra.mxu0 %v2683
    %3906 = vmatmul.bf16.gmra.mxu0 %v3844
    %v3907 = vpop.f32.mrf.mxu0
    %v3908 = vadd.f32 0.0, %v3907
    %v3909 = vpop.f32.mrf.mxu0
    %3910 = vdwg.mxu0
    %3911 = vmatpush.bf16.msra.mxu0 %v2803
    %3912 = vmatpush.bf16.msra.mxu0 %v2795
    %3913 = vmatpush.bf16.msra.mxu0 %v2787
    %3914 = vmatpush.bf16.msra.mxu0 %v2779
    %3915 = vmatpush.bf16.msra.mxu0 %v2771
    %3916 = vmatpush.bf16.msra.mxu0 %v2763
    %3917 = vmatpush.bf16.msra.mxu0 %v2755
    %3918 = vmatpush.bf16.msra.mxu0 %v2747
    %3919 = vmatmul.bf16.gmra.mxu0 %v3845
    %v3920 = vpop.f32.mrf.mxu0
    %v3921 = vadd.f32 %v3908, %v3920
    %v3922 = vpop.f32.mrf.mxu0
    %3923 = vdwg.mxu0
    %3924 = vmatpush.bf16.msra.mxu0 %v2740
    %3925 = vmatpush.bf16.msra.mxu0 %v2732
    %3926 = vmatpush.bf16.msra.mxu0 %v2724
    %3927 = vmatpush.bf16.msra.mxu0 %v2716
    %3928 = vmatpush.bf16.msra.mxu0 %v2708
    %3929 = vmatpush.bf16.msra.mxu0 %v2700
    %3930 = vmatpush.bf16.msra.mxu0 %v2692
    %3931 = vmatpush.bf16.msra.mxu0 %v2684
    %3932 = vmatmul.bf16.gmra.mxu0 %v3844
    %v3933 = vpop.f32.mrf.mxu0
    %v3934 = vadd.f32 0.0, %v3933
    %v3935 = vpop.f32.mrf.mxu0
    %3936 = vdwg.mxu0
    %3937 = vmatpush.bf16.msra.mxu0 %v2804
    %3938 = vmatpush.bf16.msra.mxu0 %v2796
    %3939 = vmatpush.bf16.msra.mxu0 %v2788
    %3940 = vmatpush.bf16.msra.mxu0 %v2780
    %3941 = vmatpush.bf16.msra.mxu0 %v2772
    %3942 = vmatpush.bf16.msra.mxu0 %v2764
    %3943 = vmatpush.bf16.msra.mxu0 %v2756
    %3944 = vmatpush.bf16.msra.mxu0 %v2748
    %3945 = vmatmul.bf16.gmra.mxu0 %v3845
    %v3946 = vpop.f32.mrf.mxu0
    %v3947 = vadd.f32 %v3934, %v3946
    %v3948 = vpop.f32.mrf.mxu0
    %3949 = vdwg.mxu0
    %3950 = vmatpush.bf16.msra.mxu0 %v2741
    %3951 = vmatpush.bf16.msra.mxu0 %v2733
    %3952 = vmatpush.bf16.msra.mxu0 %v2725
    %3953 = vmatpush.bf16.msra.mxu0 %v2717
    %3954 = vmatpush.bf16.msra.mxu0 %v2709
    %3955 = vmatpush.bf16.msra.mxu0 %v2701
    %3956 = vmatpush.bf16.msra.mxu0 %v2693
    %3957 = vmatpush.bf16.msra.mxu0 %v2685
    %3958 = vmatmul.bf16.gmra.mxu0 %v3844
    %v3959 = vpop.f32.mrf.mxu0
    %v3960 = vadd.f32 0.0, %v3959
    %v3961 = vpop.f32.mrf.mxu0
    %3962 = vdwg.mxu0
    %3963 = vmatpush.bf16.msra.mxu0 %v2805
    %3964 = vmatpush.bf16.msra.mxu0 %v2797
    %3965 = vmatpush.bf16.msra.mxu0 %v2789
    %3966 = vmatpush.bf16.msra.mxu0 %v2781
    %3967 = vmatpush.bf16.msra.mxu0 %v2773
    %3968 = vmatpush.bf16.msra.mxu0 %v2765
    %3969 = vmatpush.bf16.msra.mxu0 %v2757
    %3970 = vmatpush.bf16.msra.mxu0 %v2749
    %3971 = vmatmul.bf16.gmra.mxu0 %v3845
    %v3972 = vpop.f32.mrf.mxu0
    %v3973 = vadd.f32 %v3960, %v3972
    %v3974 = vpop.f32.mrf.mxu0
    %3975 = vdwg.mxu0
    %3976 = vmatpush.bf16.msra.mxu0 %v2742
    %3977 = vmatpush.bf16.msra.mxu0 %v2734
    %3978 = vmatpush.bf16.msra.mxu0 %v2726
    %3979 = vmatpush.bf16.msra.mxu0 %v2718
    %3980 = vmatpush.bf16.msra.mxu0 %v2710
    %3981 = vmatpush.bf16.msra.mxu0 %v2702
    %3982 = vmatpush.bf16.msra.mxu0 %v2694
    %3983 = vmatpush.bf16.msra.mxu0 %v2686
    %3984 = vmatmul.bf16.gmra.mxu0 %v3844
    %v3985 = vpop.f32.mrf.mxu0
    %v3986 = vadd.f32 0.0, %v3985
    %v3987 = vpop.f32.mrf.mxu0
    %3988 = vdwg.mxu0
    %3989 = vmatpush.bf16.msra.mxu0 %v2806
    %3990 = vmatpush.bf16.msra.mxu0 %v2798
    %3991 = vmatpush.bf16.msra.mxu0 %v2790
    %3992 = vmatpush.bf16.msra.mxu0 %v2782
    %3993 = vmatpush.bf16.msra.mxu0 %v2774
    %3994 = vmatpush.bf16.msra.mxu0 %v2766
    %3995 = vmatpush.bf16.msra.mxu0 %v2758
    %3996 = vmatpush.bf16.msra.mxu0 %v2750
    %3997 = vmatmul.bf16.gmra.mxu0 %v3845
    %v3998 = vpop.f32.mrf.mxu0
    %v3999 = vadd.f32 %v3986, %v3998
    %v4000 = vpop.f32.mrf.mxu0
    %4001 = vdwg.mxu0
    %4002 = vmatpush.bf16.msra.mxu0 %v2743
    %4003 = vmatpush.bf16.msra.mxu0 %v2735
    %4004 = vmatpush.bf16.msra.mxu0 %v2727
    %4005 = vmatpush.bf16.msra.mxu0 %v2719
    %4006 = vmatpush.bf16.msra.mxu0 %v2711
    %4007 = vmatpush.bf16.msra.mxu0 %v2703
    %4008 = vmatpush.bf16.msra.mxu0 %v2695
    %4009 = vmatpush.bf16.msra.mxu0 %v2687
    %4010 = vmatmul.bf16.gmra.mxu0 %v3844
    %v4011 = vpop.f32.mrf.mxu0
    %v4012 = vadd.f32 0.0, %v4011
    %v4013 = vpop.f32.mrf.mxu0
    %4014 = vdwg.mxu0
    %4015 = vmatpush.bf16.msra.mxu0 %v2807
    %4016 = vmatpush.bf16.msra.mxu0 %v2799
    %4017 = vmatpush.bf16.msra.mxu0 %v2791
    %4018 = vmatpush.bf16.msra.mxu0 %v2783
    %4019 = vmatpush.bf16.msra.mxu0 %v2775
    %4020 = vmatpush.bf16.msra.mxu0 %v2767
    %4021 = vmatpush.bf16.msra.mxu0 %v2759
    %4022 = vmatpush.bf16.msra.mxu0 %v2751
    %4023 = vmatmul.bf16.gmra.mxu0 %v3845
    %v4024 = vpop.f32.mrf.mxu0
    %v4025 = vadd.f32 %v4012, %v4024
    %v4026 = vpop.f32.mrf.mxu0
    %4027 = vdwg.mxu0
    %4028 = vmatpush.bf16.msra.mxu0 %v2744
    %4029 = vmatpush.bf16.msra.mxu0 %v2736
    %4030 = vmatpush.bf16.msra.mxu0 %v2728
    %4031 = vmatpush.bf16.msra.mxu0 %v2720
    %4032 = vmatpush.bf16.msra.mxu0 %v2712
    %4033 = vmatpush.bf16.msra.mxu0 %v2704
    %4034 = vmatpush.bf16.msra.mxu0 %v2696
    %4035 = vmatpush.bf16.msra.mxu0 %v2688
    %4036 = vmatmul.bf16.gmra.mxu0 %v3844
    %v4037 = vpop.f32.mrf.mxu0
    %v4038 = vadd.f32 0.0, %v4037
    %v4039 = vpop.f32.mrf.mxu0
    %4040 = vdwg.mxu0
    %4041 = vmatpush.bf16.msra.mxu0 %v2808
    %4042 = vmatpush.bf16.msra.mxu0 %v2800
    %4043 = vmatpush.bf16.msra.mxu0 %v2792
    %4044 = vmatpush.bf16.msra.mxu0 %v2784
    %4045 = vmatpush.bf16.msra.mxu0 %v2776
    %4046 = vmatpush.bf16.msra.mxu0 %v2768
    %4047 = vmatpush.bf16.msra.mxu0 %v2760
    %4048 = vmatpush.bf16.msra.mxu0 %v2752
    %4049 = vmatmul.bf16.gmra.mxu0 %v3845
    %v4050 = vpop.f32.mrf.mxu0
    %v4051 = vadd.f32 %v4038, %v4050
    %v4052 = vpop.f32.mrf.mxu0
    %4053 = vdwg.mxu0
    %v4054 = vadd.f32 %v3659, %v3869
    %v4055 = vadd.f32 %v3685, %v3895
    %v4056 = vadd.f32 %v3711, %v3921
    %v4057 = vadd.f32 %v3737, %v3947
    %v4058 = vadd.f32 %v3763, %v3973
    %v4059 = vadd.f32 %v3789, %v3999
    %v4060 = vadd.f32 %v3815, %v4025
    %v4061 = vadd.f32 %v3841, %v4051
    %v4062 = vxor.u32 %v4054, 2147483648
    %v4063 = vxor.u32 %v4055, 2147483648
    %v4064 = vmul.f32 %v4062, 1.442695
    %v4065 = vpow.pop %v4064
    %v4066 = vmul.f32 %v4063, 1.442695
    %v4067 = vpow.pop %v4066
    %v4068 = vadd.f32 %v4065, 1.0
    %v4069 = vadd.f32 %v4067, 1.0
    %v4070 = vrcp.pop %v4068
    %v4071 = vmul.f32 %v4068, %v4070
    %v4072 = vsub.f32 1.0, %v4071
    %v4073 = vmul.f32 %v4070, %v4072
    %v4074 = vadd.f32 %v4070, %v4073
    %vm4075 = vweird.f32 %v4068
    %vm4076 = vweird.f32 %v4070
    %vm4077 = vmor %vm4075, %vm4076
    %v4078 = vsel %vm4077, %v4070, %v4074
    %v4079 = vand.u32 2147483647, %v4068
    %vm4080 = vcmp.eq.f32.partialorder %v4079, 8.507059e+37
    %v4081 = vand.u32 %v4068, 2147483648
    %v4082 = vor.u32 1.1754944e-38, %v4081
    %v4083 = vsel %vm4080, %v4082, %v4078
    %v4084 = vmul.f32 1.0, %v4083
    %v4085 = vrcp.pop %v4069
    %v4086 = vmul.f32 %v4069, %v4085
    %v4087 = vsub.f32 1.0, %v4086
    %v4088 = vmul.f32 %v4085, %v4087
    %v4089 = vadd.f32 %v4085, %v4088
    %vm4090 = vweird.f32 %v4069
    %vm4091 = vweird.f32 %v4085
    %vm4092 = vmor %vm4090, %vm4091
    %v4093 = vsel %vm4092, %v4085, %v4089
    %v4094 = vand.u32 2147483647, %v4069
    %vm4095 = vcmp.eq.f32.partialorder %v4094, 8.507059e+37
    %v4096 = vand.u32 %v4069, 2147483648
    %v4097 = vor.u32 1.1754944e-38, %v4096
    %v4098 = vsel %vm4095, %v4097, %v4093
    %v4099 = vmul.f32 1.0, %v4098
    %v4100 = vxor.u32 %v4056, 2147483648
    %v4101 = vxor.u32 %v4057, 2147483648
    %v4102 = vmul.f32 %v4100, 1.442695
    %v4103 = vpow.pop %v4102
    %v4104 = vmul.f32 %v4101, 1.442695
    %v4105 = vpow.pop %v4104
    %v4106 = vadd.f32 %v4103, 1.0
    %v4107 = vadd.f32 %v4105, 1.0
    %v4108 = vrcp.pop %v4106
    %v4109 = vmul.f32 %v4106, %v4108
    %v4110 = vsub.f32 1.0, %v4109
    %v4111 = vmul.f32 %v4108, %v4110
    %v4112 = vadd.f32 %v4108, %v4111
    %vm4113 = vweird.f32 %v4106
    %vm4114 = vweird.f32 %v4108
    %vm4115 = vmor %vm4113, %vm4114
    %v4116 = vsel %vm4115, %v4108, %v4112
    %v4117 = vand.u32 2147483647, %v4106
    %vm4118 = vcmp.eq.f32.partialorder %v4117, 8.507059e+37
    %v4119 = vand.u32 %v4106, 2147483648
    %v4120 = vor.u32 1.1754944e-38, %v4119
    %v4121 = vsel %vm4118, %v4120, %v4116
    %v4122 = vmul.f32 1.0, %v4121
    %v4123 = vrcp.pop %v4107
    %v4124 = vmul.f32 %v4107, %v4123
    %v4125 = vsub.f32 1.0, %v4124
    %v4126 = vmul.f32 %v4123, %v4125
    %v4127 = vadd.f32 %v4123, %v4126
    %vm4128 = vweird.f32 %v4107
    %vm4129 = vweird.f32 %v4123
    %vm4130 = vmor %vm4128, %vm4129
    %v4131 = vsel %vm4130, %v4123, %v4127
    %v4132 = vand.u32 2147483647, %v4107
    %vm4133 = vcmp.eq.f32.partialorder %v4132, 8.507059e+37
    %v4134 = vand.u32 %v4107, 2147483648
    %v4135 = vor.u32 1.1754944e-38, %v4134
    %v4136 = vsel %vm4133, %v4135, %v4131
    %v4137 = vmul.f32 1.0, %v4136
    %v4138 = vtanh.pop %v4058
    %v4139 = vtanh.pop %v4059
    %v4140 = vxor.u32 %v4060, 2147483648
    %v4141 = vxor.u32 %v4061, 2147483648
    %v4142 = vmul.f32 %v4140, 1.442695
    %v4143 = vpow.pop %v4142
    %v4144 = vmul.f32 %v4141, 1.442695
    %v4145 = vpow.pop %v4144
    %v4146 = vadd.f32 %v4143, 1.0
    %v4147 = vadd.f32 %v4145, 1.0
    %v4148 = vrcp.pop %v4146
    %v4149 = vmul.f32 %v4146, %v4148
    %v4150 = vsub.f32 1.0, %v4149
    %v4151 = vmul.f32 %v4148, %v4150
    %v4152 = vadd.f32 %v4148, %v4151
    %vm4153 = vweird.f32 %v4146
    %vm4154 = vweird.f32 %v4148
    %vm4155 = vmor %vm4153, %vm4154
    %v4156 = vsel %vm4155, %v4148, %v4152
    %v4157 = vand.u32 2147483647, %v4146
    %vm4158 = vcmp.eq.f32.partialorder %v4157, 8.507059e+37
    %v4159 = vand.u32 %v4146, 2147483648
    %v4160 = vor.u32 1.1754944e-38, %v4159
    %v4161 = vsel %vm4158, %v4160, %v4156
    %v4162 = vmul.f32 1.0, %v4161
    %v4163 = vrcp.pop %v4147
    %v4164 = vmul.f32 %v4147, %v4163
    %v4165 = vsub.f32 1.0, %v4164
    %v4166 = vmul.f32 %v4163, %v4165
    %v4167 = vadd.f32 %v4163, %v4166
    %vm4168 = vweird.f32 %v4147
    %vm4169 = vweird.f32 %v4163
    %vm4170 = vmor %vm4168, %vm4169
    %v4171 = vsel %vm4170, %v4163, %v4167
    %v4172 = vand.u32 2147483647, %v4147
    %vm4173 = vcmp.eq.f32.partialorder %v4172, 8.507059e+37
    %v4174 = vand.u32 %v4147, 2147483648
    %v4175 = vor.u32 1.1754944e-38, %v4174
    %v4176 = vsel %vm4173, %v4175, %v4171
    %v4177 = vmul.f32 1.0, %v4176
    %v4178 = vmul.f32 %v4122, %v3273
    %v4179 = vmul.f32 %v4137, %v3274
    %v4180 = vmul.f32 %v4084, %v4138
    %v4181 = vmul.f32 %v4099, %v4139
    %v4182 = vadd.f32 %v4178, %v4180
    %v4183 = vadd.f32 %v4179, %v4181
    %v4184 = vtanh.pop %v4182
    %v4185 = vtanh.pop %v4183
    %v4186 = vmul.f32 %v4162, %v4184
    %v4187 = vmul.f32 %v4177, %v4185
    %s4188 = scalar_lea.vmem %s0, 64
    %v4189 = vld [vmem:[%s4188] sm:$0xff]
    %v4190 = vld [vmem:[%s4188 + $0x8] sm:$0xff]
    %v4191 = vld [vmem:[%s4188 + $0x10] sm:$0xff]
    %v4192 = vld [vmem:[%s4188 + $0x18] sm:$0xff]
    %v4193 = vunpack.c.l.bf16 %v4189
    %v4194 = vunpack.c.h.bf16 %v4189
    %v4195 = vunpack.c.l.bf16 %v4190
    %v4196 = vunpack.c.h.bf16 %v4190
    %v4197 = vunpack.c.l.bf16 %v4191
    %v4198 = vunpack.c.h.bf16 %v4191
    %v4199 = vunpack.c.l.bf16 %v4192
    %v4200 = vunpack.c.h.bf16 %v4192
    %v4201 = vpack.c.bf16 %v4186, %v4186
    %v4202 = vpack.c.bf16 %v4187, %v4187
    %4203 = vmatpush.bf16.msra.mxu0 %v905
    %4204 = vmatpush.bf16.msra.mxu0 %v897
    %4205 = vmatpush.bf16.msra.mxu0 %v889
    %4206 = vmatpush.bf16.msra.mxu0 %v881
    %4207 = vmatpush.bf16.msra.mxu0 %v873
    %4208 = vmatpush.bf16.msra.mxu0 %v865
    %4209 = vmatpush.bf16.msra.mxu0 %v857
    %4210 = vmatpush.bf16.msra.mxu0 %v849
    %4211 = vmatmul.bf16.gmra.mxu0 %v3844
    %v4212 = vpop.f32.mrf.mxu0
    %v4213 = vadd.f32 0.0, %v4212
    %v4214 = vpop.f32.mrf.mxu0
    %4215 = vdwg.mxu0
    %4216 = vmatpush.bf16.msra.mxu0 %v969
    %4217 = vmatpush.bf16.msra.mxu0 %v961
    %4218 = vmatpush.bf16.msra.mxu0 %v953
    %4219 = vmatpush.bf16.msra.mxu0 %v945
    %4220 = vmatpush.bf16.msra.mxu0 %v937
    %4221 = vmatpush.bf16.msra.mxu0 %v929
    %4222 = vmatpush.bf16.msra.mxu0 %v921
    %4223 = vmatpush.bf16.msra.mxu0 %v913
    %4224 = vmatmul.bf16.gmra.mxu0 %v3845
    %v4225 = vpop.f32.mrf.mxu0
    %v4226 = vadd.f32 %v4213, %v4225
    %v4227 = vpop.f32.mrf.mxu0
    %4228 = vdwg.mxu0
    %4229 = vmatpush.bf16.msra.mxu0 %v906
    %4230 = vmatpush.bf16.msra.mxu0 %v898
    %4231 = vmatpush.bf16.msra.mxu0 %v890
    %4232 = vmatpush.bf16.msra.mxu0 %v882
    %4233 = vmatpush.bf16.msra.mxu0 %v874
    %4234 = vmatpush.bf16.msra.mxu0 %v866
    %4235 = vmatpush.bf16.msra.mxu0 %v858
    %4236 = vmatpush.bf16.msra.mxu0 %v850
    %4237 = vmatmul.bf16.gmra.mxu0 %v3844
    %v4238 = vpop.f32.mrf.mxu0
    %v4239 = vadd.f32 0.0, %v4238
    %v4240 = vpop.f32.mrf.mxu0
    %4241 = vdwg.mxu0
    %4242 = vmatpush.bf16.msra.mxu0 %v970
    %4243 = vmatpush.bf16.msra.mxu0 %v962
    %4244 = vmatpush.bf16.msra.mxu0 %v954
    %4245 = vmatpush.bf16.msra.mxu0 %v946
    %4246 = vmatpush.bf16.msra.mxu0 %v938
    %4247 = vmatpush.bf16.msra.mxu0 %v930
    %4248 = vmatpush.bf16.msra.mxu0 %v922
    %4249 = vmatpush.bf16.msra.mxu0 %v914
    %4250 = vmatmul.bf16.gmra.mxu0 %v3845
    %v4251 = vpop.f32.mrf.mxu0
    %v4252 = vadd.f32 %v4239, %v4251
    %v4253 = vpop.f32.mrf.mxu0
    %4254 = vdwg.mxu0
    %4255 = vmatpush.bf16.msra.mxu0 %v907
    %4256 = vmatpush.bf16.msra.mxu0 %v899
    %4257 = vmatpush.bf16.msra.mxu0 %v891
    %4258 = vmatpush.bf16.msra.mxu0 %v883
    %4259 = vmatpush.bf16.msra.mxu0 %v875
    %4260 = vmatpush.bf16.msra.mxu0 %v867
    %4261 = vmatpush.bf16.msra.mxu0 %v859
    %4262 = vmatpush.bf16.msra.mxu0 %v851
    %4263 = vmatmul.bf16.gmra.mxu0 %v3844
    %v4264 = vpop.f32.mrf.mxu0
    %v4265 = vadd.f32 0.0, %v4264
    %v4266 = vpop.f32.mrf.mxu0
    %4267 = vdwg.mxu0
    %4268 = vmatpush.bf16.msra.mxu0 %v971
    %4269 = vmatpush.bf16.msra.mxu0 %v963
    %4270 = vmatpush.bf16.msra.mxu0 %v955
    %4271 = vmatpush.bf16.msra.mxu0 %v947
    %4272 = vmatpush.bf16.msra.mxu0 %v939
    %4273 = vmatpush.bf16.msra.mxu0 %v931
    %4274 = vmatpush.bf16.msra.mxu0 %v923
    %4275 = vmatpush.bf16.msra.mxu0 %v915
    %4276 = vmatmul.bf16.gmra.mxu0 %v3845
    %v4277 = vpop.f32.mrf.mxu0
    %v4278 = vadd.f32 %v4265, %v4277
    %v4279 = vpop.f32.mrf.mxu0
    %4280 = vdwg.mxu0
    %4281 = vmatpush.bf16.msra.mxu0 %v908
    %4282 = vmatpush.bf16.msra.mxu0 %v900
    %4283 = vmatpush.bf16.msra.mxu0 %v892
    %4284 = vmatpush.bf16.msra.mxu0 %v884
    %4285 = vmatpush.bf16.msra.mxu0 %v876
    %4286 = vmatpush.bf16.msra.mxu0 %v868
    %4287 = vmatpush.bf16.msra.mxu0 %v860
    %4288 = vmatpush.bf16.msra.mxu0 %v852
    %4289 = vmatmul.bf16.gmra.mxu0 %v3844
    %v4290 = vpop.f32.mrf.mxu0
    %v4291 = vadd.f32 0.0, %v4290
    %v4292 = vpop.f32.mrf.mxu0
    %4293 = vdwg.mxu0
    %4294 = vmatpush.bf16.msra.mxu0 %v972
    %4295 = vmatpush.bf16.msra.mxu0 %v964
    %4296 = vmatpush.bf16.msra.mxu0 %v956
    %4297 = vmatpush.bf16.msra.mxu0 %v948
    %4298 = vmatpush.bf16.msra.mxu0 %v940
    %4299 = vmatpush.bf16.msra.mxu0 %v932
    %4300 = vmatpush.bf16.msra.mxu0 %v924
    %4301 = vmatpush.bf16.msra.mxu0 %v916
    %4302 = vmatmul.bf16.gmra.mxu0 %v3845
    %v4303 = vpop.f32.mrf.mxu0
    %v4304 = vadd.f32 %v4291, %v4303
    %v4305 = vpop.f32.mrf.mxu0
    %4306 = vdwg.mxu0
    %4307 = vmatpush.bf16.msra.mxu0 %v909
    %4308 = vmatpush.bf16.msra.mxu0 %v901
    %4309 = vmatpush.bf16.msra.mxu0 %v893
    %4310 = vmatpush.bf16.msra.mxu0 %v885
    %4311 = vmatpush.bf16.msra.mxu0 %v877
    %4312 = vmatpush.bf16.msra.mxu0 %v869
    %4313 = vmatpush.bf16.msra.mxu0 %v861
    %4314 = vmatpush.bf16.msra.mxu0 %v853
    %4315 = vmatmul.bf16.gmra.mxu0 %v3844
    %v4316 = vpop.f32.mrf.mxu0
    %v4317 = vadd.f32 0.0, %v4316
    %v4318 = vpop.f32.mrf.mxu0
    %4319 = vdwg.mxu0
    %4320 = vmatpush.bf16.msra.mxu0 %v973
    %4321 = vmatpush.bf16.msra.mxu0 %v965
    %4322 = vmatpush.bf16.msra.mxu0 %v957
    %4323 = vmatpush.bf16.msra.mxu0 %v949
    %4324 = vmatpush.bf16.msra.mxu0 %v941
    %4325 = vmatpush.bf16.msra.mxu0 %v933
    %4326 = vmatpush.bf16.msra.mxu0 %v925
    %4327 = vmatpush.bf16.msra.mxu0 %v917
    %4328 = vmatmul.bf16.gmra.mxu0 %v3845
    %v4329 = vpop.f32.mrf.mxu0
    %v4330 = vadd.f32 %v4317, %v4329
    %v4331 = vpop.f32.mrf.mxu0
    %4332 = vdwg.mxu0
    %4333 = vmatpush.bf16.msra.mxu0 %v910
    %4334 = vmatpush.bf16.msra.mxu0 %v902
    %4335 = vmatpush.bf16.msra.mxu0 %v894
    %4336 = vmatpush.bf16.msra.mxu0 %v886
    %4337 = vmatpush.bf16.msra.mxu0 %v878
    %4338 = vmatpush.bf16.msra.mxu0 %v870
    %4339 = vmatpush.bf16.msra.mxu0 %v862
    %4340 = vmatpush.bf16.msra.mxu0 %v854
    %4341 = vmatmul.bf16.gmra.mxu0 %v3844
    %v4342 = vpop.f32.mrf.mxu0
    %v4343 = vadd.f32 0.0, %v4342
    %v4344 = vpop.f32.mrf.mxu0
    %4345 = vdwg.mxu0
    %4346 = vmatpush.bf16.msra.mxu0 %v974
    %4347 = vmatpush.bf16.msra.mxu0 %v966
    %4348 = vmatpush.bf16.msra.mxu0 %v958
    %4349 = vmatpush.bf16.msra.mxu0 %v950
    %4350 = vmatpush.bf16.msra.mxu0 %v942
    %4351 = vmatpush.bf16.msra.mxu0 %v934
    %4352 = vmatpush.bf16.msra.mxu0 %v926
    %4353 = vmatpush.bf16.msra.mxu0 %v918
    %4354 = vmatmul.bf16.gmra.mxu0 %v3845
    %v4355 = vpop.f32.mrf.mxu0
    %v4356 = vadd.f32 %v4343, %v4355
    %v4357 = vpop.f32.mrf.mxu0
    %4358 = vdwg.mxu0
    %4359 = vmatpush.bf16.msra.mxu0 %v911
    %4360 = vmatpush.bf16.msra.mxu0 %v903
    %4361 = vmatpush.bf16.msra.mxu0 %v895
    %4362 = vmatpush.bf16.msra.mxu0 %v887
    %4363 = vmatpush.bf16.msra.mxu0 %v879
    %4364 = vmatpush.bf16.msra.mxu0 %v871
    %4365 = vmatpush.bf16.msra.mxu0 %v863
    %4366 = vmatpush.bf16.msra.mxu0 %v855
    %4367 = vmatmul.bf16.gmra.mxu0 %v3844
    %v4368 = vpop.f32.mrf.mxu0
    %v4369 = vadd.f32 0.0, %v4368
    %v4370 = vpop.f32.mrf.mxu0
    %4371 = vdwg.mxu0
    %4372 = vmatpush.bf16.msra.mxu0 %v975
    %4373 = vmatpush.bf16.msra.mxu0 %v967
    %4374 = vmatpush.bf16.msra.mxu0 %v959
    %4375 = vmatpush.bf16.msra.mxu0 %v951
    %4376 = vmatpush.bf16.msra.mxu0 %v943
    %4377 = vmatpush.bf16.msra.mxu0 %v935
    %4378 = vmatpush.bf16.msra.mxu0 %v927
    %4379 = vmatpush.bf16.msra.mxu0 %v919
    %4380 = vmatmul.bf16.gmra.mxu0 %v3845
    %v4381 = vpop.f32.mrf.mxu0
    %v4382 = vadd.f32 %v4369, %v4381
    %v4383 = vpop.f32.mrf.mxu0
    %4384 = vdwg.mxu0
    %4385 = vmatpush.bf16.msra.mxu0 %v912
    %4386 = vmatpush.bf16.msra.mxu0 %v904
    %4387 = vmatpush.bf16.msra.mxu0 %v896
    %4388 = vmatpush.bf16.msra.mxu0 %v888
    %4389 = vmatpush.bf16.msra.mxu0 %v880
    %4390 = vmatpush.bf16.msra.mxu0 %v872
    %4391 = vmatpush.bf16.msra.mxu0 %v864
    %4392 = vmatpush.bf16.msra.mxu0 %v856
    %4393 = vmatmul.bf16.gmra.mxu0 %v3844
    %v4394 = vpop.f32.mrf.mxu0
    %v4395 = vadd.f32 0.0, %v4394
    %v4396 = vpop.f32.mrf.mxu0
    %4397 = vdwg.mxu0
    %4398 = vmatpush.bf16.msra.mxu0 %v976
    %4399 = vmatpush.bf16.msra.mxu0 %v968
    %4400 = vmatpush.bf16.msra.mxu0 %v960
    %4401 = vmatpush.bf16.msra.mxu0 %v952
    %4402 = vmatpush.bf16.msra.mxu0 %v944
    %4403 = vmatpush.bf16.msra.mxu0 %v936
    %4404 = vmatpush.bf16.msra.mxu0 %v928
    %4405 = vmatpush.bf16.msra.mxu0 %v920
    %4406 = vmatmul.bf16.gmra.mxu0 %v3845
    %v4407 = vpop.f32.mrf.mxu0
    %v4408 = vadd.f32 %v4395, %v4407
    %v4409 = vpop.f32.mrf.mxu0
    %4410 = vdwg.mxu0
    %v4411 = vadd.f32 %v4193, %v4226
    %v4412 = vadd.f32 %v4194, %v4252
    %v4413 = vadd.f32 %v4195, %v4278
    %v4414 = vadd.f32 %v4196, %v4304
    %v4415 = vadd.f32 %v4197, %v4330
    %v4416 = vadd.f32 %v4198, %v4356
    %v4417 = vadd.f32 %v4199, %v4382
    %v4418 = vadd.f32 %v4200, %v4408
    %v4419 = vxor.u32 %v4411, 2147483648
    %v4420 = vxor.u32 %v4412, 2147483648
    %v4421 = vmul.f32 %v4419, 1.442695
    %v4422 = vpow.pop %v4421
    %v4423 = vmul.f32 %v4420, 1.442695
    %v4424 = vpow.pop %v4423
    %v4425 = vadd.f32 %v4422, 1.0
    %v4426 = vadd.f32 %v4424, 1.0
    %v4427 = vrcp.pop %v4425
    %v4428 = vmul.f32 %v4425, %v4427
    %v4429 = vsub.f32 1.0, %v4428
    %v4430 = vmul.f32 %v4427, %v4429
    %v4431 = vadd.f32 %v4427, %v4430
    %vm4432 = vweird.f32 %v4425
    %vm4433 = vweird.f32 %v4427
    %vm4434 = vmor %vm4432, %vm4433
    %v4435 = vsel %vm4434, %v4427, %v4431
    %v4436 = vand.u32 2147483647, %v4425
    %vm4437 = vcmp.eq.f32.partialorder %v4436, 8.507059e+37
    %v4438 = vand.u32 %v4425, 2147483648
    %v4439 = vor.u32 1.1754944e-38, %v4438
    %v4440 = vsel %vm4437, %v4439, %v4435
    %v4441 = vmul.f32 1.0, %v4440
    %v4442 = vrcp.pop %v4426
    %v4443 = vmul.f32 %v4426, %v4442
    %v4444 = vsub.f32 1.0, %v4443
    %v4445 = vmul.f32 %v4442, %v4444
    %v4446 = vadd.f32 %v4442, %v4445
    %vm4447 = vweird.f32 %v4426
    %vm4448 = vweird.f32 %v4442
    %vm4449 = vmor %vm4447, %vm4448
    %v4450 = vsel %vm4449, %v4442, %v4446
    %v4451 = vand.u32 2147483647, %v4426
    %vm4452 = vcmp.eq.f32.partialorder %v4451, 8.507059e+37
    %v4453 = vand.u32 %v4426, 2147483648
    %v4454 = vor.u32 1.1754944e-38, %v4453
    %v4455 = vsel %vm4452, %v4454, %v4450
    %v4456 = vmul.f32 1.0, %v4455
    %v4457 = vxor.u32 %v4413, 2147483648
    %v4458 = vxor.u32 %v4414, 2147483648
    %v4459 = vmul.f32 %v4457, 1.442695
    %v4460 = vpow.pop %v4459
    %v4461 = vmul.f32 %v4458, 1.442695
    %v4462 = vpow.pop %v4461
    %v4463 = vadd.f32 %v4460, 1.0
    %v4464 = vadd.f32 %v4462, 1.0
    %v4465 = vrcp.pop %v4463
    %v4466 = vmul.f32 %v4463, %v4465
    %v4467 = vsub.f32 1.0, %v4466
    %v4468 = vmul.f32 %v4465, %v4467
    %v4469 = vadd.f32 %v4465, %v4468
    %vm4470 = vweird.f32 %v4463
    %vm4471 = vweird.f32 %v4465
    %vm4472 = vmor %vm4470, %vm4471
    %v4473 = vsel %vm4472, %v4465, %v4469
    %v4474 = vand.u32 2147483647, %v4463
    %vm4475 = vcmp.eq.f32.partialorder %v4474, 8.507059e+37
    %v4476 = vand.u32 %v4463, 2147483648
    %v4477 = vor.u32 1.1754944e-38, %v4476
    %v4478 = vsel %vm4475, %v4477, %v4473
    %v4479 = vmul.f32 1.0, %v4478
    %v4480 = vrcp.pop %v4464
    %v4481 = vmul.f32 %v4464, %v4480
    %v4482 = vsub.f32 1.0, %v4481
    %v4483 = vmul.f32 %v4480, %v4482
    %v4484 = vadd.f32 %v4480, %v4483
    %vm4485 = vweird.f32 %v4464
    %vm4486 = vweird.f32 %v4480
    %vm4487 = vmor %vm4485, %vm4486
    %v4488 = vsel %vm4487, %v4480, %v4484
    %v4489 = vand.u32 2147483647, %v4464
    %vm4490 = vcmp.eq.f32.partialorder %v4489, 8.507059e+37
    %v4491 = vand.u32 %v4464, 2147483648
    %v4492 = vor.u32 1.1754944e-38, %v4491
    %v4493 = vsel %vm4490, %v4492, %v4488
    %v4494 = vmul.f32 1.0, %v4493
    %v4495 = vtanh.pop %v4415
    %v4496 = vtanh.pop %v4416
    %v4497 = vxor.u32 %v4417, 2147483648
    %v4498 = vxor.u32 %v4418, 2147483648
    %v4499 = vmul.f32 %v4497, 1.442695
    %v4500 = vpow.pop %v4499
    %v4501 = vmul.f32 %v4498, 1.442695
    %v4502 = vpow.pop %v4501
    %v4503 = vadd.f32 %v4500, 1.0
    %v4504 = vadd.f32 %v4502, 1.0
    %v4505 = vrcp.pop %v4503
    %v4506 = vmul.f32 %v4503, %v4505
    %v4507 = vsub.f32 1.0, %v4506
    %v4508 = vmul.f32 %v4505, %v4507
    %v4509 = vadd.f32 %v4505, %v4508
    %vm4510 = vweird.f32 %v4503
    %vm4511 = vweird.f32 %v4505
    %vm4512 = vmor %vm4510, %vm4511
    %v4513 = vsel %vm4512, %v4505, %v4509
    %v4514 = vand.u32 2147483647, %v4503
    %vm4515 = vcmp.eq.f32.partialorder %v4514, 8.507059e+37
    %v4516 = vand.u32 %v4503, 2147483648
    %v4517 = vor.u32 1.1754944e-38, %v4516
    %v4518 = vsel %vm4515, %v4517, %v4513
    %v4519 = vmul.f32 1.0, %v4518
    %v4520 = vrcp.pop %v4504
    %v4521 = vmul.f32 %v4504, %v4520
    %v4522 = vsub.f32 1.0, %v4521
    %v4523 = vmul.f32 %v4520, %v4522
    %v4524 = vadd.f32 %v4520, %v4523
    %vm4525 = vweird.f32 %v4504
    %vm4526 = vweird.f32 %v4520
    %vm4527 = vmor %vm4525, %vm4526
    %v4528 = vsel %vm4527, %v4520, %v4524
    %v4529 = vand.u32 2147483647, %v4504
    %vm4530 = vcmp.eq.f32.partialorder %v4529, 8.507059e+37
    %v4531 = vand.u32 %v4504, 2147483648
    %v4532 = vor.u32 1.1754944e-38, %v4531
    %v4533 = vsel %vm4530, %v4532, %v4528
    %v4534 = vmul.f32 1.0, %v4533
    %v4535 = vmul.f32 %v4479, %v3630
    %v4536 = vmul.f32 %v4494, %v3631
    %v4537 = vmul.f32 %v4441, %v4495
    %v4538 = vmul.f32 %v4456, %v4496
    %v4539 = vadd.f32 %v4535, %v4537
    %v4540 = vadd.f32 %v4536, %v4538
    %v4541 = vtanh.pop %v4539
    %v4542 = vtanh.pop %v4540
    %v4543 = vmul.f32 %v4519, %v4541
    %v4544 = vmul.f32 %v4534, %v4542
    %4545 = vmatpush.bf16.msra.mxu0 %v1887
    %4546 = vmatpush.bf16.msra.mxu0 %v1879
    %4547 = vmatpush.bf16.msra.mxu0 %v1871
    %4548 = vmatpush.bf16.msra.mxu0 %v1863
    %4549 = vmatpush.bf16.msra.mxu0 %v1855
    %4550 = vmatpush.bf16.msra.mxu0 %v1847
    %4551 = vmatpush.bf16.msra.mxu0 %v1839
    %4552 = vmatpush.bf16.msra.mxu0 %v1831
    %4553 = vmatmul.bf16.gmra.mxu0 %v4201
    %v4554 = vpop.f32.mrf.mxu0
    %v4555 = vadd.f32 %v425, %v4554
    %v4556 = vpop.f32.mrf.mxu0
    %4557 = vdwg.mxu0
    %4558 = vmatpush.bf16.msra.mxu0 %v1951
    %4559 = vmatpush.bf16.msra.mxu0 %v1943
    %4560 = vmatpush.bf16.msra.mxu0 %v1935
    %4561 = vmatpush.bf16.msra.mxu0 %v1927
    %4562 = vmatpush.bf16.msra.mxu0 %v1919
    %4563 = vmatpush.bf16.msra.mxu0 %v1911
    %4564 = vmatpush.bf16.msra.mxu0 %v1903
    %4565 = vmatpush.bf16.msra.mxu0 %v1895
    %4566 = vmatmul.bf16.gmra.mxu0 %v4202
    %v4567 = vpop.f32.mrf.mxu0
    %v4568 = vadd.f32 %v4555, %v4567
    %v4569 = vpop.f32.mrf.mxu0
    %4570 = vdwg.mxu0
    %4571 = vmatpush.bf16.msra.mxu0 %v1888
    %4572 = vmatpush.bf16.msra.mxu0 %v1880
    %4573 = vmatpush.bf16.msra.mxu0 %v1872
    %4574 = vmatpush.bf16.msra.mxu0 %v1864
    %4575 = vmatpush.bf16.msra.mxu0 %v1856
    %4576 = vmatpush.bf16.msra.mxu0 %v1848
    %4577 = vmatpush.bf16.msra.mxu0 %v1840
    %4578 = vmatpush.bf16.msra.mxu0 %v1832
    %4579 = vmatmul.bf16.gmra.mxu0 %v4201
    %v4580 = vpop.f32.mrf.mxu0
    %v4581 = vadd.f32 %v426, %v4580
    %v4582 = vpop.f32.mrf.mxu0
    %4583 = vdwg.mxu0
    %4584 = vmatpush.bf16.msra.mxu0 %v1952
    %4585 = vmatpush.bf16.msra.mxu0 %v1944
    %4586 = vmatpush.bf16.msra.mxu0 %v1936
    %4587 = vmatpush.bf16.msra.mxu0 %v1928
    %4588 = vmatpush.bf16.msra.mxu0 %v1920
    %4589 = vmatpush.bf16.msra.mxu0 %v1912
    %4590 = vmatpush.bf16.msra.mxu0 %v1904
    %4591 = vmatpush.bf16.msra.mxu0 %v1896
    %4592 = vmatmul.bf16.gmra.mxu0 %v4202
    %v4593 = vpop.f32.mrf.mxu0
    %v4594 = vadd.f32 %v4581, %v4593
    %v4595 = vpop.f32.mrf.mxu0
    %4596 = vdwg.mxu0
    %4597 = vmatpush.bf16.msra.mxu0 %v1889
    %4598 = vmatpush.bf16.msra.mxu0 %v1881
    %4599 = vmatpush.bf16.msra.mxu0 %v1873
    %4600 = vmatpush.bf16.msra.mxu0 %v1865
    %4601 = vmatpush.bf16.msra.mxu0 %v1857
    %4602 = vmatpush.bf16.msra.mxu0 %v1849
    %4603 = vmatpush.bf16.msra.mxu0 %v1841
    %4604 = vmatpush.bf16.msra.mxu0 %v1833
    %4605 = vmatmul.bf16.gmra.mxu0 %v4201
    %v4606 = vpop.f32.mrf.mxu0
    %v4607 = vadd.f32 %v427, %v4606
    %v4608 = vpop.f32.mrf.mxu0
    %4609 = vdwg.mxu0
    %4610 = vmatpush.bf16.msra.mxu0 %v1953
    %4611 = vmatpush.bf16.msra.mxu0 %v1945
    %4612 = vmatpush.bf16.msra.mxu0 %v1937
    %4613 = vmatpush.bf16.msra.mxu0 %v1929
    %4614 = vmatpush.bf16.msra.mxu0 %v1921
    %4615 = vmatpush.bf16.msra.mxu0 %v1913
    %4616 = vmatpush.bf16.msra.mxu0 %v1905
    %4617 = vmatpush.bf16.msra.mxu0 %v1897
    %4618 = vmatmul.bf16.gmra.mxu0 %v4202
    %v4619 = vpop.f32.mrf.mxu0
    %v4620 = vadd.f32 %v4607, %v4619
    %v4621 = vpop.f32.mrf.mxu0
    %4622 = vdwg.mxu0
    %4623 = vmatpush.bf16.msra.mxu0 %v1890
    %4624 = vmatpush.bf16.msra.mxu0 %v1882
    %4625 = vmatpush.bf16.msra.mxu0 %v1874
    %4626 = vmatpush.bf16.msra.mxu0 %v1866
    %4627 = vmatpush.bf16.msra.mxu0 %v1858
    %4628 = vmatpush.bf16.msra.mxu0 %v1850
    %4629 = vmatpush.bf16.msra.mxu0 %v1842
    %4630 = vmatpush.bf16.msra.mxu0 %v1834
    %4631 = vmatmul.bf16.gmra.mxu0 %v4201
    %v4632 = vpop.f32.mrf.mxu0
    %v4633 = vadd.f32 %v428, %v4632
    %v4634 = vpop.f32.mrf.mxu0
    %4635 = vdwg.mxu0
    %4636 = vmatpush.bf16.msra.mxu0 %v1954
    %4637 = vmatpush.bf16.msra.mxu0 %v1946
    %4638 = vmatpush.bf16.msra.mxu0 %v1938
    %4639 = vmatpush.bf16.msra.mxu0 %v1930
    %4640 = vmatpush.bf16.msra.mxu0 %v1922
    %4641 = vmatpush.bf16.msra.mxu0 %v1914
    %4642 = vmatpush.bf16.msra.mxu0 %v1906
    %4643 = vmatpush.bf16.msra.mxu0 %v1898
    %4644 = vmatmul.bf16.gmra.mxu0 %v4202
    %v4645 = vpop.f32.mrf.mxu0
    %v4646 = vadd.f32 %v4633, %v4645
    %v4647 = vpop.f32.mrf.mxu0
    %4648 = vdwg.mxu0
    %4649 = vmatpush.bf16.msra.mxu0 %v1891
    %4650 = vmatpush.bf16.msra.mxu0 %v1883
    %4651 = vmatpush.bf16.msra.mxu0 %v1875
    %4652 = vmatpush.bf16.msra.mxu0 %v1867
    %4653 = vmatpush.bf16.msra.mxu0 %v1859
    %4654 = vmatpush.bf16.msra.mxu0 %v1851
    %4655 = vmatpush.bf16.msra.mxu0 %v1843
    %4656 = vmatpush.bf16.msra.mxu0 %v1835
    %4657 = vmatmul.bf16.gmra.mxu0 %v4201
    %v4658 = vpop.f32.mrf.mxu0
    %v4659 = vadd.f32 %v429, %v4658
    %v4660 = vpop.f32.mrf.mxu0
    %4661 = vdwg.mxu0
    %4662 = vmatpush.bf16.msra.mxu0 %v1955
    %4663 = vmatpush.bf16.msra.mxu0 %v1947
    %4664 = vmatpush.bf16.msra.mxu0 %v1939
    %4665 = vmatpush.bf16.msra.mxu0 %v1931
    %4666 = vmatpush.bf16.msra.mxu0 %v1923
    %4667 = vmatpush.bf16.msra.mxu0 %v1915
    %4668 = vmatpush.bf16.msra.mxu0 %v1907
    %4669 = vmatpush.bf16.msra.mxu0 %v1899
    %4670 = vmatmul.bf16.gmra.mxu0 %v4202
    %v4671 = vpop.f32.mrf.mxu0
    %v4672 = vadd.f32 %v4659, %v4671
    %v4673 = vpop.f32.mrf.mxu0
    %4674 = vdwg.mxu0
    %4675 = vmatpush.bf16.msra.mxu0 %v1892
    %4676 = vmatpush.bf16.msra.mxu0 %v1884
    %4677 = vmatpush.bf16.msra.mxu0 %v1876
    %4678 = vmatpush.bf16.msra.mxu0 %v1868
    %4679 = vmatpush.bf16.msra.mxu0 %v1860
    %4680 = vmatpush.bf16.msra.mxu0 %v1852
    %4681 = vmatpush.bf16.msra.mxu0 %v1844
    %4682 = vmatpush.bf16.msra.mxu0 %v1836
    %4683 = vmatmul.bf16.gmra.mxu0 %v4201
    %v4684 = vpop.f32.mrf.mxu0
    %v4685 = vadd.f32 %v430, %v4684
    %v4686 = vpop.f32.mrf.mxu0
    %4687 = vdwg.mxu0
    %4688 = vmatpush.bf16.msra.mxu0 %v1956
    %4689 = vmatpush.bf16.msra.mxu0 %v1948
    %4690 = vmatpush.bf16.msra.mxu0 %v1940
    %4691 = vmatpush.bf16.msra.mxu0 %v1932
    %4692 = vmatpush.bf16.msra.mxu0 %v1924
    %4693 = vmatpush.bf16.msra.mxu0 %v1916
    %4694 = vmatpush.bf16.msra.mxu0 %v1908
    %4695 = vmatpush.bf16.msra.mxu0 %v1900
    %4696 = vmatmul.bf16.gmra.mxu0 %v4202
    %v4697 = vpop.f32.mrf.mxu0
    %v4698 = vadd.f32 %v4685, %v4697
    %v4699 = vpop.f32.mrf.mxu0
    %4700 = vdwg.mxu0
    %4701 = vmatpush.bf16.msra.mxu0 %v1893
    %4702 = vmatpush.bf16.msra.mxu0 %v1885
    %4703 = vmatpush.bf16.msra.mxu0 %v1877
    %4704 = vmatpush.bf16.msra.mxu0 %v1869
    %4705 = vmatpush.bf16.msra.mxu0 %v1861
    %4706 = vmatpush.bf16.msra.mxu0 %v1853
    %4707 = vmatpush.bf16.msra.mxu0 %v1845
    %4708 = vmatpush.bf16.msra.mxu0 %v1837
    %4709 = vmatmul.bf16.gmra.mxu0 %v4201
    %v4710 = vpop.f32.mrf.mxu0
    %v4711 = vadd.f32 %v431, %v4710
    %v4712 = vpop.f32.mrf.mxu0
    %4713 = vdwg.mxu0
    %4714 = vmatpush.bf16.msra.mxu0 %v1957
    %4715 = vmatpush.bf16.msra.mxu0 %v1949
    %4716 = vmatpush.bf16.msra.mxu0 %v1941
    %4717 = vmatpush.bf16.msra.mxu0 %v1933
    %4718 = vmatpush.bf16.msra.mxu0 %v1925
    %4719 = vmatpush.bf16.msra.mxu0 %v1917
    %4720 = vmatpush.bf16.msra.mxu0 %v1909
    %4721 = vmatpush.bf16.msra.mxu0 %v1901
    %4722 = vmatmul.bf16.gmra.mxu0 %v4202
    %v4723 = vpop.f32.mrf.mxu0
    %v4724 = vadd.f32 %v4711, %v4723
    %v4725 = vpop.f32.mrf.mxu0
    %4726 = vdwg.mxu0
    %4727 = vmatpush.bf16.msra.mxu0 %v1894
    %4728 = vmatpush.bf16.msra.mxu0 %v1886
    %4729 = vmatpush.bf16.msra.mxu0 %v1878
    %4730 = vmatpush.bf16.msra.mxu0 %v1870
    %4731 = vmatpush.bf16.msra.mxu0 %v1862
    %4732 = vmatpush.bf16.msra.mxu0 %v1854
    %4733 = vmatpush.bf16.msra.mxu0 %v1846
    %4734 = vmatpush.bf16.msra.mxu0 %v1838
    %4735 = vmatmul.bf16.gmra.mxu0 %v4201
    %v4736 = vpop.f32.mrf.mxu0
    %v4737 = vadd.f32 %v432, %v4736
    %v4738 = vpop.f32.mrf.mxu0
    %4739 = vdwg.mxu0
    %4740 = vmatpush.bf16.msra.mxu0 %v1958
    %4741 = vmatpush.bf16.msra.mxu0 %v1950
    %4742 = vmatpush.bf16.msra.mxu0 %v1942
    %4743 = vmatpush.bf16.msra.mxu0 %v1934
    %4744 = vmatpush.bf16.msra.mxu0 %v1926
    %4745 = vmatpush.bf16.msra.mxu0 %v1918
    %4746 = vmatpush.bf16.msra.mxu0 %v1910
    %4747 = vmatpush.bf16.msra.mxu0 %v1902
    %4748 = vmatmul.bf16.gmra.mxu0 %v4202
    %v4749 = vpop.f32.mrf.mxu0
    %v4750 = vadd.f32 %v4737, %v4749
    %v4751 = vpop.f32.mrf.mxu0
    %4752 = vdwg.mxu0
    %v4753 = vpack.c.bf16 %v4543, %v4543
    %v4754 = vpack.c.bf16 %v4544, %v4544
    %4755 = vmatpush.bf16.msra.mxu0 %v2737
    %4756 = vmatpush.bf16.msra.mxu0 %v2729
    %4757 = vmatpush.bf16.msra.mxu0 %v2721
    %4758 = vmatpush.bf16.msra.mxu0 %v2713
    %4759 = vmatpush.bf16.msra.mxu0 %v2705
    %4760 = vmatpush.bf16.msra.mxu0 %v2697
    %4761 = vmatpush.bf16.msra.mxu0 %v2689
    %4762 = vmatpush.bf16.msra.mxu0 %v2681
    %4763 = vmatmul.bf16.gmra.mxu0 %v4753
    %v4764 = vpop.f32.mrf.mxu0
    %v4765 = vadd.f32 0.0, %v4764
    %v4766 = vpop.f32.mrf.mxu0
    %4767 = vdwg.mxu0
    %4768 = vmatpush.bf16.msra.mxu0 %v2801
    %4769 = vmatpush.bf16.msra.mxu0 %v2793
    %4770 = vmatpush.bf16.msra.mxu0 %v2785
    %4771 = vmatpush.bf16.msra.mxu0 %v2777
    %4772 = vmatpush.bf16.msra.mxu0 %v2769
    %4773 = vmatpush.bf16.msra.mxu0 %v2761
    %4774 = vmatpush.bf16.msra.mxu0 %v2753
    %4775 = vmatpush.bf16.msra.mxu0 %v2745
    %4776 = vmatmul.bf16.gmra.mxu0 %v4754
    %v4777 = vpop.f32.mrf.mxu0
    %v4778 = vadd.f32 %v4765, %v4777
    %v4779 = vpop.f32.mrf.mxu0
    %4780 = vdwg.mxu0
    %4781 = vmatpush.bf16.msra.mxu0 %v2738
    %4782 = vmatpush.bf16.msra.mxu0 %v2730
    %4783 = vmatpush.bf16.msra.mxu0 %v2722
    %4784 = vmatpush.bf16.msra.mxu0 %v2714
    %4785 = vmatpush.bf16.msra.mxu0 %v2706
    %4786 = vmatpush.bf16.msra.mxu0 %v2698
    %4787 = vmatpush.bf16.msra.mxu0 %v2690
    %4788 = vmatpush.bf16.msra.mxu0 %v2682
    %4789 = vmatmul.bf16.gmra.mxu0 %v4753
    %v4790 = vpop.f32.mrf.mxu0
    %v4791 = vadd.f32 0.0, %v4790
    %v4792 = vpop.f32.mrf.mxu0
    %4793 = vdwg.mxu0
    %4794 = vmatpush.bf16.msra.mxu0 %v2802
    %4795 = vmatpush.bf16.msra.mxu0 %v2794
    %4796 = vmatpush.bf16.msra.mxu0 %v2786
    %4797 = vmatpush.bf16.msra.mxu0 %v2778
    %4798 = vmatpush.bf16.msra.mxu0 %v2770
    %4799 = vmatpush.bf16.msra.mxu0 %v2762
    %4800 = vmatpush.bf16.msra.mxu0 %v2754
    %4801 = vmatpush.bf16.msra.mxu0 %v2746
    %4802 = vmatmul.bf16.gmra.mxu0 %v4754
    %v4803 = vpop.f32.mrf.mxu0
    %v4804 = vadd.f32 %v4791, %v4803
    %v4805 = vpop.f32.mrf.mxu0
    %4806 = vdwg.mxu0
    %4807 = vmatpush.bf16.msra.mxu0 %v2739
    %4808 = vmatpush.bf16.msra.mxu0 %v2731
    %4809 = vmatpush.bf16.msra.mxu0 %v2723
    %4810 = vmatpush.bf16.msra.mxu0 %v2715
    %4811 = vmatpush.bf16.msra.mxu0 %v2707
    %4812 = vmatpush.bf16.msra.mxu0 %v2699
    %4813 = vmatpush.bf16.msra.mxu0 %v2691
    %4814 = vmatpush.bf16.msra.mxu0 %v2683
    %4815 = vmatmul.bf16.gmra.mxu0 %v4753
    %v4816 = vpop.f32.mrf.mxu0
    %v4817 = vadd.f32 0.0, %v4816
    %v4818 = vpop.f32.mrf.mxu0
    %4819 = vdwg.mxu0
    %4820 = vmatpush.bf16.msra.mxu0 %v2803
    %4821 = vmatpush.bf16.msra.mxu0 %v2795
    %4822 = vmatpush.bf16.msra.mxu0 %v2787
    %4823 = vmatpush.bf16.msra.mxu0 %v2779
    %4824 = vmatpush.bf16.msra.mxu0 %v2771
    %4825 = vmatpush.bf16.msra.mxu0 %v2763
    %4826 = vmatpush.bf16.msra.mxu0 %v2755
    %4827 = vmatpush.bf16.msra.mxu0 %v2747
    %4828 = vmatmul.bf16.gmra.mxu0 %v4754
    %v4829 = vpop.f32.mrf.mxu0
    %v4830 = vadd.f32 %v4817, %v4829
    %v4831 = vpop.f32.mrf.mxu0
    %4832 = vdwg.mxu0
    %4833 = vmatpush.bf16.msra.mxu0 %v2740
    %4834 = vmatpush.bf16.msra.mxu0 %v2732
    %4835 = vmatpush.bf16.msra.mxu0 %v2724
    %4836 = vmatpush.bf16.msra.mxu0 %v2716
    %4837 = vmatpush.bf16.msra.mxu0 %v2708
    %4838 = vmatpush.bf16.msra.mxu0 %v2700
    %4839 = vmatpush.bf16.msra.mxu0 %v2692
    %4840 = vmatpush.bf16.msra.mxu0 %v2684
    %4841 = vmatmul.bf16.gmra.mxu0 %v4753
    %v4842 = vpop.f32.mrf.mxu0
    %v4843 = vadd.f32 0.0, %v4842
    %v4844 = vpop.f32.mrf.mxu0
    %4845 = vdwg.mxu0
    %4846 = vmatpush.bf16.msra.mxu0 %v2804
    %4847 = vmatpush.bf16.msra.mxu0 %v2796
    %4848 = vmatpush.bf16.msra.mxu0 %v2788
    %4849 = vmatpush.bf16.msra.mxu0 %v2780
    %4850 = vmatpush.bf16.msra.mxu0 %v2772
    %4851 = vmatpush.bf16.msra.mxu0 %v2764
    %4852 = vmatpush.bf16.msra.mxu0 %v2756
    %4853 = vmatpush.bf16.msra.mxu0 %v2748
    %4854 = vmatmul.bf16.gmra.mxu0 %v4754
    %v4855 = vpop.f32.mrf.mxu0
    %v4856 = vadd.f32 %v4843, %v4855
    %v4857 = vpop.f32.mrf.mxu0
    %4858 = vdwg.mxu0
    %4859 = vmatpush.bf16.msra.mxu0 %v2741
    %4860 = vmatpush.bf16.msra.mxu0 %v2733
    %4861 = vmatpush.bf16.msra.mxu0 %v2725
    %4862 = vmatpush.bf16.msra.mxu0 %v2717
    %4863 = vmatpush.bf16.msra.mxu0 %v2709
    %4864 = vmatpush.bf16.msra.mxu0 %v2701
    %4865 = vmatpush.bf16.msra.mxu0 %v2693
    %4866 = vmatpush.bf16.msra.mxu0 %v2685
    %4867 = vmatmul.bf16.gmra.mxu0 %v4753
    %v4868 = vpop.f32.mrf.mxu0
    %v4869 = vadd.f32 0.0, %v4868
    %v4870 = vpop.f32.mrf.mxu0
    %4871 = vdwg.mxu0
    %4872 = vmatpush.bf16.msra.mxu0 %v2805
    %4873 = vmatpush.bf16.msra.mxu0 %v2797
    %4874 = vmatpush.bf16.msra.mxu0 %v2789
    %4875 = vmatpush.bf16.msra.mxu0 %v2781
    %4876 = vmatpush.bf16.msra.mxu0 %v2773
    %4877 = vmatpush.bf16.msra.mxu0 %v2765
    %4878 = vmatpush.bf16.msra.mxu0 %v2757
    %4879 = vmatpush.bf16.msra.mxu0 %v2749
    %4880 = vmatmul.bf16.gmra.mxu0 %v4754
    %v4881 = vpop.f32.mrf.mxu0
    %v4882 = vadd.f32 %v4869, %v4881
    %v4883 = vpop.f32.mrf.mxu0
    %4884 = vdwg.mxu0
    %4885 = vmatpush.bf16.msra.mxu0 %v2742
    %4886 = vmatpush.bf16.msra.mxu0 %v2734
    %4887 = vmatpush.bf16.msra.mxu0 %v2726
    %4888 = vmatpush.bf16.msra.mxu0 %v2718
    %4889 = vmatpush.bf16.msra.mxu0 %v2710
    %4890 = vmatpush.bf16.msra.mxu0 %v2702
    %4891 = vmatpush.bf16.msra.mxu0 %v2694
    %4892 = vmatpush.bf16.msra.mxu0 %v2686
    %4893 = vmatmul.bf16.gmra.mxu0 %v4753
    %v4894 = vpop.f32.mrf.mxu0
    %v4895 = vadd.f32 0.0, %v4894
    %v4896 = vpop.f32.mrf.mxu0
    %4897 = vdwg.mxu0
    %4898 = vmatpush.bf16.msra.mxu0 %v2806
    %4899 = vmatpush.bf16.msra.mxu0 %v2798
    %4900 = vmatpush.bf16.msra.mxu0 %v2790
    %4901 = vmatpush.bf16.msra.mxu0 %v2782
    %4902 = vmatpush.bf16.msra.mxu0 %v2774
    %4903 = vmatpush.bf16.msra.mxu0 %v2766
    %4904 = vmatpush.bf16.msra.mxu0 %v2758
    %4905 = vmatpush.bf16.msra.mxu0 %v2750
    %4906 = vmatmul.bf16.gmra.mxu0 %v4754
    %v4907 = vpop.f32.mrf.mxu0
    %v4908 = vadd.f32 %v4895, %v4907
    %v4909 = vpop.f32.mrf.mxu0
    %4910 = vdwg.mxu0
    %4911 = vmatpush.bf16.msra.mxu0 %v2743
    %4912 = vmatpush.bf16.msra.mxu0 %v2735
    %4913 = vmatpush.bf16.msra.mxu0 %v2727
    %4914 = vmatpush.bf16.msra.mxu0 %v2719
    %4915 = vmatpush.bf16.msra.mxu0 %v2711
    %4916 = vmatpush.bf16.msra.mxu0 %v2703
    %4917 = vmatpush.bf16.msra.mxu0 %v2695
    %4918 = vmatpush.bf16.msra.mxu0 %v2687
    %4919 = vmatmul.bf16.gmra.mxu0 %v4753
    %v4920 = vpop.f32.mrf.mxu0
    %v4921 = vadd.f32 0.0, %v4920
    %v4922 = vpop.f32.mrf.mxu0
    %4923 = vdwg.mxu0
    %4924 = vmatpush.bf16.msra.mxu0 %v2807
    %4925 = vmatpush.bf16.msra.mxu0 %v2799
    %4926 = vmatpush.bf16.msra.mxu0 %v2791
    %4927 = vmatpush.bf16.msra.mxu0 %v2783
    %4928 = vmatpush.bf16.msra.mxu0 %v2775
    %4929 = vmatpush.bf16.msra.mxu0 %v2767
    %4930 = vmatpush.bf16.msra.mxu0 %v2759
    %4931 = vmatpush.bf16.msra.mxu0 %v2751
    %4932 = vmatmul.bf16.gmra.mxu0 %v4754
    %v4933 = vpop.f32.mrf.mxu0
    %v4934 = vadd.f32 %v4921, %v4933
    %v4935 = vpop.f32.mrf.mxu0
    %4936 = vdwg.mxu0
    %4937 = vmatpush.bf16.msra.mxu0 %v2744
    %4938 = vmatpush.bf16.msra.mxu0 %v2736
    %4939 = vmatpush.bf16.msra.mxu0 %v2728
    %4940 = vmatpush.bf16.msra.mxu0 %v2720
    %4941 = vmatpush.bf16.msra.mxu0 %v2712
    %4942 = vmatpush.bf16.msra.mxu0 %v2704
    %4943 = vmatpush.bf16.msra.mxu0 %v2696
    %4944 = vmatpush.bf16.msra.mxu0 %v2688
    %4945 = vmatmul.bf16.gmra.mxu0 %v4753
    %v4946 = vpop.f32.mrf.mxu0
    %v4947 = vadd.f32 0.0, %v4946
    %v4948 = vpop.f32.mrf.mxu0
    %4949 = vdwg.mxu0
    %4950 = vmatpush.bf16.msra.mxu0 %v2808
    %4951 = vmatpush.bf16.msra.mxu0 %v2800
    %4952 = vmatpush.bf16.msra.mxu0 %v2792
    %4953 = vmatpush.bf16.msra.mxu0 %v2784
    %4954 = vmatpush.bf16.msra.mxu0 %v2776
    %4955 = vmatpush.bf16.msra.mxu0 %v2768
    %4956 = vmatpush.bf16.msra.mxu0 %v2760
    %4957 = vmatpush.bf16.msra.mxu0 %v2752
    %4958 = vmatmul.bf16.gmra.mxu0 %v4754
    %v4959 = vpop.f32.mrf.mxu0
    %v4960 = vadd.f32 %v4947, %v4959
    %v4961 = vpop.f32.mrf.mxu0
    %4962 = vdwg.mxu0
    %v4963 = vadd.f32 %v4568, %v4778
    %v4964 = vadd.f32 %v4594, %v4804
    %v4965 = vadd.f32 %v4620, %v4830
    %v4966 = vadd.f32 %v4646, %v4856
    %v4967 = vadd.f32 %v4672, %v4882
    %v4968 = vadd.f32 %v4698, %v4908
    %v4969 = vadd.f32 %v4724, %v4934
    %v4970 = vadd.f32 %v4750, %v4960
    %v4971 = vxor.u32 %v4963, 2147483648
    %v4972 = vxor.u32 %v4964, 2147483648
    %v4973 = vmul.f32 %v4971, 1.442695
    %v4974 = vpow.pop %v4973
    %v4975 = vmul.f32 %v4972, 1.442695
    %v4976 = vpow.pop %v4975
    %v4977 = vadd.f32 %v4974, 1.0
    %v4978 = vadd.f32 %v4976, 1.0
    %v4979 = vrcp.pop %v4977
    %v4980 = vmul.f32 %v4977, %v4979
    %v4981 = vsub.f32 1.0, %v4980
    %v4982 = vmul.f32 %v4979, %v4981
    %v4983 = vadd.f32 %v4979, %v4982
    %vm4984 = vweird.f32 %v4977
    %vm4985 = vweird.f32 %v4979
    %vm4986 = vmor %vm4984, %vm4985
    %v4987 = vsel %vm4986, %v4979, %v4983
    %v4988 = vand.u32 2147483647, %v4977
    %vm4989 = vcmp.eq.f32.partialorder %v4988, 8.507059e+37
    %v4990 = vand.u32 %v4977, 2147483648
    %v4991 = vor.u32 1.1754944e-38, %v4990
    %v4992 = vsel %vm4989, %v4991, %v4987
    %v4993 = vmul.f32 1.0, %v4992
    %v4994 = vrcp.pop %v4978
    %v4995 = vmul.f32 %v4978, %v4994
    %v4996 = vsub.f32 1.0, %v4995
    %v4997 = vmul.f32 %v4994, %v4996
    %v4998 = vadd.f32 %v4994, %v4997
    %vm4999 = vweird.f32 %v4978
    %vm5000 = vweird.f32 %v4994
    %vm5001 = vmor %vm4999, %vm5000
    %v5002 = vsel %vm5001, %v4994, %v4998
    %v5003 = vand.u32 2147483647, %v4978
    %vm5004 = vcmp.eq.f32.partialorder %v5003, 8.507059e+37
    %v5005 = vand.u32 %v4978, 2147483648
    %v5006 = vor.u32 1.1754944e-38, %v5005
    %v5007 = vsel %vm5004, %v5006, %v5002
    %v5008 = vmul.f32 1.0, %v5007
    %v5009 = vxor.u32 %v4965, 2147483648
    %v5010 = vxor.u32 %v4966, 2147483648
    %v5011 = vmul.f32 %v5009, 1.442695
    %v5012 = vpow.pop %v5011
    %v5013 = vmul.f32 %v5010, 1.442695
    %v5014 = vpow.pop %v5013
    %v5015 = vadd.f32 %v5012, 1.0
    %v5016 = vadd.f32 %v5014, 1.0
    %v5017 = vrcp.pop %v5015
    %v5018 = vmul.f32 %v5015, %v5017
    %v5019 = vsub.f32 1.0, %v5018
    %v5020 = vmul.f32 %v5017, %v5019
    %v5021 = vadd.f32 %v5017, %v5020
    %vm5022 = vweird.f32 %v5015
    %vm5023 = vweird.f32 %v5017
    %vm5024 = vmor %vm5022, %vm5023
    %v5025 = vsel %vm5024, %v5017, %v5021
    %v5026 = vand.u32 2147483647, %v5015
    %vm5027 = vcmp.eq.f32.partialorder %v5026, 8.507059e+37
    %v5028 = vand.u32 %v5015, 2147483648
    %v5029 = vor.u32 1.1754944e-38, %v5028
    %v5030 = vsel %vm5027, %v5029, %v5025
    %v5031 = vmul.f32 1.0, %v5030
    %v5032 = vrcp.pop %v5016
    %v5033 = vmul.f32 %v5016, %v5032
    %v5034 = vsub.f32 1.0, %v5033
    %v5035 = vmul.f32 %v5032, %v5034
    %v5036 = vadd.f32 %v5032, %v5035
    %vm5037 = vweird.f32 %v5016
    %vm5038 = vweird.f32 %v5032
    %vm5039 = vmor %vm5037, %vm5038
    %v5040 = vsel %vm5039, %v5032, %v5036
    %v5041 = vand.u32 2147483647, %v5016
    %vm5042 = vcmp.eq.f32.partialorder %v5041, 8.507059e+37
    %v5043 = vand.u32 %v5016, 2147483648
    %v5044 = vor.u32 1.1754944e-38, %v5043
    %v5045 = vsel %vm5042, %v5044, %v5040
    %v5046 = vmul.f32 1.0, %v5045
    %v5047 = vtanh.pop %v4967
    %v5048 = vtanh.pop %v4968
    %v5049 = vxor.u32 %v4969, 2147483648
    %v5050 = vxor.u32 %v4970, 2147483648
    %v5051 = vmul.f32 %v5049, 1.442695
    %v5052 = vpow.pop %v5051
    %v5053 = vmul.f32 %v5050, 1.442695
    %v5054 = vpow.pop %v5053
    %v5055 = vadd.f32 %v5052, 1.0
    %v5056 = vadd.f32 %v5054, 1.0
    %v5057 = vrcp.pop %v5055
    %v5058 = vmul.f32 %v5055, %v5057
    %v5059 = vsub.f32 1.0, %v5058
    %v5060 = vmul.f32 %v5057, %v5059
    %v5061 = vadd.f32 %v5057, %v5060
    %vm5062 = vweird.f32 %v5055
    %vm5063 = vweird.f32 %v5057
    %vm5064 = vmor %vm5062, %vm5063
    %v5065 = vsel %vm5064, %v5057, %v5061
    %v5066 = vand.u32 2147483647, %v5055
    %vm5067 = vcmp.eq.f32.partialorder %v5066, 8.507059e+37
    %v5068 = vand.u32 %v5055, 2147483648
    %v5069 = vor.u32 1.1754944e-38, %v5068
    %v5070 = vsel %vm5067, %v5069, %v5065
    %v5071 = vmul.f32 1.0, %v5070
    %v5072 = vrcp.pop %v5056
    %v5073 = vmul.f32 %v5056, %v5072
    %v5074 = vsub.f32 1.0, %v5073
    %v5075 = vmul.f32 %v5072, %v5074
    %v5076 = vadd.f32 %v5072, %v5075
    %vm5077 = vweird.f32 %v5056
    %vm5078 = vweird.f32 %v5072
    %vm5079 = vmor %vm5077, %vm5078
    %v5080 = vsel %vm5079, %v5072, %v5076
    %v5081 = vand.u32 2147483647, %v5056
    %vm5082 = vcmp.eq.f32.partialorder %v5081, 8.507059e+37
    %v5083 = vand.u32 %v5056, 2147483648
    %v5084 = vor.u32 1.1754944e-38, %v5083
    %v5085 = vsel %vm5082, %v5084, %v5080
    %v5086 = vmul.f32 1.0, %v5085
    %v5087 = vmul.f32 %v5031, %v4182
    %v5088 = vmul.f32 %v5046, %v4183
    %v5089 = vmul.f32 %v4993, %v5047
    %v5090 = vmul.f32 %v5008, %v5048
    %v5091 = vadd.f32 %v5087, %v5089
    %v5092 = vadd.f32 %v5088, %v5090
    %v5093 = vtanh.pop %v5091
    %v5094 = vtanh.pop %v5092
    %v5095 = vmul.f32 %v5071, %v5093
    %v5096 = vmul.f32 %v5086, %v5094
    %s5097 = scalar_lea.vmem %s0, 96
    %v5098 = vld [vmem:[%s5097] sm:$0xff]
    %v5099 = vld [vmem:[%s5097 + $0x8] sm:$0xff]
    %v5100 = vld [vmem:[%s5097 + $0x10] sm:$0xff]
    %v5101 = vld [vmem:[%s5097 + $0x18] sm:$0xff]
    %v5102 = vunpack.c.l.bf16 %v5098
    %v5103 = vunpack.c.h.bf16 %v5098
    %v5104 = vunpack.c.l.bf16 %v5099
    %v5105 = vunpack.c.h.bf16 %v5099
    %v5106 = vunpack.c.l.bf16 %v5100
    %v5107 = vunpack.c.h.bf16 %v5100
    %v5108 = vunpack.c.l.bf16 %v5101
    %v5109 = vunpack.c.h.bf16 %v5101
    %v5110 = vpack.c.bf16 %v5095, %v5095
    %v5111 = vpack.c.bf16 %v5096, %v5096
    %5112 = vmatpush.bf16.msra.mxu0 %v905
    %5113 = vmatpush.bf16.msra.mxu0 %v897
    %5114 = vmatpush.bf16.msra.mxu0 %v889
    %5115 = vmatpush.bf16.msra.mxu0 %v881
    %5116 = vmatpush.bf16.msra.mxu0 %v873
    %5117 = vmatpush.bf16.msra.mxu0 %v865
    %5118 = vmatpush.bf16.msra.mxu0 %v857
    %5119 = vmatpush.bf16.msra.mxu0 %v849
    %5120 = vmatmul.bf16.gmra.mxu0 %v4753
    %v5121 = vpop.f32.mrf.mxu0
    %v5122 = vadd.f32 0.0, %v5121
    %v5123 = vpop.f32.mrf.mxu0
    %5124 = vdwg.mxu0
    %5125 = vmatpush.bf16.msra.mxu0 %v969
    %5126 = vmatpush.bf16.msra.mxu0 %v961
    %5127 = vmatpush.bf16.msra.mxu0 %v953
    %5128 = vmatpush.bf16.msra.mxu0 %v945
    %5129 = vmatpush.bf16.msra.mxu0 %v937
    %5130 = vmatpush.bf16.msra.mxu0 %v929
    %5131 = vmatpush.bf16.msra.mxu0 %v921
    %5132 = vmatpush.bf16.msra.mxu0 %v913
    %5133 = vmatmul.bf16.gmra.mxu0 %v4754
    %v5134 = vpop.f32.mrf.mxu0
    %v5135 = vadd.f32 %v5122, %v5134
    %v5136 = vpop.f32.mrf.mxu0
    %5137 = vdwg.mxu0
    %5138 = vmatpush.bf16.msra.mxu0 %v906
    %5139 = vmatpush.bf16.msra.mxu0 %v898
    %5140 = vmatpush.bf16.msra.mxu0 %v890
    %5141 = vmatpush.bf16.msra.mxu0 %v882
    %5142 = vmatpush.bf16.msra.mxu0 %v874
    %5143 = vmatpush.bf16.msra.mxu0 %v866
    %5144 = vmatpush.bf16.msra.mxu0 %v858
    %5145 = vmatpush.bf16.msra.mxu0 %v850
    %5146 = vmatmul.bf16.gmra.mxu0 %v4753
    %v5147 = vpop.f32.mrf.mxu0
    %v5148 = vadd.f32 0.0, %v5147
    %v5149 = vpop.f32.mrf.mxu0
    %5150 = vdwg.mxu0
    %5151 = vmatpush.bf16.msra.mxu0 %v970
    %5152 = vmatpush.bf16.msra.mxu0 %v962
    %5153 = vmatpush.bf16.msra.mxu0 %v954
    %5154 = vmatpush.bf16.msra.mxu0 %v946
    %5155 = vmatpush.bf16.msra.mxu0 %v938
    %5156 = vmatpush.bf16.msra.mxu0 %v930
    %5157 = vmatpush.bf16.msra.mxu0 %v922
    %5158 = vmatpush.bf16.msra.mxu0 %v914
    %5159 = vmatmul.bf16.gmra.mxu0 %v4754
    %v5160 = vpop.f32.mrf.mxu0
    %v5161 = vadd.f32 %v5148, %v5160
    %v5162 = vpop.f32.mrf.mxu0
    %5163 = vdwg.mxu0
    %5164 = vmatpush.bf16.msra.mxu0 %v907
    %5165 = vmatpush.bf16.msra.mxu0 %v899
    %5166 = vmatpush.bf16.msra.mxu0 %v891
    %5167 = vmatpush.bf16.msra.mxu0 %v883
    %5168 = vmatpush.bf16.msra.mxu0 %v875
    %5169 = vmatpush.bf16.msra.mxu0 %v867
    %5170 = vmatpush.bf16.msra.mxu0 %v859
    %5171 = vmatpush.bf16.msra.mxu0 %v851
    %5172 = vmatmul.bf16.gmra.mxu0 %v4753
    %v5173 = vpop.f32.mrf.mxu0
    %v5174 = vadd.f32 0.0, %v5173
    %v5175 = vpop.f32.mrf.mxu0
    %5176 = vdwg.mxu0
    %5177 = vmatpush.bf16.msra.mxu0 %v971
    %5178 = vmatpush.bf16.msra.mxu0 %v963
    %5179 = vmatpush.bf16.msra.mxu0 %v955
    %5180 = vmatpush.bf16.msra.mxu0 %v947
    %5181 = vmatpush.bf16.msra.mxu0 %v939
    %5182 = vmatpush.bf16.msra.mxu0 %v931
    %5183 = vmatpush.bf16.msra.mxu0 %v923
    %5184 = vmatpush.bf16.msra.mxu0 %v915
    %5185 = vmatmul.bf16.gmra.mxu0 %v4754
    %v5186 = vpop.f32.mrf.mxu0
    %v5187 = vadd.f32 %v5174, %v5186
    %v5188 = vpop.f32.mrf.mxu0
    %5189 = vdwg.mxu0
    %5190 = vmatpush.bf16.msra.mxu0 %v908
    %5191 = vmatpush.bf16.msra.mxu0 %v900
    %5192 = vmatpush.bf16.msra.mxu0 %v892
    %5193 = vmatpush.bf16.msra.mxu0 %v884
    %5194 = vmatpush.bf16.msra.mxu0 %v876
    %5195 = vmatpush.bf16.msra.mxu0 %v868
    %5196 = vmatpush.bf16.msra.mxu0 %v860
    %5197 = vmatpush.bf16.msra.mxu0 %v852
    %5198 = vmatmul.bf16.gmra.mxu0 %v4753
    %v5199 = vpop.f32.mrf.mxu0
    %v5200 = vadd.f32 0.0, %v5199
    %v5201 = vpop.f32.mrf.mxu0
    %5202 = vdwg.mxu0
    %5203 = vmatpush.bf16.msra.mxu0 %v972
    %5204 = vmatpush.bf16.msra.mxu0 %v964
    %5205 = vmatpush.bf16.msra.mxu0 %v956
    %5206 = vmatpush.bf16.msra.mxu0 %v948
    %5207 = vmatpush.bf16.msra.mxu0 %v940
    %5208 = vmatpush.bf16.msra.mxu0 %v932
    %5209 = vmatpush.bf16.msra.mxu0 %v924
    %5210 = vmatpush.bf16.msra.mxu0 %v916
    %5211 = vmatmul.bf16.gmra.mxu0 %v4754
    %v5212 = vpop.f32.mrf.mxu0
    %v5213 = vadd.f32 %v5200, %v5212
    %v5214 = vpop.f32.mrf.mxu0
    %5215 = vdwg.mxu0
    %5216 = vmatpush.bf16.msra.mxu0 %v909
    %5217 = vmatpush.bf16.msra.mxu0 %v901
    %5218 = vmatpush.bf16.msra.mxu0 %v893
    %5219 = vmatpush.bf16.msra.mxu0 %v885
    %5220 = vmatpush.bf16.msra.mxu0 %v877
    %5221 = vmatpush.bf16.msra.mxu0 %v869
    %5222 = vmatpush.bf16.msra.mxu0 %v861
    %5223 = vmatpush.bf16.msra.mxu0 %v853
    %5224 = vmatmul.bf16.gmra.mxu0 %v4753
    %v5225 = vpop.f32.mrf.mxu0
    %v5226 = vadd.f32 0.0, %v5225
    %v5227 = vpop.f32.mrf.mxu0
    %5228 = vdwg.mxu0
    %5229 = vmatpush.bf16.msra.mxu0 %v973
    %5230 = vmatpush.bf16.msra.mxu0 %v965
    %5231 = vmatpush.bf16.msra.mxu0 %v957
    %5232 = vmatpush.bf16.msra.mxu0 %v949
    %5233 = vmatpush.bf16.msra.mxu0 %v941
    %5234 = vmatpush.bf16.msra.mxu0 %v933
    %5235 = vmatpush.bf16.msra.mxu0 %v925
    %5236 = vmatpush.bf16.msra.mxu0 %v917
    %5237 = vmatmul.bf16.gmra.mxu0 %v4754
    %v5238 = vpop.f32.mrf.mxu0
    %v5239 = vadd.f32 %v5226, %v5238
    %v5240 = vpop.f32.mrf.mxu0
    %5241 = vdwg.mxu0
    %5242 = vmatpush.bf16.msra.mxu0 %v910
    %5243 = vmatpush.bf16.msra.mxu0 %v902
    %5244 = vmatpush.bf16.msra.mxu0 %v894
    %5245 = vmatpush.bf16.msra.mxu0 %v886
    %5246 = vmatpush.bf16.msra.mxu0 %v878
    %5247 = vmatpush.bf16.msra.mxu0 %v870
    %5248 = vmatpush.bf16.msra.mxu0 %v862
    %5249 = vmatpush.bf16.msra.mxu0 %v854
    %5250 = vmatmul.bf16.gmra.mxu0 %v4753
    %v5251 = vpop.f32.mrf.mxu0
    %v5252 = vadd.f32 0.0, %v5251
    %v5253 = vpop.f32.mrf.mxu0
    %5254 = vdwg.mxu0
    %5255 = vmatpush.bf16.msra.mxu0 %v974
    %5256 = vmatpush.bf16.msra.mxu0 %v966
    %5257 = vmatpush.bf16.msra.mxu0 %v958
    %5258 = vmatpush.bf16.msra.mxu0 %v950
    %5259 = vmatpush.bf16.msra.mxu0 %v942
    %5260 = vmatpush.bf16.msra.mxu0 %v934
    %5261 = vmatpush.bf16.msra.mxu0 %v926
    %5262 = vmatpush.bf16.msra.mxu0 %v918
    %5263 = vmatmul.bf16.gmra.mxu0 %v4754
    %v5264 = vpop.f32.mrf.mxu0
    %v5265 = vadd.f32 %v5252, %v5264
    %v5266 = vpop.f32.mrf.mxu0
    %5267 = vdwg.mxu0
    %5268 = vmatpush.bf16.msra.mxu0 %v911
    %5269 = vmatpush.bf16.msra.mxu0 %v903
    %5270 = vmatpush.bf16.msra.mxu0 %v895
    %5271 = vmatpush.bf16.msra.mxu0 %v887
    %5272 = vmatpush.bf16.msra.mxu0 %v879
    %5273 = vmatpush.bf16.msra.mxu0 %v871
    %5274 = vmatpush.bf16.msra.mxu0 %v863
    %5275 = vmatpush.bf16.msra.mxu0 %v855
    %5276 = vmatmul.bf16.gmra.mxu0 %v4753
    %v5277 = vpop.f32.mrf.mxu0
    %v5278 = vadd.f32 0.0, %v5277
    %v5279 = vpop.f32.mrf.mxu0
    %5280 = vdwg.mxu0
    %5281 = vmatpush.bf16.msra.mxu0 %v975
    %5282 = vmatpush.bf16.msra.mxu0 %v967
    %5283 = vmatpush.bf16.msra.mxu0 %v959
    %5284 = vmatpush.bf16.msra.mxu0 %v951
    %5285 = vmatpush.bf16.msra.mxu0 %v943
    %5286 = vmatpush.bf16.msra.mxu0 %v935
    %5287 = vmatpush.bf16.msra.mxu0 %v927
    %5288 = vmatpush.bf16.msra.mxu0 %v919
    %5289 = vmatmul.bf16.gmra.mxu0 %v4754
    %v5290 = vpop.f32.mrf.mxu0
    %v5291 = vadd.f32 %v5278, %v5290
    %v5292 = vpop.f32.mrf.mxu0
    %5293 = vdwg.mxu0
    %5294 = vmatpush.bf16.msra.mxu0 %v912
    %5295 = vmatpush.bf16.msra.mxu0 %v904
    %5296 = vmatpush.bf16.msra.mxu0 %v896
    %5297 = vmatpush.bf16.msra.mxu0 %v888
    %5298 = vmatpush.bf16.msra.mxu0 %v880
    %5299 = vmatpush.bf16.msra.mxu0 %v872
    %5300 = vmatpush.bf16.msra.mxu0 %v864
    %5301 = vmatpush.bf16.msra.mxu0 %v856
    %5302 = vmatmul.bf16.gmra.mxu0 %v4753
    %v5303 = vpop.f32.mrf.mxu0
    %v5304 = vadd.f32 0.0, %v5303
    %v5305 = vpop.f32.mrf.mxu0
    %5306 = vdwg.mxu0
    %5307 = vmatpush.bf16.msra.mxu0 %v976
    %5308 = vmatpush.bf16.msra.mxu0 %v968
    %5309 = vmatpush.bf16.msra.mxu0 %v960
    %5310 = vmatpush.bf16.msra.mxu0 %v952
    %5311 = vmatpush.bf16.msra.mxu0 %v944
    %5312 = vmatpush.bf16.msra.mxu0 %v936
    %5313 = vmatpush.bf16.msra.mxu0 %v928
    %5314 = vmatpush.bf16.msra.mxu0 %v920
    %5315 = vmatmul.bf16.gmra.mxu0 %v4754
    %v5316 = vpop.f32.mrf.mxu0
    %v5317 = vadd.f32 %v5304, %v5316
    %v5318 = vpop.f32.mrf.mxu0
    %5319 = vdwg.mxu0
    %v5320 = vadd.f32 %v5102, %v5135
    %v5321 = vadd.f32 %v5103, %v5161
    %v5322 = vadd.f32 %v5104, %v5187
    %v5323 = vadd.f32 %v5105, %v5213
    %v5324 = vadd.f32 %v5106, %v5239
    %v5325 = vadd.f32 %v5107, %v5265
    %v5326 = vadd.f32 %v5108, %v5291
    %v5327 = vadd.f32 %v5109, %v5317
    %v5328 = vxor.u32 %v5320, 2147483648
    %v5329 = vxor.u32 %v5321, 2147483648
    %v5330 = vmul.f32 %v5328, 1.442695
    %v5331 = vpow.pop %v5330
    %v5332 = vmul.f32 %v5329, 1.442695
    %v5333 = vpow.pop %v5332
    %v5334 = vadd.f32 %v5331, 1.0
    %v5335 = vadd.f32 %v5333, 1.0
    %v5336 = vrcp.pop %v5334
    %v5337 = vmul.f32 %v5334, %v5336
    %v5338 = vsub.f32 1.0, %v5337
    %v5339 = vmul.f32 %v5336, %v5338
    %v5340 = vadd.f32 %v5336, %v5339
    %vm5341 = vweird.f32 %v5334
    %vm5342 = vweird.f32 %v5336
    %vm5343 = vmor %vm5341, %vm5342
    %v5344 = vsel %vm5343, %v5336, %v5340
    %v5345 = vand.u32 2147483647, %v5334
    %vm5346 = vcmp.eq.f32.partialorder %v5345, 8.507059e+37
    %v5347 = vand.u32 %v5334, 2147483648
    %v5348 = vor.u32 1.1754944e-38, %v5347
    %v5349 = vsel %vm5346, %v5348, %v5344
    %v5350 = vmul.f32 1.0, %v5349
    %v5351 = vrcp.pop %v5335
    %v5352 = vmul.f32 %v5335, %v5351
    %v5353 = vsub.f32 1.0, %v5352
    %v5354 = vmul.f32 %v5351, %v5353
    %v5355 = vadd.f32 %v5351, %v5354
    %vm5356 = vweird.f32 %v5335
    %vm5357 = vweird.f32 %v5351
    %vm5358 = vmor %vm5356, %vm5357
    %v5359 = vsel %vm5358, %v5351, %v5355
    %v5360 = vand.u32 2147483647, %v5335
    %vm5361 = vcmp.eq.f32.partialorder %v5360, 8.507059e+37
    %v5362 = vand.u32 %v5335, 2147483648
    %v5363 = vor.u32 1.1754944e-38, %v5362
    %v5364 = vsel %vm5361, %v5363, %v5359
    %v5365 = vmul.f32 1.0, %v5364
    %v5366 = vxor.u32 %v5322, 2147483648
    %v5367 = vxor.u32 %v5323, 2147483648
    %v5368 = vmul.f32 %v5366, 1.442695
    %v5369 = vpow.pop %v5368
    %v5370 = vmul.f32 %v5367, 1.442695
    %v5371 = vpow.pop %v5370
    %v5372 = vadd.f32 %v5369, 1.0
    %v5373 = vadd.f32 %v5371, 1.0
    %v5374 = vrcp.pop %v5372
    %v5375 = vmul.f32 %v5372, %v5374
    %v5376 = vsub.f32 1.0, %v5375
    %v5377 = vmul.f32 %v5374, %v5376
    %v5378 = vadd.f32 %v5374, %v5377
    %vm5379 = vweird.f32 %v5372
    %vm5380 = vweird.f32 %v5374
    %vm5381 = vmor %vm5379, %vm5380
    %v5382 = vsel %vm5381, %v5374, %v5378
    %v5383 = vand.u32 2147483647, %v5372
    %vm5384 = vcmp.eq.f32.partialorder %v5383, 8.507059e+37
    %v5385 = vand.u32 %v5372, 2147483648
    %v5386 = vor.u32 1.1754944e-38, %v5385
    %v5387 = vsel %vm5384, %v5386, %v5382
    %v5388 = vmul.f32 1.0, %v5387
    %v5389 = vrcp.pop %v5373
    %v5390 = vmul.f32 %v5373, %v5389
    %v5391 = vsub.f32 1.0, %v5390
    %v5392 = vmul.f32 %v5389, %v5391
    %v5393 = vadd.f32 %v5389, %v5392
    %vm5394 = vweird.f32 %v5373
    %vm5395 = vweird.f32 %v5389
    %vm5396 = vmor %vm5394, %vm5395
    %v5397 = vsel %vm5396, %v5389, %v5393
    %v5398 = vand.u32 2147483647, %v5373
    %vm5399 = vcmp.eq.f32.partialorder %v5398, 8.507059e+37
    %v5400 = vand.u32 %v5373, 2147483648
    %v5401 = vor.u32 1.1754944e-38, %v5400
    %v5402 = vsel %vm5399, %v5401, %v5397
    %v5403 = vmul.f32 1.0, %v5402
    %v5404 = vtanh.pop %v5324
    %v5405 = vtanh.pop %v5325
    %v5406 = vxor.u32 %v5326, 2147483648
    %v5407 = vxor.u32 %v5327, 2147483648
    %v5408 = vmul.f32 %v5406, 1.442695
    %v5409 = vpow.pop %v5408
    %v5410 = vmul.f32 %v5407, 1.442695
    %v5411 = vpow.pop %v5410
    %v5412 = vadd.f32 %v5409, 1.0
    %v5413 = vadd.f32 %v5411, 1.0
    %v5414 = vrcp.pop %v5412
    %v5415 = vmul.f32 %v5412, %v5414
    %v5416 = vsub.f32 1.0, %v5415
    %v5417 = vmul.f32 %v5414, %v5416
    %v5418 = vadd.f32 %v5414, %v5417
    %vm5419 = vweird.f32 %v5412
    %vm5420 = vweird.f32 %v5414
    %vm5421 = vmor %vm5419, %vm5420
    %v5422 = vsel %vm5421, %v5414, %v5418
    %v5423 = vand.u32 2147483647, %v5412
    %vm5424 = vcmp.eq.f32.partialorder %v5423, 8.507059e+37
    %v5425 = vand.u32 %v5412, 2147483648
    %v5426 = vor.u32 1.1754944e-38, %v5425
    %v5427 = vsel %vm5424, %v5426, %v5422
    %v5428 = vmul.f32 1.0, %v5427
    %v5429 = vrcp.pop %v5413
    %v5430 = vmul.f32 %v5413, %v5429
    %v5431 = vsub.f32 1.0, %v5430
    %v5432 = vmul.f32 %v5429, %v5431
    %v5433 = vadd.f32 %v5429, %v5432
    %vm5434 = vweird.f32 %v5413
    %vm5435 = vweird.f32 %v5429
    %vm5436 = vmor %vm5434, %vm5435
    %v5437 = vsel %vm5436, %v5429, %v5433
    %v5438 = vand.u32 2147483647, %v5413
    %vm5439 = vcmp.eq.f32.partialorder %v5438, 8.507059e+37
    %v5440 = vand.u32 %v5413, 2147483648
    %v5441 = vor.u32 1.1754944e-38, %v5440
    %v5442 = vsel %vm5439, %v5441, %v5437
    %v5443 = vmul.f32 1.0, %v5442
    %v5444 = vmul.f32 %v5388, %v4539
    %v5445 = vmul.f32 %v5403, %v4540
    %v5446 = vmul.f32 %v5350, %v5404
    %v5447 = vmul.f32 %v5365, %v5405
    %v5448 = vadd.f32 %v5444, %v5446
    %v5449 = vadd.f32 %v5445, %v5447
    %v5450 = vtanh.pop %v5448
    %v5451 = vtanh.pop %v5449
    %v5452 = vmul.f32 %v5428, %v5450
    %v5453 = vmul.f32 %v5443, %v5451
    %5454 = vmatpush.bf16.msra.mxu0 %v1887
    %5455 = vmatpush.bf16.msra.mxu0 %v1879
    %5456 = vmatpush.bf16.msra.mxu0 %v1871
    %5457 = vmatpush.bf16.msra.mxu0 %v1863
    %5458 = vmatpush.bf16.msra.mxu0 %v1855
    %5459 = vmatpush.bf16.msra.mxu0 %v1847
    %5460 = vmatpush.bf16.msra.mxu0 %v1839
    %5461 = vmatpush.bf16.msra.mxu0 %v1831
    %5462 = vmatmul.bf16.gmra.mxu0 %v5110
    %v5463 = vpop.f32.mrf.mxu0
    %v5464 = vadd.f32 %v425, %v5463
    %v5465 = vpop.f32.mrf.mxu0
    %5466 = vdwg.mxu0
    %5467 = vmatpush.bf16.msra.mxu0 %v1951
    %5468 = vmatpush.bf16.msra.mxu0 %v1943
    %5469 = vmatpush.bf16.msra.mxu0 %v1935
    %5470 = vmatpush.bf16.msra.mxu0 %v1927
    %5471 = vmatpush.bf16.msra.mxu0 %v1919
    %5472 = vmatpush.bf16.msra.mxu0 %v1911
    %5473 = vmatpush.bf16.msra.mxu0 %v1903
    %5474 = vmatpush.bf16.msra.mxu0 %v1895
    %5475 = vmatmul.bf16.gmra.mxu0 %v5111
    %v5476 = vpop.f32.mrf.mxu0
    %v5477 = vadd.f32 %v5464, %v5476
    %v5478 = vpop.f32.mrf.mxu0
    %5479 = vdwg.mxu0
    %5480 = vmatpush.bf16.msra.mxu0 %v1888
    %5481 = vmatpush.bf16.msra.mxu0 %v1880
    %5482 = vmatpush.bf16.msra.mxu0 %v1872
    %5483 = vmatpush.bf16.msra.mxu0 %v1864
    %5484 = vmatpush.bf16.msra.mxu0 %v1856
    %5485 = vmatpush.bf16.msra.mxu0 %v1848
    %5486 = vmatpush.bf16.msra.mxu0 %v1840
    %5487 = vmatpush.bf16.msra.mxu0 %v1832
    %5488 = vmatmul.bf16.gmra.mxu0 %v5110
    %v5489 = vpop.f32.mrf.mxu0
    %v5490 = vadd.f32 %v426, %v5489
    %v5491 = vpop.f32.mrf.mxu0
    %5492 = vdwg.mxu0
    %5493 = vmatpush.bf16.msra.mxu0 %v1952
    %5494 = vmatpush.bf16.msra.mxu0 %v1944
    %5495 = vmatpush.bf16.msra.mxu0 %v1936
    %5496 = vmatpush.bf16.msra.mxu0 %v1928
    %5497 = vmatpush.bf16.msra.mxu0 %v1920
    %5498 = vmatpush.bf16.msra.mxu0 %v1912
    %5499 = vmatpush.bf16.msra.mxu0 %v1904
    %5500 = vmatpush.bf16.msra.mxu0 %v1896
    %5501 = vmatmul.bf16.gmra.mxu0 %v5111
    %v5502 = vpop.f32.mrf.mxu0
    %v5503 = vadd.f32 %v5490, %v5502
    %v5504 = vpop.f32.mrf.mxu0
    %5505 = vdwg.mxu0
    %5506 = vmatpush.bf16.msra.mxu0 %v1889
    %5507 = vmatpush.bf16.msra.mxu0 %v1881
    %5508 = vmatpush.bf16.msra.mxu0 %v1873
    %5509 = vmatpush.bf16.msra.mxu0 %v1865
    %5510 = vmatpush.bf16.msra.mxu0 %v1857
    %5511 = vmatpush.bf16.msra.mxu0 %v1849
    %5512 = vmatpush.bf16.msra.mxu0 %v1841
    %5513 = vmatpush.bf16.msra.mxu0 %v1833
    %5514 = vmatmul.bf16.gmra.mxu0 %v5110
    %v5515 = vpop.f32.mrf.mxu0
    %v5516 = vadd.f32 %v427, %v5515
    %v5517 = vpop.f32.mrf.mxu0
    %5518 = vdwg.mxu0
    %5519 = vmatpush.bf16.msra.mxu0 %v1953
    %5520 = vmatpush.bf16.msra.mxu0 %v1945
    %5521 = vmatpush.bf16.msra.mxu0 %v1937
    %5522 = vmatpush.bf16.msra.mxu0 %v1929
    %5523 = vmatpush.bf16.msra.mxu0 %v1921
    %5524 = vmatpush.bf16.msra.mxu0 %v1913
    %5525 = vmatpush.bf16.msra.mxu0 %v1905
    %5526 = vmatpush.bf16.msra.mxu0 %v1897
    %5527 = vmatmul.bf16.gmra.mxu0 %v5111
    %v5528 = vpop.f32.mrf.mxu0
    %v5529 = vadd.f32 %v5516, %v5528
    %v5530 = vpop.f32.mrf.mxu0
    %5531 = vdwg.mxu0
    %5532 = vmatpush.bf16.msra.mxu0 %v1890
    %5533 = vmatpush.bf16.msra.mxu0 %v1882
    %5534 = vmatpush.bf16.msra.mxu0 %v1874
    %5535 = vmatpush.bf16.msra.mxu0 %v1866
    %5536 = vmatpush.bf16.msra.mxu0 %v1858
    %5537 = vmatpush.bf16.msra.mxu0 %v1850
    %5538 = vmatpush.bf16.msra.mxu0 %v1842
    %5539 = vmatpush.bf16.msra.mxu0 %v1834
    %5540 = vmatmul.bf16.gmra.mxu0 %v5110
    %v5541 = vpop.f32.mrf.mxu0
    %v5542 = vadd.f32 %v428, %v5541
    %v5543 = vpop.f32.mrf.mxu0
    %5544 = vdwg.mxu0
    %5545 = vmatpush.bf16.msra.mxu0 %v1954
    %5546 = vmatpush.bf16.msra.mxu0 %v1946
    %5547 = vmatpush.bf16.msra.mxu0 %v1938
    %5548 = vmatpush.bf16.msra.mxu0 %v1930
    %5549 = vmatpush.bf16.msra.mxu0 %v1922
    %5550 = vmatpush.bf16.msra.mxu0 %v1914
    %5551 = vmatpush.bf16.msra.mxu0 %v1906
    %5552 = vmatpush.bf16.msra.mxu0 %v1898
    %5553 = vmatmul.bf16.gmra.mxu0 %v5111
    %v5554 = vpop.f32.mrf.mxu0
    %v5555 = vadd.f32 %v5542, %v5554
    %v5556 = vpop.f32.mrf.mxu0
    %5557 = vdwg.mxu0
    %5558 = vmatpush.bf16.msra.mxu0 %v1891
    %5559 = vmatpush.bf16.msra.mxu0 %v1883
    %5560 = vmatpush.bf16.msra.mxu0 %v1875
    %5561 = vmatpush.bf16.msra.mxu0 %v1867
    %5562 = vmatpush.bf16.msra.mxu0 %v1859
    %5563 = vmatpush.bf16.msra.mxu0 %v1851
    %5564 = vmatpush.bf16.msra.mxu0 %v1843
    %5565 = vmatpush.bf16.msra.mxu0 %v1835
    %5566 = vmatmul.bf16.gmra.mxu0 %v5110
    %v5567 = vpop.f32.mrf.mxu0
    %v5568 = vadd.f32 %v429, %v5567
    %v5569 = vpop.f32.mrf.mxu0
    %5570 = vdwg.mxu0
    %5571 = vmatpush.bf16.msra.mxu0 %v1955
    %5572 = vmatpush.bf16.msra.mxu0 %v1947
    %5573 = vmatpush.bf16.msra.mxu0 %v1939
    %5574 = vmatpush.bf16.msra.mxu0 %v1931
    %5575 = vmatpush.bf16.msra.mxu0 %v1923
    %5576 = vmatpush.bf16.msra.mxu0 %v1915
    %5577 = vmatpush.bf16.msra.mxu0 %v1907
    %5578 = vmatpush.bf16.msra.mxu0 %v1899
    %5579 = vmatmul.bf16.gmra.mxu0 %v5111
    %v5580 = vpop.f32.mrf.mxu0
    %v5581 = vadd.f32 %v5568, %v5580
    %v5582 = vpop.f32.mrf.mxu0
    %5583 = vdwg.mxu0
    %5584 = vmatpush.bf16.msra.mxu0 %v1892
    %5585 = vmatpush.bf16.msra.mxu0 %v1884
    %5586 = vmatpush.bf16.msra.mxu0 %v1876
    %5587 = vmatpush.bf16.msra.mxu0 %v1868
    %5588 = vmatpush.bf16.msra.mxu0 %v1860
    %5589 = vmatpush.bf16.msra.mxu0 %v1852
    %5590 = vmatpush.bf16.msra.mxu0 %v1844
    %5591 = vmatpush.bf16.msra.mxu0 %v1836
    %5592 = vmatmul.bf16.gmra.mxu0 %v5110
    %v5593 = vpop.f32.mrf.mxu0
    %v5594 = vadd.f32 %v430, %v5593
    %v5595 = vpop.f32.mrf.mxu0
    %5596 = vdwg.mxu0
    %5597 = vmatpush.bf16.msra.mxu0 %v1956
    %5598 = vmatpush.bf16.msra.mxu0 %v1948
    %5599 = vmatpush.bf16.msra.mxu0 %v1940
    %5600 = vmatpush.bf16.msra.mxu0 %v1932
    %5601 = vmatpush.bf16.msra.mxu0 %v1924
    %5602 = vmatpush.bf16.msra.mxu0 %v1916
    %5603 = vmatpush.bf16.msra.mxu0 %v1908
    %5604 = vmatpush.bf16.msra.mxu0 %v1900
    %5605 = vmatmul.bf16.gmra.mxu0 %v5111
    %v5606 = vpop.f32.mrf.mxu0
    %v5607 = vadd.f32 %v5594, %v5606
    %v5608 = vpop.f32.mrf.mxu0
    %5609 = vdwg.mxu0
    %5610 = vmatpush.bf16.msra.mxu0 %v1893
    %5611 = vmatpush.bf16.msra.mxu0 %v1885
    %5612 = vmatpush.bf16.msra.mxu0 %v1877
    %5613 = vmatpush.bf16.msra.mxu0 %v1869
    %5614 = vmatpush.bf16.msra.mxu0 %v1861
    %5615 = vmatpush.bf16.msra.mxu0 %v1853
    %5616 = vmatpush.bf16.msra.mxu0 %v1845
    %5617 = vmatpush.bf16.msra.mxu0 %v1837
    %5618 = vmatmul.bf16.gmra.mxu0 %v5110
    %v5619 = vpop.f32.mrf.mxu0
    %v5620 = vadd.f32 %v431, %v5619
    %v5621 = vpop.f32.mrf.mxu0
    %5622 = vdwg.mxu0
    %5623 = vmatpush.bf16.msra.mxu0 %v1957
    %5624 = vmatpush.bf16.msra.mxu0 %v1949
    %5625 = vmatpush.bf16.msra.mxu0 %v1941
    %5626 = vmatpush.bf16.msra.mxu0 %v1933
    %5627 = vmatpush.bf16.msra.mxu0 %v1925
    %5628 = vmatpush.bf16.msra.mxu0 %v1917
    %5629 = vmatpush.bf16.msra.mxu0 %v1909
    %5630 = vmatpush.bf16.msra.mxu0 %v1901
    %5631 = vmatmul.bf16.gmra.mxu0 %v5111
    %v5632 = vpop.f32.mrf.mxu0
    %v5633 = vadd.f32 %v5620, %v5632
    %v5634 = vpop.f32.mrf.mxu0
    %5635 = vdwg.mxu0
    %5636 = vmatpush.bf16.msra.mxu0 %v1894
    %5637 = vmatpush.bf16.msra.mxu0 %v1886
    %5638 = vmatpush.bf16.msra.mxu0 %v1878
    %5639 = vmatpush.bf16.msra.mxu0 %v1870
    %5640 = vmatpush.bf16.msra.mxu0 %v1862
    %5641 = vmatpush.bf16.msra.mxu0 %v1854
    %5642 = vmatpush.bf16.msra.mxu0 %v1846
    %5643 = vmatpush.bf16.msra.mxu0 %v1838
    %5644 = vmatmul.bf16.gmra.mxu0 %v5110
    %v5645 = vpop.f32.mrf.mxu0
    %v5646 = vadd.f32 %v432, %v5645
    %v5647 = vpop.f32.mrf.mxu0
    %5648 = vdwg.mxu0
    %5649 = vmatpush.bf16.msra.mxu0 %v1958
    %5650 = vmatpush.bf16.msra.mxu0 %v1950
    %5651 = vmatpush.bf16.msra.mxu0 %v1942
    %5652 = vmatpush.bf16.msra.mxu0 %v1934
    %5653 = vmatpush.bf16.msra.mxu0 %v1926
    %5654 = vmatpush.bf16.msra.mxu0 %v1918
    %5655 = vmatpush.bf16.msra.mxu0 %v1910
    %5656 = vmatpush.bf16.msra.mxu0 %v1902
    %5657 = vmatmul.bf16.gmra.mxu0 %v5111
    %v5658 = vpop.f32.mrf.mxu0
    %v5659 = vadd.f32 %v5646, %v5658
    %v5660 = vpop.f32.mrf.mxu0
    %5661 = vdwg.mxu0
    %v5662 = vpack.c.bf16 %v5452, %v5452
    %v5663 = vpack.c.bf16 %v5453, %v5453
    %5664 = vmatpush.bf16.msra.mxu0 %v2737
    %5665 = vmatpush.bf16.msra.mxu0 %v2729
    %5666 = vmatpush.bf16.msra.mxu0 %v2721
    %5667 = vmatpush.bf16.msra.mxu0 %v2713
    %5668 = vmatpush.bf16.msra.mxu0 %v2705
    %5669 = vmatpush.bf16.msra.mxu0 %v2697
    %5670 = vmatpush.bf16.msra.mxu0 %v2689
    %5671 = vmatpush.bf16.msra.mxu0 %v2681
    %5672 = vmatmul.bf16.gmra.mxu0 %v5662
    %v5673 = vpop.f32.mrf.mxu0
    %v5674 = vadd.f32 0.0, %v5673
    %v5675 = vpop.f32.mrf.mxu0
    %5676 = vdwg.mxu0
    %5677 = vmatpush.bf16.msra.mxu0 %v2801
    %5678 = vmatpush.bf16.msra.mxu0 %v2793
    %5679 = vmatpush.bf16.msra.mxu0 %v2785
    %5680 = vmatpush.bf16.msra.mxu0 %v2777
    %5681 = vmatpush.bf16.msra.mxu0 %v2769
    %5682 = vmatpush.bf16.msra.mxu0 %v2761
    %5683 = vmatpush.bf16.msra.mxu0 %v2753
    %5684 = vmatpush.bf16.msra.mxu0 %v2745
    %5685 = vmatmul.bf16.gmra.mxu0 %v5663
    %v5686 = vpop.f32.mrf.mxu0
    %v5687 = vadd.f32 %v5674, %v5686
    %v5688 = vpop.f32.mrf.mxu0
    %5689 = vdwg.mxu0
    %5690 = vmatpush.bf16.msra.mxu0 %v2738
    %5691 = vmatpush.bf16.msra.mxu0 %v2730
    %5692 = vmatpush.bf16.msra.mxu0 %v2722
    %5693 = vmatpush.bf16.msra.mxu0 %v2714
    %5694 = vmatpush.bf16.msra.mxu0 %v2706
    %5695 = vmatpush.bf16.msra.mxu0 %v2698
    %5696 = vmatpush.bf16.msra.mxu0 %v2690
    %5697 = vmatpush.bf16.msra.mxu0 %v2682
    %5698 = vmatmul.bf16.gmra.mxu0 %v5662
    %v5699 = vpop.f32.mrf.mxu0
    %v5700 = vadd.f32 0.0, %v5699
    %v5701 = vpop.f32.mrf.mxu0
    %5702 = vdwg.mxu0
    %5703 = vmatpush.bf16.msra.mxu0 %v2802
    %5704 = vmatpush.bf16.msra.mxu0 %v2794
    %5705 = vmatpush.bf16.msra.mxu0 %v2786
    %5706 = vmatpush.bf16.msra.mxu0 %v2778
    %5707 = vmatpush.bf16.msra.mxu0 %v2770
    %5708 = vmatpush.bf16.msra.mxu0 %v2762
    %5709 = vmatpush.bf16.msra.mxu0 %v2754
    %5710 = vmatpush.bf16.msra.mxu0 %v2746
    %5711 = vmatmul.bf16.gmra.mxu0 %v5663
    %v5712 = vpop.f32.mrf.mxu0
    %v5713 = vadd.f32 %v5700, %v5712
    %v5714 = vpop.f32.mrf.mxu0
    %5715 = vdwg.mxu0
    %5716 = vmatpush.bf16.msra.mxu0 %v2739
    %5717 = vmatpush.bf16.msra.mxu0 %v2731
    %5718 = vmatpush.bf16.msra.mxu0 %v2723
    %5719 = vmatpush.bf16.msra.mxu0 %v2715
    %5720 = vmatpush.bf16.msra.mxu0 %v2707
    %5721 = vmatpush.bf16.msra.mxu0 %v2699
    %5722 = vmatpush.bf16.msra.mxu0 %v2691
    %5723 = vmatpush.bf16.msra.mxu0 %v2683
    %5724 = vmatmul.bf16.gmra.mxu0 %v5662
    %v5725 = vpop.f32.mrf.mxu0
    %v5726 = vadd.f32 0.0, %v5725
    %v5727 = vpop.f32.mrf.mxu0
    %5728 = vdwg.mxu0
    %5729 = vmatpush.bf16.msra.mxu0 %v2803
    %5730 = vmatpush.bf16.msra.mxu0 %v2795
    %5731 = vmatpush.bf16.msra.mxu0 %v2787
    %5732 = vmatpush.bf16.msra.mxu0 %v2779
    %5733 = vmatpush.bf16.msra.mxu0 %v2771
    %5734 = vmatpush.bf16.msra.mxu0 %v2763
    %5735 = vmatpush.bf16.msra.mxu0 %v2755
    %5736 = vmatpush.bf16.msra.mxu0 %v2747
    %5737 = vmatmul.bf16.gmra.mxu0 %v5663
    %v5738 = vpop.f32.mrf.mxu0
    %v5739 = vadd.f32 %v5726, %v5738
    %v5740 = vpop.f32.mrf.mxu0
    %5741 = vdwg.mxu0
    %5742 = vmatpush.bf16.msra.mxu0 %v2740
    %5743 = vmatpush.bf16.msra.mxu0 %v2732
    %5744 = vmatpush.bf16.msra.mxu0 %v2724
    %5745 = vmatpush.bf16.msra.mxu0 %v2716
    %5746 = vmatpush.bf16.msra.mxu0 %v2708
    %5747 = vmatpush.bf16.msra.mxu0 %v2700
    %5748 = vmatpush.bf16.msra.mxu0 %v2692
    %5749 = vmatpush.bf16.msra.mxu0 %v2684
    %5750 = vmatmul.bf16.gmra.mxu0 %v5662
    %v5751 = vpop.f32.mrf.mxu0
    %v5752 = vadd.f32 0.0, %v5751
    %v5753 = vpop.f32.mrf.mxu0
    %5754 = vdwg.mxu0
    %5755 = vmatpush.bf16.msra.mxu0 %v2804
    %5756 = vmatpush.bf16.msra.mxu0 %v2796
    %5757 = vmatpush.bf16.msra.mxu0 %v2788
    %5758 = vmatpush.bf16.msra.mxu0 %v2780
    %5759 = vmatpush.bf16.msra.mxu0 %v2772
    %5760 = vmatpush.bf16.msra.mxu0 %v2764
    %5761 = vmatpush.bf16.msra.mxu0 %v2756
    %5762 = vmatpush.bf16.msra.mxu0 %v2748
    %5763 = vmatmul.bf16.gmra.mxu0 %v5663
    %v5764 = vpop.f32.mrf.mxu0
    %v5765 = vadd.f32 %v5752, %v5764
    %v5766 = vpop.f32.mrf.mxu0
    %5767 = vdwg.mxu0
    %5768 = vmatpush.bf16.msra.mxu0 %v2741
    %5769 = vmatpush.bf16.msra.mxu0 %v2733
    %5770 = vmatpush.bf16.msra.mxu0 %v2725
    %5771 = vmatpush.bf16.msra.mxu0 %v2717
    %5772 = vmatpush.bf16.msra.mxu0 %v2709
    %5773 = vmatpush.bf16.msra.mxu0 %v2701
    %5774 = vmatpush.bf16.msra.mxu0 %v2693
    %5775 = vmatpush.bf16.msra.mxu0 %v2685
    %5776 = vmatmul.bf16.gmra.mxu0 %v5662
    %v5777 = vpop.f32.mrf.mxu0
    %v5778 = vadd.f32 0.0, %v5777
    %v5779 = vpop.f32.mrf.mxu0
    %5780 = vdwg.mxu0
    %5781 = vmatpush.bf16.msra.mxu0 %v2805
    %5782 = vmatpush.bf16.msra.mxu0 %v2797
    %5783 = vmatpush.bf16.msra.mxu0 %v2789
    %5784 = vmatpush.bf16.msra.mxu0 %v2781
    %5785 = vmatpush.bf16.msra.mxu0 %v2773
    %5786 = vmatpush.bf16.msra.mxu0 %v2765
    %5787 = vmatpush.bf16.msra.mxu0 %v2757
    %5788 = vmatpush.bf16.msra.mxu0 %v2749
    %5789 = vmatmul.bf16.gmra.mxu0 %v5663
    %v5790 = vpop.f32.mrf.mxu0
    %v5791 = vadd.f32 %v5778, %v5790
    %v5792 = vpop.f32.mrf.mxu0
    %5793 = vdwg.mxu0
    %5794 = vmatpush.bf16.msra.mxu0 %v2742
    %5795 = vmatpush.bf16.msra.mxu0 %v2734
    %5796 = vmatpush.bf16.msra.mxu0 %v2726
    %5797 = vmatpush.bf16.msra.mxu0 %v2718
    %5798 = vmatpush.bf16.msra.mxu0 %v2710
    %5799 = vmatpush.bf16.msra.mxu0 %v2702
    %5800 = vmatpush.bf16.msra.mxu0 %v2694
    %5801 = vmatpush.bf16.msra.mxu0 %v2686
    %5802 = vmatmul.bf16.gmra.mxu0 %v5662
    %v5803 = vpop.f32.mrf.mxu0
    %v5804 = vadd.f32 0.0, %v5803
    %v5805 = vpop.f32.mrf.mxu0
    %5806 = vdwg.mxu0
    %5807 = vmatpush.bf16.msra.mxu0 %v2806
    %5808 = vmatpush.bf16.msra.mxu0 %v2798
    %5809 = vmatpush.bf16.msra.mxu0 %v2790
    %5810 = vmatpush.bf16.msra.mxu0 %v2782
    %5811 = vmatpush.bf16.msra.mxu0 %v2774
    %5812 = vmatpush.bf16.msra.mxu0 %v2766
    %5813 = vmatpush.bf16.msra.mxu0 %v2758
    %5814 = vmatpush.bf16.msra.mxu0 %v2750
    %5815 = vmatmul.bf16.gmra.mxu0 %v5663
    %v5816 = vpop.f32.mrf.mxu0
    %v5817 = vadd.f32 %v5804, %v5816
    %v5818 = vpop.f32.mrf.mxu0
    %5819 = vdwg.mxu0
    %5820 = vmatpush.bf16.msra.mxu0 %v2743
    %5821 = vmatpush.bf16.msra.mxu0 %v2735
    %5822 = vmatpush.bf16.msra.mxu0 %v2727
    %5823 = vmatpush.bf16.msra.mxu0 %v2719
    %5824 = vmatpush.bf16.msra.mxu0 %v2711
    %5825 = vmatpush.bf16.msra.mxu0 %v2703
    %5826 = vmatpush.bf16.msra.mxu0 %v2695
    %5827 = vmatpush.bf16.msra.mxu0 %v2687
    %5828 = vmatmul.bf16.gmra.mxu0 %v5662
    %v5829 = vpop.f32.mrf.mxu0
    %v5830 = vadd.f32 0.0, %v5829
    %v5831 = vpop.f32.mrf.mxu0
    %5832 = vdwg.mxu0
    %5833 = vmatpush.bf16.msra.mxu0 %v2807
    %5834 = vmatpush.bf16.msra.mxu0 %v2799
    %5835 = vmatpush.bf16.msra.mxu0 %v2791
    %5836 = vmatpush.bf16.msra.mxu0 %v2783
    %5837 = vmatpush.bf16.msra.mxu0 %v2775
    %5838 = vmatpush.bf16.msra.mxu0 %v2767
    %5839 = vmatpush.bf16.msra.mxu0 %v2759
    %5840 = vmatpush.bf16.msra.mxu0 %v2751
    %5841 = vmatmul.bf16.gmra.mxu0 %v5663
    %v5842 = vpop.f32.mrf.mxu0
    %v5843 = vadd.f32 %v5830, %v5842
    %v5844 = vpop.f32.mrf.mxu0
    %5845 = vdwg.mxu0
    %5846 = vmatpush.bf16.msra.mxu0 %v2744
    %5847 = vmatpush.bf16.msra.mxu0 %v2736
    %5848 = vmatpush.bf16.msra.mxu0 %v2728
    %5849 = vmatpush.bf16.msra.mxu0 %v2720
    %5850 = vmatpush.bf16.msra.mxu0 %v2712
    %5851 = vmatpush.bf16.msra.mxu0 %v2704
    %5852 = vmatpush.bf16.msra.mxu0 %v2696
    %5853 = vmatpush.bf16.msra.mxu0 %v2688
    %5854 = vmatmul.bf16.gmra.mxu0 %v5662
    %v5855 = vpop.f32.mrf.mxu0
    %v5856 = vadd.f32 0.0, %v5855
    %v5857 = vpop.f32.mrf.mxu0
    %5858 = vdwg.mxu0
    %5859 = vmatpush.bf16.msra.mxu0 %v2808
    %5860 = vmatpush.bf16.msra.mxu0 %v2800
    %5861 = vmatpush.bf16.msra.mxu0 %v2792
    %5862 = vmatpush.bf16.msra.mxu0 %v2784
    %5863 = vmatpush.bf16.msra.mxu0 %v2776
    %5864 = vmatpush.bf16.msra.mxu0 %v2768
    %5865 = vmatpush.bf16.msra.mxu0 %v2760
    %5866 = vmatpush.bf16.msra.mxu0 %v2752
    %5867 = vmatmul.bf16.gmra.mxu0 %v5663
    %v5868 = vpop.f32.mrf.mxu0
    %v5869 = vadd.f32 %v5856, %v5868
    %v5870 = vpop.f32.mrf.mxu0
    %5871 = vdwg.mxu0
    %v5872 = vadd.f32 %v5477, %v5687
    %v5873 = vadd.f32 %v5503, %v5713
    %v5874 = vadd.f32 %v5529, %v5739
    %v5875 = vadd.f32 %v5555, %v5765
    %v5876 = vadd.f32 %v5581, %v5791
    %v5877 = vadd.f32 %v5607, %v5817
    %v5878 = vadd.f32 %v5633, %v5843
    %v5879 = vadd.f32 %v5659, %v5869
    %v5880 = vxor.u32 %v5872, 2147483648
    %v5881 = vxor.u32 %v5873, 2147483648
    %v5882 = vmul.f32 %v5880, 1.442695
    %v5883 = vpow.pop %v5882
    %v5884 = vmul.f32 %v5881, 1.442695
    %v5885 = vpow.pop %v5884
    %v5886 = vadd.f32 %v5883, 1.0
    %v5887 = vadd.f32 %v5885, 1.0
    %v5888 = vrcp.pop %v5886
    %v5889 = vmul.f32 %v5886, %v5888
    %v5890 = vsub.f32 1.0, %v5889
    %v5891 = vmul.f32 %v5888, %v5890
    %v5892 = vadd.f32 %v5888, %v5891
    %vm5893 = vweird.f32 %v5886
    %vm5894 = vweird.f32 %v5888
    %vm5895 = vmor %vm5893, %vm5894
    %v5896 = vsel %vm5895, %v5888, %v5892
    %v5897 = vand.u32 2147483647, %v5886
    %vm5898 = vcmp.eq.f32.partialorder %v5897, 8.507059e+37
    %v5899 = vand.u32 %v5886, 2147483648
    %v5900 = vor.u32 1.1754944e-38, %v5899
    %v5901 = vsel %vm5898, %v5900, %v5896
    %v5902 = vmul.f32 1.0, %v5901
    %v5903 = vrcp.pop %v5887
    %v5904 = vmul.f32 %v5887, %v5903
    %v5905 = vsub.f32 1.0, %v5904
    %v5906 = vmul.f32 %v5903, %v5905
    %v5907 = vadd.f32 %v5903, %v5906
    %vm5908 = vweird.f32 %v5887
    %vm5909 = vweird.f32 %v5903
    %vm5910 = vmor %vm5908, %vm5909
    %v5911 = vsel %vm5910, %v5903, %v5907
    %v5912 = vand.u32 2147483647, %v5887
    %vm5913 = vcmp.eq.f32.partialorder %v5912, 8.507059e+37
    %v5914 = vand.u32 %v5887, 2147483648
    %v5915 = vor.u32 1.1754944e-38, %v5914
    %v5916 = vsel %vm5913, %v5915, %v5911
    %v5917 = vmul.f32 1.0, %v5916
    %v5918 = vxor.u32 %v5874, 2147483648
    %v5919 = vxor.u32 %v5875, 2147483648
    %v5920 = vmul.f32 %v5918, 1.442695
    %v5921 = vpow.pop %v5920
    %v5922 = vmul.f32 %v5919, 1.442695
    %v5923 = vpow.pop %v5922
    %v5924 = vadd.f32 %v5921, 1.0
    %v5925 = vadd.f32 %v5923, 1.0
    %v5926 = vrcp.pop %v5924
    %v5927 = vmul.f32 %v5924, %v5926
    %v5928 = vsub.f32 1.0, %v5927
    %v5929 = vmul.f32 %v5926, %v5928
    %v5930 = vadd.f32 %v5926, %v5929
    %vm5931 = vweird.f32 %v5924
    %vm5932 = vweird.f32 %v5926
    %vm5933 = vmor %vm5931, %vm5932
    %v5934 = vsel %vm5933, %v5926, %v5930
    %v5935 = vand.u32 2147483647, %v5924
    %vm5936 = vcmp.eq.f32.partialorder %v5935, 8.507059e+37
    %v5937 = vand.u32 %v5924, 2147483648
    %v5938 = vor.u32 1.1754944e-38, %v5937
    %v5939 = vsel %vm5936, %v5938, %v5934
    %v5940 = vmul.f32 1.0, %v5939
    %v5941 = vrcp.pop %v5925
    %v5942 = vmul.f32 %v5925, %v5941
    %v5943 = vsub.f32 1.0, %v5942
    %v5944 = vmul.f32 %v5941, %v5943
    %v5945 = vadd.f32 %v5941, %v5944
    %vm5946 = vweird.f32 %v5925
    %vm5947 = vweird.f32 %v5941
    %vm5948 = vmor %vm5946, %vm5947
    %v5949 = vsel %vm5948, %v5941, %v5945
    %v5950 = vand.u32 2147483647, %v5925
    %vm5951 = vcmp.eq.f32.partialorder %v5950, 8.507059e+37
    %v5952 = vand.u32 %v5925, 2147483648
    %v5953 = vor.u32 1.1754944e-38, %v5952
    %v5954 = vsel %vm5951, %v5953, %v5949
    %v5955 = vmul.f32 1.0, %v5954
    %v5956 = vtanh.pop %v5876
    %v5957 = vtanh.pop %v5877
    %v5958 = vxor.u32 %v5878, 2147483648
    %v5959 = vxor.u32 %v5879, 2147483648
    %v5960 = vmul.f32 %v5958, 1.442695
    %v5961 = vpow.pop %v5960
    %v5962 = vmul.f32 %v5959, 1.442695
    %v5963 = vpow.pop %v5962
    %v5964 = vadd.f32 %v5961, 1.0
    %v5965 = vadd.f32 %v5963, 1.0
    %v5966 = vrcp.pop %v5964
    %v5967 = vmul.f32 %v5964, %v5966
    %v5968 = vsub.f32 1.0, %v5967
    %v5969 = vmul.f32 %v5966, %v5968
    %v5970 = vadd.f32 %v5966, %v5969
    %vm5971 = vweird.f32 %v5964
    %vm5972 = vweird.f32 %v5966
    %vm5973 = vmor %vm5971, %vm5972
    %v5974 = vsel %vm5973, %v5966, %v5970
    %v5975 = vand.u32 2147483647, %v5964
    %vm5976 = vcmp.eq.f32.partialorder %v5975, 8.507059e+37
    %v5977 = vand.u32 %v5964, 2147483648
    %v5978 = vor.u32 1.1754944e-38, %v5977
    %v5979 = vsel %vm5976, %v5978, %v5974
    %v5980 = vmul.f32 1.0, %v5979
    %v5981 = vrcp.pop %v5965
    %v5982 = vmul.f32 %v5965, %v5981
    %v5983 = vsub.f32 1.0, %v5982
    %v5984 = vmul.f32 %v5981, %v5983
    %v5985 = vadd.f32 %v5981, %v5984
    %vm5986 = vweird.f32 %v5965
    %vm5987 = vweird.f32 %v5981
    %vm5988 = vmor %vm5986, %vm5987
    %v5989 = vsel %vm5988, %v5981, %v5985
    %v5990 = vand.u32 2147483647, %v5965
    %vm5991 = vcmp.eq.f32.partialorder %v5990, 8.507059e+37
    %v5992 = vand.u32 %v5965, 2147483648
    %v5993 = vor.u32 1.1754944e-38, %v5992
    %v5994 = vsel %vm5991, %v5993, %v5989
    %v5995 = vmul.f32 1.0, %v5994
    %v5996 = vmul.f32 %v5940, %v5091
    %v5997 = vmul.f32 %v5955, %v5092
    %v5998 = vmul.f32 %v5902, %v5956
    %v5999 = vmul.f32 %v5917, %v5957
    %v6000 = vadd.f32 %v5996, %v5998
    %v6001 = vadd.f32 %v5997, %v5999
    %v6002 = vtanh.pop %v6000
    %v6003 = vtanh.pop %v6001
    %v6004 = vmul.f32 %v5980, %v6002
    %v6005 = vmul.f32 %v5995, %v6003
    %s6006 = scalar_lea.vmem %s0, 128
    %v6007 = vld [vmem:[%s6006] sm:$0xff]
    %v6008 = vld [vmem:[%s6006 + $0x8] sm:$0xff]
    %v6009 = vld [vmem:[%s6006 + $0x10] sm:$0xff]
    %v6010 = vld [vmem:[%s6006 + $0x18] sm:$0xff]
    %v6011 = vunpack.c.l.bf16 %v6007
    %v6012 = vunpack.c.h.bf16 %v6007
    %v6013 = vunpack.c.l.bf16 %v6008
    %v6014 = vunpack.c.h.bf16 %v6008
    %v6015 = vunpack.c.l.bf16 %v6009
    %v6016 = vunpack.c.h.bf16 %v6009
    %v6017 = vunpack.c.l.bf16 %v6010
    %v6018 = vunpack.c.h.bf16 %v6010
    %v6019 = vpack.c.bf16 %v6004, %v6004
    %v6020 = vpack.c.bf16 %v6005, %v6005
    %6021 = vmatpush.bf16.msra.mxu0 %v905
    %6022 = vmatpush.bf16.msra.mxu0 %v897
    %6023 = vmatpush.bf16.msra.mxu0 %v889
    %6024 = vmatpush.bf16.msra.mxu0 %v881
    %6025 = vmatpush.bf16.msra.mxu0 %v873
    %6026 = vmatpush.bf16.msra.mxu0 %v865
    %6027 = vmatpush.bf16.msra.mxu0 %v857
    %6028 = vmatpush.bf16.msra.mxu0 %v849
    %6029 = vmatmul.bf16.gmra.mxu0 %v5662
    %v6030 = vpop.f32.mrf.mxu0
    %v6031 = vadd.f32 0.0, %v6030
    %v6032 = vpop.f32.mrf.mxu0
    %6033 = vdwg.mxu0
    %6034 = vmatpush.bf16.msra.mxu0 %v969
    %6035 = vmatpush.bf16.msra.mxu0 %v961
    %6036 = vmatpush.bf16.msra.mxu0 %v953
    %6037 = vmatpush.bf16.msra.mxu0 %v945
    %6038 = vmatpush.bf16.msra.mxu0 %v937
    %6039 = vmatpush.bf16.msra.mxu0 %v929
    %6040 = vmatpush.bf16.msra.mxu0 %v921
    %6041 = vmatpush.bf16.msra.mxu0 %v913
    %6042 = vmatmul.bf16.gmra.mxu0 %v5663
    %v6043 = vpop.f32.mrf.mxu0
    %v6044 = vadd.f32 %v6031, %v6043
    %v6045 = vpop.f32.mrf.mxu0
    %6046 = vdwg.mxu0
    %6047 = vmatpush.bf16.msra.mxu0 %v906
    %6048 = vmatpush.bf16.msra.mxu0 %v898
    %6049 = vmatpush.bf16.msra.mxu0 %v890
    %6050 = vmatpush.bf16.msra.mxu0 %v882
    %6051 = vmatpush.bf16.msra.mxu0 %v874
    %6052 = vmatpush.bf16.msra.mxu0 %v866
    %6053 = vmatpush.bf16.msra.mxu0 %v858
    %6054 = vmatpush.bf16.msra.mxu0 %v850
    %6055 = vmatmul.bf16.gmra.mxu0 %v5662
    %v6056 = vpop.f32.mrf.mxu0
    %v6057 = vadd.f32 0.0, %v6056
    %v6058 = vpop.f32.mrf.mxu0
    %6059 = vdwg.mxu0
    %6060 = vmatpush.bf16.msra.mxu0 %v970
    %6061 = vmatpush.bf16.msra.mxu0 %v962
    %6062 = vmatpush.bf16.msra.mxu0 %v954
    %6063 = vmatpush.bf16.msra.mxu0 %v946
    %6064 = vmatpush.bf16.msra.mxu0 %v938
    %6065 = vmatpush.bf16.msra.mxu0 %v930
    %6066 = vmatpush.bf16.msra.mxu0 %v922
    %6067 = vmatpush.bf16.msra.mxu0 %v914
    %6068 = vmatmul.bf16.gmra.mxu0 %v5663
    %v6069 = vpop.f32.mrf.mxu0
    %v6070 = vadd.f32 %v6057, %v6069
    %v6071 = vpop.f32.mrf.mxu0
    %6072 = vdwg.mxu0
    %6073 = vmatpush.bf16.msra.mxu0 %v907
    %6074 = vmatpush.bf16.msra.mxu0 %v899
    %6075 = vmatpush.bf16.msra.mxu0 %v891
    %6076 = vmatpush.bf16.msra.mxu0 %v883
    %6077 = vmatpush.bf16.msra.mxu0 %v875
    %6078 = vmatpush.bf16.msra.mxu0 %v867
    %6079 = vmatpush.bf16.msra.mxu0 %v859
    %6080 = vmatpush.bf16.msra.mxu0 %v851
    %6081 = vmatmul.bf16.gmra.mxu0 %v5662
    %v6082 = vpop.f32.mrf.mxu0
    %v6083 = vadd.f32 0.0, %v6082
    %v6084 = vpop.f32.mrf.mxu0
    %6085 = vdwg.mxu0
    %6086 = vmatpush.bf16.msra.mxu0 %v971
    %6087 = vmatpush.bf16.msra.mxu0 %v963
    %6088 = vmatpush.bf16.msra.mxu0 %v955
    %6089 = vmatpush.bf16.msra.mxu0 %v947
    %6090 = vmatpush.bf16.msra.mxu0 %v939
    %6091 = vmatpush.bf16.msra.mxu0 %v931
    %6092 = vmatpush.bf16.msra.mxu0 %v923
    %6093 = vmatpush.bf16.msra.mxu0 %v915
    %6094 = vmatmul.bf16.gmra.mxu0 %v5663
    %v6095 = vpop.f32.mrf.mxu0
    %v6096 = vadd.f32 %v6083, %v6095
    %v6097 = vpop.f32.mrf.mxu0
    %6098 = vdwg.mxu0
    %6099 = vmatpush.bf16.msra.mxu0 %v908
    %6100 = vmatpush.bf16.msra.mxu0 %v900
    %6101 = vmatpush.bf16.msra.mxu0 %v892
    %6102 = vmatpush.bf16.msra.mxu0 %v884
    %6103 = vmatpush.bf16.msra.mxu0 %v876
    %6104 = vmatpush.bf16.msra.mxu0 %v868
    %6105 = vmatpush.bf16.msra.mxu0 %v860
    %6106 = vmatpush.bf16.msra.mxu0 %v852
    %6107 = vmatmul.bf16.gmra.mxu0 %v5662
    %v6108 = vpop.f32.mrf.mxu0
    %v6109 = vadd.f32 0.0, %v6108
    %v6110 = vpop.f32.mrf.mxu0
    %6111 = vdwg.mxu0
    %6112 = vmatpush.bf16.msra.mxu0 %v972
    %6113 = vmatpush.bf16.msra.mxu0 %v964
    %6114 = vmatpush.bf16.msra.mxu0 %v956
    %6115 = vmatpush.bf16.msra.mxu0 %v948
    %6116 = vmatpush.bf16.msra.mxu0 %v940
    %6117 = vmatpush.bf16.msra.mxu0 %v932
    %6118 = vmatpush.bf16.msra.mxu0 %v924
    %6119 = vmatpush.bf16.msra.mxu0 %v916
    %6120 = vmatmul.bf16.gmra.mxu0 %v5663
    %v6121 = vpop.f32.mrf.mxu0
    %v6122 = vadd.f32 %v6109, %v6121
    %v6123 = vpop.f32.mrf.mxu0
    %6124 = vdwg.mxu0
    %6125 = vmatpush.bf16.msra.mxu0 %v909
    %6126 = vmatpush.bf16.msra.mxu0 %v901
    %6127 = vmatpush.bf16.msra.mxu0 %v893
    %6128 = vmatpush.bf16.msra.mxu0 %v885
    %6129 = vmatpush.bf16.msra.mxu0 %v877
    %6130 = vmatpush.bf16.msra.mxu0 %v869
    %6131 = vmatpush.bf16.msra.mxu0 %v861
    %6132 = vmatpush.bf16.msra.mxu0 %v853
    %6133 = vmatmul.bf16.gmra.mxu0 %v5662
    %v6134 = vpop.f32.mrf.mxu0
    %v6135 = vadd.f32 0.0, %v6134
    %v6136 = vpop.f32.mrf.mxu0
    %6137 = vdwg.mxu0
    %6138 = vmatpush.bf16.msra.mxu0 %v973
    %6139 = vmatpush.bf16.msra.mxu0 %v965
    %6140 = vmatpush.bf16.msra.mxu0 %v957
    %6141 = vmatpush.bf16.msra.mxu0 %v949
    %6142 = vmatpush.bf16.msra.mxu0 %v941
    %6143 = vmatpush.bf16.msra.mxu0 %v933
    %6144 = vmatpush.bf16.msra.mxu0 %v925
    %6145 = vmatpush.bf16.msra.mxu0 %v917
    %6146 = vmatmul.bf16.gmra.mxu0 %v5663
    %v6147 = vpop.f32.mrf.mxu0
    %v6148 = vadd.f32 %v6135, %v6147
    %v6149 = vpop.f32.mrf.mxu0
    %6150 = vdwg.mxu0
    %6151 = vmatpush.bf16.msra.mxu0 %v910
    %6152 = vmatpush.bf16.msra.mxu0 %v902
    %6153 = vmatpush.bf16.msra.mxu0 %v894
    %6154 = vmatpush.bf16.msra.mxu0 %v886
    %6155 = vmatpush.bf16.msra.mxu0 %v878
    %6156 = vmatpush.bf16.msra.mxu0 %v870
    %6157 = vmatpush.bf16.msra.mxu0 %v862
    %6158 = vmatpush.bf16.msra.mxu0 %v854
    %6159 = vmatmul.bf16.gmra.mxu0 %v5662
    %v6160 = vpop.f32.mrf.mxu0
    %v6161 = vadd.f32 0.0, %v6160
    %v6162 = vpop.f32.mrf.mxu0
    %6163 = vdwg.mxu0
    %6164 = vmatpush.bf16.msra.mxu0 %v974
    %6165 = vmatpush.bf16.msra.mxu0 %v966
    %6166 = vmatpush.bf16.msra.mxu0 %v958
    %6167 = vmatpush.bf16.msra.mxu0 %v950
    %6168 = vmatpush.bf16.msra.mxu0 %v942
    %6169 = vmatpush.bf16.msra.mxu0 %v934
    %6170 = vmatpush.bf16.msra.mxu0 %v926
    %6171 = vmatpush.bf16.msra.mxu0 %v918
    %6172 = vmatmul.bf16.gmra.mxu0 %v5663
    %v6173 = vpop.f32.mrf.mxu0
    %v6174 = vadd.f32 %v6161, %v6173
    %v6175 = vpop.f32.mrf.mxu0
    %6176 = vdwg.mxu0
    %6177 = vmatpush.bf16.msra.mxu0 %v911
    %6178 = vmatpush.bf16.msra.mxu0 %v903
    %6179 = vmatpush.bf16.msra.mxu0 %v895
    %6180 = vmatpush.bf16.msra.mxu0 %v887
    %6181 = vmatpush.bf16.msra.mxu0 %v879
    %6182 = vmatpush.bf16.msra.mxu0 %v871
    %6183 = vmatpush.bf16.msra.mxu0 %v863
    %6184 = vmatpush.bf16.msra.mxu0 %v855
    %6185 = vmatmul.bf16.gmra.mxu0 %v5662
    %v6186 = vpop.f32.mrf.mxu0
    %v6187 = vadd.f32 0.0, %v6186
    %v6188 = vpop.f32.mrf.mxu0
    %6189 = vdwg.mxu0
    %6190 = vmatpush.bf16.msra.mxu0 %v975
    %6191 = vmatpush.bf16.msra.mxu0 %v967
    %6192 = vmatpush.bf16.msra.mxu0 %v959
    %6193 = vmatpush.bf16.msra.mxu0 %v951
    %6194 = vmatpush.bf16.msra.mxu0 %v943
    %6195 = vmatpush.bf16.msra.mxu0 %v935
    %6196 = vmatpush.bf16.msra.mxu0 %v927
    %6197 = vmatpush.bf16.msra.mxu0 %v919
    %6198 = vmatmul.bf16.gmra.mxu0 %v5663
    %v6199 = vpop.f32.mrf.mxu0
    %v6200 = vadd.f32 %v6187, %v6199
    %v6201 = vpop.f32.mrf.mxu0
    %6202 = vdwg.mxu0
    %6203 = vmatpush.bf16.msra.mxu0 %v912
    %6204 = vmatpush.bf16.msra.mxu0 %v904
    %6205 = vmatpush.bf16.msra.mxu0 %v896
    %6206 = vmatpush.bf16.msra.mxu0 %v888
    %6207 = vmatpush.bf16.msra.mxu0 %v880
    %6208 = vmatpush.bf16.msra.mxu0 %v872
    %6209 = vmatpush.bf16.msra.mxu0 %v864
    %6210 = vmatpush.bf16.msra.mxu0 %v856
    %6211 = vmatmul.bf16.gmra.mxu0 %v5662
    %v6212 = vpop.f32.mrf.mxu0
    %v6213 = vadd.f32 0.0, %v6212
    %v6214 = vpop.f32.mrf.mxu0
    %6215 = vdwg.mxu0
    %6216 = vmatpush.bf16.msra.mxu0 %v976
    %6217 = vmatpush.bf16.msra.mxu0 %v968
    %6218 = vmatpush.bf16.msra.mxu0 %v960
    %6219 = vmatpush.bf16.msra.mxu0 %v952
    %6220 = vmatpush.bf16.msra.mxu0 %v944
    %6221 = vmatpush.bf16.msra.mxu0 %v936
    %6222 = vmatpush.bf16.msra.mxu0 %v928
    %6223 = vmatpush.bf16.msra.mxu0 %v920
    %6224 = vmatmul.bf16.gmra.mxu0 %v5663
    %v6225 = vpop.f32.mrf.mxu0
    %v6226 = vadd.f32 %v6213, %v6225
    %v6227 = vpop.f32.mrf.mxu0
    %6228 = vdwg.mxu0
    %v6229 = vadd.f32 %v6011, %v6044
    %v6230 = vadd.f32 %v6012, %v6070
    %v6231 = vadd.f32 %v6013, %v6096
    %v6232 = vadd.f32 %v6014, %v6122
    %v6233 = vadd.f32 %v6015, %v6148
    %v6234 = vadd.f32 %v6016, %v6174
    %v6235 = vadd.f32 %v6017, %v6200
    %v6236 = vadd.f32 %v6018, %v6226
    %v6237 = vxor.u32 %v6229, 2147483648
    %v6238 = vxor.u32 %v6230, 2147483648
    %v6239 = vmul.f32 %v6237, 1.442695
    %v6240 = vpow.pop %v6239
    %v6241 = vmul.f32 %v6238, 1.442695
    %v6242 = vpow.pop %v6241
    %v6243 = vadd.f32 %v6240, 1.0
    %v6244 = vadd.f32 %v6242, 1.0
    %v6245 = vrcp.pop %v6243
    %v6246 = vmul.f32 %v6243, %v6245
    %v6247 = vsub.f32 1.0, %v6246
    %v6248 = vmul.f32 %v6245, %v6247
    %v6249 = vadd.f32 %v6245, %v6248
    %vm6250 = vweird.f32 %v6243
    %vm6251 = vweird.f32 %v6245
    %vm6252 = vmor %vm6250, %vm6251
    %v6253 = vsel %vm6252, %v6245, %v6249
    %v6254 = vand.u32 2147483647, %v6243
    %vm6255 = vcmp.eq.f32.partialorder %v6254, 8.507059e+37
    %v6256 = vand.u32 %v6243, 2147483648
    %v6257 = vor.u32 1.1754944e-38, %v6256
    %v6258 = vsel %vm6255, %v6257, %v6253
    %v6259 = vmul.f32 1.0, %v6258
    %v6260 = vrcp.pop %v6244
    %v6261 = vmul.f32 %v6244, %v6260
    %v6262 = vsub.f32 1.0, %v6261
    %v6263 = vmul.f32 %v6260, %v6262
    %v6264 = vadd.f32 %v6260, %v6263
    %vm6265 = vweird.f32 %v6244
    %vm6266 = vweird.f32 %v6260
    %vm6267 = vmor %vm6265, %vm6266
    %v6268 = vsel %vm6267, %v6260, %v6264
    %v6269 = vand.u32 2147483647, %v6244
    %vm6270 = vcmp.eq.f32.partialorder %v6269, 8.507059e+37
    %v6271 = vand.u32 %v6244, 2147483648
    %v6272 = vor.u32 1.1754944e-38, %v6271
    %v6273 = vsel %vm6270, %v6272, %v6268
    %v6274 = vmul.f32 1.0, %v6273
    %v6275 = vxor.u32 %v6231, 2147483648
    %v6276 = vxor.u32 %v6232, 2147483648
    %v6277 = vmul.f32 %v6275, 1.442695
    %v6278 = vpow.pop %v6277
    %v6279 = vmul.f32 %v6276, 1.442695
    %v6280 = vpow.pop %v6279
    %v6281 = vadd.f32 %v6278, 1.0
    %v6282 = vadd.f32 %v6280, 1.0
    %v6283 = vrcp.pop %v6281
    %v6284 = vmul.f32 %v6281, %v6283
    %v6285 = vsub.f32 1.0, %v6284
    %v6286 = vmul.f32 %v6283, %v6285
    %v6287 = vadd.f32 %v6283, %v6286
    %vm6288 = vweird.f32 %v6281
    %vm6289 = vweird.f32 %v6283
    %vm6290 = vmor %vm6288, %vm6289
    %v6291 = vsel %vm6290, %v6283, %v6287
    %v6292 = vand.u32 2147483647, %v6281
    %vm6293 = vcmp.eq.f32.partialorder %v6292, 8.507059e+37
    %v6294 = vand.u32 %v6281, 2147483648
    %v6295 = vor.u32 1.1754944e-38, %v6294
    %v6296 = vsel %vm6293, %v6295, %v6291
    %v6297 = vmul.f32 1.0, %v6296
    %v6298 = vrcp.pop %v6282
    %v6299 = vmul.f32 %v6282, %v6298
    %v6300 = vsub.f32 1.0, %v6299
    %v6301 = vmul.f32 %v6298, %v6300
    %v6302 = vadd.f32 %v6298, %v6301
    %vm6303 = vweird.f32 %v6282
    %vm6304 = vweird.f32 %v6298
    %vm6305 = vmor %vm6303, %vm6304
    %v6306 = vsel %vm6305, %v6298, %v6302
    %v6307 = vand.u32 2147483647, %v6282
    %vm6308 = vcmp.eq.f32.partialorder %v6307, 8.507059e+37
    %v6309 = vand.u32 %v6282, 2147483648
    %v6310 = vor.u32 1.1754944e-38, %v6309
    %v6311 = vsel %vm6308, %v6310, %v6306
    %v6312 = vmul.f32 1.0, %v6311
    %v6313 = vtanh.pop %v6233
    %v6314 = vtanh.pop %v6234
    %v6315 = vxor.u32 %v6235, 2147483648
    %v6316 = vxor.u32 %v6236, 2147483648
    %v6317 = vmul.f32 %v6315, 1.442695
    %v6318 = vpow.pop %v6317
    %v6319 = vmul.f32 %v6316, 1.442695
    %v6320 = vpow.pop %v6319
    %v6321 = vadd.f32 %v6318, 1.0
    %v6322 = vadd.f32 %v6320, 1.0
    %v6323 = vrcp.pop %v6321
    %v6324 = vmul.f32 %v6321, %v6323
    %v6325 = vsub.f32 1.0, %v6324
    %v6326 = vmul.f32 %v6323, %v6325
    %v6327 = vadd.f32 %v6323, %v6326
    %vm6328 = vweird.f32 %v6321
    %vm6329 = vweird.f32 %v6323
    %vm6330 = vmor %vm6328, %vm6329
    %v6331 = vsel %vm6330, %v6323, %v6327
    %v6332 = vand.u32 2147483647, %v6321
    %vm6333 = vcmp.eq.f32.partialorder %v6332, 8.507059e+37
    %v6334 = vand.u32 %v6321, 2147483648
    %v6335 = vor.u32 1.1754944e-38, %v6334
    %v6336 = vsel %vm6333, %v6335, %v6331
    %v6337 = vmul.f32 1.0, %v6336
    %v6338 = vrcp.pop %v6322
    %v6339 = vmul.f32 %v6322, %v6338
    %v6340 = vsub.f32 1.0, %v6339
    %v6341 = vmul.f32 %v6338, %v6340
    %v6342 = vadd.f32 %v6338, %v6341
    %vm6343 = vweird.f32 %v6322
    %vm6344 = vweird.f32 %v6338
    %vm6345 = vmor %vm6343, %vm6344
    %v6346 = vsel %vm6345, %v6338, %v6342
    %v6347 = vand.u32 2147483647, %v6322
    %vm6348 = vcmp.eq.f32.partialorder %v6347, 8.507059e+37
    %v6349 = vand.u32 %v6322, 2147483648
    %v6350 = vor.u32 1.1754944e-38, %v6349
    %v6351 = vsel %vm6348, %v6350, %v6346
    %v6352 = vmul.f32 1.0, %v6351
    %v6353 = vmul.f32 %v6297, %v5448
    %v6354 = vmul.f32 %v6312, %v5449
    %v6355 = vmul.f32 %v6259, %v6313
    %v6356 = vmul.f32 %v6274, %v6314
    %v6357 = vadd.f32 %v6353, %v6355
    %v6358 = vadd.f32 %v6354, %v6356
    %v6359 = vtanh.pop %v6357
    %v6360 = vtanh.pop %v6358
    %v6361 = vmul.f32 %v6337, %v6359
    %v6362 = vmul.f32 %v6352, %v6360
    %6363 = vmatpush.bf16.msra.mxu0 %v1887
    %6364 = vmatpush.bf16.msra.mxu0 %v1879
    %6365 = vmatpush.bf16.msra.mxu0 %v1871
    %6366 = vmatpush.bf16.msra.mxu0 %v1863
    %6367 = vmatpush.bf16.msra.mxu0 %v1855
    %6368 = vmatpush.bf16.msra.mxu0 %v1847
    %6369 = vmatpush.bf16.msra.mxu0 %v1839
    %6370 = vmatpush.bf16.msra.mxu0 %v1831
    %6371 = vmatmul.bf16.gmra.mxu0 %v6019
    %v6372 = vpop.f32.mrf.mxu0
    %v6373 = vadd.f32 %v425, %v6372
    %v6374 = vpop.f32.mrf.mxu0
    %6375 = vdwg.mxu0
    %6376 = vmatpush.bf16.msra.mxu0 %v1951
    %6377 = vmatpush.bf16.msra.mxu0 %v1943
    %6378 = vmatpush.bf16.msra.mxu0 %v1935
    %6379 = vmatpush.bf16.msra.mxu0 %v1927
    %6380 = vmatpush.bf16.msra.mxu0 %v1919
    %6381 = vmatpush.bf16.msra.mxu0 %v1911
    %6382 = vmatpush.bf16.msra.mxu0 %v1903
    %6383 = vmatpush.bf16.msra.mxu0 %v1895
    %6384 = vmatmul.bf16.gmra.mxu0 %v6020
    %v6385 = vpop.f32.mrf.mxu0
    %v6386 = vadd.f32 %v6373, %v6385
    %v6387 = vpop.f32.mrf.mxu0
    %6388 = vdwg.mxu0
    %6389 = vmatpush.bf16.msra.mxu0 %v1888
    %6390 = vmatpush.bf16.msra.mxu0 %v1880
    %6391 = vmatpush.bf16.msra.mxu0 %v1872
    %6392 = vmatpush.bf16.msra.mxu0 %v1864
    %6393 = vmatpush.bf16.msra.mxu0 %v1856
    %6394 = vmatpush.bf16.msra.mxu0 %v1848
    %6395 = vmatpush.bf16.msra.mxu0 %v1840
    %6396 = vmatpush.bf16.msra.mxu0 %v1832
    %6397 = vmatmul.bf16.gmra.mxu0 %v6019
    %v6398 = vpop.f32.mrf.mxu0
    %v6399 = vadd.f32 %v426, %v6398
    %v6400 = vpop.f32.mrf.mxu0
    %6401 = vdwg.mxu0
    %6402 = vmatpush.bf16.msra.mxu0 %v1952
    %6403 = vmatpush.bf16.msra.mxu0 %v1944
    %6404 = vmatpush.bf16.msra.mxu0 %v1936
    %6405 = vmatpush.bf16.msra.mxu0 %v1928
    %6406 = vmatpush.bf16.msra.mxu0 %v1920
    %6407 = vmatpush.bf16.msra.mxu0 %v1912
    %6408 = vmatpush.bf16.msra.mxu0 %v1904
    %6409 = vmatpush.bf16.msra.mxu0 %v1896
    %6410 = vmatmul.bf16.gmra.mxu0 %v6020
    %v6411 = vpop.f32.mrf.mxu0
    %v6412 = vadd.f32 %v6399, %v6411
    %v6413 = vpop.f32.mrf.mxu0
    %6414 = vdwg.mxu0
    %6415 = vmatpush.bf16.msra.mxu0 %v1889
    %6416 = vmatpush.bf16.msra.mxu0 %v1881
    %6417 = vmatpush.bf16.msra.mxu0 %v1873
    %6418 = vmatpush.bf16.msra.mxu0 %v1865
    %6419 = vmatpush.bf16.msra.mxu0 %v1857
    %6420 = vmatpush.bf16.msra.mxu0 %v1849
    %6421 = vmatpush.bf16.msra.mxu0 %v1841
    %6422 = vmatpush.bf16.msra.mxu0 %v1833
    %6423 = vmatmul.bf16.gmra.mxu0 %v6019
    %v6424 = vpop.f32.mrf.mxu0
    %v6425 = vadd.f32 %v427, %v6424
    %v6426 = vpop.f32.mrf.mxu0
    %6427 = vdwg.mxu0
    %6428 = vmatpush.bf16.msra.mxu0 %v1953
    %6429 = vmatpush.bf16.msra.mxu0 %v1945
    %6430 = vmatpush.bf16.msra.mxu0 %v1937
    %6431 = vmatpush.bf16.msra.mxu0 %v1929
    %6432 = vmatpush.bf16.msra.mxu0 %v1921
    %6433 = vmatpush.bf16.msra.mxu0 %v1913
    %6434 = vmatpush.bf16.msra.mxu0 %v1905
    %6435 = vmatpush.bf16.msra.mxu0 %v1897
    %6436 = vmatmul.bf16.gmra.mxu0 %v6020
    %v6437 = vpop.f32.mrf.mxu0
    %v6438 = vadd.f32 %v6425, %v6437
    %v6439 = vpop.f32.mrf.mxu0
    %6440 = vdwg.mxu0
    %6441 = vmatpush.bf16.msra.mxu0 %v1890
    %6442 = vmatpush.bf16.msra.mxu0 %v1882
    %6443 = vmatpush.bf16.msra.mxu0 %v1874
    %6444 = vmatpush.bf16.msra.mxu0 %v1866
    %6445 = vmatpush.bf16.msra.mxu0 %v1858
    %6446 = vmatpush.bf16.msra.mxu0 %v1850
    %6447 = vmatpush.bf16.msra.mxu0 %v1842
    %6448 = vmatpush.bf16.msra.mxu0 %v1834
    %6449 = vmatmul.bf16.gmra.mxu0 %v6019
    %v6450 = vpop.f32.mrf.mxu0
    %v6451 = vadd.f32 %v428, %v6450
    %v6452 = vpop.f32.mrf.mxu0
    %6453 = vdwg.mxu0
    %6454 = vmatpush.bf16.msra.mxu0 %v1954
    %6455 = vmatpush.bf16.msra.mxu0 %v1946
    %6456 = vmatpush.bf16.msra.mxu0 %v1938
    %6457 = vmatpush.bf16.msra.mxu0 %v1930
    %6458 = vmatpush.bf16.msra.mxu0 %v1922
    %6459 = vmatpush.bf16.msra.mxu0 %v1914
    %6460 = vmatpush.bf16.msra.mxu0 %v1906
    %6461 = vmatpush.bf16.msra.mxu0 %v1898
    %6462 = vmatmul.bf16.gmra.mxu0 %v6020
    %v6463 = vpop.f32.mrf.mxu0
    %v6464 = vadd.f32 %v6451, %v6463
    %v6465 = vpop.f32.mrf.mxu0
    %6466 = vdwg.mxu0
    %6467 = vmatpush.bf16.msra.mxu0 %v1891
    %6468 = vmatpush.bf16.msra.mxu0 %v1883
    %6469 = vmatpush.bf16.msra.mxu0 %v1875
    %6470 = vmatpush.bf16.msra.mxu0 %v1867
    %6471 = vmatpush.bf16.msra.mxu0 %v1859
    %6472 = vmatpush.bf16.msra.mxu0 %v1851
    %6473 = vmatpush.bf16.msra.mxu0 %v1843
    %6474 = vmatpush.bf16.msra.mxu0 %v1835
    %6475 = vmatmul.bf16.gmra.mxu0 %v6019
    %v6476 = vpop.f32.mrf.mxu0
    %v6477 = vadd.f32 %v429, %v6476
    %v6478 = vpop.f32.mrf.mxu0
    %6479 = vdwg.mxu0
    %6480 = vmatpush.bf16.msra.mxu0 %v1955
    %6481 = vmatpush.bf16.msra.mxu0 %v1947
    %6482 = vmatpush.bf16.msra.mxu0 %v1939
    %6483 = vmatpush.bf16.msra.mxu0 %v1931
    %6484 = vmatpush.bf16.msra.mxu0 %v1923
    %6485 = vmatpush.bf16.msra.mxu0 %v1915
    %6486 = vmatpush.bf16.msra.mxu0 %v1907
    %6487 = vmatpush.bf16.msra.mxu0 %v1899
    %6488 = vmatmul.bf16.gmra.mxu0 %v6020
    %v6489 = vpop.f32.mrf.mxu0
    %v6490 = vadd.f32 %v6477, %v6489
    %v6491 = vpop.f32.mrf.mxu0
    %6492 = vdwg.mxu0
    %6493 = vmatpush.bf16.msra.mxu0 %v1892
    %6494 = vmatpush.bf16.msra.mxu0 %v1884
    %6495 = vmatpush.bf16.msra.mxu0 %v1876
    %6496 = vmatpush.bf16.msra.mxu0 %v1868
    %6497 = vmatpush.bf16.msra.mxu0 %v1860
    %6498 = vmatpush.bf16.msra.mxu0 %v1852
    %6499 = vmatpush.bf16.msra.mxu0 %v1844
    %6500 = vmatpush.bf16.msra.mxu0 %v1836
    %6501 = vmatmul.bf16.gmra.mxu0 %v6019
    %v6502 = vpop.f32.mrf.mxu0
    %v6503 = vadd.f32 %v430, %v6502
    %v6504 = vpop.f32.mrf.mxu0
    %6505 = vdwg.mxu0
    %6506 = vmatpush.bf16.msra.mxu0 %v1956
    %6507 = vmatpush.bf16.msra.mxu0 %v1948
    %6508 = vmatpush.bf16.msra.mxu0 %v1940
    %6509 = vmatpush.bf16.msra.mxu0 %v1932
    %6510 = vmatpush.bf16.msra.mxu0 %v1924
    %6511 = vmatpush.bf16.msra.mxu0 %v1916
    %6512 = vmatpush.bf16.msra.mxu0 %v1908
    %6513 = vmatpush.bf16.msra.mxu0 %v1900
    %6514 = vmatmul.bf16.gmra.mxu0 %v6020
    %v6515 = vpop.f32.mrf.mxu0
    %v6516 = vadd.f32 %v6503, %v6515
    %v6517 = vpop.f32.mrf.mxu0
    %6518 = vdwg.mxu0
    %6519 = vmatpush.bf16.msra.mxu0 %v1893
    %6520 = vmatpush.bf16.msra.mxu0 %v1885
    %6521 = vmatpush.bf16.msra.mxu0 %v1877
    %6522 = vmatpush.bf16.msra.mxu0 %v1869
    %6523 = vmatpush.bf16.msra.mxu0 %v1861
    %6524 = vmatpush.bf16.msra.mxu0 %v1853
    %6525 = vmatpush.bf16.msra.mxu0 %v1845
    %6526 = vmatpush.bf16.msra.mxu0 %v1837
    %6527 = vmatmul.bf16.gmra.mxu0 %v6019
    %v6528 = vpop.f32.mrf.mxu0
    %v6529 = vadd.f32 %v431, %v6528
    %v6530 = vpop.f32.mrf.mxu0
    %6531 = vdwg.mxu0
    %6532 = vmatpush.bf16.msra.mxu0 %v1957
    %6533 = vmatpush.bf16.msra.mxu0 %v1949
    %6534 = vmatpush.bf16.msra.mxu0 %v1941
    %6535 = vmatpush.bf16.msra.mxu0 %v1933
    %6536 = vmatpush.bf16.msra.mxu0 %v1925
    %6537 = vmatpush.bf16.msra.mxu0 %v1917
    %6538 = vmatpush.bf16.msra.mxu0 %v1909
    %6539 = vmatpush.bf16.msra.mxu0 %v1901
    %6540 = vmatmul.bf16.gmra.mxu0 %v6020
    %v6541 = vpop.f32.mrf.mxu0
    %v6542 = vadd.f32 %v6529, %v6541
    %v6543 = vpop.f32.mrf.mxu0
    %6544 = vdwg.mxu0
    %6545 = vmatpush.bf16.msra.mxu0 %v1894
    %6546 = vmatpush.bf16.msra.mxu0 %v1886
    %6547 = vmatpush.bf16.msra.mxu0 %v1878
    %6548 = vmatpush.bf16.msra.mxu0 %v1870
    %6549 = vmatpush.bf16.msra.mxu0 %v1862
    %6550 = vmatpush.bf16.msra.mxu0 %v1854
    %6551 = vmatpush.bf16.msra.mxu0 %v1846
    %6552 = vmatpush.bf16.msra.mxu0 %v1838
    %6553 = vmatmul.bf16.gmra.mxu0 %v6019
    %v6554 = vpop.f32.mrf.mxu0
    %v6555 = vadd.f32 %v432, %v6554
    %v6556 = vpop.f32.mrf.mxu0
    %6557 = vdwg.mxu0
    %6558 = vmatpush.bf16.msra.mxu0 %v1958
    %6559 = vmatpush.bf16.msra.mxu0 %v1950
    %6560 = vmatpush.bf16.msra.mxu0 %v1942
    %6561 = vmatpush.bf16.msra.mxu0 %v1934
    %6562 = vmatpush.bf16.msra.mxu0 %v1926
    %6563 = vmatpush.bf16.msra.mxu0 %v1918
    %6564 = vmatpush.bf16.msra.mxu0 %v1910
    %6565 = vmatpush.bf16.msra.mxu0 %v1902
    %6566 = vmatmul.bf16.gmra.mxu0 %v6020
    %v6567 = vpop.f32.mrf.mxu0
    %v6568 = vadd.f32 %v6555, %v6567
    %v6569 = vpop.f32.mrf.mxu0
    %6570 = vdwg.mxu0
    %v6571 = vpack.c.bf16 %v6361, %v6361
    %v6572 = vpack.c.bf16 %v6362, %v6362
    %6573 = vmatpush.bf16.msra.mxu0 %v2737
    %6574 = vmatpush.bf16.msra.mxu0 %v2729
    %6575 = vmatpush.bf16.msra.mxu0 %v2721
    %6576 = vmatpush.bf16.msra.mxu0 %v2713
    %6577 = vmatpush.bf16.msra.mxu0 %v2705
    %6578 = vmatpush.bf16.msra.mxu0 %v2697
    %6579 = vmatpush.bf16.msra.mxu0 %v2689
    %6580 = vmatpush.bf16.msra.mxu0 %v2681
    %6581 = vmatmul.bf16.gmra.mxu0 %v6571
    %v6582 = vpop.f32.mrf.mxu0
    %v6583 = vadd.f32 0.0, %v6582
    %v6584 = vpop.f32.mrf.mxu0
    %6585 = vdwg.mxu0
    %6586 = vmatpush.bf16.msra.mxu0 %v2801
    %6587 = vmatpush.bf16.msra.mxu0 %v2793
    %6588 = vmatpush.bf16.msra.mxu0 %v2785
    %6589 = vmatpush.bf16.msra.mxu0 %v2777
    %6590 = vmatpush.bf16.msra.mxu0 %v2769
    %6591 = vmatpush.bf16.msra.mxu0 %v2761
    %6592 = vmatpush.bf16.msra.mxu0 %v2753
    %6593 = vmatpush.bf16.msra.mxu0 %v2745
    %6594 = vmatmul.bf16.gmra.mxu0 %v6572
    %v6595 = vpop.f32.mrf.mxu0
    %v6596 = vadd.f32 %v6583, %v6595
    %v6597 = vpop.f32.mrf.mxu0
    %6598 = vdwg.mxu0
    %6599 = vmatpush.bf16.msra.mxu0 %v2738
    %6600 = vmatpush.bf16.msra.mxu0 %v2730
    %6601 = vmatpush.bf16.msra.mxu0 %v2722
    %6602 = vmatpush.bf16.msra.mxu0 %v2714
    %6603 = vmatpush.bf16.msra.mxu0 %v2706
    %6604 = vmatpush.bf16.msra.mxu0 %v2698
    %6605 = vmatpush.bf16.msra.mxu0 %v2690
    %6606 = vmatpush.bf16.msra.mxu0 %v2682
    %6607 = vmatmul.bf16.gmra.mxu0 %v6571
    %v6608 = vpop.f32.mrf.mxu0
    %v6609 = vadd.f32 0.0, %v6608
    %v6610 = vpop.f32.mrf.mxu0
    %6611 = vdwg.mxu0
    %6612 = vmatpush.bf16.msra.mxu0 %v2802
    %6613 = vmatpush.bf16.msra.mxu0 %v2794
    %6614 = vmatpush.bf16.msra.mxu0 %v2786
    %6615 = vmatpush.bf16.msra.mxu0 %v2778
    %6616 = vmatpush.bf16.msra.mxu0 %v2770
    %6617 = vmatpush.bf16.msra.mxu0 %v2762
    %6618 = vmatpush.bf16.msra.mxu0 %v2754
    %6619 = vmatpush.bf16.msra.mxu0 %v2746
    %6620 = vmatmul.bf16.gmra.mxu0 %v6572
    %v6621 = vpop.f32.mrf.mxu0
    %v6622 = vadd.f32 %v6609, %v6621
    %v6623 = vpop.f32.mrf.mxu0
    %6624 = vdwg.mxu0
    %6625 = vmatpush.bf16.msra.mxu0 %v2739
    %6626 = vmatpush.bf16.msra.mxu0 %v2731
    %6627 = vmatpush.bf16.msra.mxu0 %v2723
    %6628 = vmatpush.bf16.msra.mxu0 %v2715
    %6629 = vmatpush.bf16.msra.mxu0 %v2707
    %6630 = vmatpush.bf16.msra.mxu0 %v2699
    %6631 = vmatpush.bf16.msra.mxu0 %v2691
    %6632 = vmatpush.bf16.msra.mxu0 %v2683
    %6633 = vmatmul.bf16.gmra.mxu0 %v6571
    %v6634 = vpop.f32.mrf.mxu0
    %v6635 = vadd.f32 0.0, %v6634
    %v6636 = vpop.f32.mrf.mxu0
    %6637 = vdwg.mxu0
    %6638 = vmatpush.bf16.msra.mxu0 %v2803
    %6639 = vmatpush.bf16.msra.mxu0 %v2795
    %6640 = vmatpush.bf16.msra.mxu0 %v2787
    %6641 = vmatpush.bf16.msra.mxu0 %v2779
    %6642 = vmatpush.bf16.msra.mxu0 %v2771
    %6643 = vmatpush.bf16.msra.mxu0 %v2763
    %6644 = vmatpush.bf16.msra.mxu0 %v2755
    %6645 = vmatpush.bf16.msra.mxu0 %v2747
    %6646 = vmatmul.bf16.gmra.mxu0 %v6572
    %v6647 = vpop.f32.mrf.mxu0
    %v6648 = vadd.f32 %v6635, %v6647
    %v6649 = vpop.f32.mrf.mxu0
    %6650 = vdwg.mxu0
    %6651 = vmatpush.bf16.msra.mxu0 %v2740
    %6652 = vmatpush.bf16.msra.mxu0 %v2732
    %6653 = vmatpush.bf16.msra.mxu0 %v2724
    %6654 = vmatpush.bf16.msra.mxu0 %v2716
    %6655 = vmatpush.bf16.msra.mxu0 %v2708
    %6656 = vmatpush.bf16.msra.mxu0 %v2700
    %6657 = vmatpush.bf16.msra.mxu0 %v2692
    %6658 = vmatpush.bf16.msra.mxu0 %v2684
    %6659 = vmatmul.bf16.gmra.mxu0 %v6571
    %v6660 = vpop.f32.mrf.mxu0
    %v6661 = vadd.f32 0.0, %v6660
    %v6662 = vpop.f32.mrf.mxu0
    %6663 = vdwg.mxu0
    %6664 = vmatpush.bf16.msra.mxu0 %v2804
    %6665 = vmatpush.bf16.msra.mxu0 %v2796
    %6666 = vmatpush.bf16.msra.mxu0 %v2788
    %6667 = vmatpush.bf16.msra.mxu0 %v2780
    %6668 = vmatpush.bf16.msra.mxu0 %v2772
    %6669 = vmatpush.bf16.msra.mxu0 %v2764
    %6670 = vmatpush.bf16.msra.mxu0 %v2756
    %6671 = vmatpush.bf16.msra.mxu0 %v2748
    %6672 = vmatmul.bf16.gmra.mxu0 %v6572
    %v6673 = vpop.f32.mrf.mxu0
    %v6674 = vadd.f32 %v6661, %v6673
    %v6675 = vpop.f32.mrf.mxu0
    %6676 = vdwg.mxu0
    %6677 = vmatpush.bf16.msra.mxu0 %v2741
    %6678 = vmatpush.bf16.msra.mxu0 %v2733
    %6679 = vmatpush.bf16.msra.mxu0 %v2725
    %6680 = vmatpush.bf16.msra.mxu0 %v2717
    %6681 = vmatpush.bf16.msra.mxu0 %v2709
    %6682 = vmatpush.bf16.msra.mxu0 %v2701
    %6683 = vmatpush.bf16.msra.mxu0 %v2693
    %6684 = vmatpush.bf16.msra.mxu0 %v2685
    %6685 = vmatmul.bf16.gmra.mxu0 %v6571
    %v6686 = vpop.f32.mrf.mxu0
    %v6687 = vadd.f32 0.0, %v6686
    %v6688 = vpop.f32.mrf.mxu0
    %6689 = vdwg.mxu0
    %6690 = vmatpush.bf16.msra.mxu0 %v2805
    %6691 = vmatpush.bf16.msra.mxu0 %v2797
    %6692 = vmatpush.bf16.msra.mxu0 %v2789
    %6693 = vmatpush.bf16.msra.mxu0 %v2781
    %6694 = vmatpush.bf16.msra.mxu0 %v2773
    %6695 = vmatpush.bf16.msra.mxu0 %v2765
    %6696 = vmatpush.bf16.msra.mxu0 %v2757
    %6697 = vmatpush.bf16.msra.mxu0 %v2749
    %6698 = vmatmul.bf16.gmra.mxu0 %v6572
    %v6699 = vpop.f32.mrf.mxu0
    %v6700 = vadd.f32 %v6687, %v6699
    %v6701 = vpop.f32.mrf.mxu0
    %6702 = vdwg.mxu0
    %6703 = vmatpush.bf16.msra.mxu0 %v2742
    %6704 = vmatpush.bf16.msra.mxu0 %v2734
    %6705 = vmatpush.bf16.msra.mxu0 %v2726
    %6706 = vmatpush.bf16.msra.mxu0 %v2718
    %6707 = vmatpush.bf16.msra.mxu0 %v2710
    %6708 = vmatpush.bf16.msra.mxu0 %v2702
    %6709 = vmatpush.bf16.msra.mxu0 %v2694
    %6710 = vmatpush.bf16.msra.mxu0 %v2686
    %6711 = vmatmul.bf16.gmra.mxu0 %v6571
    %v6712 = vpop.f32.mrf.mxu0
    %v6713 = vadd.f32 0.0, %v6712
    %v6714 = vpop.f32.mrf.mxu0
    %6715 = vdwg.mxu0
    %6716 = vmatpush.bf16.msra.mxu0 %v2806
    %6717 = vmatpush.bf16.msra.mxu0 %v2798
    %6718 = vmatpush.bf16.msra.mxu0 %v2790
    %6719 = vmatpush.bf16.msra.mxu0 %v2782
    %6720 = vmatpush.bf16.msra.mxu0 %v2774
    %6721 = vmatpush.bf16.msra.mxu0 %v2766
    %6722 = vmatpush.bf16.msra.mxu0 %v2758
    %6723 = vmatpush.bf16.msra.mxu0 %v2750
    %6724 = vmatmul.bf16.gmra.mxu0 %v6572
    %v6725 = vpop.f32.mrf.mxu0
    %v6726 = vadd.f32 %v6713, %v6725
    %v6727 = vpop.f32.mrf.mxu0
    %6728 = vdwg.mxu0
    %6729 = vmatpush.bf16.msra.mxu0 %v2743
    %6730 = vmatpush.bf16.msra.mxu0 %v2735
    %6731 = vmatpush.bf16.msra.mxu0 %v2727
    %6732 = vmatpush.bf16.msra.mxu0 %v2719
    %6733 = vmatpush.bf16.msra.mxu0 %v2711
    %6734 = vmatpush.bf16.msra.mxu0 %v2703
    %6735 = vmatpush.bf16.msra.mxu0 %v2695
    %6736 = vmatpush.bf16.msra.mxu0 %v2687
    %6737 = vmatmul.bf16.gmra.mxu0 %v6571
    %v6738 = vpop.f32.mrf.mxu0
    %v6739 = vadd.f32 0.0, %v6738
    %v6740 = vpop.f32.mrf.mxu0
    %6741 = vdwg.mxu0
    %6742 = vmatpush.bf16.msra.mxu0 %v2807
    %6743 = vmatpush.bf16.msra.mxu0 %v2799
    %6744 = vmatpush.bf16.msra.mxu0 %v2791
    %6745 = vmatpush.bf16.msra.mxu0 %v2783
    %6746 = vmatpush.bf16.msra.mxu0 %v2775
    %6747 = vmatpush.bf16.msra.mxu0 %v2767
    %6748 = vmatpush.bf16.msra.mxu0 %v2759
    %6749 = vmatpush.bf16.msra.mxu0 %v2751
    %6750 = vmatmul.bf16.gmra.mxu0 %v6572
    %v6751 = vpop.f32.mrf.mxu0
    %v6752 = vadd.f32 %v6739, %v6751
    %v6753 = vpop.f32.mrf.mxu0
    %6754 = vdwg.mxu0
    %6755 = vmatpush.bf16.msra.mxu0 %v2744
    %6756 = vmatpush.bf16.msra.mxu0 %v2736
    %6757 = vmatpush.bf16.msra.mxu0 %v2728
    %6758 = vmatpush.bf16.msra.mxu0 %v2720
    %6759 = vmatpush.bf16.msra.mxu0 %v2712
    %6760 = vmatpush.bf16.msra.mxu0 %v2704
    %6761 = vmatpush.bf16.msra.mxu0 %v2696
    %6762 = vmatpush.bf16.msra.mxu0 %v2688
    %6763 = vmatmul.bf16.gmra.mxu0 %v6571
    %v6764 = vpop.f32.mrf.mxu0
    %v6765 = vadd.f32 0.0, %v6764
    %v6766 = vpop.f32.mrf.mxu0
    %6767 = vdwg.mxu0
    %6768 = vmatpush.bf16.msra.mxu0 %v2808
    %6769 = vmatpush.bf16.msra.mxu0 %v2800
    %6770 = vmatpush.bf16.msra.mxu0 %v2792
    %6771 = vmatpush.bf16.msra.mxu0 %v2784
    %6772 = vmatpush.bf16.msra.mxu0 %v2776
    %6773 = vmatpush.bf16.msra.mxu0 %v2768
    %6774 = vmatpush.bf16.msra.mxu0 %v2760
    %6775 = vmatpush.bf16.msra.mxu0 %v2752
    %6776 = vmatmul.bf16.gmra.mxu0 %v6572
    %v6777 = vpop.f32.mrf.mxu0
    %v6778 = vadd.f32 %v6765, %v6777
    %v6779 = vpop.f32.mrf.mxu0
    %6780 = vdwg.mxu0
    %v6781 = vadd.f32 %v6386, %v6596
    %v6782 = vadd.f32 %v6412, %v6622
    %v6783 = vadd.f32 %v6438, %v6648
    %v6784 = vadd.f32 %v6464, %v6674
    %v6785 = vadd.f32 %v6490, %v6700
    %v6786 = vadd.f32 %v6516, %v6726
    %v6787 = vadd.f32 %v6542, %v6752
    %v6788 = vadd.f32 %v6568, %v6778
    %v6789 = vxor.u32 %v6781, 2147483648
    %v6790 = vxor.u32 %v6782, 2147483648
    %v6791 = vmul.f32 %v6789, 1.442695
    %v6792 = vpow.pop %v6791
    %v6793 = vmul.f32 %v6790, 1.442695
    %v6794 = vpow.pop %v6793
    %v6795 = vadd.f32 %v6792, 1.0
    %v6796 = vadd.f32 %v6794, 1.0
    %v6797 = vrcp.pop %v6795
    %v6798 = vmul.f32 %v6795, %v6797
    %v6799 = vsub.f32 1.0, %v6798
    %v6800 = vmul.f32 %v6797, %v6799
    %v6801 = vadd.f32 %v6797, %v6800
    %vm6802 = vweird.f32 %v6795
    %vm6803 = vweird.f32 %v6797
    %vm6804 = vmor %vm6802, %vm6803
    %v6805 = vsel %vm6804, %v6797, %v6801
    %v6806 = vand.u32 2147483647, %v6795
    %vm6807 = vcmp.eq.f32.partialorder %v6806, 8.507059e+37
    %v6808 = vand.u32 %v6795, 2147483648
    %v6809 = vor.u32 1.1754944e-38, %v6808
    %v6810 = vsel %vm6807, %v6809, %v6805
    %v6811 = vmul.f32 1.0, %v6810
    %v6812 = vrcp.pop %v6796
    %v6813 = vmul.f32 %v6796, %v6812
    %v6814 = vsub.f32 1.0, %v6813
    %v6815 = vmul.f32 %v6812, %v6814
    %v6816 = vadd.f32 %v6812, %v6815
    %vm6817 = vweird.f32 %v6796
    %vm6818 = vweird.f32 %v6812
    %vm6819 = vmor %vm6817, %vm6818
    %v6820 = vsel %vm6819, %v6812, %v6816
    %v6821 = vand.u32 2147483647, %v6796
    %vm6822 = vcmp.eq.f32.partialorder %v6821, 8.507059e+37
    %v6823 = vand.u32 %v6796, 2147483648
    %v6824 = vor.u32 1.1754944e-38, %v6823
    %v6825 = vsel %vm6822, %v6824, %v6820
    %v6826 = vmul.f32 1.0, %v6825
    %v6827 = vxor.u32 %v6783, 2147483648
    %v6828 = vxor.u32 %v6784, 2147483648
    %v6829 = vmul.f32 %v6827, 1.442695
    %v6830 = vpow.pop %v6829
    %v6831 = vmul.f32 %v6828, 1.442695
    %v6832 = vpow.pop %v6831
    %v6833 = vadd.f32 %v6830, 1.0
    %v6834 = vadd.f32 %v6832, 1.0
    %v6835 = vrcp.pop %v6833
    %v6836 = vmul.f32 %v6833, %v6835
    %v6837 = vsub.f32 1.0, %v6836
    %v6838 = vmul.f32 %v6835, %v6837
    %v6839 = vadd.f32 %v6835, %v6838
    %vm6840 = vweird.f32 %v6833
    %vm6841 = vweird.f32 %v6835
    %vm6842 = vmor %vm6840, %vm6841
    %v6843 = vsel %vm6842, %v6835, %v6839
    %v6844 = vand.u32 2147483647, %v6833
    %vm6845 = vcmp.eq.f32.partialorder %v6844, 8.507059e+37
    %v6846 = vand.u32 %v6833, 2147483648
    %v6847 = vor.u32 1.1754944e-38, %v6846
    %v6848 = vsel %vm6845, %v6847, %v6843
    %v6849 = vmul.f32 1.0, %v6848
    %v6850 = vrcp.pop %v6834
    %v6851 = vmul.f32 %v6834, %v6850
    %v6852 = vsub.f32 1.0, %v6851
    %v6853 = vmul.f32 %v6850, %v6852
    %v6854 = vadd.f32 %v6850, %v6853
    %vm6855 = vweird.f32 %v6834
    %vm6856 = vweird.f32 %v6850
    %vm6857 = vmor %vm6855, %vm6856
    %v6858 = vsel %vm6857, %v6850, %v6854
    %v6859 = vand.u32 2147483647, %v6834
    %vm6860 = vcmp.eq.f32.partialorder %v6859, 8.507059e+37
    %v6861 = vand.u32 %v6834, 2147483648
    %v6862 = vor.u32 1.1754944e-38, %v6861
    %v6863 = vsel %vm6860, %v6862, %v6858
    %v6864 = vmul.f32 1.0, %v6863
    %v6865 = vtanh.pop %v6785
    %v6866 = vtanh.pop %v6786
    %v6867 = vxor.u32 %v6787, 2147483648
    %v6868 = vxor.u32 %v6788, 2147483648
    %v6869 = vmul.f32 %v6867, 1.442695
    %v6870 = vpow.pop %v6869
    %v6871 = vmul.f32 %v6868, 1.442695
    %v6872 = vpow.pop %v6871
    %v6873 = vadd.f32 %v6870, 1.0
    %v6874 = vadd.f32 %v6872, 1.0
    %v6875 = vrcp.pop %v6873
    %v6876 = vmul.f32 %v6873, %v6875
    %v6877 = vsub.f32 1.0, %v6876
    %v6878 = vmul.f32 %v6875, %v6877
    %v6879 = vadd.f32 %v6875, %v6878
    %vm6880 = vweird.f32 %v6873
    %vm6881 = vweird.f32 %v6875
    %vm6882 = vmor %vm6880, %vm6881
    %v6883 = vsel %vm6882, %v6875, %v6879
    %v6884 = vand.u32 2147483647, %v6873
    %vm6885 = vcmp.eq.f32.partialorder %v6884, 8.507059e+37
    %v6886 = vand.u32 %v6873, 2147483648
    %v6887 = vor.u32 1.1754944e-38, %v6886
    %v6888 = vsel %vm6885, %v6887, %v6883
    %v6889 = vmul.f32 1.0, %v6888
    %v6890 = vrcp.pop %v6874
    %v6891 = vmul.f32 %v6874, %v6890
    %v6892 = vsub.f32 1.0, %v6891
    %v6893 = vmul.f32 %v6890, %v6892
    %v6894 = vadd.f32 %v6890, %v6893
    %vm6895 = vweird.f32 %v6874
    %vm6896 = vweird.f32 %v6890
    %vm6897 = vmor %vm6895, %vm6896
    %v6898 = vsel %vm6897, %v6890, %v6894
    %v6899 = vand.u32 2147483647, %v6874
    %vm6900 = vcmp.eq.f32.partialorder %v6899, 8.507059e+37
    %v6901 = vand.u32 %v6874, 2147483648
    %v6902 = vor.u32 1.1754944e-38, %v6901
    %v6903 = vsel %vm6900, %v6902, %v6898
    %v6904 = vmul.f32 1.0, %v6903
    %v6905 = vmul.f32 %v6849, %v6000
    %v6906 = vmul.f32 %v6864, %v6001
    %v6907 = vmul.f32 %v6811, %v6865
    %v6908 = vmul.f32 %v6826, %v6866
    %v6909 = vadd.f32 %v6905, %v6907
    %v6910 = vadd.f32 %v6906, %v6908
    %v6911 = vtanh.pop %v6909
    %v6912 = vtanh.pop %v6910
    %v6913 = vmul.f32 %v6889, %v6911
    %v6914 = vmul.f32 %v6904, %v6912
    %s6915 = scalar_lea.vmem %s0, 160
    %v6916 = vld [vmem:[%s6915] sm:$0xff]
    %v6917 = vld [vmem:[%s6915 + $0x8] sm:$0xff]
    %v6918 = vld [vmem:[%s6915 + $0x10] sm:$0xff]
    %v6919 = vld [vmem:[%s6915 + $0x18] sm:$0xff]
    %v6920 = vunpack.c.l.bf16 %v6916
    %v6921 = vunpack.c.h.bf16 %v6916
    %v6922 = vunpack.c.l.bf16 %v6917
    %v6923 = vunpack.c.h.bf16 %v6917
    %v6924 = vunpack.c.l.bf16 %v6918
    %v6925 = vunpack.c.h.bf16 %v6918
    %v6926 = vunpack.c.l.bf16 %v6919
    %v6927 = vunpack.c.h.bf16 %v6919
    %v6928 = vpack.c.bf16 %v6913, %v6913
    %v6929 = vpack.c.bf16 %v6914, %v6914
    %6930 = vmatpush.bf16.msra.mxu0 %v905
    %6931 = vmatpush.bf16.msra.mxu0 %v897
    %6932 = vmatpush.bf16.msra.mxu0 %v889
    %6933 = vmatpush.bf16.msra.mxu0 %v881
    %6934 = vmatpush.bf16.msra.mxu0 %v873
    %6935 = vmatpush.bf16.msra.mxu0 %v865
    %6936 = vmatpush.bf16.msra.mxu0 %v857
    %6937 = vmatpush.bf16.msra.mxu0 %v849
    %6938 = vmatmul.bf16.gmra.mxu0 %v6571
    %v6939 = vpop.f32.mrf.mxu0
    %v6940 = vadd.f32 0.0, %v6939
    %v6941 = vpop.f32.mrf.mxu0
    %6942 = vdwg.mxu0
    %6943 = vmatpush.bf16.msra.mxu0 %v969
    %6944 = vmatpush.bf16.msra.mxu0 %v961
    %6945 = vmatpush.bf16.msra.mxu0 %v953
    %6946 = vmatpush.bf16.msra.mxu0 %v945
    %6947 = vmatpush.bf16.msra.mxu0 %v937
    %6948 = vmatpush.bf16.msra.mxu0 %v929
    %6949 = vmatpush.bf16.msra.mxu0 %v921
    %6950 = vmatpush.bf16.msra.mxu0 %v913
    %6951 = vmatmul.bf16.gmra.mxu0 %v6572
    %v6952 = vpop.f32.mrf.mxu0
    %v6953 = vadd.f32 %v6940, %v6952
    %v6954 = vpop.f32.mrf.mxu0
    %6955 = vdwg.mxu0
    %6956 = vmatpush.bf16.msra.mxu0 %v906
    %6957 = vmatpush.bf16.msra.mxu0 %v898
    %6958 = vmatpush.bf16.msra.mxu0 %v890
    %6959 = vmatpush.bf16.msra.mxu0 %v882
    %6960 = vmatpush.bf16.msra.mxu0 %v874
    %6961 = vmatpush.bf16.msra.mxu0 %v866
    %6962 = vmatpush.bf16.msra.mxu0 %v858
    %6963 = vmatpush.bf16.msra.mxu0 %v850
    %6964 = vmatmul.bf16.gmra.mxu0 %v6571
    %v6965 = vpop.f32.mrf.mxu0
    %v6966 = vadd.f32 0.0, %v6965
    %v6967 = vpop.f32.mrf.mxu0
    %6968 = vdwg.mxu0
    %6969 = vmatpush.bf16.msra.mxu0 %v970
    %6970 = vmatpush.bf16.msra.mxu0 %v962
    %6971 = vmatpush.bf16.msra.mxu0 %v954
    %6972 = vmatpush.bf16.msra.mxu0 %v946
    %6973 = vmatpush.bf16.msra.mxu0 %v938
    %6974 = vmatpush.bf16.msra.mxu0 %v930
    %6975 = vmatpush.bf16.msra.mxu0 %v922
    %6976 = vmatpush.bf16.msra.mxu0 %v914
    %6977 = vmatmul.bf16.gmra.mxu0 %v6572
    %v6978 = vpop.f32.mrf.mxu0
    %v6979 = vadd.f32 %v6966, %v6978
    %v6980 = vpop.f32.mrf.mxu0
    %6981 = vdwg.mxu0
    %6982 = vmatpush.bf16.msra.mxu0 %v907
    %6983 = vmatpush.bf16.msra.mxu0 %v899
    %6984 = vmatpush.bf16.msra.mxu0 %v891
    %6985 = vmatpush.bf16.msra.mxu0 %v883
    %6986 = vmatpush.bf16.msra.mxu0 %v875
    %6987 = vmatpush.bf16.msra.mxu0 %v867
    %6988 = vmatpush.bf16.msra.mxu0 %v859
    %6989 = vmatpush.bf16.msra.mxu0 %v851
    %6990 = vmatmul.bf16.gmra.mxu0 %v6571
    %v6991 = vpop.f32.mrf.mxu0
    %v6992 = vadd.f32 0.0, %v6991
    %v6993 = vpop.f32.mrf.mxu0
    %6994 = vdwg.mxu0
    %6995 = vmatpush.bf16.msra.mxu0 %v971
    %6996 = vmatpush.bf16.msra.mxu0 %v963
    %6997 = vmatpush.bf16.msra.mxu0 %v955
    %6998 = vmatpush.bf16.msra.mxu0 %v947
    %6999 = vmatpush.bf16.msra.mxu0 %v939
    %7000 = vmatpush.bf16.msra.mxu0 %v931
    %7001 = vmatpush.bf16.msra.mxu0 %v923
    %7002 = vmatpush.bf16.msra.mxu0 %v915
    %7003 = vmatmul.bf16.gmra.mxu0 %v6572
    %v7004 = vpop.f32.mrf.mxu0
    %v7005 = vadd.f32 %v6992, %v7004
    %v7006 = vpop.f32.mrf.mxu0
    %7007 = vdwg.mxu0
    %7008 = vmatpush.bf16.msra.mxu0 %v908
    %7009 = vmatpush.bf16.msra.mxu0 %v900
    %7010 = vmatpush.bf16.msra.mxu0 %v892
    %7011 = vmatpush.bf16.msra.mxu0 %v884
    %7012 = vmatpush.bf16.msra.mxu0 %v876
    %7013 = vmatpush.bf16.msra.mxu0 %v868
    %7014 = vmatpush.bf16.msra.mxu0 %v860
    %7015 = vmatpush.bf16.msra.mxu0 %v852
    %7016 = vmatmul.bf16.gmra.mxu0 %v6571
    %v7017 = vpop.f32.mrf.mxu0
    %v7018 = vadd.f32 0.0, %v7017
    %v7019 = vpop.f32.mrf.mxu0
    %7020 = vdwg.mxu0
    %7021 = vmatpush.bf16.msra.mxu0 %v972
    %7022 = vmatpush.bf16.msra.mxu0 %v964
    %7023 = vmatpush.bf16.msra.mxu0 %v956
    %7024 = vmatpush.bf16.msra.mxu0 %v948
    %7025 = vmatpush.bf16.msra.mxu0 %v940
    %7026 = vmatpush.bf16.msra.mxu0 %v932
    %7027 = vmatpush.bf16.msra.mxu0 %v924
    %7028 = vmatpush.bf16.msra.mxu0 %v916
    %7029 = vmatmul.bf16.gmra.mxu0 %v6572
    %v7030 = vpop.f32.mrf.mxu0
    %v7031 = vadd.f32 %v7018, %v7030
    %v7032 = vpop.f32.mrf.mxu0
    %7033 = vdwg.mxu0
    %7034 = vmatpush.bf16.msra.mxu0 %v909
    %7035 = vmatpush.bf16.msra.mxu0 %v901
    %7036 = vmatpush.bf16.msra.mxu0 %v893
    %7037 = vmatpush.bf16.msra.mxu0 %v885
    %7038 = vmatpush.bf16.msra.mxu0 %v877
    %7039 = vmatpush.bf16.msra.mxu0 %v869
    %7040 = vmatpush.bf16.msra.mxu0 %v861
    %7041 = vmatpush.bf16.msra.mxu0 %v853
    %7042 = vmatmul.bf16.gmra.mxu0 %v6571
    %v7043 = vpop.f32.mrf.mxu0
    %v7044 = vadd.f32 0.0, %v7043
    %v7045 = vpop.f32.mrf.mxu0
    %7046 = vdwg.mxu0
    %7047 = vmatpush.bf16.msra.mxu0 %v973
    %7048 = vmatpush.bf16.msra.mxu0 %v965
    %7049 = vmatpush.bf16.msra.mxu0 %v957
    %7050 = vmatpush.bf16.msra.mxu0 %v949
    %7051 = vmatpush.bf16.msra.mxu0 %v941
    %7052 = vmatpush.bf16.msra.mxu0 %v933
    %7053 = vmatpush.bf16.msra.mxu0 %v925
    %7054 = vmatpush.bf16.msra.mxu0 %v917
    %7055 = vmatmul.bf16.gmra.mxu0 %v6572
    %v7056 = vpop.f32.mrf.mxu0
    %v7057 = vadd.f32 %v7044, %v7056
    %v7058 = vpop.f32.mrf.mxu0
    %7059 = vdwg.mxu0
    %7060 = vmatpush.bf16.msra.mxu0 %v910
    %7061 = vmatpush.bf16.msra.mxu0 %v902
    %7062 = vmatpush.bf16.msra.mxu0 %v894
    %7063 = vmatpush.bf16.msra.mxu0 %v886
    %7064 = vmatpush.bf16.msra.mxu0 %v878
    %7065 = vmatpush.bf16.msra.mxu0 %v870
    %7066 = vmatpush.bf16.msra.mxu0 %v862
    %7067 = vmatpush.bf16.msra.mxu0 %v854
    %7068 = vmatmul.bf16.gmra.mxu0 %v6571
    %v7069 = vpop.f32.mrf.mxu0
    %v7070 = vadd.f32 0.0, %v7069
    %v7071 = vpop.f32.mrf.mxu0
    %7072 = vdwg.mxu0
    %7073 = vmatpush.bf16.msra.mxu0 %v974
    %7074 = vmatpush.bf16.msra.mxu0 %v966
    %7075 = vmatpush.bf16.msra.mxu0 %v958
    %7076 = vmatpush.bf16.msra.mxu0 %v950
    %7077 = vmatpush.bf16.msra.mxu0 %v942
    %7078 = vmatpush.bf16.msra.mxu0 %v934
    %7079 = vmatpush.bf16.msra.mxu0 %v926
    %7080 = vmatpush.bf16.msra.mxu0 %v918
    %7081 = vmatmul.bf16.gmra.mxu0 %v6572
    %v7082 = vpop.f32.mrf.mxu0
    %v7083 = vadd.f32 %v7070, %v7082
    %v7084 = vpop.f32.mrf.mxu0
    %7085 = vdwg.mxu0
    %7086 = vmatpush.bf16.msra.mxu0 %v911
    %7087 = vmatpush.bf16.msra.mxu0 %v903
    %7088 = vmatpush.bf16.msra.mxu0 %v895
    %7089 = vmatpush.bf16.msra.mxu0 %v887
    %7090 = vmatpush.bf16.msra.mxu0 %v879
    %7091 = vmatpush.bf16.msra.mxu0 %v871
    %7092 = vmatpush.bf16.msra.mxu0 %v863
    %7093 = vmatpush.bf16.msra.mxu0 %v855
    %7094 = vmatmul.bf16.gmra.mxu0 %v6571
    %v7095 = vpop.f32.mrf.mxu0
    %v7096 = vadd.f32 0.0, %v7095
    %v7097 = vpop.f32.mrf.mxu0
    %7098 = vdwg.mxu0
    %7099 = vmatpush.bf16.msra.mxu0 %v975
    %7100 = vmatpush.bf16.msra.mxu0 %v967
    %7101 = vmatpush.bf16.msra.mxu0 %v959
    %7102 = vmatpush.bf16.msra.mxu0 %v951
    %7103 = vmatpush.bf16.msra.mxu0 %v943
    %7104 = vmatpush.bf16.msra.mxu0 %v935
    %7105 = vmatpush.bf16.msra.mxu0 %v927
    %7106 = vmatpush.bf16.msra.mxu0 %v919
    %7107 = vmatmul.bf16.gmra.mxu0 %v6572
    %v7108 = vpop.f32.mrf.mxu0
    %v7109 = vadd.f32 %v7096, %v7108
    %v7110 = vpop.f32.mrf.mxu0
    %7111 = vdwg.mxu0
    %7112 = vmatpush.bf16.msra.mxu0 %v912
    %7113 = vmatpush.bf16.msra.mxu0 %v904
    %7114 = vmatpush.bf16.msra.mxu0 %v896
    %7115 = vmatpush.bf16.msra.mxu0 %v888
    %7116 = vmatpush.bf16.msra.mxu0 %v880
    %7117 = vmatpush.bf16.msra.mxu0 %v872
    %7118 = vmatpush.bf16.msra.mxu0 %v864
    %7119 = vmatpush.bf16.msra.mxu0 %v856
    %7120 = vmatmul.bf16.gmra.mxu0 %v6571
    %v7121 = vpop.f32.mrf.mxu0
    %v7122 = vadd.f32 0.0, %v7121
    %v7123 = vpop.f32.mrf.mxu0
    %7124 = vdwg.mxu0
    %7125 = vmatpush.bf16.msra.mxu0 %v976
    %7126 = vmatpush.bf16.msra.mxu0 %v968
    %7127 = vmatpush.bf16.msra.mxu0 %v960
    %7128 = vmatpush.bf16.msra.mxu0 %v952
    %7129 = vmatpush.bf16.msra.mxu0 %v944
    %7130 = vmatpush.bf16.msra.mxu0 %v936
    %7131 = vmatpush.bf16.msra.mxu0 %v928
    %7132 = vmatpush.bf16.msra.mxu0 %v920
    %7133 = vmatmul.bf16.gmra.mxu0 %v6572
    %v7134 = vpop.f32.mrf.mxu0
    %v7135 = vadd.f32 %v7122, %v7134
    %v7136 = vpop.f32.mrf.mxu0
    %7137 = vdwg.mxu0
    %v7138 = vadd.f32 %v6920, %v6953
    %v7139 = vadd.f32 %v6921, %v6979
    %v7140 = vadd.f32 %v6922, %v7005
    %v7141 = vadd.f32 %v6923, %v7031
    %v7142 = vadd.f32 %v6924, %v7057
    %v7143 = vadd.f32 %v6925, %v7083
    %v7144 = vadd.f32 %v6926, %v7109
    %v7145 = vadd.f32 %v6927, %v7135
    %v7146 = vxor.u32 %v7138, 2147483648
    %v7147 = vxor.u32 %v7139, 2147483648
    %v7148 = vmul.f32 %v7146, 1.442695
    %v7149 = vpow.pop %v7148
    %v7150 = vmul.f32 %v7147, 1.442695
    %v7151 = vpow.pop %v7150
    %v7152 = vadd.f32 %v7149, 1.0
    %v7153 = vadd.f32 %v7151, 1.0
    %v7154 = vrcp.pop %v7152
    %v7155 = vmul.f32 %v7152, %v7154
    %v7156 = vsub.f32 1.0, %v7155
    %v7157 = vmul.f32 %v7154, %v7156
    %v7158 = vadd.f32 %v7154, %v7157
    %vm7159 = vweird.f32 %v7152
    %vm7160 = vweird.f32 %v7154
    %vm7161 = vmor %vm7159, %vm7160
    %v7162 = vsel %vm7161, %v7154, %v7158
    %v7163 = vand.u32 2147483647, %v7152
    %vm7164 = vcmp.eq.f32.partialorder %v7163, 8.507059e+37
    %v7165 = vand.u32 %v7152, 2147483648
    %v7166 = vor.u32 1.1754944e-38, %v7165
    %v7167 = vsel %vm7164, %v7166, %v7162
    %v7168 = vmul.f32 1.0, %v7167
    %v7169 = vrcp.pop %v7153
    %v7170 = vmul.f32 %v7153, %v7169
    %v7171 = vsub.f32 1.0, %v7170
    %v7172 = vmul.f32 %v7169, %v7171
    %v7173 = vadd.f32 %v7169, %v7172
    %vm7174 = vweird.f32 %v7153
    %vm7175 = vweird.f32 %v7169
    %vm7176 = vmor %vm7174, %vm7175
    %v7177 = vsel %vm7176, %v7169, %v7173
    %v7178 = vand.u32 2147483647, %v7153
    %vm7179 = vcmp.eq.f32.partialorder %v7178, 8.507059e+37
    %v7180 = vand.u32 %v7153, 2147483648
    %v7181 = vor.u32 1.1754944e-38, %v7180
    %v7182 = vsel %vm7179, %v7181, %v7177
    %v7183 = vmul.f32 1.0, %v7182
    %v7184 = vxor.u32 %v7140, 2147483648
    %v7185 = vxor.u32 %v7141, 2147483648
    %v7186 = vmul.f32 %v7184, 1.442695
    %v7187 = vpow.pop %v7186
    %v7188 = vmul.f32 %v7185, 1.442695
    %v7189 = vpow.pop %v7188
    %v7190 = vadd.f32 %v7187, 1.0
    %v7191 = vadd.f32 %v7189, 1.0
    %v7192 = vrcp.pop %v7190
    %v7193 = vmul.f32 %v7190, %v7192
    %v7194 = vsub.f32 1.0, %v7193
    %v7195 = vmul.f32 %v7192, %v7194
    %v7196 = vadd.f32 %v7192, %v7195
    %vm7197 = vweird.f32 %v7190
    %vm7198 = vweird.f32 %v7192
    %vm7199 = vmor %vm7197, %vm7198
    %v7200 = vsel %vm7199, %v7192, %v7196
    %v7201 = vand.u32 2147483647, %v7190
    %vm7202 = vcmp.eq.f32.partialorder %v7201, 8.507059e+37
    %v7203 = vand.u32 %v7190, 2147483648
    %v7204 = vor.u32 1.1754944e-38, %v7203
    %v7205 = vsel %vm7202, %v7204, %v7200
    %v7206 = vmul.f32 1.0, %v7205
    %v7207 = vrcp.pop %v7191
    %v7208 = vmul.f32 %v7191, %v7207
    %v7209 = vsub.f32 1.0, %v7208
    %v7210 = vmul.f32 %v7207, %v7209
    %v7211 = vadd.f32 %v7207, %v7210
    %vm7212 = vweird.f32 %v7191
    %vm7213 = vweird.f32 %v7207
    %vm7214 = vmor %vm7212, %vm7213
    %v7215 = vsel %vm7214, %v7207, %v7211
    %v7216 = vand.u32 2147483647, %v7191
    %vm7217 = vcmp.eq.f32.partialorder %v7216, 8.507059e+37
    %v7218 = vand.u32 %v7191, 2147483648
    %v7219 = vor.u32 1.1754944e-38, %v7218
    %v7220 = vsel %vm7217, %v7219, %v7215
    %v7221 = vmul.f32 1.0, %v7220
    %v7222 = vtanh.pop %v7142
    %v7223 = vtanh.pop %v7143
    %v7224 = vxor.u32 %v7144, 2147483648
    %v7225 = vxor.u32 %v7145, 2147483648
    %v7226 = vmul.f32 %v7224, 1.442695
    %v7227 = vpow.pop %v7226
    %v7228 = vmul.f32 %v7225, 1.442695
    %v7229 = vpow.pop %v7228
    %v7230 = vadd.f32 %v7227, 1.0
    %v7231 = vadd.f32 %v7229, 1.0
    %v7232 = vrcp.pop %v7230
    %v7233 = vmul.f32 %v7230, %v7232
    %v7234 = vsub.f32 1.0, %v7233
    %v7235 = vmul.f32 %v7232, %v7234
    %v7236 = vadd.f32 %v7232, %v7235
    %vm7237 = vweird.f32 %v7230
    %vm7238 = vweird.f32 %v7232
    %vm7239 = vmor %vm7237, %vm7238
    %v7240 = vsel %vm7239, %v7232, %v7236
    %v7241 = vand.u32 2147483647, %v7230
    %vm7242 = vcmp.eq.f32.partialorder %v7241, 8.507059e+37
    %v7243 = vand.u32 %v7230, 2147483648
    %v7244 = vor.u32 1.1754944e-38, %v7243
    %v7245 = vsel %vm7242, %v7244, %v7240
    %v7246 = vmul.f32 1.0, %v7245
    %v7247 = vrcp.pop %v7231
    %v7248 = vmul.f32 %v7231, %v7247
    %v7249 = vsub.f32 1.0, %v7248
    %v7250 = vmul.f32 %v7247, %v7249
    %v7251 = vadd.f32 %v7247, %v7250
    %vm7252 = vweird.f32 %v7231
    %vm7253 = vweird.f32 %v7247
    %vm7254 = vmor %vm7252, %vm7253
    %v7255 = vsel %vm7254, %v7247, %v7251
    %v7256 = vand.u32 2147483647, %v7231
    %vm7257 = vcmp.eq.f32.partialorder %v7256, 8.507059e+37
    %v7258 = vand.u32 %v7231, 2147483648
    %v7259 = vor.u32 1.1754944e-38, %v7258
    %v7260 = vsel %vm7257, %v7259, %v7255
    %v7261 = vmul.f32 1.0, %v7260
    %v7262 = vmul.f32 %v7206, %v6357
    %v7263 = vmul.f32 %v7221, %v6358
    %v7264 = vmul.f32 %v7168, %v7222
    %v7265 = vmul.f32 %v7183, %v7223
    %v7266 = vadd.f32 %v7262, %v7264
    %v7267 = vadd.f32 %v7263, %v7265
    %v7268 = vtanh.pop %v7266
    %v7269 = vtanh.pop %v7267
    %v7270 = vmul.f32 %v7246, %v7268
    %v7271 = vmul.f32 %v7261, %v7269
    %7272 = vmatpush.bf16.msra.mxu0 %v1887
    %7273 = vmatpush.bf16.msra.mxu0 %v1879
    %7274 = vmatpush.bf16.msra.mxu0 %v1871
    %7275 = vmatpush.bf16.msra.mxu0 %v1863
    %7276 = vmatpush.bf16.msra.mxu0 %v1855
    %7277 = vmatpush.bf16.msra.mxu0 %v1847
    %7278 = vmatpush.bf16.msra.mxu0 %v1839
    %7279 = vmatpush.bf16.msra.mxu0 %v1831
    %7280 = vmatmul.bf16.gmra.mxu0 %v6928
    %v7281 = vpop.f32.mrf.mxu0
    %v7282 = vadd.f32 %v425, %v7281
    %v7283 = vpop.f32.mrf.mxu0
    %7284 = vdwg.mxu0
    %7285 = vmatpush.bf16.msra.mxu0 %v1951
    %7286 = vmatpush.bf16.msra.mxu0 %v1943
    %7287 = vmatpush.bf16.msra.mxu0 %v1935
    %7288 = vmatpush.bf16.msra.mxu0 %v1927
    %7289 = vmatpush.bf16.msra.mxu0 %v1919
    %7290 = vmatpush.bf16.msra.mxu0 %v1911
    %7291 = vmatpush.bf16.msra.mxu0 %v1903
    %7292 = vmatpush.bf16.msra.mxu0 %v1895
    %7293 = vmatmul.bf16.gmra.mxu0 %v6929
    %v7294 = vpop.f32.mrf.mxu0
    %v7295 = vadd.f32 %v7282, %v7294
    %v7296 = vpop.f32.mrf.mxu0
    %7297 = vdwg.mxu0
    %7298 = vmatpush.bf16.msra.mxu0 %v1888
    %7299 = vmatpush.bf16.msra.mxu0 %v1880
    %7300 = vmatpush.bf16.msra.mxu0 %v1872
    %7301 = vmatpush.bf16.msra.mxu0 %v1864
    %7302 = vmatpush.bf16.msra.mxu0 %v1856
    %7303 = vmatpush.bf16.msra.mxu0 %v1848
    %7304 = vmatpush.bf16.msra.mxu0 %v1840
    %7305 = vmatpush.bf16.msra.mxu0 %v1832
    %7306 = vmatmul.bf16.gmra.mxu0 %v6928
    %v7307 = vpop.f32.mrf.mxu0
    %v7308 = vadd.f32 %v426, %v7307
    %v7309 = vpop.f32.mrf.mxu0
    %7310 = vdwg.mxu0
    %7311 = vmatpush.bf16.msra.mxu0 %v1952
    %7312 = vmatpush.bf16.msra.mxu0 %v1944
    %7313 = vmatpush.bf16.msra.mxu0 %v1936
    %7314 = vmatpush.bf16.msra.mxu0 %v1928
    %7315 = vmatpush.bf16.msra.mxu0 %v1920
    %7316 = vmatpush.bf16.msra.mxu0 %v1912
    %7317 = vmatpush.bf16.msra.mxu0 %v1904
    %7318 = vmatpush.bf16.msra.mxu0 %v1896
    %7319 = vmatmul.bf16.gmra.mxu0 %v6929
    %v7320 = vpop.f32.mrf.mxu0
    %v7321 = vadd.f32 %v7308, %v7320
    %v7322 = vpop.f32.mrf.mxu0
    %7323 = vdwg.mxu0
    %7324 = vmatpush.bf16.msra.mxu0 %v1889
    %7325 = vmatpush.bf16.msra.mxu0 %v1881
    %7326 = vmatpush.bf16.msra.mxu0 %v1873
    %7327 = vmatpush.bf16.msra.mxu0 %v1865
    %7328 = vmatpush.bf16.msra.mxu0 %v1857
    %7329 = vmatpush.bf16.msra.mxu0 %v1849
    %7330 = vmatpush.bf16.msra.mxu0 %v1841
    %7331 = vmatpush.bf16.msra.mxu0 %v1833
    %7332 = vmatmul.bf16.gmra.mxu0 %v6928
    %v7333 = vpop.f32.mrf.mxu0
    %v7334 = vadd.f32 %v427, %v7333
    %v7335 = vpop.f32.mrf.mxu0
    %7336 = vdwg.mxu0
    %7337 = vmatpush.bf16.msra.mxu0 %v1953
    %7338 = vmatpush.bf16.msra.mxu0 %v1945
    %7339 = vmatpush.bf16.msra.mxu0 %v1937
    %7340 = vmatpush.bf16.msra.mxu0 %v1929
    %7341 = vmatpush.bf16.msra.mxu0 %v1921
    %7342 = vmatpush.bf16.msra.mxu0 %v1913
    %7343 = vmatpush.bf16.msra.mxu0 %v1905
    %7344 = vmatpush.bf16.msra.mxu0 %v1897
    %7345 = vmatmul.bf16.gmra.mxu0 %v6929
    %v7346 = vpop.f32.mrf.mxu0
    %v7347 = vadd.f32 %v7334, %v7346
    %v7348 = vpop.f32.mrf.mxu0
    %7349 = vdwg.mxu0
    %7350 = vmatpush.bf16.msra.mxu0 %v1890
    %7351 = vmatpush.bf16.msra.mxu0 %v1882
    %7352 = vmatpush.bf16.msra.mxu0 %v1874
    %7353 = vmatpush.bf16.msra.mxu0 %v1866
    %7354 = vmatpush.bf16.msra.mxu0 %v1858
    %7355 = vmatpush.bf16.msra.mxu0 %v1850
    %7356 = vmatpush.bf16.msra.mxu0 %v1842
    %7357 = vmatpush.bf16.msra.mxu0 %v1834
    %7358 = vmatmul.bf16.gmra.mxu0 %v6928
    %v7359 = vpop.f32.mrf.mxu0
    %v7360 = vadd.f32 %v428, %v7359
    %v7361 = vpop.f32.mrf.mxu0
    %7362 = vdwg.mxu0
    %7363 = vmatpush.bf16.msra.mxu0 %v1954
    %7364 = vmatpush.bf16.msra.mxu0 %v1946
    %7365 = vmatpush.bf16.msra.mxu0 %v1938
    %7366 = vmatpush.bf16.msra.mxu0 %v1930
    %7367 = vmatpush.bf16.msra.mxu0 %v1922
    %7368 = vmatpush.bf16.msra.mxu0 %v1914
    %7369 = vmatpush.bf16.msra.mxu0 %v1906
    %7370 = vmatpush.bf16.msra.mxu0 %v1898
    %7371 = vmatmul.bf16.gmra.mxu0 %v6929
    %v7372 = vpop.f32.mrf.mxu0
    %v7373 = vadd.f32 %v7360, %v7372
    %v7374 = vpop.f32.mrf.mxu0
    %7375 = vdwg.mxu0
    %7376 = vmatpush.bf16.msra.mxu0 %v1891
    %7377 = vmatpush.bf16.msra.mxu0 %v1883
    %7378 = vmatpush.bf16.msra.mxu0 %v1875
    %7379 = vmatpush.bf16.msra.mxu0 %v1867
    %7380 = vmatpush.bf16.msra.mxu0 %v1859
    %7381 = vmatpush.bf16.msra.mxu0 %v1851
    %7382 = vmatpush.bf16.msra.mxu0 %v1843
    %7383 = vmatpush.bf16.msra.mxu0 %v1835
    %7384 = vmatmul.bf16.gmra.mxu0 %v6928
    %v7385 = vpop.f32.mrf.mxu0
    %v7386 = vadd.f32 %v429, %v7385
    %v7387 = vpop.f32.mrf.mxu0
    %7388 = vdwg.mxu0
    %7389 = vmatpush.bf16.msra.mxu0 %v1955
    %7390 = vmatpush.bf16.msra.mxu0 %v1947
    %7391 = vmatpush.bf16.msra.mxu0 %v1939
    %7392 = vmatpush.bf16.msra.mxu0 %v1931
    %7393 = vmatpush.bf16.msra.mxu0 %v1923
    %7394 = vmatpush.bf16.msra.mxu0 %v1915
    %7395 = vmatpush.bf16.msra.mxu0 %v1907
    %7396 = vmatpush.bf16.msra.mxu0 %v1899
    %7397 = vmatmul.bf16.gmra.mxu0 %v6929
    %v7398 = vpop.f32.mrf.mxu0
    %v7399 = vadd.f32 %v7386, %v7398
    %v7400 = vpop.f32.mrf.mxu0
    %7401 = vdwg.mxu0
    %7402 = vmatpush.bf16.msra.mxu0 %v1892
    %7403 = vmatpush.bf16.msra.mxu0 %v1884
    %7404 = vmatpush.bf16.msra.mxu0 %v1876
    %7405 = vmatpush.bf16.msra.mxu0 %v1868
    %7406 = vmatpush.bf16.msra.mxu0 %v1860
    %7407 = vmatpush.bf16.msra.mxu0 %v1852
    %7408 = vmatpush.bf16.msra.mxu0 %v1844
    %7409 = vmatpush.bf16.msra.mxu0 %v1836
    %7410 = vmatmul.bf16.gmra.mxu0 %v6928
    %v7411 = vpop.f32.mrf.mxu0
    %v7412 = vadd.f32 %v430, %v7411
    %v7413 = vpop.f32.mrf.mxu0
    %7414 = vdwg.mxu0
    %7415 = vmatpush.bf16.msra.mxu0 %v1956
    %7416 = vmatpush.bf16.msra.mxu0 %v1948
    %7417 = vmatpush.bf16.msra.mxu0 %v1940
    %7418 = vmatpush.bf16.msra.mxu0 %v1932
    %7419 = vmatpush.bf16.msra.mxu0 %v1924
    %7420 = vmatpush.bf16.msra.mxu0 %v1916
    %7421 = vmatpush.bf16.msra.mxu0 %v1908
    %7422 = vmatpush.bf16.msra.mxu0 %v1900
    %7423 = vmatmul.bf16.gmra.mxu0 %v6929
    %v7424 = vpop.f32.mrf.mxu0
    %v7425 = vadd.f32 %v7412, %v7424
    %v7426 = vpop.f32.mrf.mxu0
    %7427 = vdwg.mxu0
    %7428 = vmatpush.bf16.msra.mxu0 %v1893
    %7429 = vmatpush.bf16.msra.mxu0 %v1885
    %7430 = vmatpush.bf16.msra.mxu0 %v1877
    %7431 = vmatpush.bf16.msra.mxu0 %v1869
    %7432 = vmatpush.bf16.msra.mxu0 %v1861
    %7433 = vmatpush.bf16.msra.mxu0 %v1853
    %7434 = vmatpush.bf16.msra.mxu0 %v1845
    %7435 = vmatpush.bf16.msra.mxu0 %v1837
    %7436 = vmatmul.bf16.gmra.mxu0 %v6928
    %v7437 = vpop.f32.mrf.mxu0
    %v7438 = vadd.f32 %v431, %v7437
    %v7439 = vpop.f32.mrf.mxu0
    %7440 = vdwg.mxu0
    %7441 = vmatpush.bf16.msra.mxu0 %v1957
    %7442 = vmatpush.bf16.msra.mxu0 %v1949
    %7443 = vmatpush.bf16.msra.mxu0 %v1941
    %7444 = vmatpush.bf16.msra.mxu0 %v1933
    %7445 = vmatpush.bf16.msra.mxu0 %v1925
    %7446 = vmatpush.bf16.msra.mxu0 %v1917
    %7447 = vmatpush.bf16.msra.mxu0 %v1909
    %7448 = vmatpush.bf16.msra.mxu0 %v1901
    %7449 = vmatmul.bf16.gmra.mxu0 %v6929
    %v7450 = vpop.f32.mrf.mxu0
    %v7451 = vadd.f32 %v7438, %v7450
    %v7452 = vpop.f32.mrf.mxu0
    %7453 = vdwg.mxu0
    %7454 = vmatpush.bf16.msra.mxu0 %v1894
    %7455 = vmatpush.bf16.msra.mxu0 %v1886
    %7456 = vmatpush.bf16.msra.mxu0 %v1878
    %7457 = vmatpush.bf16.msra.mxu0 %v1870
    %7458 = vmatpush.bf16.msra.mxu0 %v1862
    %7459 = vmatpush.bf16.msra.mxu0 %v1854
    %7460 = vmatpush.bf16.msra.mxu0 %v1846
    %7461 = vmatpush.bf16.msra.mxu0 %v1838
    %7462 = vmatmul.bf16.gmra.mxu0 %v6928
    %v7463 = vpop.f32.mrf.mxu0
    %v7464 = vadd.f32 %v432, %v7463
    %v7465 = vpop.f32.mrf.mxu0
    %7466 = vdwg.mxu0
    %7467 = vmatpush.bf16.msra.mxu0 %v1958
    %7468 = vmatpush.bf16.msra.mxu0 %v1950
    %7469 = vmatpush.bf16.msra.mxu0 %v1942
    %7470 = vmatpush.bf16.msra.mxu0 %v1934
    %7471 = vmatpush.bf16.msra.mxu0 %v1926
    %7472 = vmatpush.bf16.msra.mxu0 %v1918
    %7473 = vmatpush.bf16.msra.mxu0 %v1910
    %7474 = vmatpush.bf16.msra.mxu0 %v1902
    %7475 = vmatmul.bf16.gmra.mxu0 %v6929
    %v7476 = vpop.f32.mrf.mxu0
    %v7477 = vadd.f32 %v7464, %v7476
    %v7478 = vpop.f32.mrf.mxu0
    %7479 = vdwg.mxu0
    %v7480 = vpack.c.bf16 %v7270, %v7270
    %v7481 = vpack.c.bf16 %v7271, %v7271
    %7482 = vmatpush.bf16.msra.mxu0 %v2737
    %7483 = vmatpush.bf16.msra.mxu0 %v2729
    %7484 = vmatpush.bf16.msra.mxu0 %v2721
    %7485 = vmatpush.bf16.msra.mxu0 %v2713
    %7486 = vmatpush.bf16.msra.mxu0 %v2705
    %7487 = vmatpush.bf16.msra.mxu0 %v2697
    %7488 = vmatpush.bf16.msra.mxu0 %v2689
    %7489 = vmatpush.bf16.msra.mxu0 %v2681
    %7490 = vmatmul.bf16.gmra.mxu0 %v7480
    %v7491 = vpop.f32.mrf.mxu0
    %v7492 = vadd.f32 0.0, %v7491
    %v7493 = vpop.f32.mrf.mxu0
    %7494 = vdwg.mxu0
    %7495 = vmatpush.bf16.msra.mxu0 %v2801
    %7496 = vmatpush.bf16.msra.mxu0 %v2793
    %7497 = vmatpush.bf16.msra.mxu0 %v2785
    %7498 = vmatpush.bf16.msra.mxu0 %v2777
    %7499 = vmatpush.bf16.msra.mxu0 %v2769
    %7500 = vmatpush.bf16.msra.mxu0 %v2761
    %7501 = vmatpush.bf16.msra.mxu0 %v2753
    %7502 = vmatpush.bf16.msra.mxu0 %v2745
    %7503 = vmatmul.bf16.gmra.mxu0 %v7481
    %v7504 = vpop.f32.mrf.mxu0
    %v7505 = vadd.f32 %v7492, %v7504
    %v7506 = vpop.f32.mrf.mxu0
    %7507 = vdwg.mxu0
    %7508 = vmatpush.bf16.msra.mxu0 %v2738
    %7509 = vmatpush.bf16.msra.mxu0 %v2730
    %7510 = vmatpush.bf16.msra.mxu0 %v2722
    %7511 = vmatpush.bf16.msra.mxu0 %v2714
    %7512 = vmatpush.bf16.msra.mxu0 %v2706
    %7513 = vmatpush.bf16.msra.mxu0 %v2698
    %7514 = vmatpush.bf16.msra.mxu0 %v2690
    %7515 = vmatpush.bf16.msra.mxu0 %v2682
    %7516 = vmatmul.bf16.gmra.mxu0 %v7480
    %v7517 = vpop.f32.mrf.mxu0
    %v7518 = vadd.f32 0.0, %v7517
    %v7519 = vpop.f32.mrf.mxu0
    %7520 = vdwg.mxu0
    %7521 = vmatpush.bf16.msra.mxu0 %v2802
    %7522 = vmatpush.bf16.msra.mxu0 %v2794
    %7523 = vmatpush.bf16.msra.mxu0 %v2786
    %7524 = vmatpush.bf16.msra.mxu0 %v2778
    %7525 = vmatpush.bf16.msra.mxu0 %v2770
    %7526 = vmatpush.bf16.msra.mxu0 %v2762
    %7527 = vmatpush.bf16.msra.mxu0 %v2754
    %7528 = vmatpush.bf16.msra.mxu0 %v2746
    %7529 = vmatmul.bf16.gmra.mxu0 %v7481
    %v7530 = vpop.f32.mrf.mxu0
    %v7531 = vadd.f32 %v7518, %v7530
    %v7532 = vpop.f32.mrf.mxu0
    %7533 = vdwg.mxu0
    %7534 = vmatpush.bf16.msra.mxu0 %v2739
    %7535 = vmatpush.bf16.msra.mxu0 %v2731
    %7536 = vmatpush.bf16.msra.mxu0 %v2723
    %7537 = vmatpush.bf16.msra.mxu0 %v2715
    %7538 = vmatpush.bf16.msra.mxu0 %v2707
    %7539 = vmatpush.bf16.msra.mxu0 %v2699
    %7540 = vmatpush.bf16.msra.mxu0 %v2691
    %7541 = vmatpush.bf16.msra.mxu0 %v2683
    %7542 = vmatmul.bf16.gmra.mxu0 %v7480
    %v7543 = vpop.f32.mrf.mxu0
    %v7544 = vadd.f32 0.0, %v7543
    %v7545 = vpop.f32.mrf.mxu0
    %7546 = vdwg.mxu0
    %7547 = vmatpush.bf16.msra.mxu0 %v2803
    %7548 = vmatpush.bf16.msra.mxu0 %v2795
    %7549 = vmatpush.bf16.msra.mxu0 %v2787
    %7550 = vmatpush.bf16.msra.mxu0 %v2779
    %7551 = vmatpush.bf16.msra.mxu0 %v2771
    %7552 = vmatpush.bf16.msra.mxu0 %v2763
    %7553 = vmatpush.bf16.msra.mxu0 %v2755
    %7554 = vmatpush.bf16.msra.mxu0 %v2747
    %7555 = vmatmul.bf16.gmra.mxu0 %v7481
    %v7556 = vpop.f32.mrf.mxu0
    %v7557 = vadd.f32 %v7544, %v7556
    %v7558 = vpop.f32.mrf.mxu0
    %7559 = vdwg.mxu0
    %7560 = vmatpush.bf16.msra.mxu0 %v2740
    %7561 = vmatpush.bf16.msra.mxu0 %v2732
    %7562 = vmatpush.bf16.msra.mxu0 %v2724
    %7563 = vmatpush.bf16.msra.mxu0 %v2716
    %7564 = vmatpush.bf16.msra.mxu0 %v2708
    %7565 = vmatpush.bf16.msra.mxu0 %v2700
    %7566 = vmatpush.bf16.msra.mxu0 %v2692
    %7567 = vmatpush.bf16.msra.mxu0 %v2684
    %7568 = vmatmul.bf16.gmra.mxu0 %v7480
    %v7569 = vpop.f32.mrf.mxu0
    %v7570 = vadd.f32 0.0, %v7569
    %v7571 = vpop.f32.mrf.mxu0
    %7572 = vdwg.mxu0
    %7573 = vmatpush.bf16.msra.mxu0 %v2804
    %7574 = vmatpush.bf16.msra.mxu0 %v2796
    %7575 = vmatpush.bf16.msra.mxu0 %v2788
    %7576 = vmatpush.bf16.msra.mxu0 %v2780
    %7577 = vmatpush.bf16.msra.mxu0 %v2772
    %7578 = vmatpush.bf16.msra.mxu0 %v2764
    %7579 = vmatpush.bf16.msra.mxu0 %v2756
    %7580 = vmatpush.bf16.msra.mxu0 %v2748
    %7581 = vmatmul.bf16.gmra.mxu0 %v7481
    %v7582 = vpop.f32.mrf.mxu0
    %v7583 = vadd.f32 %v7570, %v7582
    %v7584 = vpop.f32.mrf.mxu0
    %7585 = vdwg.mxu0
    %7586 = vmatpush.bf16.msra.mxu0 %v2741
    %7587 = vmatpush.bf16.msra.mxu0 %v2733
    %7588 = vmatpush.bf16.msra.mxu0 %v2725
    %7589 = vmatpush.bf16.msra.mxu0 %v2717
    %7590 = vmatpush.bf16.msra.mxu0 %v2709
    %7591 = vmatpush.bf16.msra.mxu0 %v2701
    %7592 = vmatpush.bf16.msra.mxu0 %v2693
    %7593 = vmatpush.bf16.msra.mxu0 %v2685
    %7594 = vmatmul.bf16.gmra.mxu0 %v7480
    %v7595 = vpop.f32.mrf.mxu0
    %v7596 = vadd.f32 0.0, %v7595
    %v7597 = vpop.f32.mrf.mxu0
    %7598 = vdwg.mxu0
    %7599 = vmatpush.bf16.msra.mxu0 %v2805
    %7600 = vmatpush.bf16.msra.mxu0 %v2797
    %7601 = vmatpush.bf16.msra.mxu0 %v2789
    %7602 = vmatpush.bf16.msra.mxu0 %v2781
    %7603 = vmatpush.bf16.msra.mxu0 %v2773
    %7604 = vmatpush.bf16.msra.mxu0 %v2765
    %7605 = vmatpush.bf16.msra.mxu0 %v2757
    %7606 = vmatpush.bf16.msra.mxu0 %v2749
    %7607 = vmatmul.bf16.gmra.mxu0 %v7481
    %v7608 = vpop.f32.mrf.mxu0
    %v7609 = vadd.f32 %v7596, %v7608
    %v7610 = vpop.f32.mrf.mxu0
    %7611 = vdwg.mxu0
    %7612 = vmatpush.bf16.msra.mxu0 %v2742
    %7613 = vmatpush.bf16.msra.mxu0 %v2734
    %7614 = vmatpush.bf16.msra.mxu0 %v2726
    %7615 = vmatpush.bf16.msra.mxu0 %v2718
    %7616 = vmatpush.bf16.msra.mxu0 %v2710
    %7617 = vmatpush.bf16.msra.mxu0 %v2702
    %7618 = vmatpush.bf16.msra.mxu0 %v2694
    %7619 = vmatpush.bf16.msra.mxu0 %v2686
    %7620 = vmatmul.bf16.gmra.mxu0 %v7480
    %v7621 = vpop.f32.mrf.mxu0
    %v7622 = vadd.f32 0.0, %v7621
    %v7623 = vpop.f32.mrf.mxu0
    %7624 = vdwg.mxu0
    %7625 = vmatpush.bf16.msra.mxu0 %v2806
    %7626 = vmatpush.bf16.msra.mxu0 %v2798
    %7627 = vmatpush.bf16.msra.mxu0 %v2790
    %7628 = vmatpush.bf16.msra.mxu0 %v2782
    %7629 = vmatpush.bf16.msra.mxu0 %v2774
    %7630 = vmatpush.bf16.msra.mxu0 %v2766
    %7631 = vmatpush.bf16.msra.mxu0 %v2758
    %7632 = vmatpush.bf16.msra.mxu0 %v2750
    %7633 = vmatmul.bf16.gmra.mxu0 %v7481
    %v7634 = vpop.f32.mrf.mxu0
    %v7635 = vadd.f32 %v7622, %v7634
    %v7636 = vpop.f32.mrf.mxu0
    %7637 = vdwg.mxu0
    %7638 = vmatpush.bf16.msra.mxu0 %v2743
    %7639 = vmatpush.bf16.msra.mxu0 %v2735
    %7640 = vmatpush.bf16.msra.mxu0 %v2727
    %7641 = vmatpush.bf16.msra.mxu0 %v2719
    %7642 = vmatpush.bf16.msra.mxu0 %v2711
    %7643 = vmatpush.bf16.msra.mxu0 %v2703
    %7644 = vmatpush.bf16.msra.mxu0 %v2695
    %7645 = vmatpush.bf16.msra.mxu0 %v2687
    %7646 = vmatmul.bf16.gmra.mxu0 %v7480
    %v7647 = vpop.f32.mrf.mxu0
    %v7648 = vadd.f32 0.0, %v7647
    %v7649 = vpop.f32.mrf.mxu0
    %7650 = vdwg.mxu0
    %7651 = vmatpush.bf16.msra.mxu0 %v2807
    %7652 = vmatpush.bf16.msra.mxu0 %v2799
    %7653 = vmatpush.bf16.msra.mxu0 %v2791
    %7654 = vmatpush.bf16.msra.mxu0 %v2783
    %7655 = vmatpush.bf16.msra.mxu0 %v2775
    %7656 = vmatpush.bf16.msra.mxu0 %v2767
    %7657 = vmatpush.bf16.msra.mxu0 %v2759
    %7658 = vmatpush.bf16.msra.mxu0 %v2751
    %7659 = vmatmul.bf16.gmra.mxu0 %v7481
    %v7660 = vpop.f32.mrf.mxu0
    %v7661 = vadd.f32 %v7648, %v7660
    %v7662 = vpop.f32.mrf.mxu0
    %7663 = vdwg.mxu0
    %7664 = vmatpush.bf16.msra.mxu0 %v2744
    %7665 = vmatpush.bf16.msra.mxu0 %v2736
    %7666 = vmatpush.bf16.msra.mxu0 %v2728
    %7667 = vmatpush.bf16.msra.mxu0 %v2720
    %7668 = vmatpush.bf16.msra.mxu0 %v2712
    %7669 = vmatpush.bf16.msra.mxu0 %v2704
    %7670 = vmatpush.bf16.msra.mxu0 %v2696
    %7671 = vmatpush.bf16.msra.mxu0 %v2688
    %7672 = vmatmul.bf16.gmra.mxu0 %v7480
    %v7673 = vpop.f32.mrf.mxu0
    %v7674 = vadd.f32 0.0, %v7673
    %v7675 = vpop.f32.mrf.mxu0
    %7676 = vdwg.mxu0
    %7677 = vmatpush.bf16.msra.mxu0 %v2808
    %7678 = vmatpush.bf16.msra.mxu0 %v2800
    %7679 = vmatpush.bf16.msra.mxu0 %v2792
    %7680 = vmatpush.bf16.msra.mxu0 %v2784
    %7681 = vmatpush.bf16.msra.mxu0 %v2776
    %7682 = vmatpush.bf16.msra.mxu0 %v2768
    %7683 = vmatpush.bf16.msra.mxu0 %v2760
    %7684 = vmatpush.bf16.msra.mxu0 %v2752
    %7685 = vmatmul.bf16.gmra.mxu0 %v7481
    %v7686 = vpop.f32.mrf.mxu0
    %v7687 = vadd.f32 %v7674, %v7686
    %v7688 = vpop.f32.mrf.mxu0
    %7689 = vdwg.mxu0
    %v7690 = vadd.f32 %v7295, %v7505
    %v7691 = vadd.f32 %v7321, %v7531
    %v7692 = vadd.f32 %v7347, %v7557
    %v7693 = vadd.f32 %v7373, %v7583
    %v7694 = vadd.f32 %v7399, %v7609
    %v7695 = vadd.f32 %v7425, %v7635
    %v7696 = vadd.f32 %v7451, %v7661
    %v7697 = vadd.f32 %v7477, %v7687
    %v7698 = vxor.u32 %v7690, 2147483648
    %v7699 = vxor.u32 %v7691, 2147483648
    %v7700 = vmul.f32 %v7698, 1.442695
    %v7701 = vpow.pop %v7700
    %v7702 = vmul.f32 %v7699, 1.442695
    %v7703 = vpow.pop %v7702
    %v7704 = vadd.f32 %v7701, 1.0
    %v7705 = vadd.f32 %v7703, 1.0
    %v7706 = vrcp.pop %v7704
    %v7707 = vmul.f32 %v7704, %v7706
    %v7708 = vsub.f32 1.0, %v7707
    %v7709 = vmul.f32 %v7706, %v7708
    %v7710 = vadd.f32 %v7706, %v7709
    %vm7711 = vweird.f32 %v7704
    %vm7712 = vweird.f32 %v7706
    %vm7713 = vmor %vm7711, %vm7712
    %v7714 = vsel %vm7713, %v7706, %v7710
    %v7715 = vand.u32 2147483647, %v7704
    %vm7716 = vcmp.eq.f32.partialorder %v7715, 8.507059e+37
    %v7717 = vand.u32 %v7704, 2147483648
    %v7718 = vor.u32 1.1754944e-38, %v7717
    %v7719 = vsel %vm7716, %v7718, %v7714
    %v7720 = vmul.f32 1.0, %v7719
    %v7721 = vrcp.pop %v7705
    %v7722 = vmul.f32 %v7705, %v7721
    %v7723 = vsub.f32 1.0, %v7722
    %v7724 = vmul.f32 %v7721, %v7723
    %v7725 = vadd.f32 %v7721, %v7724
    %vm7726 = vweird.f32 %v7705
    %vm7727 = vweird.f32 %v7721
    %vm7728 = vmor %vm7726, %vm7727
    %v7729 = vsel %vm7728, %v7721, %v7725
    %v7730 = vand.u32 2147483647, %v7705
    %vm7731 = vcmp.eq.f32.partialorder %v7730, 8.507059e+37
    %v7732 = vand.u32 %v7705, 2147483648
    %v7733 = vor.u32 1.1754944e-38, %v7732
    %v7734 = vsel %vm7731, %v7733, %v7729
    %v7735 = vmul.f32 1.0, %v7734
    %v7736 = vxor.u32 %v7692, 2147483648
    %v7737 = vxor.u32 %v7693, 2147483648
    %v7738 = vmul.f32 %v7736, 1.442695
    %v7739 = vpow.pop %v7738
    %v7740 = vmul.f32 %v7737, 1.442695
    %v7741 = vpow.pop %v7740
    %v7742 = vadd.f32 %v7739, 1.0
    %v7743 = vadd.f32 %v7741, 1.0
    %v7744 = vrcp.pop %v7742
    %v7745 = vmul.f32 %v7742, %v7744
    %v7746 = vsub.f32 1.0, %v7745
    %v7747 = vmul.f32 %v7744, %v7746
    %v7748 = vadd.f32 %v7744, %v7747
    %vm7749 = vweird.f32 %v7742
    %vm7750 = vweird.f32 %v7744
    %vm7751 = vmor %vm7749, %vm7750
    %v7752 = vsel %vm7751, %v7744, %v7748
    %v7753 = vand.u32 2147483647, %v7742
    %vm7754 = vcmp.eq.f32.partialorder %v7753, 8.507059e+37
    %v7755 = vand.u32 %v7742, 2147483648
    %v7756 = vor.u32 1.1754944e-38, %v7755
    %v7757 = vsel %vm7754, %v7756, %v7752
    %v7758 = vmul.f32 1.0, %v7757
    %v7759 = vrcp.pop %v7743
    %v7760 = vmul.f32 %v7743, %v7759
    %v7761 = vsub.f32 1.0, %v7760
    %v7762 = vmul.f32 %v7759, %v7761
    %v7763 = vadd.f32 %v7759, %v7762
    %vm7764 = vweird.f32 %v7743
    %vm7765 = vweird.f32 %v7759
    %vm7766 = vmor %vm7764, %vm7765
    %v7767 = vsel %vm7766, %v7759, %v7763
    %v7768 = vand.u32 2147483647, %v7743
    %vm7769 = vcmp.eq.f32.partialorder %v7768, 8.507059e+37
    %v7770 = vand.u32 %v7743, 2147483648
    %v7771 = vor.u32 1.1754944e-38, %v7770
    %v7772 = vsel %vm7769, %v7771, %v7767
    %v7773 = vmul.f32 1.0, %v7772
    %v7774 = vtanh.pop %v7694
    %v7775 = vtanh.pop %v7695
    %v7776 = vxor.u32 %v7696, 2147483648
    %v7777 = vxor.u32 %v7697, 2147483648
    %v7778 = vmul.f32 %v7776, 1.442695
    %v7779 = vpow.pop %v7778
    %v7780 = vmul.f32 %v7777, 1.442695
    %v7781 = vpow.pop %v7780
    %v7782 = vadd.f32 %v7779, 1.0
    %v7783 = vadd.f32 %v7781, 1.0
    %v7784 = vrcp.pop %v7782
    %v7785 = vmul.f32 %v7782, %v7784
    %v7786 = vsub.f32 1.0, %v7785
    %v7787 = vmul.f32 %v7784, %v7786
    %v7788 = vadd.f32 %v7784, %v7787
    %vm7789 = vweird.f32 %v7782
    %vm7790 = vweird.f32 %v7784
    %vm7791 = vmor %vm7789, %vm7790
    %v7792 = vsel %vm7791, %v7784, %v7788
    %v7793 = vand.u32 2147483647, %v7782
    %vm7794 = vcmp.eq.f32.partialorder %v7793, 8.507059e+37
    %v7795 = vand.u32 %v7782, 2147483648
    %v7796 = vor.u32 1.1754944e-38, %v7795
    %v7797 = vsel %vm7794, %v7796, %v7792
    %v7798 = vmul.f32 1.0, %v7797
    %v7799 = vrcp.pop %v7783
    %v7800 = vmul.f32 %v7783, %v7799
    %v7801 = vsub.f32 1.0, %v7800
    %v7802 = vmul.f32 %v7799, %v7801
    %v7803 = vadd.f32 %v7799, %v7802
    %vm7804 = vweird.f32 %v7783
    %vm7805 = vweird.f32 %v7799
    %vm7806 = vmor %vm7804, %vm7805
    %v7807 = vsel %vm7806, %v7799, %v7803
    %v7808 = vand.u32 2147483647, %v7783
    %vm7809 = vcmp.eq.f32.partialorder %v7808, 8.507059e+37
    %v7810 = vand.u32 %v7783, 2147483648
    %v7811 = vor.u32 1.1754944e-38, %v7810
    %v7812 = vsel %vm7809, %v7811, %v7807
    %v7813 = vmul.f32 1.0, %v7812
    %v7814 = vmul.f32 %v7758, %v6909
    %v7815 = vmul.f32 %v7773, %v6910
    %v7816 = vmul.f32 %v7720, %v7774
    %v7817 = vmul.f32 %v7735, %v7775
    %v7818 = vadd.f32 %v7814, %v7816
    %v7819 = vadd.f32 %v7815, %v7817
    %v7820 = vtanh.pop %v7818
    %v7821 = vtanh.pop %v7819
    %v7822 = vmul.f32 %v7798, %v7820
    %v7823 = vmul.f32 %v7813, %v7821
    %s7824 = scalar_lea.vmem %s0, 192
    %v7825 = vld [vmem:[%s7824] sm:$0xff]
    %v7826 = vld [vmem:[%s7824 + $0x8] sm:$0xff]
    %v7827 = vld [vmem:[%s7824 + $0x10] sm:$0xff]
    %v7828 = vld [vmem:[%s7824 + $0x18] sm:$0xff]
    %v7829 = vunpack.c.l.bf16 %v7825
    %v7830 = vunpack.c.h.bf16 %v7825
    %v7831 = vunpack.c.l.bf16 %v7826
    %v7832 = vunpack.c.h.bf16 %v7826
    %v7833 = vunpack.c.l.bf16 %v7827
    %v7834 = vunpack.c.h.bf16 %v7827
    %v7835 = vunpack.c.l.bf16 %v7828
    %v7836 = vunpack.c.h.bf16 %v7828
    %v7837 = vpack.c.bf16 %v7822, %v7822
    %v7838 = vpack.c.bf16 %v7823, %v7823
    %7839 = vmatpush.bf16.msra.mxu0 %v905
    %7840 = vmatpush.bf16.msra.mxu0 %v897
    %7841 = vmatpush.bf16.msra.mxu0 %v889
    %7842 = vmatpush.bf16.msra.mxu0 %v881
    %7843 = vmatpush.bf16.msra.mxu0 %v873
    %7844 = vmatpush.bf16.msra.mxu0 %v865
    %7845 = vmatpush.bf16.msra.mxu0 %v857
    %7846 = vmatpush.bf16.msra.mxu0 %v849
    %7847 = vmatmul.bf16.gmra.mxu0 %v7480
    %v7848 = vpop.f32.mrf.mxu0
    %v7849 = vadd.f32 0.0, %v7848
    %v7850 = vpop.f32.mrf.mxu0
    %7851 = vdwg.mxu0
    %7852 = vmatpush.bf16.msra.mxu0 %v969
    %7853 = vmatpush.bf16.msra.mxu0 %v961
    %7854 = vmatpush.bf16.msra.mxu0 %v953
    %7855 = vmatpush.bf16.msra.mxu0 %v945
    %7856 = vmatpush.bf16.msra.mxu0 %v937
    %7857 = vmatpush.bf16.msra.mxu0 %v929
    %7858 = vmatpush.bf16.msra.mxu0 %v921
    %7859 = vmatpush.bf16.msra.mxu0 %v913
    %7860 = vmatmul.bf16.gmra.mxu0 %v7481
    %v7861 = vpop.f32.mrf.mxu0
    %v7862 = vadd.f32 %v7849, %v7861
    %v7863 = vpop.f32.mrf.mxu0
    %7864 = vdwg.mxu0
    %7865 = vmatpush.bf16.msra.mxu0 %v906
    %7866 = vmatpush.bf16.msra.mxu0 %v898
    %7867 = vmatpush.bf16.msra.mxu0 %v890
    %7868 = vmatpush.bf16.msra.mxu0 %v882
    %7869 = vmatpush.bf16.msra.mxu0 %v874
    %7870 = vmatpush.bf16.msra.mxu0 %v866
    %7871 = vmatpush.bf16.msra.mxu0 %v858
    %7872 = vmatpush.bf16.msra.mxu0 %v850
    %7873 = vmatmul.bf16.gmra.mxu0 %v7480
    %v7874 = vpop.f32.mrf.mxu0
    %v7875 = vadd.f32 0.0, %v7874
    %v7876 = vpop.f32.mrf.mxu0
    %7877 = vdwg.mxu0
    %7878 = vmatpush.bf16.msra.mxu0 %v970
    %7879 = vmatpush.bf16.msra.mxu0 %v962
    %7880 = vmatpush.bf16.msra.mxu0 %v954
    %7881 = vmatpush.bf16.msra.mxu0 %v946
    %7882 = vmatpush.bf16.msra.mxu0 %v938
    %7883 = vmatpush.bf16.msra.mxu0 %v930
    %7884 = vmatpush.bf16.msra.mxu0 %v922
    %7885 = vmatpush.bf16.msra.mxu0 %v914
    %7886 = vmatmul.bf16.gmra.mxu0 %v7481
    %v7887 = vpop.f32.mrf.mxu0
    %v7888 = vadd.f32 %v7875, %v7887
    %v7889 = vpop.f32.mrf.mxu0
    %7890 = vdwg.mxu0
    %7891 = vmatpush.bf16.msra.mxu0 %v907
    %7892 = vmatpush.bf16.msra.mxu0 %v899
    %7893 = vmatpush.bf16.msra.mxu0 %v891
    %7894 = vmatpush.bf16.msra.mxu0 %v883
    %7895 = vmatpush.bf16.msra.mxu0 %v875
    %7896 = vmatpush.bf16.msra.mxu0 %v867
    %7897 = vmatpush.bf16.msra.mxu0 %v859
    %7898 = vmatpush.bf16.msra.mxu0 %v851
    %7899 = vmatmul.bf16.gmra.mxu0 %v7480
    %v7900 = vpop.f32.mrf.mxu0
    %v7901 = vadd.f32 0.0, %v7900
    %v7902 = vpop.f32.mrf.mxu0
    %7903 = vdwg.mxu0
    %7904 = vmatpush.bf16.msra.mxu0 %v971
    %7905 = vmatpush.bf16.msra.mxu0 %v963
    %7906 = vmatpush.bf16.msra.mxu0 %v955
    %7907 = vmatpush.bf16.msra.mxu0 %v947
    %7908 = vmatpush.bf16.msra.mxu0 %v939
    %7909 = vmatpush.bf16.msra.mxu0 %v931
    %7910 = vmatpush.bf16.msra.mxu0 %v923
    %7911 = vmatpush.bf16.msra.mxu0 %v915
    %7912 = vmatmul.bf16.gmra.mxu0 %v7481
    %v7913 = vpop.f32.mrf.mxu0
    %v7914 = vadd.f32 %v7901, %v7913
    %v7915 = vpop.f32.mrf.mxu0
    %7916 = vdwg.mxu0
    %7917 = vmatpush.bf16.msra.mxu0 %v908
    %7918 = vmatpush.bf16.msra.mxu0 %v900
    %7919 = vmatpush.bf16.msra.mxu0 %v892
    %7920 = vmatpush.bf16.msra.mxu0 %v884
    %7921 = vmatpush.bf16.msra.mxu0 %v876
    %7922 = vmatpush.bf16.msra.mxu0 %v868
    %7923 = vmatpush.bf16.msra.mxu0 %v860
    %7924 = vmatpush.bf16.msra.mxu0 %v852
    %7925 = vmatmul.bf16.gmra.mxu0 %v7480
    %v7926 = vpop.f32.mrf.mxu0
    %v7927 = vadd.f32 0.0, %v7926
    %v7928 = vpop.f32.mrf.mxu0
    %7929 = vdwg.mxu0
    %7930 = vmatpush.bf16.msra.mxu0 %v972
    %7931 = vmatpush.bf16.msra.mxu0 %v964
    %7932 = vmatpush.bf16.msra.mxu0 %v956
    %7933 = vmatpush.bf16.msra.mxu0 %v948
    %7934 = vmatpush.bf16.msra.mxu0 %v940
    %7935 = vmatpush.bf16.msra.mxu0 %v932
    %7936 = vmatpush.bf16.msra.mxu0 %v924
    %7937 = vmatpush.bf16.msra.mxu0 %v916
    %7938 = vmatmul.bf16.gmra.mxu0 %v7481
    %v7939 = vpop.f32.mrf.mxu0
    %v7940 = vadd.f32 %v7927, %v7939
    %v7941 = vpop.f32.mrf.mxu0
    %7942 = vdwg.mxu0
    %7943 = vmatpush.bf16.msra.mxu0 %v909
    %7944 = vmatpush.bf16.msra.mxu0 %v901
    %7945 = vmatpush.bf16.msra.mxu0 %v893
    %7946 = vmatpush.bf16.msra.mxu0 %v885
    %7947 = vmatpush.bf16.msra.mxu0 %v877
    %7948 = vmatpush.bf16.msra.mxu0 %v869
    %7949 = vmatpush.bf16.msra.mxu0 %v861
    %7950 = vmatpush.bf16.msra.mxu0 %v853
    %7951 = vmatmul.bf16.gmra.mxu0 %v7480
    %v7952 = vpop.f32.mrf.mxu0
    %v7953 = vadd.f32 0.0, %v7952
    %v7954 = vpop.f32.mrf.mxu0
    %7955 = vdwg.mxu0
    %7956 = vmatpush.bf16.msra.mxu0 %v973
    %7957 = vmatpush.bf16.msra.mxu0 %v965
    %7958 = vmatpush.bf16.msra.mxu0 %v957
    %7959 = vmatpush.bf16.msra.mxu0 %v949
    %7960 = vmatpush.bf16.msra.mxu0 %v941
    %7961 = vmatpush.bf16.msra.mxu0 %v933
    %7962 = vmatpush.bf16.msra.mxu0 %v925
    %7963 = vmatpush.bf16.msra.mxu0 %v917
    %7964 = vmatmul.bf16.gmra.mxu0 %v7481
    %v7965 = vpop.f32.mrf.mxu0
    %v7966 = vadd.f32 %v7953, %v7965
    %v7967 = vpop.f32.mrf.mxu0
    %7968 = vdwg.mxu0
    %7969 = vmatpush.bf16.msra.mxu0 %v910
    %7970 = vmatpush.bf16.msra.mxu0 %v902
    %7971 = vmatpush.bf16.msra.mxu0 %v894
    %7972 = vmatpush.bf16.msra.mxu0 %v886
    %7973 = vmatpush.bf16.msra.mxu0 %v878
    %7974 = vmatpush.bf16.msra.mxu0 %v870
    %7975 = vmatpush.bf16.msra.mxu0 %v862
    %7976 = vmatpush.bf16.msra.mxu0 %v854
    %7977 = vmatmul.bf16.gmra.mxu0 %v7480
    %v7978 = vpop.f32.mrf.mxu0
    %v7979 = vadd.f32 0.0, %v7978
    %v7980 = vpop.f32.mrf.mxu0
    %7981 = vdwg.mxu0
    %7982 = vmatpush.bf16.msra.mxu0 %v974
    %7983 = vmatpush.bf16.msra.mxu0 %v966
    %7984 = vmatpush.bf16.msra.mxu0 %v958
    %7985 = vmatpush.bf16.msra.mxu0 %v950
    %7986 = vmatpush.bf16.msra.mxu0 %v942
    %7987 = vmatpush.bf16.msra.mxu0 %v934
    %7988 = vmatpush.bf16.msra.mxu0 %v926
    %7989 = vmatpush.bf16.msra.mxu0 %v918
    %7990 = vmatmul.bf16.gmra.mxu0 %v7481
    %v7991 = vpop.f32.mrf.mxu0
    %v7992 = vadd.f32 %v7979, %v7991
    %v7993 = vpop.f32.mrf.mxu0
    %7994 = vdwg.mxu0
    %7995 = vmatpush.bf16.msra.mxu0 %v911
    %7996 = vmatpush.bf16.msra.mxu0 %v903
    %7997 = vmatpush.bf16.msra.mxu0 %v895
    %7998 = vmatpush.bf16.msra.mxu0 %v887
    %7999 = vmatpush.bf16.msra.mxu0 %v879
    %8000 = vmatpush.bf16.msra.mxu0 %v871
    %8001 = vmatpush.bf16.msra.mxu0 %v863
    %8002 = vmatpush.bf16.msra.mxu0 %v855
    %8003 = vmatmul.bf16.gmra.mxu0 %v7480
    %v8004 = vpop.f32.mrf.mxu0
    %v8005 = vadd.f32 0.0, %v8004
    %v8006 = vpop.f32.mrf.mxu0
    %8007 = vdwg.mxu0
    %8008 = vmatpush.bf16.msra.mxu0 %v975
    %8009 = vmatpush.bf16.msra.mxu0 %v967
    %8010 = vmatpush.bf16.msra.mxu0 %v959
    %8011 = vmatpush.bf16.msra.mxu0 %v951
    %8012 = vmatpush.bf16.msra.mxu0 %v943
    %8013 = vmatpush.bf16.msra.mxu0 %v935
    %8014 = vmatpush.bf16.msra.mxu0 %v927
    %8015 = vmatpush.bf16.msra.mxu0 %v919
    %8016 = vmatmul.bf16.gmra.mxu0 %v7481
    %v8017 = vpop.f32.mrf.mxu0
    %v8018 = vadd.f32 %v8005, %v8017
    %v8019 = vpop.f32.mrf.mxu0
    %8020 = vdwg.mxu0
    %8021 = vmatpush.bf16.msra.mxu0 %v912
    %8022 = vmatpush.bf16.msra.mxu0 %v904
    %8023 = vmatpush.bf16.msra.mxu0 %v896
    %8024 = vmatpush.bf16.msra.mxu0 %v888
    %8025 = vmatpush.bf16.msra.mxu0 %v880
    %8026 = vmatpush.bf16.msra.mxu0 %v872
    %8027 = vmatpush.bf16.msra.mxu0 %v864
    %8028 = vmatpush.bf16.msra.mxu0 %v856
    %8029 = vmatmul.bf16.gmra.mxu0 %v7480
    %v8030 = vpop.f32.mrf.mxu0
    %v8031 = vadd.f32 0.0, %v8030
    %v8032 = vpop.f32.mrf.mxu0
    %8033 = vdwg.mxu0
    %8034 = vmatpush.bf16.msra.mxu0 %v976
    %8035 = vmatpush.bf16.msra.mxu0 %v968
    %8036 = vmatpush.bf16.msra.mxu0 %v960
    %8037 = vmatpush.bf16.msra.mxu0 %v952
    %8038 = vmatpush.bf16.msra.mxu0 %v944
    %8039 = vmatpush.bf16.msra.mxu0 %v936
    %8040 = vmatpush.bf16.msra.mxu0 %v928
    %8041 = vmatpush.bf16.msra.mxu0 %v920
    %8042 = vmatmul.bf16.gmra.mxu0 %v7481
    %v8043 = vpop.f32.mrf.mxu0
    %v8044 = vadd.f32 %v8031, %v8043
    %v8045 = vpop.f32.mrf.mxu0
    %8046 = vdwg.mxu0
    %v8047 = vadd.f32 %v7829, %v7862
    %v8048 = vadd.f32 %v7830, %v7888
    %v8049 = vadd.f32 %v7831, %v7914
    %v8050 = vadd.f32 %v7832, %v7940
    %v8051 = vadd.f32 %v7833, %v7966
    %v8052 = vadd.f32 %v7834, %v7992
    %v8053 = vadd.f32 %v7835, %v8018
    %v8054 = vadd.f32 %v7836, %v8044
    %v8055 = vxor.u32 %v8047, 2147483648
    %v8056 = vxor.u32 %v8048, 2147483648
    %v8057 = vmul.f32 %v8055, 1.442695
    %v8058 = vpow.pop %v8057
    %v8059 = vmul.f32 %v8056, 1.442695
    %v8060 = vpow.pop %v8059
    %v8061 = vadd.f32 %v8058, 1.0
    %v8062 = vadd.f32 %v8060, 1.0
    %v8063 = vrcp.pop %v8061
    %v8064 = vmul.f32 %v8061, %v8063
    %v8065 = vsub.f32 1.0, %v8064
    %v8066 = vmul.f32 %v8063, %v8065
    %v8067 = vadd.f32 %v8063, %v8066
    %vm8068 = vweird.f32 %v8061
    %vm8069 = vweird.f32 %v8063
    %vm8070 = vmor %vm8068, %vm8069
    %v8071 = vsel %vm8070, %v8063, %v8067
    %v8072 = vand.u32 2147483647, %v8061
    %vm8073 = vcmp.eq.f32.partialorder %v8072, 8.507059e+37
    %v8074 = vand.u32 %v8061, 2147483648
    %v8075 = vor.u32 1.1754944e-38, %v8074
    %v8076 = vsel %vm8073, %v8075, %v8071
    %v8077 = vmul.f32 1.0, %v8076
    %v8078 = vrcp.pop %v8062
    %v8079 = vmul.f32 %v8062, %v8078
    %v8080 = vsub.f32 1.0, %v8079
    %v8081 = vmul.f32 %v8078, %v8080
    %v8082 = vadd.f32 %v8078, %v8081
    %vm8083 = vweird.f32 %v8062
    %vm8084 = vweird.f32 %v8078
    %vm8085 = vmor %vm8083, %vm8084
    %v8086 = vsel %vm8085, %v8078, %v8082
    %v8087 = vand.u32 2147483647, %v8062
    %vm8088 = vcmp.eq.f32.partialorder %v8087, 8.507059e+37
    %v8089 = vand.u32 %v8062, 2147483648
    %v8090 = vor.u32 1.1754944e-38, %v8089
    %v8091 = vsel %vm8088, %v8090, %v8086
    %v8092 = vmul.f32 1.0, %v8091
    %v8093 = vxor.u32 %v8049, 2147483648
    %v8094 = vxor.u32 %v8050, 2147483648
    %v8095 = vmul.f32 %v8093, 1.442695
    %v8096 = vpow.pop %v8095
    %v8097 = vmul.f32 %v8094, 1.442695
    %v8098 = vpow.pop %v8097
    %v8099 = vadd.f32 %v8096, 1.0
    %v8100 = vadd.f32 %v8098, 1.0
    %v8101 = vrcp.pop %v8099
    %v8102 = vmul.f32 %v8099, %v8101
    %v8103 = vsub.f32 1.0, %v8102
    %v8104 = vmul.f32 %v8101, %v8103
    %v8105 = vadd.f32 %v8101, %v8104
    %vm8106 = vweird.f32 %v8099
    %vm8107 = vweird.f32 %v8101
    %vm8108 = vmor %vm8106, %vm8107
    %v8109 = vsel %vm8108, %v8101, %v8105
    %v8110 = vand.u32 2147483647, %v8099
    %vm8111 = vcmp.eq.f32.partialorder %v8110, 8.507059e+37
    %v8112 = vand.u32 %v8099, 2147483648
    %v8113 = vor.u32 1.1754944e-38, %v8112
    %v8114 = vsel %vm8111, %v8113, %v8109
    %v8115 = vmul.f32 1.0, %v8114
    %v8116 = vrcp.pop %v8100
    %v8117 = vmul.f32 %v8100, %v8116
    %v8118 = vsub.f32 1.0, %v8117
    %v8119 = vmul.f32 %v8116, %v8118
    %v8120 = vadd.f32 %v8116, %v8119
    %vm8121 = vweird.f32 %v8100
    %vm8122 = vweird.f32 %v8116
    %vm8123 = vmor %vm8121, %vm8122
    %v8124 = vsel %vm8123, %v8116, %v8120
    %v8125 = vand.u32 2147483647, %v8100
    %vm8126 = vcmp.eq.f32.partialorder %v8125, 8.507059e+37
    %v8127 = vand.u32 %v8100, 2147483648
    %v8128 = vor.u32 1.1754944e-38, %v8127
    %v8129 = vsel %vm8126, %v8128, %v8124
    %v8130 = vmul.f32 1.0, %v8129
    %v8131 = vtanh.pop %v8051
    %v8132 = vtanh.pop %v8052
    %v8133 = vxor.u32 %v8053, 2147483648
    %v8134 = vxor.u32 %v8054, 2147483648
    %v8135 = vmul.f32 %v8133, 1.442695
    %v8136 = vpow.pop %v8135
    %v8137 = vmul.f32 %v8134, 1.442695
    %v8138 = vpow.pop %v8137
    %v8139 = vadd.f32 %v8136, 1.0
    %v8140 = vadd.f32 %v8138, 1.0
    %v8141 = vrcp.pop %v8139
    %v8142 = vmul.f32 %v8139, %v8141
    %v8143 = vsub.f32 1.0, %v8142
    %v8144 = vmul.f32 %v8141, %v8143
    %v8145 = vadd.f32 %v8141, %v8144
    %vm8146 = vweird.f32 %v8139
    %vm8147 = vweird.f32 %v8141
    %vm8148 = vmor %vm8146, %vm8147
    %v8149 = vsel %vm8148, %v8141, %v8145
    %v8150 = vand.u32 2147483647, %v8139
    %vm8151 = vcmp.eq.f32.partialorder %v8150, 8.507059e+37
    %v8152 = vand.u32 %v8139, 2147483648
    %v8153 = vor.u32 1.1754944e-38, %v8152
    %v8154 = vsel %vm8151, %v8153, %v8149
    %v8155 = vmul.f32 1.0, %v8154
    %v8156 = vrcp.pop %v8140
    %v8157 = vmul.f32 %v8140, %v8156
    %v8158 = vsub.f32 1.0, %v8157
    %v8159 = vmul.f32 %v8156, %v8158
    %v8160 = vadd.f32 %v8156, %v8159
    %vm8161 = vweird.f32 %v8140
    %vm8162 = vweird.f32 %v8156
    %vm8163 = vmor %vm8161, %vm8162
    %v8164 = vsel %vm8163, %v8156, %v8160
    %v8165 = vand.u32 2147483647, %v8140
    %vm8166 = vcmp.eq.f32.partialorder %v8165, 8.507059e+37
    %v8167 = vand.u32 %v8140, 2147483648
    %v8168 = vor.u32 1.1754944e-38, %v8167
    %v8169 = vsel %vm8166, %v8168, %v8164
    %v8170 = vmul.f32 1.0, %v8169
    %v8171 = vmul.f32 %v8115, %v7266
    %v8172 = vmul.f32 %v8130, %v7267
    %v8173 = vmul.f32 %v8077, %v8131
    %v8174 = vmul.f32 %v8092, %v8132
    %v8175 = vadd.f32 %v8171, %v8173
    %v8176 = vadd.f32 %v8172, %v8174
    %v8177 = vtanh.pop %v8175
    %v8178 = vtanh.pop %v8176
    %v8179 = vmul.f32 %v8155, %v8177
    %v8180 = vmul.f32 %v8170, %v8178
    %8181 = vmatpush.bf16.msra.mxu0 %v1887
    %8182 = vmatpush.bf16.msra.mxu0 %v1879
    %8183 = vmatpush.bf16.msra.mxu0 %v1871
    %8184 = vmatpush.bf16.msra.mxu0 %v1863
    %8185 = vmatpush.bf16.msra.mxu0 %v1855
    %8186 = vmatpush.bf16.msra.mxu0 %v1847
    %8187 = vmatpush.bf16.msra.mxu0 %v1839
    %8188 = vmatpush.bf16.msra.mxu0 %v1831
    %8189 = vmatmul.bf16.gmra.mxu0 %v7837
    %v8190 = vpop.f32.mrf.mxu0
    %v8191 = vadd.f32 %v425, %v8190
    %v8192 = vpop.f32.mrf.mxu0
    %8193 = vdwg.mxu0
    %8194 = vmatpush.bf16.msra.mxu0 %v1951
    %8195 = vmatpush.bf16.msra.mxu0 %v1943
    %8196 = vmatpush.bf16.msra.mxu0 %v1935
    %8197 = vmatpush.bf16.msra.mxu0 %v1927
    %8198 = vmatpush.bf16.msra.mxu0 %v1919
    %8199 = vmatpush.bf16.msra.mxu0 %v1911
    %8200 = vmatpush.bf16.msra.mxu0 %v1903
    %8201 = vmatpush.bf16.msra.mxu0 %v1895
    %8202 = vmatmul.bf16.gmra.mxu0 %v7838
    %v8203 = vpop.f32.mrf.mxu0
    %v8204 = vadd.f32 %v8191, %v8203
    %v8205 = vpop.f32.mrf.mxu0
    %8206 = vdwg.mxu0
    %8207 = vmatpush.bf16.msra.mxu0 %v1888
    %8208 = vmatpush.bf16.msra.mxu0 %v1880
    %8209 = vmatpush.bf16.msra.mxu0 %v1872
    %8210 = vmatpush.bf16.msra.mxu0 %v1864
    %8211 = vmatpush.bf16.msra.mxu0 %v1856
    %8212 = vmatpush.bf16.msra.mxu0 %v1848
    %8213 = vmatpush.bf16.msra.mxu0 %v1840
    %8214 = vmatpush.bf16.msra.mxu0 %v1832
    %8215 = vmatmul.bf16.gmra.mxu0 %v7837
    %v8216 = vpop.f32.mrf.mxu0
    %v8217 = vadd.f32 %v426, %v8216
    %v8218 = vpop.f32.mrf.mxu0
    %8219 = vdwg.mxu0
    %8220 = vmatpush.bf16.msra.mxu0 %v1952
    %8221 = vmatpush.bf16.msra.mxu0 %v1944
    %8222 = vmatpush.bf16.msra.mxu0 %v1936
    %8223 = vmatpush.bf16.msra.mxu0 %v1928
    %8224 = vmatpush.bf16.msra.mxu0 %v1920
    %8225 = vmatpush.bf16.msra.mxu0 %v1912
    %8226 = vmatpush.bf16.msra.mxu0 %v1904
    %8227 = vmatpush.bf16.msra.mxu0 %v1896
    %8228 = vmatmul.bf16.gmra.mxu0 %v7838
    %v8229 = vpop.f32.mrf.mxu0
    %v8230 = vadd.f32 %v8217, %v8229
    %v8231 = vpop.f32.mrf.mxu0
    %8232 = vdwg.mxu0
    %8233 = vmatpush.bf16.msra.mxu0 %v1889
    %8234 = vmatpush.bf16.msra.mxu0 %v1881
    %8235 = vmatpush.bf16.msra.mxu0 %v1873
    %8236 = vmatpush.bf16.msra.mxu0 %v1865
    %8237 = vmatpush.bf16.msra.mxu0 %v1857
    %8238 = vmatpush.bf16.msra.mxu0 %v1849
    %8239 = vmatpush.bf16.msra.mxu0 %v1841
    %8240 = vmatpush.bf16.msra.mxu0 %v1833
    %8241 = vmatmul.bf16.gmra.mxu0 %v7837
    %v8242 = vpop.f32.mrf.mxu0
    %v8243 = vadd.f32 %v427, %v8242
    %v8244 = vpop.f32.mrf.mxu0
    %8245 = vdwg.mxu0
    %8246 = vmatpush.bf16.msra.mxu0 %v1953
    %8247 = vmatpush.bf16.msra.mxu0 %v1945
    %8248 = vmatpush.bf16.msra.mxu0 %v1937
    %8249 = vmatpush.bf16.msra.mxu0 %v1929
    %8250 = vmatpush.bf16.msra.mxu0 %v1921
    %8251 = vmatpush.bf16.msra.mxu0 %v1913
    %8252 = vmatpush.bf16.msra.mxu0 %v1905
    %8253 = vmatpush.bf16.msra.mxu0 %v1897
    %8254 = vmatmul.bf16.gmra.mxu0 %v7838
    %v8255 = vpop.f32.mrf.mxu0
    %v8256 = vadd.f32 %v8243, %v8255
    %v8257 = vpop.f32.mrf.mxu0
    %8258 = vdwg.mxu0
    %8259 = vmatpush.bf16.msra.mxu0 %v1890
    %8260 = vmatpush.bf16.msra.mxu0 %v1882
    %8261 = vmatpush.bf16.msra.mxu0 %v1874
    %8262 = vmatpush.bf16.msra.mxu0 %v1866
    %8263 = vmatpush.bf16.msra.mxu0 %v1858
    %8264 = vmatpush.bf16.msra.mxu0 %v1850
    %8265 = vmatpush.bf16.msra.mxu0 %v1842
    %8266 = vmatpush.bf16.msra.mxu0 %v1834
    %8267 = vmatmul.bf16.gmra.mxu0 %v7837
    %v8268 = vpop.f32.mrf.mxu0
    %v8269 = vadd.f32 %v428, %v8268
    %v8270 = vpop.f32.mrf.mxu0
    %8271 = vdwg.mxu0
    %8272 = vmatpush.bf16.msra.mxu0 %v1954
    %8273 = vmatpush.bf16.msra.mxu0 %v1946
    %8274 = vmatpush.bf16.msra.mxu0 %v1938
    %8275 = vmatpush.bf16.msra.mxu0 %v1930
    %8276 = vmatpush.bf16.msra.mxu0 %v1922
    %8277 = vmatpush.bf16.msra.mxu0 %v1914
    %8278 = vmatpush.bf16.msra.mxu0 %v1906
    %8279 = vmatpush.bf16.msra.mxu0 %v1898
    %8280 = vmatmul.bf16.gmra.mxu0 %v7838
    %v8281 = vpop.f32.mrf.mxu0
    %v8282 = vadd.f32 %v8269, %v8281
    %v8283 = vpop.f32.mrf.mxu0
    %8284 = vdwg.mxu0
    %8285 = vmatpush.bf16.msra.mxu0 %v1891
    %8286 = vmatpush.bf16.msra.mxu0 %v1883
    %8287 = vmatpush.bf16.msra.mxu0 %v1875
    %8288 = vmatpush.bf16.msra.mxu0 %v1867
    %8289 = vmatpush.bf16.msra.mxu0 %v1859
    %8290 = vmatpush.bf16.msra.mxu0 %v1851
    %8291 = vmatpush.bf16.msra.mxu0 %v1843
    %8292 = vmatpush.bf16.msra.mxu0 %v1835
    %8293 = vmatmul.bf16.gmra.mxu0 %v7837
    %v8294 = vpop.f32.mrf.mxu0
    %v8295 = vadd.f32 %v429, %v8294
    %v8296 = vpop.f32.mrf.mxu0
    %8297 = vdwg.mxu0
    %8298 = vmatpush.bf16.msra.mxu0 %v1955
    %8299 = vmatpush.bf16.msra.mxu0 %v1947
    %8300 = vmatpush.bf16.msra.mxu0 %v1939
    %8301 = vmatpush.bf16.msra.mxu0 %v1931
    %8302 = vmatpush.bf16.msra.mxu0 %v1923
    %8303 = vmatpush.bf16.msra.mxu0 %v1915
    %8304 = vmatpush.bf16.msra.mxu0 %v1907
    %8305 = vmatpush.bf16.msra.mxu0 %v1899
    %8306 = vmatmul.bf16.gmra.mxu0 %v7838
    %v8307 = vpop.f32.mrf.mxu0
    %v8308 = vadd.f32 %v8295, %v8307
    %v8309 = vpop.f32.mrf.mxu0
    %8310 = vdwg.mxu0
    %8311 = vmatpush.bf16.msra.mxu0 %v1892
    %8312 = vmatpush.bf16.msra.mxu0 %v1884
    %8313 = vmatpush.bf16.msra.mxu0 %v1876
    %8314 = vmatpush.bf16.msra.mxu0 %v1868
    %8315 = vmatpush.bf16.msra.mxu0 %v1860
    %8316 = vmatpush.bf16.msra.mxu0 %v1852
    %8317 = vmatpush.bf16.msra.mxu0 %v1844
    %8318 = vmatpush.bf16.msra.mxu0 %v1836
    %8319 = vmatmul.bf16.gmra.mxu0 %v7837
    %v8320 = vpop.f32.mrf.mxu0
    %v8321 = vadd.f32 %v430, %v8320
    %v8322 = vpop.f32.mrf.mxu0
    %8323 = vdwg.mxu0
    %8324 = vmatpush.bf16.msra.mxu0 %v1956
    %8325 = vmatpush.bf16.msra.mxu0 %v1948
    %8326 = vmatpush.bf16.msra.mxu0 %v1940
    %8327 = vmatpush.bf16.msra.mxu0 %v1932
    %8328 = vmatpush.bf16.msra.mxu0 %v1924
    %8329 = vmatpush.bf16.msra.mxu0 %v1916
    %8330 = vmatpush.bf16.msra.mxu0 %v1908
    %8331 = vmatpush.bf16.msra.mxu0 %v1900
    %8332 = vmatmul.bf16.gmra.mxu0 %v7838
    %v8333 = vpop.f32.mrf.mxu0
    %v8334 = vadd.f32 %v8321, %v8333
    %v8335 = vpop.f32.mrf.mxu0
    %8336 = vdwg.mxu0
    %8337 = vmatpush.bf16.msra.mxu0 %v1893
    %8338 = vmatpush.bf16.msra.mxu0 %v1885
    %8339 = vmatpush.bf16.msra.mxu0 %v1877
    %8340 = vmatpush.bf16.msra.mxu0 %v1869
    %8341 = vmatpush.bf16.msra.mxu0 %v1861
    %8342 = vmatpush.bf16.msra.mxu0 %v1853
    %8343 = vmatpush.bf16.msra.mxu0 %v1845
    %8344 = vmatpush.bf16.msra.mxu0 %v1837
    %8345 = vmatmul.bf16.gmra.mxu0 %v7837
    %v8346 = vpop.f32.mrf.mxu0
    %v8347 = vadd.f32 %v431, %v8346
    %v8348 = vpop.f32.mrf.mxu0
    %8349 = vdwg.mxu0
    %8350 = vmatpush.bf16.msra.mxu0 %v1957
    %8351 = vmatpush.bf16.msra.mxu0 %v1949
    %8352 = vmatpush.bf16.msra.mxu0 %v1941
    %8353 = vmatpush.bf16.msra.mxu0 %v1933
    %8354 = vmatpush.bf16.msra.mxu0 %v1925
    %8355 = vmatpush.bf16.msra.mxu0 %v1917
    %8356 = vmatpush.bf16.msra.mxu0 %v1909
    %8357 = vmatpush.bf16.msra.mxu0 %v1901
    %8358 = vmatmul.bf16.gmra.mxu0 %v7838
    %v8359 = vpop.f32.mrf.mxu0
    %v8360 = vadd.f32 %v8347, %v8359
    %v8361 = vpop.f32.mrf.mxu0
    %8362 = vdwg.mxu0
    %8363 = vmatpush.bf16.msra.mxu0 %v1894
    %8364 = vmatpush.bf16.msra.mxu0 %v1886
    %8365 = vmatpush.bf16.msra.mxu0 %v1878
    %8366 = vmatpush.bf16.msra.mxu0 %v1870
    %8367 = vmatpush.bf16.msra.mxu0 %v1862
    %8368 = vmatpush.bf16.msra.mxu0 %v1854
    %8369 = vmatpush.bf16.msra.mxu0 %v1846
    %8370 = vmatpush.bf16.msra.mxu0 %v1838
    %8371 = vmatmul.bf16.gmra.mxu0 %v7837
    %v8372 = vpop.f32.mrf.mxu0
    %v8373 = vadd.f32 %v432, %v8372
    %v8374 = vpop.f32.mrf.mxu0
    %8375 = vdwg.mxu0
    %8376 = vmatpush.bf16.msra.mxu0 %v1958
    %8377 = vmatpush.bf16.msra.mxu0 %v1950
    %8378 = vmatpush.bf16.msra.mxu0 %v1942
    %8379 = vmatpush.bf16.msra.mxu0 %v1934
    %8380 = vmatpush.bf16.msra.mxu0 %v1926
    %8381 = vmatpush.bf16.msra.mxu0 %v1918
    %8382 = vmatpush.bf16.msra.mxu0 %v1910
    %8383 = vmatpush.bf16.msra.mxu0 %v1902
    %8384 = vmatmul.bf16.gmra.mxu0 %v7838
    %v8385 = vpop.f32.mrf.mxu0
    %v8386 = vadd.f32 %v8373, %v8385
    %v8387 = vpop.f32.mrf.mxu0
    %8388 = vdwg.mxu0
    %v8389 = vpack.c.bf16 %v8179, %v8179
    %v8390 = vpack.c.bf16 %v8180, %v8180
    %8391 = vmatpush.bf16.msra.mxu0 %v2737
    %8392 = vmatpush.bf16.msra.mxu0 %v2729
    %8393 = vmatpush.bf16.msra.mxu0 %v2721
    %8394 = vmatpush.bf16.msra.mxu0 %v2713
    %8395 = vmatpush.bf16.msra.mxu0 %v2705
    %8396 = vmatpush.bf16.msra.mxu0 %v2697
    %8397 = vmatpush.bf16.msra.mxu0 %v2689
    %8398 = vmatpush.bf16.msra.mxu0 %v2681
    %8399 = vmatmul.bf16.gmra.mxu0 %v8389
    %v8400 = vpop.f32.mrf.mxu0
    %v8401 = vadd.f32 0.0, %v8400
    %v8402 = vpop.f32.mrf.mxu0
    %8403 = vdwg.mxu0
    %8404 = vmatpush.bf16.msra.mxu0 %v2801
    %8405 = vmatpush.bf16.msra.mxu0 %v2793
    %8406 = vmatpush.bf16.msra.mxu0 %v2785
    %8407 = vmatpush.bf16.msra.mxu0 %v2777
    %8408 = vmatpush.bf16.msra.mxu0 %v2769
    %8409 = vmatpush.bf16.msra.mxu0 %v2761
    %8410 = vmatpush.bf16.msra.mxu0 %v2753
    %8411 = vmatpush.bf16.msra.mxu0 %v2745
    %8412 = vmatmul.bf16.gmra.mxu0 %v8390
    %v8413 = vpop.f32.mrf.mxu0
    %v8414 = vadd.f32 %v8401, %v8413
    %v8415 = vpop.f32.mrf.mxu0
    %8416 = vdwg.mxu0
    %8417 = vmatpush.bf16.msra.mxu0 %v2738
    %8418 = vmatpush.bf16.msra.mxu0 %v2730
    %8419 = vmatpush.bf16.msra.mxu0 %v2722
    %8420 = vmatpush.bf16.msra.mxu0 %v2714
    %8421 = vmatpush.bf16.msra.mxu0 %v2706
    %8422 = vmatpush.bf16.msra.mxu0 %v2698
    %8423 = vmatpush.bf16.msra.mxu0 %v2690
    %8424 = vmatpush.bf16.msra.mxu0 %v2682
    %8425 = vmatmul.bf16.gmra.mxu0 %v8389
    %v8426 = vpop.f32.mrf.mxu0
    %v8427 = vadd.f32 0.0, %v8426
    %v8428 = vpop.f32.mrf.mxu0
    %8429 = vdwg.mxu0
    %8430 = vmatpush.bf16.msra.mxu0 %v2802
    %8431 = vmatpush.bf16.msra.mxu0 %v2794
    %8432 = vmatpush.bf16.msra.mxu0 %v2786
    %8433 = vmatpush.bf16.msra.mxu0 %v2778
    %8434 = vmatpush.bf16.msra.mxu0 %v2770
    %8435 = vmatpush.bf16.msra.mxu0 %v2762
    %8436 = vmatpush.bf16.msra.mxu0 %v2754
    %8437 = vmatpush.bf16.msra.mxu0 %v2746
    %8438 = vmatmul.bf16.gmra.mxu0 %v8390
    %v8439 = vpop.f32.mrf.mxu0
    %v8440 = vadd.f32 %v8427, %v8439
    %v8441 = vpop.f32.mrf.mxu0
    %8442 = vdwg.mxu0
    %8443 = vmatpush.bf16.msra.mxu0 %v2739
    %8444 = vmatpush.bf16.msra.mxu0 %v2731
    %8445 = vmatpush.bf16.msra.mxu0 %v2723
    %8446 = vmatpush.bf16.msra.mxu0 %v2715
    %8447 = vmatpush.bf16.msra.mxu0 %v2707
    %8448 = vmatpush.bf16.msra.mxu0 %v2699
    %8449 = vmatpush.bf16.msra.mxu0 %v2691
    %8450 = vmatpush.bf16.msra.mxu0 %v2683
    %8451 = vmatmul.bf16.gmra.mxu0 %v8389
    %v8452 = vpop.f32.mrf.mxu0
    %v8453 = vadd.f32 0.0, %v8452
    %v8454 = vpop.f32.mrf.mxu0
    %8455 = vdwg.mxu0
    %8456 = vmatpush.bf16.msra.mxu0 %v2803
    %8457 = vmatpush.bf16.msra.mxu0 %v2795
    %8458 = vmatpush.bf16.msra.mxu0 %v2787
    %8459 = vmatpush.bf16.msra.mxu0 %v2779
    %8460 = vmatpush.bf16.msra.mxu0 %v2771
    %8461 = vmatpush.bf16.msra.mxu0 %v2763
    %8462 = vmatpush.bf16.msra.mxu0 %v2755
    %8463 = vmatpush.bf16.msra.mxu0 %v2747
    %8464 = vmatmul.bf16.gmra.mxu0 %v8390
    %v8465 = vpop.f32.mrf.mxu0
    %v8466 = vadd.f32 %v8453, %v8465
    %v8467 = vpop.f32.mrf.mxu0
    %8468 = vdwg.mxu0
    %8469 = vmatpush.bf16.msra.mxu0 %v2740
    %8470 = vmatpush.bf16.msra.mxu0 %v2732
    %8471 = vmatpush.bf16.msra.mxu0 %v2724
    %8472 = vmatpush.bf16.msra.mxu0 %v2716
    %8473 = vmatpush.bf16.msra.mxu0 %v2708
    %8474 = vmatpush.bf16.msra.mxu0 %v2700
    %8475 = vmatpush.bf16.msra.mxu0 %v2692
    %8476 = vmatpush.bf16.msra.mxu0 %v2684
    %8477 = vmatmul.bf16.gmra.mxu0 %v8389
    %v8478 = vpop.f32.mrf.mxu0
    %v8479 = vadd.f32 0.0, %v8478
    %v8480 = vpop.f32.mrf.mxu0
    %8481 = vdwg.mxu0
    %8482 = vmatpush.bf16.msra.mxu0 %v2804
    %8483 = vmatpush.bf16.msra.mxu0 %v2796
    %8484 = vmatpush.bf16.msra.mxu0 %v2788
    %8485 = vmatpush.bf16.msra.mxu0 %v2780
    %8486 = vmatpush.bf16.msra.mxu0 %v2772
    %8487 = vmatpush.bf16.msra.mxu0 %v2764
    %8488 = vmatpush.bf16.msra.mxu0 %v2756
    %8489 = vmatpush.bf16.msra.mxu0 %v2748
    %8490 = vmatmul.bf16.gmra.mxu0 %v8390
    %v8491 = vpop.f32.mrf.mxu0
    %v8492 = vadd.f32 %v8479, %v8491
    %v8493 = vpop.f32.mrf.mxu0
    %8494 = vdwg.mxu0
    %8495 = vmatpush.bf16.msra.mxu0 %v2741
    %8496 = vmatpush.bf16.msra.mxu0 %v2733
    %8497 = vmatpush.bf16.msra.mxu0 %v2725
    %8498 = vmatpush.bf16.msra.mxu0 %v2717
    %8499 = vmatpush.bf16.msra.mxu0 %v2709
    %8500 = vmatpush.bf16.msra.mxu0 %v2701
    %8501 = vmatpush.bf16.msra.mxu0 %v2693
    %8502 = vmatpush.bf16.msra.mxu0 %v2685
    %8503 = vmatmul.bf16.gmra.mxu0 %v8389
    %v8504 = vpop.f32.mrf.mxu0
    %v8505 = vadd.f32 0.0, %v8504
    %v8506 = vpop.f32.mrf.mxu0
    %8507 = vdwg.mxu0
    %8508 = vmatpush.bf16.msra.mxu0 %v2805
    %8509 = vmatpush.bf16.msra.mxu0 %v2797
    %8510 = vmatpush.bf16.msra.mxu0 %v2789
    %8511 = vmatpush.bf16.msra.mxu0 %v2781
    %8512 = vmatpush.bf16.msra.mxu0 %v2773
    %8513 = vmatpush.bf16.msra.mxu0 %v2765
    %8514 = vmatpush.bf16.msra.mxu0 %v2757
    %8515 = vmatpush.bf16.msra.mxu0 %v2749
    %8516 = vmatmul.bf16.gmra.mxu0 %v8390
    %v8517 = vpop.f32.mrf.mxu0
    %v8518 = vadd.f32 %v8505, %v8517
    %v8519 = vpop.f32.mrf.mxu0
    %8520 = vdwg.mxu0
    %8521 = vmatpush.bf16.msra.mxu0 %v2742
    %8522 = vmatpush.bf16.msra.mxu0 %v2734
    %8523 = vmatpush.bf16.msra.mxu0 %v2726
    %8524 = vmatpush.bf16.msra.mxu0 %v2718
    %8525 = vmatpush.bf16.msra.mxu0 %v2710
    %8526 = vmatpush.bf16.msra.mxu0 %v2702
    %8527 = vmatpush.bf16.msra.mxu0 %v2694
    %8528 = vmatpush.bf16.msra.mxu0 %v2686
    %8529 = vmatmul.bf16.gmra.mxu0 %v8389
    %v8530 = vpop.f32.mrf.mxu0
    %v8531 = vadd.f32 0.0, %v8530
    %v8532 = vpop.f32.mrf.mxu0
    %8533 = vdwg.mxu0
    %8534 = vmatpush.bf16.msra.mxu0 %v2806
    %8535 = vmatpush.bf16.msra.mxu0 %v2798
    %8536 = vmatpush.bf16.msra.mxu0 %v2790
    %8537 = vmatpush.bf16.msra.mxu0 %v2782
    %8538 = vmatpush.bf16.msra.mxu0 %v2774
    %8539 = vmatpush.bf16.msra.mxu0 %v2766
    %8540 = vmatpush.bf16.msra.mxu0 %v2758
    %8541 = vmatpush.bf16.msra.mxu0 %v2750
    %8542 = vmatmul.bf16.gmra.mxu0 %v8390
    %v8543 = vpop.f32.mrf.mxu0
    %v8544 = vadd.f32 %v8531, %v8543
    %v8545 = vpop.f32.mrf.mxu0
    %8546 = vdwg.mxu0
    %8547 = vmatpush.bf16.msra.mxu0 %v2743
    %8548 = vmatpush.bf16.msra.mxu0 %v2735
    %8549 = vmatpush.bf16.msra.mxu0 %v2727
    %8550 = vmatpush.bf16.msra.mxu0 %v2719
    %8551 = vmatpush.bf16.msra.mxu0 %v2711
    %8552 = vmatpush.bf16.msra.mxu0 %v2703
    %8553 = vmatpush.bf16.msra.mxu0 %v2695
    %8554 = vmatpush.bf16.msra.mxu0 %v2687
    %8555 = vmatmul.bf16.gmra.mxu0 %v8389
    %v8556 = vpop.f32.mrf.mxu0
    %v8557 = vadd.f32 0.0, %v8556
    %v8558 = vpop.f32.mrf.mxu0
    %8559 = vdwg.mxu0
    %8560 = vmatpush.bf16.msra.mxu0 %v2807
    %8561 = vmatpush.bf16.msra.mxu0 %v2799
    %8562 = vmatpush.bf16.msra.mxu0 %v2791
    %8563 = vmatpush.bf16.msra.mxu0 %v2783
    %8564 = vmatpush.bf16.msra.mxu0 %v2775
    %8565 = vmatpush.bf16.msra.mxu0 %v2767
    %8566 = vmatpush.bf16.msra.mxu0 %v2759
    %8567 = vmatpush.bf16.msra.mxu0 %v2751
    %8568 = vmatmul.bf16.gmra.mxu0 %v8390
    %v8569 = vpop.f32.mrf.mxu0
    %v8570 = vadd.f32 %v8557, %v8569
    %v8571 = vpop.f32.mrf.mxu0
    %8572 = vdwg.mxu0
    %8573 = vmatpush.bf16.msra.mxu0 %v2744
    %8574 = vmatpush.bf16.msra.mxu0 %v2736
    %8575 = vmatpush.bf16.msra.mxu0 %v2728
    %8576 = vmatpush.bf16.msra.mxu0 %v2720
    %8577 = vmatpush.bf16.msra.mxu0 %v2712
    %8578 = vmatpush.bf16.msra.mxu0 %v2704
    %8579 = vmatpush.bf16.msra.mxu0 %v2696
    %8580 = vmatpush.bf16.msra.mxu0 %v2688
    %8581 = vmatmul.bf16.gmra.mxu0 %v8389
    %v8582 = vpop.f32.mrf.mxu0
    %v8583 = vadd.f32 0.0, %v8582
    %v8584 = vpop.f32.mrf.mxu0
    %8585 = vdwg.mxu0
    %8586 = vmatpush.bf16.msra.mxu0 %v2808
    %8587 = vmatpush.bf16.msra.mxu0 %v2800
    %8588 = vmatpush.bf16.msra.mxu0 %v2792
    %8589 = vmatpush.bf16.msra.mxu0 %v2784
    %8590 = vmatpush.bf16.msra.mxu0 %v2776
    %8591 = vmatpush.bf16.msra.mxu0 %v2768
    %8592 = vmatpush.bf16.msra.mxu0 %v2760
    %8593 = vmatpush.bf16.msra.mxu0 %v2752
    %8594 = vmatmul.bf16.gmra.mxu0 %v8390
    %v8595 = vpop.f32.mrf.mxu0
    %v8596 = vadd.f32 %v8583, %v8595
    %v8597 = vpop.f32.mrf.mxu0
    %8598 = vdwg.mxu0
    %v8599 = vadd.f32 %v8204, %v8414
    %v8600 = vadd.f32 %v8230, %v8440
    %v8601 = vadd.f32 %v8256, %v8466
    %v8602 = vadd.f32 %v8282, %v8492
    %v8603 = vadd.f32 %v8308, %v8518
    %v8604 = vadd.f32 %v8334, %v8544
    %v8605 = vadd.f32 %v8360, %v8570
    %v8606 = vadd.f32 %v8386, %v8596
    %v8607 = vxor.u32 %v8599, 2147483648
    %v8608 = vxor.u32 %v8600, 2147483648
    %v8609 = vmul.f32 %v8607, 1.442695
    %v8610 = vpow.pop %v8609
    %v8611 = vmul.f32 %v8608, 1.442695
    %v8612 = vpow.pop %v8611
    %v8613 = vadd.f32 %v8610, 1.0
    %v8614 = vadd.f32 %v8612, 1.0
    %v8615 = vrcp.pop %v8613
    %v8616 = vmul.f32 %v8613, %v8615
    %v8617 = vsub.f32 1.0, %v8616
    %v8618 = vmul.f32 %v8615, %v8617
    %v8619 = vadd.f32 %v8615, %v8618
    %vm8620 = vweird.f32 %v8613
    %vm8621 = vweird.f32 %v8615
    %vm8622 = vmor %vm8620, %vm8621
    %v8623 = vsel %vm8622, %v8615, %v8619
    %v8624 = vand.u32 2147483647, %v8613
    %vm8625 = vcmp.eq.f32.partialorder %v8624, 8.507059e+37
    %v8626 = vand.u32 %v8613, 2147483648
    %v8627 = vor.u32 1.1754944e-38, %v8626
    %v8628 = vsel %vm8625, %v8627, %v8623
    %v8629 = vmul.f32 1.0, %v8628
    %v8630 = vrcp.pop %v8614
    %v8631 = vmul.f32 %v8614, %v8630
    %v8632 = vsub.f32 1.0, %v8631
    %v8633 = vmul.f32 %v8630, %v8632
    %v8634 = vadd.f32 %v8630, %v8633
    %vm8635 = vweird.f32 %v8614
    %vm8636 = vweird.f32 %v8630
    %vm8637 = vmor %vm8635, %vm8636
    %v8638 = vsel %vm8637, %v8630, %v8634
    %v8639 = vand.u32 2147483647, %v8614
    %vm8640 = vcmp.eq.f32.partialorder %v8639, 8.507059e+37
    %v8641 = vand.u32 %v8614, 2147483648
    %v8642 = vor.u32 1.1754944e-38, %v8641
    %v8643 = vsel %vm8640, %v8642, %v8638
    %v8644 = vmul.f32 1.0, %v8643
    %v8645 = vxor.u32 %v8601, 2147483648
    %v8646 = vxor.u32 %v8602, 2147483648
    %v8647 = vmul.f32 %v8645, 1.442695
    %v8648 = vpow.pop %v8647
    %v8649 = vmul.f32 %v8646, 1.442695
    %v8650 = vpow.pop %v8649
    %v8651 = vadd.f32 %v8648, 1.0
    %v8652 = vadd.f32 %v8650, 1.0
    %v8653 = vrcp.pop %v8651
    %v8654 = vmul.f32 %v8651, %v8653
    %v8655 = vsub.f32 1.0, %v8654
    %v8656 = vmul.f32 %v8653, %v8655
    %v8657 = vadd.f32 %v8653, %v8656
    %vm8658 = vweird.f32 %v8651
    %vm8659 = vweird.f32 %v8653
    %vm8660 = vmor %vm8658, %vm8659
    %v8661 = vsel %vm8660, %v8653, %v8657
    %v8662 = vand.u32 2147483647, %v8651
    %vm8663 = vcmp.eq.f32.partialorder %v8662, 8.507059e+37
    %v8664 = vand.u32 %v8651, 2147483648
    %v8665 = vor.u32 1.1754944e-38, %v8664
    %v8666 = vsel %vm8663, %v8665, %v8661
    %v8667 = vmul.f32 1.0, %v8666
    %v8668 = vrcp.pop %v8652
    %v8669 = vmul.f32 %v8652, %v8668
    %v8670 = vsub.f32 1.0, %v8669
    %v8671 = vmul.f32 %v8668, %v8670
    %v8672 = vadd.f32 %v8668, %v8671
    %vm8673 = vweird.f32 %v8652
    %vm8674 = vweird.f32 %v8668
    %vm8675 = vmor %vm8673, %vm8674
    %v8676 = vsel %vm8675, %v8668, %v8672
    %v8677 = vand.u32 2147483647, %v8652
    %vm8678 = vcmp.eq.f32.partialorder %v8677, 8.507059e+37
    %v8679 = vand.u32 %v8652, 2147483648
    %v8680 = vor.u32 1.1754944e-38, %v8679
    %v8681 = vsel %vm8678, %v8680, %v8676
    %v8682 = vmul.f32 1.0, %v8681
    %v8683 = vtanh.pop %v8603
    %v8684 = vtanh.pop %v8604
    %v8685 = vxor.u32 %v8605, 2147483648
    %v8686 = vxor.u32 %v8606, 2147483648
    %v8687 = vmul.f32 %v8685, 1.442695
    %v8688 = vpow.pop %v8687
    %v8689 = vmul.f32 %v8686, 1.442695
    %v8690 = vpow.pop %v8689
    %v8691 = vadd.f32 %v8688, 1.0
    %v8692 = vadd.f32 %v8690, 1.0
    %v8693 = vrcp.pop %v8691
    %v8694 = vmul.f32 %v8691, %v8693
    %v8695 = vsub.f32 1.0, %v8694
    %v8696 = vmul.f32 %v8693, %v8695
    %v8697 = vadd.f32 %v8693, %v8696
    %vm8698 = vweird.f32 %v8691
    %vm8699 = vweird.f32 %v8693
    %vm8700 = vmor %vm8698, %vm8699
    %v8701 = vsel %vm8700, %v8693, %v8697
    %v8702 = vand.u32 2147483647, %v8691
    %vm8703 = vcmp.eq.f32.partialorder %v8702, 8.507059e+37
    %v8704 = vand.u32 %v8691, 2147483648
    %v8705 = vor.u32 1.1754944e-38, %v8704
    %v8706 = vsel %vm8703, %v8705, %v8701
    %v8707 = vmul.f32 1.0, %v8706
    %v8708 = vrcp.pop %v8692
    %v8709 = vmul.f32 %v8692, %v8708
    %v8710 = vsub.f32 1.0, %v8709
    %v8711 = vmul.f32 %v8708, %v8710
    %v8712 = vadd.f32 %v8708, %v8711
    %vm8713 = vweird.f32 %v8692
    %vm8714 = vweird.f32 %v8708
    %vm8715 = vmor %vm8713, %vm8714
    %v8716 = vsel %vm8715, %v8708, %v8712
    %v8717 = vand.u32 2147483647, %v8692
    %vm8718 = vcmp.eq.f32.partialorder %v8717, 8.507059e+37
    %v8719 = vand.u32 %v8692, 2147483648
    %v8720 = vor.u32 1.1754944e-38, %v8719
    %v8721 = vsel %vm8718, %v8720, %v8716
    %v8722 = vmul.f32 1.0, %v8721
    %v8723 = vmul.f32 %v8667, %v7818
    %v8724 = vmul.f32 %v8682, %v7819
    %v8725 = vmul.f32 %v8629, %v8683
    %v8726 = vmul.f32 %v8644, %v8684
    %v8727 = vadd.f32 %v8723, %v8725
    %v8728 = vadd.f32 %v8724, %v8726
    %v8729 = vtanh.pop %v8727
    %v8730 = vtanh.pop %v8728
    %v8731 = vmul.f32 %v8707, %v8729
    %v8732 = vmul.f32 %v8722, %v8730
    %s8733 = scalar_lea.vmem %s0, 224
    %v8734 = vld [vmem:[%s8733] sm:$0xff]
    %v8735 = vld [vmem:[%s8733 + $0x8] sm:$0xff]
    %v8736 = vld [vmem:[%s8733 + $0x10] sm:$0xff]
    %v8737 = vld [vmem:[%s8733 + $0x18] sm:$0xff]
    %v8738 = vunpack.c.l.bf16 %v8734
    %v8739 = vunpack.c.h.bf16 %v8734
    %v8740 = vunpack.c.l.bf16 %v8735
    %v8741 = vunpack.c.h.bf16 %v8735
    %v8742 = vunpack.c.l.bf16 %v8736
    %v8743 = vunpack.c.h.bf16 %v8736
    %v8744 = vunpack.c.l.bf16 %v8737
    %v8745 = vunpack.c.h.bf16 %v8737
    %v8746 = vpack.c.bf16 %v8731, %v8731
    %v8747 = vpack.c.bf16 %v8732, %v8732
    %8748 = vmatpush.bf16.msra.mxu0 %v905
    %8749 = vmatpush.bf16.msra.mxu0 %v897
    %8750 = vmatpush.bf16.msra.mxu0 %v889
    %8751 = vmatpush.bf16.msra.mxu0 %v881
    %8752 = vmatpush.bf16.msra.mxu0 %v873
    %8753 = vmatpush.bf16.msra.mxu0 %v865
    %8754 = vmatpush.bf16.msra.mxu0 %v857
    %8755 = vmatpush.bf16.msra.mxu0 %v849
    %8756 = vmatmul.bf16.gmra.mxu0 %v8389
    %v8757 = vpop.f32.mrf.mxu0
    %v8758 = vadd.f32 0.0, %v8757
    %v8759 = vpop.f32.mrf.mxu0
    %8760 = vdwg.mxu0
    %8761 = vmatpush.bf16.msra.mxu0 %v969
    %8762 = vmatpush.bf16.msra.mxu0 %v961
    %8763 = vmatpush.bf16.msra.mxu0 %v953
    %8764 = vmatpush.bf16.msra.mxu0 %v945
    %8765 = vmatpush.bf16.msra.mxu0 %v937
    %8766 = vmatpush.bf16.msra.mxu0 %v929
    %8767 = vmatpush.bf16.msra.mxu0 %v921
    %8768 = vmatpush.bf16.msra.mxu0 %v913
    %8769 = vmatmul.bf16.gmra.mxu0 %v8390
    %v8770 = vpop.f32.mrf.mxu0
    %v8771 = vadd.f32 %v8758, %v8770
    %v8772 = vpop.f32.mrf.mxu0
    %8773 = vdwg.mxu0
    %8774 = vmatpush.bf16.msra.mxu0 %v906
    %8775 = vmatpush.bf16.msra.mxu0 %v898
    %8776 = vmatpush.bf16.msra.mxu0 %v890
    %8777 = vmatpush.bf16.msra.mxu0 %v882
    %8778 = vmatpush.bf16.msra.mxu0 %v874
    %8779 = vmatpush.bf16.msra.mxu0 %v866
    %8780 = vmatpush.bf16.msra.mxu0 %v858
    %8781 = vmatpush.bf16.msra.mxu0 %v850
    %8782 = vmatmul.bf16.gmra.mxu0 %v8389
    %v8783 = vpop.f32.mrf.mxu0
    %v8784 = vadd.f32 0.0, %v8783
    %v8785 = vpop.f32.mrf.mxu0
    %8786 = vdwg.mxu0
    %8787 = vmatpush.bf16.msra.mxu0 %v970
    %8788 = vmatpush.bf16.msra.mxu0 %v962
    %8789 = vmatpush.bf16.msra.mxu0 %v954
    %8790 = vmatpush.bf16.msra.mxu0 %v946
    %8791 = vmatpush.bf16.msra.mxu0 %v938
    %8792 = vmatpush.bf16.msra.mxu0 %v930
    %8793 = vmatpush.bf16.msra.mxu0 %v922
    %8794 = vmatpush.bf16.msra.mxu0 %v914
    %8795 = vmatmul.bf16.gmra.mxu0 %v8390
    %v8796 = vpop.f32.mrf.mxu0
    %v8797 = vadd.f32 %v8784, %v8796
    %v8798 = vpop.f32.mrf.mxu0
    %8799 = vdwg.mxu0
    %8800 = vmatpush.bf16.msra.mxu0 %v907
    %8801 = vmatpush.bf16.msra.mxu0 %v899
    %8802 = vmatpush.bf16.msra.mxu0 %v891
    %8803 = vmatpush.bf16.msra.mxu0 %v883
    %8804 = vmatpush.bf16.msra.mxu0 %v875
    %8805 = vmatpush.bf16.msra.mxu0 %v867
    %8806 = vmatpush.bf16.msra.mxu0 %v859
    %8807 = vmatpush.bf16.msra.mxu0 %v851
    %8808 = vmatmul.bf16.gmra.mxu0 %v8389
    %v8809 = vpop.f32.mrf.mxu0
    %v8810 = vadd.f32 0.0, %v8809
    %v8811 = vpop.f32.mrf.mxu0
    %8812 = vdwg.mxu0
    %8813 = vmatpush.bf16.msra.mxu0 %v971
    %8814 = vmatpush.bf16.msra.mxu0 %v963
    %8815 = vmatpush.bf16.msra.mxu0 %v955
    %8816 = vmatpush.bf16.msra.mxu0 %v947
    %8817 = vmatpush.bf16.msra.mxu0 %v939
    %8818 = vmatpush.bf16.msra.mxu0 %v931
    %8819 = vmatpush.bf16.msra.mxu0 %v923
    %8820 = vmatpush.bf16.msra.mxu0 %v915
    %8821 = vmatmul.bf16.gmra.mxu0 %v8390
    %v8822 = vpop.f32.mrf.mxu0
    %v8823 = vadd.f32 %v8810, %v8822
    %v8824 = vpop.f32.mrf.mxu0
    %8825 = vdwg.mxu0
    %8826 = vmatpush.bf16.msra.mxu0 %v908
    %8827 = vmatpush.bf16.msra.mxu0 %v900
    %8828 = vmatpush.bf16.msra.mxu0 %v892
    %8829 = vmatpush.bf16.msra.mxu0 %v884
    %8830 = vmatpush.bf16.msra.mxu0 %v876
    %8831 = vmatpush.bf16.msra.mxu0 %v868
    %8832 = vmatpush.bf16.msra.mxu0 %v860
    %8833 = vmatpush.bf16.msra.mxu0 %v852
    %8834 = vmatmul.bf16.gmra.mxu0 %v8389
    %v8835 = vpop.f32.mrf.mxu0
    %v8836 = vadd.f32 0.0, %v8835
    %v8837 = vpop.f32.mrf.mxu0
    %8838 = vdwg.mxu0
    %8839 = vmatpush.bf16.msra.mxu0 %v972
    %8840 = vmatpush.bf16.msra.mxu0 %v964
    %8841 = vmatpush.bf16.msra.mxu0 %v956
    %8842 = vmatpush.bf16.msra.mxu0 %v948
    %8843 = vmatpush.bf16.msra.mxu0 %v940
    %8844 = vmatpush.bf16.msra.mxu0 %v932
    %8845 = vmatpush.bf16.msra.mxu0 %v924
    %8846 = vmatpush.bf16.msra.mxu0 %v916
    %8847 = vmatmul.bf16.gmra.mxu0 %v8390
    %v8848 = vpop.f32.mrf.mxu0
    %v8849 = vadd.f32 %v8836, %v8848
    %v8850 = vpop.f32.mrf.mxu0
    %8851 = vdwg.mxu0
    %8852 = vmatpush.bf16.msra.mxu0 %v909
    %8853 = vmatpush.bf16.msra.mxu0 %v901
    %8854 = vmatpush.bf16.msra.mxu0 %v893
    %8855 = vmatpush.bf16.msra.mxu0 %v885
    %8856 = vmatpush.bf16.msra.mxu0 %v877
    %8857 = vmatpush.bf16.msra.mxu0 %v869
    %8858 = vmatpush.bf16.msra.mxu0 %v861
    %8859 = vmatpush.bf16.msra.mxu0 %v853
    %8860 = vmatmul.bf16.gmra.mxu0 %v8389
    %v8861 = vpop.f32.mrf.mxu0
    %v8862 = vadd.f32 0.0, %v8861
    %v8863 = vpop.f32.mrf.mxu0
    %8864 = vdwg.mxu0
    %8865 = vmatpush.bf16.msra.mxu0 %v973
    %8866 = vmatpush.bf16.msra.mxu0 %v965
    %8867 = vmatpush.bf16.msra.mxu0 %v957
    %8868 = vmatpush.bf16.msra.mxu0 %v949
    %8869 = vmatpush.bf16.msra.mxu0 %v941
    %8870 = vmatpush.bf16.msra.mxu0 %v933
    %8871 = vmatpush.bf16.msra.mxu0 %v925
    %8872 = vmatpush.bf16.msra.mxu0 %v917
    %8873 = vmatmul.bf16.gmra.mxu0 %v8390
    %v8874 = vpop.f32.mrf.mxu0
    %v8875 = vadd.f32 %v8862, %v8874
    %v8876 = vpop.f32.mrf.mxu0
    %8877 = vdwg.mxu0
    %8878 = vmatpush.bf16.msra.mxu0 %v910
    %8879 = vmatpush.bf16.msra.mxu0 %v902
    %8880 = vmatpush.bf16.msra.mxu0 %v894
    %8881 = vmatpush.bf16.msra.mxu0 %v886
    %8882 = vmatpush.bf16.msra.mxu0 %v878
    %8883 = vmatpush.bf16.msra.mxu0 %v870
    %8884 = vmatpush.bf16.msra.mxu0 %v862
    %8885 = vmatpush.bf16.msra.mxu0 %v854
    %8886 = vmatmul.bf16.gmra.mxu0 %v8389
    %v8887 = vpop.f32.mrf.mxu0
    %v8888 = vadd.f32 0.0, %v8887
    %v8889 = vpop.f32.mrf.mxu0
    %8890 = vdwg.mxu0
    %8891 = vmatpush.bf16.msra.mxu0 %v974
    %8892 = vmatpush.bf16.msra.mxu0 %v966
    %8893 = vmatpush.bf16.msra.mxu0 %v958
    %8894 = vmatpush.bf16.msra.mxu0 %v950
    %8895 = vmatpush.bf16.msra.mxu0 %v942
    %8896 = vmatpush.bf16.msra.mxu0 %v934
    %8897 = vmatpush.bf16.msra.mxu0 %v926
    %8898 = vmatpush.bf16.msra.mxu0 %v918
    %8899 = vmatmul.bf16.gmra.mxu0 %v8390
    %v8900 = vpop.f32.mrf.mxu0
    %v8901 = vadd.f32 %v8888, %v8900
    %v8902 = vpop.f32.mrf.mxu0
    %8903 = vdwg.mxu0
    %8904 = vmatpush.bf16.msra.mxu0 %v911
    %8905 = vmatpush.bf16.msra.mxu0 %v903
    %8906 = vmatpush.bf16.msra.mxu0 %v895
    %8907 = vmatpush.bf16.msra.mxu0 %v887
    %8908 = vmatpush.bf16.msra.mxu0 %v879
    %8909 = vmatpush.bf16.msra.mxu0 %v871
    %8910 = vmatpush.bf16.msra.mxu0 %v863
    %8911 = vmatpush.bf16.msra.mxu0 %v855
    %8912 = vmatmul.bf16.gmra.mxu0 %v8389
    %v8913 = vpop.f32.mrf.mxu0
    %v8914 = vadd.f32 0.0, %v8913
    %v8915 = vpop.f32.mrf.mxu0
    %8916 = vdwg.mxu0
    %8917 = vmatpush.bf16.msra.mxu0 %v975
    %8918 = vmatpush.bf16.msra.mxu0 %v967
    %8919 = vmatpush.bf16.msra.mxu0 %v959
    %8920 = vmatpush.bf16.msra.mxu0 %v951
    %8921 = vmatpush.bf16.msra.mxu0 %v943
    %8922 = vmatpush.bf16.msra.mxu0 %v935
    %8923 = vmatpush.bf16.msra.mxu0 %v927
    %8924 = vmatpush.bf16.msra.mxu0 %v919
    %8925 = vmatmul.bf16.gmra.mxu0 %v8390
    %v8926 = vpop.f32.mrf.mxu0
    %v8927 = vadd.f32 %v8914, %v8926
    %v8928 = vpop.f32.mrf.mxu0
    %8929 = vdwg.mxu0
    %8930 = vmatpush.bf16.msra.mxu0 %v912
    %8931 = vmatpush.bf16.msra.mxu0 %v904
    %8932 = vmatpush.bf16.msra.mxu0 %v896
    %8933 = vmatpush.bf16.msra.mxu0 %v888
    %8934 = vmatpush.bf16.msra.mxu0 %v880
    %8935 = vmatpush.bf16.msra.mxu0 %v872
    %8936 = vmatpush.bf16.msra.mxu0 %v864
    %8937 = vmatpush.bf16.msra.mxu0 %v856
    %8938 = vmatmul.bf16.gmra.mxu0 %v8389
    %v8939 = vpop.f32.mrf.mxu0
    %v8940 = vadd.f32 0.0, %v8939
    %v8941 = vpop.f32.mrf.mxu0
    %8942 = vdwg.mxu0
    %8943 = vmatpush.bf16.msra.mxu0 %v976
    %8944 = vmatpush.bf16.msra.mxu0 %v968
    %8945 = vmatpush.bf16.msra.mxu0 %v960
    %8946 = vmatpush.bf16.msra.mxu0 %v952
    %8947 = vmatpush.bf16.msra.mxu0 %v944
    %8948 = vmatpush.bf16.msra.mxu0 %v936
    %8949 = vmatpush.bf16.msra.mxu0 %v928
    %8950 = vmatpush.bf16.msra.mxu0 %v920
    %8951 = vmatmul.bf16.gmra.mxu0 %v8390
    %v8952 = vpop.f32.mrf.mxu0
    %v8953 = vadd.f32 %v8940, %v8952
    %v8954 = vpop.f32.mrf.mxu0
    %8955 = vdwg.mxu0
    %v8956 = vadd.f32 %v8738, %v8771
    %v8957 = vadd.f32 %v8739, %v8797
    %v8958 = vadd.f32 %v8740, %v8823
    %v8959 = vadd.f32 %v8741, %v8849
    %v8960 = vadd.f32 %v8742, %v8875
    %v8961 = vadd.f32 %v8743, %v8901
    %v8962 = vadd.f32 %v8744, %v8927
    %v8963 = vadd.f32 %v8745, %v8953
    %v8964 = vxor.u32 %v8956, 2147483648
    %v8965 = vxor.u32 %v8957, 2147483648
    %v8966 = vmul.f32 %v8964, 1.442695
    %v8967 = vpow.pop %v8966
    %v8968 = vmul.f32 %v8965, 1.442695
    %v8969 = vpow.pop %v8968
    %v8970 = vadd.f32 %v8967, 1.0
    %v8971 = vadd.f32 %v8969, 1.0
    %v8972 = vrcp.pop %v8970
    %v8973 = vmul.f32 %v8970, %v8972
    %v8974 = vsub.f32 1.0, %v8973
    %v8975 = vmul.f32 %v8972, %v8974
    %v8976 = vadd.f32 %v8972, %v8975
    %vm8977 = vweird.f32 %v8970
    %vm8978 = vweird.f32 %v8972
    %vm8979 = vmor %vm8977, %vm8978
    %v8980 = vsel %vm8979, %v8972, %v8976
    %v8981 = vand.u32 2147483647, %v8970
    %vm8982 = vcmp.eq.f32.partialorder %v8981, 8.507059e+37
    %v8983 = vand.u32 %v8970, 2147483648
    %v8984 = vor.u32 1.1754944e-38, %v8983
    %v8985 = vsel %vm8982, %v8984, %v8980
    %v8986 = vmul.f32 1.0, %v8985
    %v8987 = vrcp.pop %v8971
    %v8988 = vmul.f32 %v8971, %v8987
    %v8989 = vsub.f32 1.0, %v8988
    %v8990 = vmul.f32 %v8987, %v8989
    %v8991 = vadd.f32 %v8987, %v8990
    %vm8992 = vweird.f32 %v8971
    %vm8993 = vweird.f32 %v8987
    %vm8994 = vmor %vm8992, %vm8993
    %v8995 = vsel %vm8994, %v8987, %v8991
    %v8996 = vand.u32 2147483647, %v8971
    %vm8997 = vcmp.eq.f32.partialorder %v8996, 8.507059e+37
    %v8998 = vand.u32 %v8971, 2147483648
    %v8999 = vor.u32 1.1754944e-38, %v8998
    %v9000 = vsel %vm8997, %v8999, %v8995
    %v9001 = vmul.f32 1.0, %v9000
    %v9002 = vxor.u32 %v8958, 2147483648
    %v9003 = vxor.u32 %v8959, 2147483648
    %v9004 = vmul.f32 %v9002, 1.442695
    %v9005 = vpow.pop %v9004
    %v9006 = vmul.f32 %v9003, 1.442695
    %v9007 = vpow.pop %v9006
    %v9008 = vadd.f32 %v9005, 1.0
    %v9009 = vadd.f32 %v9007, 1.0
    %v9010 = vrcp.pop %v9008
    %v9011 = vmul.f32 %v9008, %v9010
    %v9012 = vsub.f32 1.0, %v9011
    %v9013 = vmul.f32 %v9010, %v9012
    %v9014 = vadd.f32 %v9010, %v9013
    %vm9015 = vweird.f32 %v9008
    %vm9016 = vweird.f32 %v9010
    %vm9017 = vmor %vm9015, %vm9016
    %v9018 = vsel %vm9017, %v9010, %v9014
    %v9019 = vand.u32 2147483647, %v9008
    %vm9020 = vcmp.eq.f32.partialorder %v9019, 8.507059e+37
    %v9021 = vand.u32 %v9008, 2147483648
    %v9022 = vor.u32 1.1754944e-38, %v9021
    %v9023 = vsel %vm9020, %v9022, %v9018
    %v9024 = vmul.f32 1.0, %v9023
    %v9025 = vrcp.pop %v9009
    %v9026 = vmul.f32 %v9009, %v9025
    %v9027 = vsub.f32 1.0, %v9026
    %v9028 = vmul.f32 %v9025, %v9027
    %v9029 = vadd.f32 %v9025, %v9028
    %vm9030 = vweird.f32 %v9009
    %vm9031 = vweird.f32 %v9025
    %vm9032 = vmor %vm9030, %vm9031
    %v9033 = vsel %vm9032, %v9025, %v9029
    %v9034 = vand.u32 2147483647, %v9009
    %vm9035 = vcmp.eq.f32.partialorder %v9034, 8.507059e+37
    %v9036 = vand.u32 %v9009, 2147483648
    %v9037 = vor.u32 1.1754944e-38, %v9036
    %v9038 = vsel %vm9035, %v9037, %v9033
    %v9039 = vmul.f32 1.0, %v9038
    %v9040 = vtanh.pop %v8960
    %v9041 = vtanh.pop %v8961
    %v9042 = vxor.u32 %v8962, 2147483648
    %v9043 = vxor.u32 %v8963, 2147483648
    %v9044 = vmul.f32 %v9042, 1.442695
    %v9045 = vpow.pop %v9044
    %v9046 = vmul.f32 %v9043, 1.442695
    %v9047 = vpow.pop %v9046
    %v9048 = vadd.f32 %v9045, 1.0
    %v9049 = vadd.f32 %v9047, 1.0
    %v9050 = vrcp.pop %v9048
    %v9051 = vmul.f32 %v9048, %v9050
    %v9052 = vsub.f32 1.0, %v9051
    %v9053 = vmul.f32 %v9050, %v9052
    %v9054 = vadd.f32 %v9050, %v9053
    %vm9055 = vweird.f32 %v9048
    %vm9056 = vweird.f32 %v9050
    %vm9057 = vmor %vm9055, %vm9056
    %v9058 = vsel %vm9057, %v9050, %v9054
    %v9059 = vand.u32 2147483647, %v9048
    %vm9060 = vcmp.eq.f32.partialorder %v9059, 8.507059e+37
    %v9061 = vand.u32 %v9048, 2147483648
    %v9062 = vor.u32 1.1754944e-38, %v9061
    %v9063 = vsel %vm9060, %v9062, %v9058
    %v9064 = vmul.f32 1.0, %v9063
    %v9065 = vrcp.pop %v9049
    %v9066 = vmul.f32 %v9049, %v9065
    %v9067 = vsub.f32 1.0, %v9066
    %v9068 = vmul.f32 %v9065, %v9067
    %v9069 = vadd.f32 %v9065, %v9068
    %vm9070 = vweird.f32 %v9049
    %vm9071 = vweird.f32 %v9065
    %vm9072 = vmor %vm9070, %vm9071
    %v9073 = vsel %vm9072, %v9065, %v9069
    %v9074 = vand.u32 2147483647, %v9049
    %vm9075 = vcmp.eq.f32.partialorder %v9074, 8.507059e+37
    %v9076 = vand.u32 %v9049, 2147483648
    %v9077 = vor.u32 1.1754944e-38, %v9076
    %v9078 = vsel %vm9075, %v9077, %v9073
    %v9079 = vmul.f32 1.0, %v9078
    %v9080 = vmul.f32 %v9024, %v8175
    %v9081 = vmul.f32 %v9039, %v8176
    %v9082 = vmul.f32 %v8986, %v9040
    %v9083 = vmul.f32 %v9001, %v9041
    %v9084 = vadd.f32 %v9080, %v9082
    %v9085 = vadd.f32 %v9081, %v9083
    %v9086 = vtanh.pop %v9084
    %v9087 = vtanh.pop %v9085
    %v9088 = vmul.f32 %v9064, %v9086
    %v9089 = vmul.f32 %v9079, %v9087
    %9090 = vmatpush.bf16.msra.mxu0 %v1887
    %9091 = vmatpush.bf16.msra.mxu0 %v1879
    %9092 = vmatpush.bf16.msra.mxu0 %v1871
    %9093 = vmatpush.bf16.msra.mxu0 %v1863
    %9094 = vmatpush.bf16.msra.mxu0 %v1855
    %9095 = vmatpush.bf16.msra.mxu0 %v1847
    %9096 = vmatpush.bf16.msra.mxu0 %v1839
    %9097 = vmatpush.bf16.msra.mxu0 %v1831
    %9098 = vmatmul.bf16.gmra.mxu0 %v8746
    %v9099 = vpop.f32.mrf.mxu0
    %v9100 = vadd.f32 %v425, %v9099
    %v9101 = vpop.f32.mrf.mxu0
    %9102 = vdwg.mxu0
    %9103 = vmatpush.bf16.msra.mxu0 %v1951
    %9104 = vmatpush.bf16.msra.mxu0 %v1943
    %9105 = vmatpush.bf16.msra.mxu0 %v1935
    %9106 = vmatpush.bf16.msra.mxu0 %v1927
    %9107 = vmatpush.bf16.msra.mxu0 %v1919
    %9108 = vmatpush.bf16.msra.mxu0 %v1911
    %9109 = vmatpush.bf16.msra.mxu0 %v1903
    %9110 = vmatpush.bf16.msra.mxu0 %v1895
    %9111 = vmatmul.bf16.gmra.mxu0 %v8747
    %v9112 = vpop.f32.mrf.mxu0
    %v9113 = vadd.f32 %v9100, %v9112
    %v9114 = vpop.f32.mrf.mxu0
    %9115 = vdwg.mxu0
    %9116 = vmatpush.bf16.msra.mxu0 %v1888
    %9117 = vmatpush.bf16.msra.mxu0 %v1880
    %9118 = vmatpush.bf16.msra.mxu0 %v1872
    %9119 = vmatpush.bf16.msra.mxu0 %v1864
    %9120 = vmatpush.bf16.msra.mxu0 %v1856
    %9121 = vmatpush.bf16.msra.mxu0 %v1848
    %9122 = vmatpush.bf16.msra.mxu0 %v1840
    %9123 = vmatpush.bf16.msra.mxu0 %v1832
    %9124 = vmatmul.bf16.gmra.mxu0 %v8746
    %v9125 = vpop.f32.mrf.mxu0
    %v9126 = vadd.f32 %v426, %v9125
    %v9127 = vpop.f32.mrf.mxu0
    %9128 = vdwg.mxu0
    %9129 = vmatpush.bf16.msra.mxu0 %v1952
    %9130 = vmatpush.bf16.msra.mxu0 %v1944
    %9131 = vmatpush.bf16.msra.mxu0 %v1936
    %9132 = vmatpush.bf16.msra.mxu0 %v1928
    %9133 = vmatpush.bf16.msra.mxu0 %v1920
    %9134 = vmatpush.bf16.msra.mxu0 %v1912
    %9135 = vmatpush.bf16.msra.mxu0 %v1904
    %9136 = vmatpush.bf16.msra.mxu0 %v1896
    %9137 = vmatmul.bf16.gmra.mxu0 %v8747
    %v9138 = vpop.f32.mrf.mxu0
    %v9139 = vadd.f32 %v9126, %v9138
    %v9140 = vpop.f32.mrf.mxu0
    %9141 = vdwg.mxu0
    %9142 = vmatpush.bf16.msra.mxu0 %v1889
    %9143 = vmatpush.bf16.msra.mxu0 %v1881
    %9144 = vmatpush.bf16.msra.mxu0 %v1873
    %9145 = vmatpush.bf16.msra.mxu0 %v1865
    %9146 = vmatpush.bf16.msra.mxu0 %v1857
    %9147 = vmatpush.bf16.msra.mxu0 %v1849
    %9148 = vmatpush.bf16.msra.mxu0 %v1841
    %9149 = vmatpush.bf16.msra.mxu0 %v1833
    %9150 = vmatmul.bf16.gmra.mxu0 %v8746
    %v9151 = vpop.f32.mrf.mxu0
    %v9152 = vadd.f32 %v427, %v9151
    %v9153 = vpop.f32.mrf.mxu0
    %9154 = vdwg.mxu0
    %9155 = vmatpush.bf16.msra.mxu0 %v1953
    %9156 = vmatpush.bf16.msra.mxu0 %v1945
    %9157 = vmatpush.bf16.msra.mxu0 %v1937
    %9158 = vmatpush.bf16.msra.mxu0 %v1929
    %9159 = vmatpush.bf16.msra.mxu0 %v1921
    %9160 = vmatpush.bf16.msra.mxu0 %v1913
    %9161 = vmatpush.bf16.msra.mxu0 %v1905
    %9162 = vmatpush.bf16.msra.mxu0 %v1897
    %9163 = vmatmul.bf16.gmra.mxu0 %v8747
    %v9164 = vpop.f32.mrf.mxu0
    %v9165 = vadd.f32 %v9152, %v9164
    %v9166 = vpop.f32.mrf.mxu0
    %9167 = vdwg.mxu0
    %9168 = vmatpush.bf16.msra.mxu0 %v1890
    %9169 = vmatpush.bf16.msra.mxu0 %v1882
    %9170 = vmatpush.bf16.msra.mxu0 %v1874
    %9171 = vmatpush.bf16.msra.mxu0 %v1866
    %9172 = vmatpush.bf16.msra.mxu0 %v1858
    %9173 = vmatpush.bf16.msra.mxu0 %v1850
    %9174 = vmatpush.bf16.msra.mxu0 %v1842
    %9175 = vmatpush.bf16.msra.mxu0 %v1834
    %9176 = vmatmul.bf16.gmra.mxu0 %v8746
    %v9177 = vpop.f32.mrf.mxu0
    %v9178 = vadd.f32 %v428, %v9177
    %v9179 = vpop.f32.mrf.mxu0
    %9180 = vdwg.mxu0
    %9181 = vmatpush.bf16.msra.mxu0 %v1954
    %9182 = vmatpush.bf16.msra.mxu0 %v1946
    %9183 = vmatpush.bf16.msra.mxu0 %v1938
    %9184 = vmatpush.bf16.msra.mxu0 %v1930
    %9185 = vmatpush.bf16.msra.mxu0 %v1922
    %9186 = vmatpush.bf16.msra.mxu0 %v1914
    %9187 = vmatpush.bf16.msra.mxu0 %v1906
    %9188 = vmatpush.bf16.msra.mxu0 %v1898
    %9189 = vmatmul.bf16.gmra.mxu0 %v8747
    %v9190 = vpop.f32.mrf.mxu0
    %v9191 = vadd.f32 %v9178, %v9190
    %v9192 = vpop.f32.mrf.mxu0
    %9193 = vdwg.mxu0
    %9194 = vmatpush.bf16.msra.mxu0 %v1891
    %9195 = vmatpush.bf16.msra.mxu0 %v1883
    %9196 = vmatpush.bf16.msra.mxu0 %v1875
    %9197 = vmatpush.bf16.msra.mxu0 %v1867
    %9198 = vmatpush.bf16.msra.mxu0 %v1859
    %9199 = vmatpush.bf16.msra.mxu0 %v1851
    %9200 = vmatpush.bf16.msra.mxu0 %v1843
    %9201 = vmatpush.bf16.msra.mxu0 %v1835
    %9202 = vmatmul.bf16.gmra.mxu0 %v8746
    %v9203 = vpop.f32.mrf.mxu0
    %v9204 = vadd.f32 %v429, %v9203
    %v9205 = vpop.f32.mrf.mxu0
    %9206 = vdwg.mxu0
    %9207 = vmatpush.bf16.msra.mxu0 %v1955
    %9208 = vmatpush.bf16.msra.mxu0 %v1947
    %9209 = vmatpush.bf16.msra.mxu0 %v1939
    %9210 = vmatpush.bf16.msra.mxu0 %v1931
    %9211 = vmatpush.bf16.msra.mxu0 %v1923
    %9212 = vmatpush.bf16.msra.mxu0 %v1915
    %9213 = vmatpush.bf16.msra.mxu0 %v1907
    %9214 = vmatpush.bf16.msra.mxu0 %v1899
    %9215 = vmatmul.bf16.gmra.mxu0 %v8747
    %v9216 = vpop.f32.mrf.mxu0
    %v9217 = vadd.f32 %v9204, %v9216
    %v9218 = vpop.f32.mrf.mxu0
    %9219 = vdwg.mxu0
    %9220 = vmatpush.bf16.msra.mxu0 %v1892
    %9221 = vmatpush.bf16.msra.mxu0 %v1884
    %9222 = vmatpush.bf16.msra.mxu0 %v1876
    %9223 = vmatpush.bf16.msra.mxu0 %v1868
    %9224 = vmatpush.bf16.msra.mxu0 %v1860
    %9225 = vmatpush.bf16.msra.mxu0 %v1852
    %9226 = vmatpush.bf16.msra.mxu0 %v1844
    %9227 = vmatpush.bf16.msra.mxu0 %v1836
    %9228 = vmatmul.bf16.gmra.mxu0 %v8746
    %v9229 = vpop.f32.mrf.mxu0
    %v9230 = vadd.f32 %v430, %v9229
    %v9231 = vpop.f32.mrf.mxu0
    %9232 = vdwg.mxu0
    %9233 = vmatpush.bf16.msra.mxu0 %v1956
    %9234 = vmatpush.bf16.msra.mxu0 %v1948
    %9235 = vmatpush.bf16.msra.mxu0 %v1940
    %9236 = vmatpush.bf16.msra.mxu0 %v1932
    %9237 = vmatpush.bf16.msra.mxu0 %v1924
    %9238 = vmatpush.bf16.msra.mxu0 %v1916
    %9239 = vmatpush.bf16.msra.mxu0 %v1908
    %9240 = vmatpush.bf16.msra.mxu0 %v1900
    %9241 = vmatmul.bf16.gmra.mxu0 %v8747
    %v9242 = vpop.f32.mrf.mxu0
    %v9243 = vadd.f32 %v9230, %v9242
    %v9244 = vpop.f32.mrf.mxu0
    %9245 = vdwg.mxu0
    %9246 = vmatpush.bf16.msra.mxu0 %v1893
    %9247 = vmatpush.bf16.msra.mxu0 %v1885
    %9248 = vmatpush.bf16.msra.mxu0 %v1877
    %9249 = vmatpush.bf16.msra.mxu0 %v1869
    %9250 = vmatpush.bf16.msra.mxu0 %v1861
    %9251 = vmatpush.bf16.msra.mxu0 %v1853
    %9252 = vmatpush.bf16.msra.mxu0 %v1845
    %9253 = vmatpush.bf16.msra.mxu0 %v1837
    %9254 = vmatmul.bf16.gmra.mxu0 %v8746
    %v9255 = vpop.f32.mrf.mxu0
    %v9256 = vadd.f32 %v431, %v9255
    %v9257 = vpop.f32.mrf.mxu0
    %9258 = vdwg.mxu0
    %9259 = vmatpush.bf16.msra.mxu0 %v1957
    %9260 = vmatpush.bf16.msra.mxu0 %v1949
    %9261 = vmatpush.bf16.msra.mxu0 %v1941
    %9262 = vmatpush.bf16.msra.mxu0 %v1933
    %9263 = vmatpush.bf16.msra.mxu0 %v1925
    %9264 = vmatpush.bf16.msra.mxu0 %v1917
    %9265 = vmatpush.bf16.msra.mxu0 %v1909
    %9266 = vmatpush.bf16.msra.mxu0 %v1901
    %9267 = vmatmul.bf16.gmra.mxu0 %v8747
    %v9268 = vpop.f32.mrf.mxu0
    %v9269 = vadd.f32 %v9256, %v9268
    %v9270 = vpop.f32.mrf.mxu0
    %9271 = vdwg.mxu0
    %9272 = vmatpush.bf16.msra.mxu0 %v1894
    %9273 = vmatpush.bf16.msra.mxu0 %v1886
    %9274 = vmatpush.bf16.msra.mxu0 %v1878
    %9275 = vmatpush.bf16.msra.mxu0 %v1870
    %9276 = vmatpush.bf16.msra.mxu0 %v1862
    %9277 = vmatpush.bf16.msra.mxu0 %v1854
    %9278 = vmatpush.bf16.msra.mxu0 %v1846
    %9279 = vmatpush.bf16.msra.mxu0 %v1838
    %9280 = vmatmul.bf16.gmra.mxu0 %v8746
    %v9281 = vpop.f32.mrf.mxu0
    %v9282 = vadd.f32 %v432, %v9281
    %v9283 = vpop.f32.mrf.mxu0
    %9284 = vdwg.mxu0
    %9285 = vmatpush.bf16.msra.mxu0 %v1958
    %9286 = vmatpush.bf16.msra.mxu0 %v1950
    %9287 = vmatpush.bf16.msra.mxu0 %v1942
    %9288 = vmatpush.bf16.msra.mxu0 %v1934
    %9289 = vmatpush.bf16.msra.mxu0 %v1926
    %9290 = vmatpush.bf16.msra.mxu0 %v1918
    %9291 = vmatpush.bf16.msra.mxu0 %v1910
    %9292 = vmatpush.bf16.msra.mxu0 %v1902
    %9293 = vmatmul.bf16.gmra.mxu0 %v8747
    %v9294 = vpop.f32.mrf.mxu0
    %v9295 = vadd.f32 %v9282, %v9294
    %v9296 = vpop.f32.mrf.mxu0
    %9297 = vdwg.mxu0
    %v9298 = vpack.c.bf16 %v9088, %v9088
    %v9299 = vpack.c.bf16 %v9089, %v9089
    %9300 = vmatpush.bf16.msra.mxu0 %v2737
    %9301 = vmatpush.bf16.msra.mxu0 %v2729
    %9302 = vmatpush.bf16.msra.mxu0 %v2721
    %9303 = vmatpush.bf16.msra.mxu0 %v2713
    %9304 = vmatpush.bf16.msra.mxu0 %v2705
    %9305 = vmatpush.bf16.msra.mxu0 %v2697
    %9306 = vmatpush.bf16.msra.mxu0 %v2689
    %9307 = vmatpush.bf16.msra.mxu0 %v2681
    %9308 = vmatmul.bf16.gmra.mxu0 %v9298
    %v9309 = vpop.f32.mrf.mxu0
    %v9310 = vadd.f32 0.0, %v9309
    %v9311 = vpop.f32.mrf.mxu0
    %9312 = vdwg.mxu0
    %9313 = vmatpush.bf16.msra.mxu0 %v2801
    %9314 = vmatpush.bf16.msra.mxu0 %v2793
    %9315 = vmatpush.bf16.msra.mxu0 %v2785
    %9316 = vmatpush.bf16.msra.mxu0 %v2777
    %9317 = vmatpush.bf16.msra.mxu0 %v2769
    %9318 = vmatpush.bf16.msra.mxu0 %v2761
    %9319 = vmatpush.bf16.msra.mxu0 %v2753
    %9320 = vmatpush.bf16.msra.mxu0 %v2745
    %9321 = vmatmul.bf16.gmra.mxu0 %v9299
    %v9322 = vpop.f32.mrf.mxu0
    %v9323 = vadd.f32 %v9310, %v9322
    %v9324 = vpop.f32.mrf.mxu0
    %9325 = vdwg.mxu0
    %9326 = vmatpush.bf16.msra.mxu0 %v2738
    %9327 = vmatpush.bf16.msra.mxu0 %v2730
    %9328 = vmatpush.bf16.msra.mxu0 %v2722
    %9329 = vmatpush.bf16.msra.mxu0 %v2714
    %9330 = vmatpush.bf16.msra.mxu0 %v2706
    %9331 = vmatpush.bf16.msra.mxu0 %v2698
    %9332 = vmatpush.bf16.msra.mxu0 %v2690
    %9333 = vmatpush.bf16.msra.mxu0 %v2682
    %9334 = vmatmul.bf16.gmra.mxu0 %v9298
    %v9335 = vpop.f32.mrf.mxu0
    %v9336 = vadd.f32 0.0, %v9335
    %v9337 = vpop.f32.mrf.mxu0
    %9338 = vdwg.mxu0
    %9339 = vmatpush.bf16.msra.mxu0 %v2802
    %9340 = vmatpush.bf16.msra.mxu0 %v2794
    %9341 = vmatpush.bf16.msra.mxu0 %v2786
    %9342 = vmatpush.bf16.msra.mxu0 %v2778
    %9343 = vmatpush.bf16.msra.mxu0 %v2770
    %9344 = vmatpush.bf16.msra.mxu0 %v2762
    %9345 = vmatpush.bf16.msra.mxu0 %v2754
    %9346 = vmatpush.bf16.msra.mxu0 %v2746
    %9347 = vmatmul.bf16.gmra.mxu0 %v9299
    %v9348 = vpop.f32.mrf.mxu0
    %v9349 = vadd.f32 %v9336, %v9348
    %v9350 = vpop.f32.mrf.mxu0
    %9351 = vdwg.mxu0
    %9352 = vmatpush.bf16.msra.mxu0 %v2739
    %9353 = vmatpush.bf16.msra.mxu0 %v2731
    %9354 = vmatpush.bf16.msra.mxu0 %v2723
    %9355 = vmatpush.bf16.msra.mxu0 %v2715
    %9356 = vmatpush.bf16.msra.mxu0 %v2707
    %9357 = vmatpush.bf16.msra.mxu0 %v2699
    %9358 = vmatpush.bf16.msra.mxu0 %v2691
    %9359 = vmatpush.bf16.msra.mxu0 %v2683
    %9360 = vmatmul.bf16.gmra.mxu0 %v9298
    %v9361 = vpop.f32.mrf.mxu0
    %v9362 = vadd.f32 0.0, %v9361
    %v9363 = vpop.f32.mrf.mxu0
    %9364 = vdwg.mxu0
    %9365 = vmatpush.bf16.msra.mxu0 %v2803
    %9366 = vmatpush.bf16.msra.mxu0 %v2795
    %9367 = vmatpush.bf16.msra.mxu0 %v2787
    %9368 = vmatpush.bf16.msra.mxu0 %v2779
    %9369 = vmatpush.bf16.msra.mxu0 %v2771
    %9370 = vmatpush.bf16.msra.mxu0 %v2763
    %9371 = vmatpush.bf16.msra.mxu0 %v2755
    %9372 = vmatpush.bf16.msra.mxu0 %v2747
    %9373 = vmatmul.bf16.gmra.mxu0 %v9299
    %v9374 = vpop.f32.mrf.mxu0
    %v9375 = vadd.f32 %v9362, %v9374
    %v9376 = vpop.f32.mrf.mxu0
    %9377 = vdwg.mxu0
    %9378 = vmatpush.bf16.msra.mxu0 %v2740
    %9379 = vmatpush.bf16.msra.mxu0 %v2732
    %9380 = vmatpush.bf16.msra.mxu0 %v2724
    %9381 = vmatpush.bf16.msra.mxu0 %v2716
    %9382 = vmatpush.bf16.msra.mxu0 %v2708
    %9383 = vmatpush.bf16.msra.mxu0 %v2700
    %9384 = vmatpush.bf16.msra.mxu0 %v2692
    %9385 = vmatpush.bf16.msra.mxu0 %v2684
    %9386 = vmatmul.bf16.gmra.mxu0 %v9298
    %v9387 = vpop.f32.mrf.mxu0
    %v9388 = vadd.f32 0.0, %v9387
    %v9389 = vpop.f32.mrf.mxu0
    %9390 = vdwg.mxu0
    %9391 = vmatpush.bf16.msra.mxu0 %v2804
    %9392 = vmatpush.bf16.msra.mxu0 %v2796
    %9393 = vmatpush.bf16.msra.mxu0 %v2788
    %9394 = vmatpush.bf16.msra.mxu0 %v2780
    %9395 = vmatpush.bf16.msra.mxu0 %v2772
    %9396 = vmatpush.bf16.msra.mxu0 %v2764
    %9397 = vmatpush.bf16.msra.mxu0 %v2756
    %9398 = vmatpush.bf16.msra.mxu0 %v2748
    %9399 = vmatmul.bf16.gmra.mxu0 %v9299
    %v9400 = vpop.f32.mrf.mxu0
    %v9401 = vadd.f32 %v9388, %v9400
    %v9402 = vpop.f32.mrf.mxu0
    %9403 = vdwg.mxu0
    %9404 = vmatpush.bf16.msra.mxu0 %v2741
    %9405 = vmatpush.bf16.msra.mxu0 %v2733
    %9406 = vmatpush.bf16.msra.mxu0 %v2725
    %9407 = vmatpush.bf16.msra.mxu0 %v2717
    %9408 = vmatpush.bf16.msra.mxu0 %v2709
    %9409 = vmatpush.bf16.msra.mxu0 %v2701
    %9410 = vmatpush.bf16.msra.mxu0 %v2693
    %9411 = vmatpush.bf16.msra.mxu0 %v2685
    %9412 = vmatmul.bf16.gmra.mxu0 %v9298
    %v9413 = vpop.f32.mrf.mxu0
    %v9414 = vadd.f32 0.0, %v9413
    %v9415 = vpop.f32.mrf.mxu0
    %9416 = vdwg.mxu0
    %9417 = vmatpush.bf16.msra.mxu0 %v2805
    %9418 = vmatpush.bf16.msra.mxu0 %v2797
    %9419 = vmatpush.bf16.msra.mxu0 %v2789
    %9420 = vmatpush.bf16.msra.mxu0 %v2781
    %9421 = vmatpush.bf16.msra.mxu0 %v2773
    %9422 = vmatpush.bf16.msra.mxu0 %v2765
    %9423 = vmatpush.bf16.msra.mxu0 %v2757
    %9424 = vmatpush.bf16.msra.mxu0 %v2749
    %9425 = vmatmul.bf16.gmra.mxu0 %v9299
    %v9426 = vpop.f32.mrf.mxu0
    %v9427 = vadd.f32 %v9414, %v9426
    %v9428 = vpop.f32.mrf.mxu0
    %9429 = vdwg.mxu0
    %9430 = vmatpush.bf16.msra.mxu0 %v2742
    %9431 = vmatpush.bf16.msra.mxu0 %v2734
    %9432 = vmatpush.bf16.msra.mxu0 %v2726
    %9433 = vmatpush.bf16.msra.mxu0 %v2718
    %9434 = vmatpush.bf16.msra.mxu0 %v2710
    %9435 = vmatpush.bf16.msra.mxu0 %v2702
    %9436 = vmatpush.bf16.msra.mxu0 %v2694
    %9437 = vmatpush.bf16.msra.mxu0 %v2686
    %9438 = vmatmul.bf16.gmra.mxu0 %v9298
    %v9439 = vpop.f32.mrf.mxu0
    %v9440 = vadd.f32 0.0, %v9439
    %v9441 = vpop.f32.mrf.mxu0
    %9442 = vdwg.mxu0
    %9443 = vmatpush.bf16.msra.mxu0 %v2806
    %9444 = vmatpush.bf16.msra.mxu0 %v2798
    %9445 = vmatpush.bf16.msra.mxu0 %v2790
    %9446 = vmatpush.bf16.msra.mxu0 %v2782
    %9447 = vmatpush.bf16.msra.mxu0 %v2774
    %9448 = vmatpush.bf16.msra.mxu0 %v2766
    %9449 = vmatpush.bf16.msra.mxu0 %v2758
    %9450 = vmatpush.bf16.msra.mxu0 %v2750
    %9451 = vmatmul.bf16.gmra.mxu0 %v9299
    %v9452 = vpop.f32.mrf.mxu0
    %v9453 = vadd.f32 %v9440, %v9452
    %v9454 = vpop.f32.mrf.mxu0
    %9455 = vdwg.mxu0
    %9456 = vmatpush.bf16.msra.mxu0 %v2743
    %9457 = vmatpush.bf16.msra.mxu0 %v2735
    %9458 = vmatpush.bf16.msra.mxu0 %v2727
    %9459 = vmatpush.bf16.msra.mxu0 %v2719
    %9460 = vmatpush.bf16.msra.mxu0 %v2711
    %9461 = vmatpush.bf16.msra.mxu0 %v2703
    %9462 = vmatpush.bf16.msra.mxu0 %v2695
    %9463 = vmatpush.bf16.msra.mxu0 %v2687
    %9464 = vmatmul.bf16.gmra.mxu0 %v9298
    %v9465 = vpop.f32.mrf.mxu0
    %v9466 = vadd.f32 0.0, %v9465
    %v9467 = vpop.f32.mrf.mxu0
    %9468 = vdwg.mxu0
    %9469 = vmatpush.bf16.msra.mxu0 %v2807
    %9470 = vmatpush.bf16.msra.mxu0 %v2799
    %9471 = vmatpush.bf16.msra.mxu0 %v2791
    %9472 = vmatpush.bf16.msra.mxu0 %v2783
    %9473 = vmatpush.bf16.msra.mxu0 %v2775
    %9474 = vmatpush.bf16.msra.mxu0 %v2767
    %9475 = vmatpush.bf16.msra.mxu0 %v2759
    %9476 = vmatpush.bf16.msra.mxu0 %v2751
    %9477 = vmatmul.bf16.gmra.mxu0 %v9299
    %v9478 = vpop.f32.mrf.mxu0
    %v9479 = vadd.f32 %v9466, %v9478
    %v9480 = vpop.f32.mrf.mxu0
    %9481 = vdwg.mxu0
    %9482 = vmatpush.bf16.msra.mxu0 %v2744
    %9483 = vmatpush.bf16.msra.mxu0 %v2736
    %9484 = vmatpush.bf16.msra.mxu0 %v2728
    %9485 = vmatpush.bf16.msra.mxu0 %v2720
    %9486 = vmatpush.bf16.msra.mxu0 %v2712
    %9487 = vmatpush.bf16.msra.mxu0 %v2704
    %9488 = vmatpush.bf16.msra.mxu0 %v2696
    %9489 = vmatpush.bf16.msra.mxu0 %v2688
    %9490 = vmatmul.bf16.gmra.mxu0 %v9298
    %v9491 = vpop.f32.mrf.mxu0
    %v9492 = vadd.f32 0.0, %v9491
    %v9493 = vpop.f32.mrf.mxu0
    %9494 = vdwg.mxu0
    %9495 = vmatpush.bf16.msra.mxu0 %v2808
    %9496 = vmatpush.bf16.msra.mxu0 %v2800
    %9497 = vmatpush.bf16.msra.mxu0 %v2792
    %9498 = vmatpush.bf16.msra.mxu0 %v2784
    %9499 = vmatpush.bf16.msra.mxu0 %v2776
    %9500 = vmatpush.bf16.msra.mxu0 %v2768
    %9501 = vmatpush.bf16.msra.mxu0 %v2760
    %9502 = vmatpush.bf16.msra.mxu0 %v2752
    %9503 = vmatmul.bf16.gmra.mxu0 %v9299
    %v9504 = vpop.f32.mrf.mxu0
    %v9505 = vadd.f32 %v9492, %v9504
    %v9506 = vpop.f32.mrf.mxu0
    %9507 = vdwg.mxu0
    %v9508 = vadd.f32 %v9113, %v9323
    %v9509 = vadd.f32 %v9139, %v9349
    %v9510 = vadd.f32 %v9165, %v9375
    %v9511 = vadd.f32 %v9191, %v9401
    %v9512 = vadd.f32 %v9217, %v9427
    %v9513 = vadd.f32 %v9243, %v9453
    %v9514 = vadd.f32 %v9269, %v9479
    %v9515 = vadd.f32 %v9295, %v9505
    %v9516 = vxor.u32 %v9508, 2147483648
    %v9517 = vxor.u32 %v9509, 2147483648
    %v9518 = vmul.f32 %v9516, 1.442695
    %v9519 = vpow.pop %v9518
    %v9520 = vmul.f32 %v9517, 1.442695
    %v9521 = vpow.pop %v9520
    %v9522 = vadd.f32 %v9519, 1.0
    %v9523 = vadd.f32 %v9521, 1.0
    %v9524 = vrcp.pop %v9522
    %v9525 = vmul.f32 %v9522, %v9524
    %v9526 = vsub.f32 1.0, %v9525
    %v9527 = vmul.f32 %v9524, %v9526
    %v9528 = vadd.f32 %v9524, %v9527
    %vm9529 = vweird.f32 %v9522
    %vm9530 = vweird.f32 %v9524
    %vm9531 = vmor %vm9529, %vm9530
    %v9532 = vsel %vm9531, %v9524, %v9528
    %v9533 = vand.u32 2147483647, %v9522
    %vm9534 = vcmp.eq.f32.partialorder %v9533, 8.507059e+37
    %v9535 = vand.u32 %v9522, 2147483648
    %v9536 = vor.u32 1.1754944e-38, %v9535
    %v9537 = vsel %vm9534, %v9536, %v9532
    %v9538 = vmul.f32 1.0, %v9537
    %v9539 = vrcp.pop %v9523
    %v9540 = vmul.f32 %v9523, %v9539
    %v9541 = vsub.f32 1.0, %v9540
    %v9542 = vmul.f32 %v9539, %v9541
    %v9543 = vadd.f32 %v9539, %v9542
    %vm9544 = vweird.f32 %v9523
    %vm9545 = vweird.f32 %v9539
    %vm9546 = vmor %vm9544, %vm9545
    %v9547 = vsel %vm9546, %v9539, %v9543
    %v9548 = vand.u32 2147483647, %v9523
    %vm9549 = vcmp.eq.f32.partialorder %v9548, 8.507059e+37
    %v9550 = vand.u32 %v9523, 2147483648
    %v9551 = vor.u32 1.1754944e-38, %v9550
    %v9552 = vsel %vm9549, %v9551, %v9547
    %v9553 = vmul.f32 1.0, %v9552
    %v9554 = vxor.u32 %v9510, 2147483648
    %v9555 = vxor.u32 %v9511, 2147483648
    %v9556 = vmul.f32 %v9554, 1.442695
    %v9557 = vpow.pop %v9556
    %v9558 = vmul.f32 %v9555, 1.442695
    %v9559 = vpow.pop %v9558
    %v9560 = vadd.f32 %v9557, 1.0
    %v9561 = vadd.f32 %v9559, 1.0
    %v9562 = vrcp.pop %v9560
    %v9563 = vmul.f32 %v9560, %v9562
    %v9564 = vsub.f32 1.0, %v9563
    %v9565 = vmul.f32 %v9562, %v9564
    %v9566 = vadd.f32 %v9562, %v9565
    %vm9567 = vweird.f32 %v9560
    %vm9568 = vweird.f32 %v9562
    %vm9569 = vmor %vm9567, %vm9568
    %v9570 = vsel %vm9569, %v9562, %v9566
    %v9571 = vand.u32 2147483647, %v9560
    %vm9572 = vcmp.eq.f32.partialorder %v9571, 8.507059e+37
    %v9573 = vand.u32 %v9560, 2147483648
    %v9574 = vor.u32 1.1754944e-38, %v9573
    %v9575 = vsel %vm9572, %v9574, %v9570
    %v9576 = vmul.f32 1.0, %v9575
    %v9577 = vrcp.pop %v9561
    %v9578 = vmul.f32 %v9561, %v9577
    %v9579 = vsub.f32 1.0, %v9578
    %v9580 = vmul.f32 %v9577, %v9579
    %v9581 = vadd.f32 %v9577, %v9580
    %vm9582 = vweird.f32 %v9561
    %vm9583 = vweird.f32 %v9577
    %vm9584 = vmor %vm9582, %vm9583
    %v9585 = vsel %vm9584, %v9577, %v9581
    %v9586 = vand.u32 2147483647, %v9561
    %vm9587 = vcmp.eq.f32.partialorder %v9586, 8.507059e+37
    %v9588 = vand.u32 %v9561, 2147483648
    %v9589 = vor.u32 1.1754944e-38, %v9588
    %v9590 = vsel %vm9587, %v9589, %v9585
    %v9591 = vmul.f32 1.0, %v9590
    %v9592 = vtanh.pop %v9512
    %v9593 = vtanh.pop %v9513
    %v9594 = vxor.u32 %v9514, 2147483648
    %v9595 = vxor.u32 %v9515, 2147483648
    %v9596 = vmul.f32 %v9594, 1.442695
    %v9597 = vpow.pop %v9596
    %v9598 = vmul.f32 %v9595, 1.442695
    %v9599 = vpow.pop %v9598
    %v9600 = vadd.f32 %v9597, 1.0
    %v9601 = vadd.f32 %v9599, 1.0
    %v9602 = vrcp.pop %v9600
    %v9603 = vmul.f32 %v9600, %v9602
    %v9604 = vsub.f32 1.0, %v9603
    %v9605 = vmul.f32 %v9602, %v9604
    %v9606 = vadd.f32 %v9602, %v9605
    %vm9607 = vweird.f32 %v9600
    %vm9608 = vweird.f32 %v9602
    %vm9609 = vmor %vm9607, %vm9608
    %v9610 = vsel %vm9609, %v9602, %v9606
    %v9611 = vand.u32 2147483647, %v9600
    %vm9612 = vcmp.eq.f32.partialorder %v9611, 8.507059e+37
    %v9613 = vand.u32 %v9600, 2147483648
    %v9614 = vor.u32 1.1754944e-38, %v9613
    %v9615 = vsel %vm9612, %v9614, %v9610
    %v9616 = vmul.f32 1.0, %v9615
    %v9617 = vrcp.pop %v9601
    %v9618 = vmul.f32 %v9601, %v9617
    %v9619 = vsub.f32 1.0, %v9618
    %v9620 = vmul.f32 %v9617, %v9619
    %v9621 = vadd.f32 %v9617, %v9620
    %vm9622 = vweird.f32 %v9601
    %vm9623 = vweird.f32 %v9617
    %vm9624 = vmor %vm9622, %vm9623
    %v9625 = vsel %vm9624, %v9617, %v9621
    %v9626 = vand.u32 2147483647, %v9601
    %vm9627 = vcmp.eq.f32.partialorder %v9626, 8.507059e+37
    %v9628 = vand.u32 %v9601, 2147483648
    %v9629 = vor.u32 1.1754944e-38, %v9628
    %v9630 = vsel %vm9627, %v9629, %v9625
    %v9631 = vmul.f32 1.0, %v9630
    %v9632 = vmul.f32 %v9576, %v8727
    %v9633 = vmul.f32 %v9591, %v8728
    %v9634 = vmul.f32 %v9538, %v9592
    %v9635 = vmul.f32 %v9553, %v9593
    %v9636 = vadd.f32 %v9632, %v9634
    %v9637 = vadd.f32 %v9633, %v9635
    %v9638 = vtanh.pop %v9636
    %v9639 = vtanh.pop %v9637
    %v9640 = vmul.f32 %v9616, %v9638
    %v9641 = vmul.f32 %v9631, %v9639
    %9642 = vst [vmem:[#allocation2] sm:$0xff] %v9088
    %9643 = vst [vmem:[#allocation2 + $0x8] sm:$0xff] %v9089
    %9644 = vst [vmem:[#allocation3] sm:$0xff] %v9084
    %9645 = vst [vmem:[#allocation3 + $0x8] sm:$0xff] %v9085
    %9646 = vst [vmem:[#allocation4] sm:$0xff] %v9640
    %9647 = vst [vmem:[#allocation4 + $0x8] sm:$0xff] %v9641
    %9648 = vst [vmem:[#allocation5] sm:$0xff] %v9636
    %9649 = vst [vmem:[#allocation5 + $0x8] sm:$0xff] %v9637
    // Predicated region
    $region34: #{lstm2_classifier_forward.1} parent=1 // pred_check
      %p9650 = pneg %p27
    $region35: #{lstm2_classifier_forward.1} parent=1 // pred_check_branch
      %9652 = sbr.rel (%p9650) target = $region37
    $region36: #{lstm2_classifier_forward.1} parent=1 // pred_region
      %v9653 = vld [vmem:[%s5] sm:$0xff]
      %v9654 = vld [vmem:[%s5 + $0x8] sm:$0xff]
      %v9655 = vld [vmem:[%s5 + $0x10] sm:$0xff]
      %v9656 = vld [vmem:[%s5 + $0x18] sm:$0xff]
      %v9657 = vld [vmem:[%s5 + $0x20] sm:$0xff]
      %v9658 = vld [vmem:[%s5 + $0x28] sm:$0xff]
      %v9659 = vld [vmem:[%s5 + $0x30] sm:$0xff]
      %v9660 = vld [vmem:[%s5 + $0x38] sm:$0xff]
      %v9661 = vld [vmem:[%s5 + $0x40] sm:$0xff]
      %v9662 = vld [vmem:[%s5 + $0x48] sm:$0xff]
      %v9663 = vld [vmem:[%s5 + $0x50] sm:$0xff]
      %v9664 = vld [vmem:[%s5 + $0x58] sm:$0xff]
      %v9665 = vld [vmem:[%s5 + $0x60] sm:$0xff]
      %v9666 = vld [vmem:[%s5 + $0x68] sm:$0xff]
      %v9667 = vld [vmem:[%s5 + $0x70] sm:$0xff]
      %v9668 = vld [vmem:[%s5 + $0x78] sm:$0xff]
      %v9669 = vld [vmem:[%s5 + $0x80] sm:$0xff]
      %v9670 = vld [vmem:[%s5 + $0x88] sm:$0xff]
      %v9671 = vld [vmem:[%s5 + $0x90] sm:$0xff]
      %v9672 = vld [vmem:[%s5 + $0x98] sm:$0xff]
      %v9673 = vld [vmem:[%s5 + $0xa0] sm:$0xff]
      %v9674 = vld [vmem:[%s5 + $0xa8] sm:$0xff]
      %v9675 = vld [vmem:[%s5 + $0xb0] sm:$0xff]
      %v9676 = vld [vmem:[%s5 + $0xb8] sm:$0xff]
      %v9677 = vld [vmem:[%s5 + $0xc0] sm:$0xff]
      %v9678 = vld [vmem:[%s5 + $0xc8] sm:$0xff]
      %v9679 = vld [vmem:[%s5 + $0xd0] sm:$0xff]
      %v9680 = vld [vmem:[%s5 + $0xd8] sm:$0xff]
      %v9681 = vld [vmem:[%s5 + $0xe0] sm:$0xff]
      %v9682 = vld [vmem:[%s5 + $0xe8] sm:$0xff]
      %v9683 = vld [vmem:[%s5 + $0xf0] sm:$0xff]
      %v9684 = vld [vmem:[%s5 + $0xf8] sm:$0xff]
      %v9685 = vld [vmem:[%s6] sm:$0x1]
      %v9687 = vperm.slane %v9685, 0
      %9689 = vmatpush.msra.mxu0 %v9668
      %9690 = vmatpush.msra.mxu0 %v9667
      %9691 = vmatpush.msra.mxu0 %v9666
      %9692 = vmatpush.msra.mxu0 %v9665
      %9693 = vmatpush.msra.mxu0 %v9664
      %9694 = vmatpush.msra.mxu0 %v9663
      %9695 = vmatpush.msra.mxu0 %v9662
      %9696 = vmatpush.msra.mxu0 %v9661
      %9697 = vmatpush.msra.mxu0 %v9660
      %9698 = vmatpush.msra.mxu0 %v9659
      %9699 = vmatpush.msra.mxu0 %v9658
      %9700 = vmatpush.msra.mxu0 %v9657
      %9701 = vmatpush.msra.mxu0 %v9656
      %9702 = vmatpush.msra.mxu0 %v9655
      %9703 = vmatpush.msra.mxu0 %v9654
      %9704 = vmatpush.msra.mxu0 %v9653
      %9705 = vmatmul.f32.gmra.mxu0 %v9640
      %v9706 = vpop.f32.mrf.mxu0
      %v9707 = vadd.f32 %v9687, %v9706
      %9708 = vdwg.mxu0
      %9709 = vmatpush.msra.mxu0 %v9684
      %9710 = vmatpush.msra.mxu0 %v9683
      %9711 = vmatpush.msra.mxu0 %v9682
      %9712 = vmatpush.msra.mxu0 %v9681
      %9713 = vmatpush.msra.mxu0 %v9680
      %9714 = vmatpush.msra.mxu0 %v9679
      %9715 = vmatpush.msra.mxu0 %v9678
      %9716 = vmatpush.msra.mxu0 %v9677
      %9717 = vmatpush.msra.mxu0 %v9676
      %9718 = vmatpush.msra.mxu0 %v9675
      %9719 = vmatpush.msra.mxu0 %v9674
      %9720 = vmatpush.msra.mxu0 %v9673
      %9721 = vmatpush.msra.mxu0 %v9672
      %9722 = vmatpush.msra.mxu0 %v9671
      %9723 = vmatpush.msra.mxu0 %v9670
      %9724 = vmatpush.msra.mxu0 %v9669
      %9725 = vmatmul.f32.gmra.mxu0 %v9641
      %v9726 = vpop.f32.mrf.mxu0
      %v9727 = vadd.f32 %v9707, %v9726
      %9728 = vdwg.mxu0
      %9729 = vst [vmem:[#allocation6] sm:$0xff] %v9727
    $region37: #{lstm2_classifier_forward.1} parent=1 // pred_fallthru
      _
    // Predicated region
    $region38: #{lstm2_classifier_forward.1} parent=1 // pred_check
      _
    $region39: #{lstm2_classifier_forward.1} parent=1 // pred_check_branch
      %9731 = sbr.rel (0) target = $region41
    $region40: #{lstm2_classifier_forward.1} parent=1 // pred_region
      %9733 = vsyncadd [#allocation7], 0
      %s9735 = sshll.u32 [#allocation6], 4
      %s9736 = int_to_ptr.vmem [resolvable:$true] %s9735
      %s9737 = sshll.u32 %s7, 4
      %s9738 = int_to_ptr.hbm [resolvable:$true] %s9737
      %9740 = dma.vmem_to_hbm [thread:$0]  %s9736, 128, %s9738, [#allocation7]
    $region41: #{lstm2_classifier_forward.1} parent=1 // pred_fallthru
      _
    // Predicated region
    $region42: #{lstm2_classifier_forward.1} parent=1 // pred_check
      _
    $region43: #{lstm2_classifier_forward.1} parent=1 // pred_check_branch
      %9742 = sbr.rel (0) target = $region45
    $region44: #{lstm2_classifier_forward.1} parent=1 // pred_region
      %9744 = dma.done [#allocation7], 128
    $region45: #{lstm2_classifier_forward.1} parent=1 // pred_fallthru
      _
    %9745 = vsyncpa [#allocation7], 1

</llo_original>
